<compile_context>
chip_gen: v6e
topology: v6e:2x2x1
jax: 0.10.0
libtpu: 0.0.40
codegen_flags: <defaults>
</compile_context>

<pallas_src>
import functools
import math

import jax
import jax.numpy as jnp
from jax.experimental import pallas as pl
from jax.experimental.pallas import tpu as pltpu

_HIGHEST = jax.lax.Precision.HIGHEST


def attention_block_kernel(x_ref, gmat_ref, wqkv_ref, bqkv_ref, wproj_ref, bproj_ref,
                           o_ref, *, num_heads, eps):
    # x_ref     : (1, T, C)  channel-last activation tile (one batch element)
    # gmat_ref  : (C, C)     block-diagonal group-averaging matrix (1/(gs*T) inside a group)
    # wqkv_ref  : (C, 3C)    qkv 1x1-conv weight, transposed, with GN affine + attn scale folded
    # bqkv_ref  : (1, 3C)    qkv bias with GN beta contribution + attn scale folded
    # wproj_ref : (C, C)     proj_out 1x1-conv weight, transposed
    # bproj_ref : (1, C)
    # o_ref     : (1, T, C)
    xf = x_ref[0].astype(jnp.float32)                          # (T, C)
    t, c = xf.shape
    hd = c // num_heads

    # --- GroupNorm(32, C) statistics via an MXU matmul (no in-kernel reshapes) ---
    s = jnp.sum(xf, axis=0, keepdims=True)                     # (1, C) per-channel sum
    ss = jnp.sum(xf * xf, axis=0, keepdims=True)               # (1, C) per-channel sum of squares
    mean = jnp.dot(s, gmat_ref[...], precision=_HIGHEST,
                   preferred_element_type=jnp.float32)         # (1, C) group mean (per channel)
    ex2 = jnp.dot(ss, gmat_ref[...], precision=_HIGHEST,
                  preferred_element_type=jnp.float32)          # (1, C) group E[x^2] (per channel)
    var = ex2 - mean * mean
    inv = jax.lax.rsqrt(var + eps)
    xn = (xf - mean) * inv                                     # (T, C) -- affine folded into W_qkv

    # --- qkv 1x1 conv: (T, C) @ (C, 3C) on the MXU (gamma/beta/scale pre-folded) ---
    qkv = jnp.dot(xn, wqkv_ref[...], precision=_HIGHEST,
                  preferred_element_type=jnp.float32) + bqkv_ref[...]       # (T, 3C)

    # --- per-head attention; heads are interleaved along the 3C axis, matching the
    #     (B, 3C, T) -> (B*H, 3C/H, T) reshape + split of the PyTorch module ---
    head_outs = []
    for h in range(num_heads):
        base = h * 3 * hd
        q = qkv[:, base:base + hd]                             # (T, hd), already * scale
        k = qkv[:, base + hd:base + 2 * hd]                    # (T, hd), already * scale
        v = qkv[:, base + 2 * hd:base + 3 * hd]                # (T, hd)
        scores = jax.lax.dot_general(                          # (T, T) = q @ k^T  (MXU)
            q, k, (((1,), (1,)), ((), ())),
            precision=_HIGHEST, preferred_element_type=jnp.float32)
        m = jnp.max(scores, axis=-1, keepdims=True)
        p = jnp.exp(scores - m)
        probs = p * pl.reciprocal(jnp.sum(p, axis=-1, keepdims=True))       # softmax in f32
        head_outs.append(jnp.dot(probs, v, precision=_HIGHEST,
                                 preferred_element_type=jnp.float32))       # (T, hd)
    attn = head_outs[0] if num_heads == 1 else jnp.concatenate(head_outs, axis=1)  # (T, C)

    # --- proj_out 1x1 conv + residual; single full-tile, lane-dense store ---
    proj = jnp.dot(attn, wproj_ref[...], precision=_HIGHEST,
                   preferred_element_type=jnp.float32) + bproj_ref[...]
    o_ref[0] = (xf + proj).astype(o_ref.dtype)


def attention_block_forward(x, gn_w, gn_b, w_qkv, b_qkv, w_proj, b_proj, *,
                            num_heads=1, num_groups=32, eps=1e-5):
    """Mirror of AttentionBlock._forward (checkpoint is a forward-pass no-op)."""
    B, C = x.shape[:2]
    spatial = x.shape[2:]
    T = math.prod(spatial)
    assert C % num_groups == 0, "normalization(channels)=GroupNorm(32, C) needs C % 32 == 0"
    assert C % num_heads == 0
    hd = C // num_heads
    scale = 1.0 / math.sqrt(math.sqrt(hd))

    # channel-last internal layout: channels become the 128-lane axis
    x_t = jnp.transpose(x.reshape(B, C, T), (0, 2, 1))         # (B, T, C)

    # block-diagonal group-averaging matrix for GroupNorm statistics (MXU-friendly)
    gs = C // num_groups
    gidx = jnp.arange(C) // gs
    gmat = (gidx[:, None] == gidx[None, :]).astype(jnp.float32) / float(gs * T)   # (C, C)

    # 1x1-conv weights as plain 2-D matrices, transposed for channel-last matmuls.
    # Fold (a) GroupNorm affine gamma/beta and (b) the attention scale 1/sqrt(sqrt(hd)) for
    # the q and k output channels directly into the qkv weight/bias on the host.
    wqkv_t = jnp.transpose(w_qkv.reshape(3 * C, C)).astype(jnp.float32)   # (C, 3C)
    wproj_t = jnp.transpose(w_proj.reshape(C, C)).astype(jnp.float32)    # (C, C)

    out_ch = jnp.arange(3 * C)
    qk_scale = jnp.where((out_ch % (3 * hd)) < 2 * hd, scale, 1.0).astype(jnp.float32)  # (3C,)
    wqkv_eff = (gn_w.astype(jnp.float32)[:, None] * wqkv_t) * qk_scale[None, :]          # (C, 3C)
    bqkv_eff = ((gn_b.astype(jnp.float32)[None, :] @ wqkv_t
                 + b_qkv.astype(jnp.float32)[None, :]) * qk_scale[None, :])              # (1, 3C)

    kernel = functools.partial(attention_block_kernel, num_heads=num_heads, eps=eps)

    out_t = pl.pallas_call(
        kernel,
        out_shape=jax.ShapeDtypeStruct((B, T, C), x.dtype),
        grid_spec=pltpu.PrefetchScalarGridSpec(
            num_scalar_prefetch=0,
            grid=(B,),
            in_specs=[
                pl.BlockSpec((1, T, C), lambda b: (b, 0, 0)),      # x (per-batch tile)
                pl.BlockSpec((C, C), lambda b: (0, 0)),            # group-averaging matrix
                pl.BlockSpec((C, 3 * C), lambda b: (0, 0)),        # W_qkv^T (folded)
                pl.BlockSpec((1, 3 * C), lambda b: (0, 0)),        # b_qkv   (folded)
                pl.BlockSpec((C, C), lambda b: (0, 0)),            # W_proj^T
                pl.BlockSpec((1, C), lambda b: (0, 0)),            # b_proj
            ],
            out_specs=pl.BlockSpec((1, T, C), lambda b: (b, 0, 0)),
        ),
        compiler_params=pltpu.CompilerParams(
            dimension_semantics=("parallel",),
            vmem_limit_bytes=32 * 1024 * 1024,
        ),
    )(x_t, gmat, wqkv_eff, bqkv_eff, wproj_t,
      b_proj.astype(jnp.float32).reshape(1, C))

    return jnp.transpose(out_t, (0, 2, 1)).reshape(B, C, *spatial)


def attention_block_ref(x, gn_w, gn_b, w_qkv, b_qkv, w_proj, b_proj, *,
                        num_heads, num_groups=32, eps=1e-5):
    """Pure-JAX reference that mirrors the PyTorch forward pass exactly."""
    B, C = x.shape[:2]
    spatial = x.shape[2:]
    T = math.prod(spatial)
    xr = x.reshape(B, C, T)
    xf = xr.astype(jnp.float32)
    gs = C // num_groups
    xg = xf.reshape(B, num_groups, gs * T)
    mean = jnp.mean(xg, axis=-1, keepdims=True)
    var = jnp.var(xg, axis=-1, keepdims=True)
    xn = ((xg - mean) / jnp.sqrt(var + eps)).reshape(B, C, T)
    xn = xn * gn_w[None, :, None] + gn_b[None, :, None]
    qkv = jnp.einsum('oc,bct->bot', w_qkv, xn, precision=_HIGHEST) + b_qkv[None, :, None]
    hd = C // num_heads
    qkv = qkv.reshape(B * num_heads, 3 * hd, T)
    q, k, v = jnp.split(qkv, 3, axis=1)
    scale = 1.0 / math.sqrt(math.sqrt(hd))
    w = jnp.einsum('bct,bcs->bts', q * scale, k * scale, precision=_HIGHEST)
    w = jax.nn.softmax(w.astype(jnp.float32), axis=-1)
    a = jnp.einsum('bts,bcs->bct', w, v, precision=_HIGHEST).reshape(B, C, T)
    h = jnp.einsum('oc,bct->bot', w_proj, a, precision=_HIGHEST) + b_proj[None, :, None]
    return (xr + h).reshape(B, C, *spatial)


if __name__ == "__main__":
    B, C, H, W = 2, 32, 8, 8          # C must be a multiple of 32 for GroupNorm(32, C)
    num_heads = 2
    T = H * W

    key = jax.random.PRNGKey(0)
    kx, kg, kb, kqw, kqb, kpw, kpb = jax.random.split(key, 7)
    x = jax.random.normal(kx, (B, C, H, W), dtype=jnp.float32)

    gn_w = 1.0 + 0.1 * jax.random.normal(kg, (C,), dtype=jnp.float32)
    gn_b = 0.1 * jax.random.normal(kb, (C,), dtype=jnp.float32)

    bound = 1.0 / math.sqrt(C)
    w_qkv = jax.random.uniform(kqw, (3 * C, C), jnp.float32, -bound, bound)
    b_qkv = jax.random.uniform(kqb, (3 * C,), jnp.float32, -bound, bound)
    # NOTE: the module zero-initializes proj_out (zero_module); random values are used
    # here so the self-test actually exercises the projection + residual path.
    w_proj = 0.1 * jax.random.normal(kpw, (C, C), dtype=jnp.float32)
    b_proj = 0.1 * jax.random.normal(kpb, (C,), dtype=jnp.float32)

    y = attention_block_forward(x, gn_w, gn_b, w_qkv, b_qkv, w_proj, b_proj,
                                num_heads=num_heads)
    y = jax.block_until_ready(y)

    y_ref = attention_block_ref(x, gn_w, gn_b, w_qkv, b_qkv, w_proj, b_proj,
                                num_heads=num_heads)

    assert y.shape == y_ref.shape == (B, C, H, W), (y.shape, y_ref.shape)
    if not jnp.allclose(y, y_ref, atol=1e-4, rtol=1e-4):
        err = float(jnp.max(jnp.abs(y - y_ref)))
        raise AssertionError(f"Pallas AttentionBlock mismatch vs reference (max abs err {err})")
    print("KERNEL_OK")
</pallas_src>

<mosaic_0001>
module attributes {stable_mosaic.version = 11 : i64} {
  func.func @attention_block_kernel(%arg0: i32, %arg1: memref<1x64x32xf32, #tpu.memory_space<vmem>>, %arg2: memref<32x32xf32, #tpu.memory_space<vmem>>, %arg3: memref<32x96xf32, #tpu.memory_space<vmem>>, %arg4: memref<1x96xf32, #tpu.memory_space<vmem>>, %arg5: memref<32x32xf32, #tpu.memory_space<vmem>>, %arg6: memref<1x32xf32, #tpu.memory_space<vmem>>, %arg7: memref<1x64x32xf32, #tpu.memory_space<vmem>>) attributes {dimension_semantics = [#tpu.dimension_semantics<parallel>], iteration_bounds = array<i64: 2>, scalar_prefetch = 0 : i64, scratch_operands = 0 : i64, tpu.core_type = #tpu.core_type<tc>, window_params = [{transform_indices = @transform_0, window_bounds = array<i64: 1, 64, 32>}, {pipeline_mode = #tpu.pipeline_mode<synchronous>, transform_indices = @transform_1, window_bounds = array<i64: 32, 32>}, {pipeline_mode = #tpu.pipeline_mode<synchronous>, transform_indices = @transform_2, window_bounds = array<i64: 32, 96>}, {pipeline_mode = #tpu.pipeline_mode<synchronous>, transform_indices = @transform_3, window_bounds = array<i64: 1, 96>}, {pipeline_mode = #tpu.pipeline_mode<synchronous>, transform_indices = @transform_4, window_bounds = array<i64: 32, 32>}, {pipeline_mode = #tpu.pipeline_mode<synchronous>, transform_indices = @transform_5, window_bounds = array<i64: 1, 32>}, {transform_indices = @transform_6, window_bounds = array<i64: 1, 64, 32>}]} {
    %c0 = arith.constant 0 : index
    %c0_0 = arith.constant 0 : index
    %c0_1 = arith.constant 0 : index
    %0 = vector.load %arg1[%c0, %c0_0, %c0_1] : memref<1x64x32xf32, #tpu.memory_space<vmem>>, vector<1x64x32xf32>
    %1 = vector.shape_cast %0 : vector<1x64x32xf32> to vector<64x32xf32>
    %cst = arith.constant dense<0.000000e+00> : vector<32xf32>
    %2 = vector.multi_reduction <add>, %1, %cst [0] : vector<64x32xf32> to vector<32xf32>
    %3 = vector.shape_cast %2 : vector<32xf32> to vector<1x32xf32>
    %4 = arith.mulf %1, %1 : vector<64x32xf32>
    %cst_2 = arith.constant dense<0.000000e+00> : vector<32xf32>
    %5 = vector.multi_reduction <add>, %4, %cst_2 [0] : vector<64x32xf32> to vector<32xf32>
    %6 = vector.shape_cast %5 : vector<32xf32> to vector<1x32xf32>
    %c0_3 = arith.constant 0 : index
    %c0_4 = arith.constant 0 : index
    %7 = vector.load %arg2[%c0_3, %c0_4] : memref<32x32xf32, #tpu.memory_space<vmem>>, vector<32x32xf32>
    %cst_5 = arith.constant dense<0.000000e+00> : vector<1x32xf32>
    %8 = tpu.matmul %3, %7, %cst_5 {dimension_numbers = #tpu.dot_dimension_numbers<[1], [0], [0], [1], [0, 0, 1, 1], [], []>, precision = #tpu.contract_precision<fp32>} : vector<1x32xf32>, vector<32x32xf32>, vector<1x32xf32> -> vector<1x32xf32>
    %c0_6 = arith.constant 0 : index
    %c0_7 = arith.constant 0 : index
    %9 = vector.load %arg2[%c0_6, %c0_7] : memref<32x32xf32, #tpu.memory_space<vmem>>, vector<32x32xf32>
    %cst_8 = arith.constant dense<0.000000e+00> : vector<1x32xf32>
    %10 = tpu.matmul %6, %9, %cst_8 {dimension_numbers = #tpu.dot_dimension_numbers<[1], [0], [0], [1], [0, 0, 1, 1], [], []>, precision = #tpu.contract_precision<fp32>} : vector<1x32xf32>, vector<32x32xf32>, vector<1x32xf32> -> vector<1x32xf32>
    %11 = arith.mulf %8, %8 : vector<1x32xf32>
    %12 = arith.subf %10, %11 : vector<1x32xf32>
    %cst_9 = arith.constant 9.99999974E-6 : f32
    %13 = vector.broadcast %cst_9 : f32 to vector<1x32xf32>
    %14 = arith.addf %12, %13 : vector<1x32xf32>
    %15 = math.rsqrt %14 : vector<1x32xf32>
    %16 = vector.broadcast %8 : vector<1x32xf32> to vector<64x32xf32>
    %17 = arith.subf %1, %16 : vector<64x32xf32>
    %18 = vector.broadcast %15 : vector<1x32xf32> to vector<64x32xf32>
    %19 = arith.mulf %17, %18 : vector<64x32xf32>
    %c0_10 = arith.constant 0 : index
    %c0_11 = arith.constant 0 : index
    %20 = vector.load %arg3[%c0_10, %c0_11] : memref<32x96xf32, #tpu.memory_space<vmem>>, vector<32x96xf32>
    %cst_12 = arith.constant dense<0.000000e+00> : vector<64x96xf32>
    %21 = tpu.matmul %19, %20, %cst_12 {dimension_numbers = #tpu.dot_dimension_numbers<[1], [0], [0], [1], [0, 0, 1, 1], [], []>, precision = #tpu.contract_precision<fp32>} : vector<64x32xf32>, vector<32x96xf32>, vector<64x96xf32> -> vector<64x96xf32>
    %c0_13 = arith.constant 0 : index
    %c0_14 = arith.constant 0 : index
    %22 = vector.load %arg4[%c0_13, %c0_14] : memref<1x96xf32, #tpu.memory_space<vmem>>, vector<1x96xf32>
    %23 = vector.broadcast %22 : vector<1x96xf32> to vector<64x96xf32>
    %24 = arith.addf %21, %23 : vector<64x96xf32>
    %25 = vector.extract_strided_slice %24 {offsets = [0, 0], sizes = [64, 16], strides = [1, 1]} : vector<64x96xf32> to vector<64x16xf32>
    %26 = vector.extract_strided_slice %24 {offsets = [0, 16], sizes = [64, 16], strides = [1, 1]} : vector<64x96xf32> to vector<64x16xf32>
    %27 = vector.extract_strided_slice %24 {offsets = [0, 32], sizes = [64, 16], strides = [1, 1]} : vector<64x96xf32> to vector<64x16xf32>
    %cst_15 = arith.constant dense<0.000000e+00> : vector<64x64xf32>
    %28 = tpu.matmul %25, %26, %cst_15 {dimension_numbers = #tpu.dot_dimension_numbers<[1], [1], [0], [0], [0, 0, 1, 0], [], []>, precision = #tpu.contract_precision<fp32>} : vector<64x16xf32>, vector<64x16xf32>, vector<64x64xf32> -> vector<64x64xf32>
    %cst_16 = arith.constant dense<0xFF800000> : vector<64xf32>
    %29 = vector.multi_reduction <maximumf>, %28, %cst_16 [1] : vector<64x64xf32> to vector<64xf32>
    %30 = vector.shape_cast %29 : vector<64xf32> to vector<64x1xf32>
    %31 = vector.broadcast %30 : vector<64x1xf32> to vector<64x64xf32>
    %32 = arith.subf %28, %31 : vector<64x64xf32>
    %33 = math.exp %32 : vector<64x64xf32>
    %cst_17 = arith.constant dense<0.000000e+00> : vector<64xf32>
    %34 = vector.multi_reduction <add>, %33, %cst_17 [1] : vector<64x64xf32> to vector<64xf32>
    %35 = vector.shape_cast %34 : vector<64xf32> to vector<64x1xf32>
    %36 = tpu.reciprocal %35 : vector<64x1xf32> -> vector<64x1xf32>
    %37 = vector.broadcast %36 : vector<64x1xf32> to vector<64x64xf32>
    %38 = arith.mulf %33, %37 : vector<64x64xf32>
    %cst_18 = arith.constant dense<0.000000e+00> : vector<64x16xf32>
    %39 = tpu.matmul %38, %27, %cst_18 {dimension_numbers = #tpu.dot_dimension_numbers<[1], [0], [0], [1], [0, 0, 1, 1], [], []>, precision = #tpu.contract_precision<fp32>} : vector<64x64xf32>, vector<64x16xf32>, vector<64x16xf32> -> vector<64x16xf32>
    %40 = vector.extract_strided_slice %24 {offsets = [0, 48], sizes = [64, 16], strides = [1, 1]} : vector<64x96xf32> to vector<64x16xf32>
    %41 = vector.extract_strided_slice %24 {offsets = [0, 64], sizes = [64, 16], strides = [1, 1]} : vector<64x96xf32> to vector<64x16xf32>
    %42 = vector.extract_strided_slice %24 {offsets = [0, 80], sizes = [64, 16], strides = [1, 1]} : vector<64x96xf32> to vector<64x16xf32>
    %cst_19 = arith.constant dense<0.000000e+00> : vector<64x64xf32>
    %43 = tpu.matmul %40, %41, %cst_19 {dimension_numbers = #tpu.dot_dimension_numbers<[1], [1], [0], [0], [0, 0, 1, 0], [], []>, precision = #tpu.contract_precision<fp32>} : vector<64x16xf32>, vector<64x16xf32>, vector<64x64xf32> -> vector<64x64xf32>
    %cst_20 = arith.constant dense<0xFF800000> : vector<64xf32>
    %44 = vector.multi_reduction <maximumf>, %43, %cst_20 [1] : vector<64x64xf32> to vector<64xf32>
    %45 = vector.shape_cast %44 : vector<64xf32> to vector<64x1xf32>
    %46 = vector.broadcast %45 : vector<64x1xf32> to vector<64x64xf32>
    %47 = arith.subf %43, %46 : vector<64x64xf32>
    %48 = math.exp %47 : vector<64x64xf32>
    %cst_21 = arith.constant dense<0.000000e+00> : vector<64xf32>
    %49 = vector.multi_reduction <add>, %48, %cst_21 [1] : vector<64x64xf32> to vector<64xf32>
    %50 = vector.shape_cast %49 : vector<64xf32> to vector<64x1xf32>
    %51 = tpu.reciprocal %50 : vector<64x1xf32> -> vector<64x1xf32>
    %52 = vector.broadcast %51 : vector<64x1xf32> to vector<64x64xf32>
    %53 = arith.mulf %48, %52 : vector<64x64xf32>
    %cst_22 = arith.constant dense<0.000000e+00> : vector<64x16xf32>
    %54 = tpu.matmul %53, %42, %cst_22 {dimension_numbers = #tpu.dot_dimension_numbers<[1], [0], [0], [1], [0, 0, 1, 1], [], []>, precision = #tpu.contract_precision<fp32>} : vector<64x64xf32>, vector<64x16xf32>, vector<64x16xf32> -> vector<64x16xf32>
    %55 = tpu.concatenate %39, %54 in 1 : vector<64x16xf32>, vector<64x16xf32> -> vector<64x32xf32>
    %c0_23 = arith.constant 0 : index
    %c0_24 = arith.constant 0 : index
    %56 = vector.load %arg5[%c0_23, %c0_24] : memref<32x32xf32, #tpu.memory_space<vmem>>, vector<32x32xf32>
    %cst_25 = arith.constant dense<0.000000e+00> : vector<64x32xf32>
    %57 = tpu.matmul %55, %56, %cst_25 {dimension_numbers = #tpu.dot_dimension_numbers<[1], [0], [0], [1], [0, 0, 1, 1], [], []>, precision = #tpu.contract_precision<fp32>} : vector<64x32xf32>, vector<32x32xf32>, vector<64x32xf32> -> vector<64x32xf32>
    %c0_26 = arith.constant 0 : index
    %c0_27 = arith.constant 0 : index
    %58 = vector.load %arg6[%c0_26, %c0_27] : memref<1x32xf32, #tpu.memory_space<vmem>>, vector<1x32xf32>
    %59 = vector.broadcast %58 : vector<1x32xf32> to vector<64x32xf32>
    %60 = arith.addf %57, %59 : vector<64x32xf32>
    %61 = arith.addf %1, %60 : vector<64x32xf32>
    %c0_28 = arith.constant 0 : index
    %c0_29 = arith.constant 0 : index
    %c0_30 = arith.constant 0 : index
    %62 = vector.load %arg7[%c0_28, %c0_29, %c0_30] : memref<1x64x32xf32, #tpu.memory_space<vmem>>, vector<1x64x32xf32>
    %63 = vector.shape_cast %62 : vector<1x64x32xf32> to vector<64x32xf32>
    %64 = vector.shape_cast %61 : vector<64x32xf32> to vector<1x64x32xf32>
    tpu.vector_store %arg7[%c0_28, %c0_29, %c0_30], %64 {strides = array<i32>} : memref<1x64x32xf32, #tpu.memory_space<vmem>>, vector<1x64x32xf32>,
    return
  }
  func.func @transform_0(%arg0: i32) -> (i32, i32, i32) {
    %c0_i32 = arith.constant 0 : i32
    %c0_i32_0 = arith.constant 0 : i32
    %c0_i32_1 = arith.constant 0 : i32
    return %arg0, %c0_i32, %c0_i32_0 : i32, i32, i32
  }
  func.func @transform_1(%arg0: i32) -> (i32, i32) {
    %c0_i32 = arith.constant 0 : i32
    %c0_i32_0 = arith.constant 0 : i32
    %c0_i32_1 = arith.constant 0 : i32
    return %c0_i32, %c0_i32_0 : i32, i32
  }
  func.func @transform_2(%arg0: i32) -> (i32, i32) {
    %c0_i32 = arith.constant 0 : i32
    %c0_i32_0 = arith.constant 0 : i32
    %c0_i32_1 = arith.constant 0 : i32
    return %c0_i32, %c0_i32_0 : i32, i32
  }
  func.func @transform_3(%arg0: i32) -> (i32, i32) {
    %c0_i32 = arith.constant 0 : i32
    %c0_i32_0 = arith.constant 0 : i32
    %c0_i32_1 = arith.constant 0 : i32
    return %c0_i32, %c0_i32_0 : i32, i32
  }
  func.func @transform_4(%arg0: i32) -> (i32, i32) {
    %c0_i32 = arith.constant 0 : i32
    %c0_i32_0 = arith.constant 0 : i32
    %c0_i32_1 = arith.constant 0 : i32
    return %c0_i32, %c0_i32_0 : i32, i32
  }
  func.func @transform_5(%arg0: i32) -> (i32, i32) {
    %c0_i32 = arith.constant 0 : i32
    %c0_i32_0 = arith.constant 0 : i32
    %c0_i32_1 = arith.constant 0 : i32
    return %c0_i32, %c0_i32_0 : i32, i32
  }
  func.func @transform_6(%arg0: i32) -> (i32, i32, i32) {
    %c0_i32 = arith.constant 0 : i32
    %c0_i32_0 = arith.constant 0 : i32
    %c0_i32_1 = arith.constant 0 : i32
    return %arg0, %c0_i32, %c0_i32_0 : i32, i32, i32
  }
}

</mosaic_0001>

<llo_original>
// kernel: tpu_custom_call.1
$region0: #{tpu_custom_call.1}
  #allocation0 [shape = 'u32[]', space=smem, size = 0x4, offset = 0x4, fixed_abs, tag = 'smem constant byte address 0x4 - core index']
  #allocation1 [shape = 'u32[144,128]{1,0:T(1,128)}', space=vmem, size = 0x12000, scoped, tag = 'internal scratch']
  %s0 = inlined_call_operand.vmem [shape: f32[2,64,32], index: 0, kind: input, shape index: {}]
  %s1 = inlined_call_operand.vmem [shape: f32[32,32], index: 1, kind: input, shape index: {}]
  %s2 = inlined_call_operand.vmem [shape: f32[32,96], index: 2, kind: input, shape index: {}]
  %s3 = inlined_call_operand.vmem [shape: f32[1,96], index: 3, kind: input, shape index: {}]
  %s4 = inlined_call_operand.vmem [shape: f32[32,32], index: 4, kind: input, shape index: {}]
  %s5 = inlined_call_operand.vmem [shape: f32[1,32], index: 5, kind: input, shape index: {}]
  %s6 = inlined_call_operand.vmem [shape: f32[2,64,32], index: 6, kind: output, shape index: {}]
  %s7 = sld [smem:[#allocation0]]
  $region57: #{tpu_custom_call.1} parent=0
    _
  %s9 = ssub.s32 1, %s7
  %s10 = scalar_select 0, %s9, %s7
  loop: start=0, step=1, limit=4
  $region2: #{tpu_custom_call.1} parent=0 // loop_pre_header
    _
  $region3: #{tpu_custom_call.1} parent=0 // loop_header
    %s12 = sphi 0, %s16
    %p13 = scmp.ge.s32.totalorder %s12, 4
    %s22 = sphi 0, %s24
    %s25 = sphi 0, %s22
    %s26 = sphi 0, %s25
    %s42 = sphi 0, %s26
    %s46 = sphi 0, %s46
    %s48 = sphi 0, %s46
    %s49 = sphi 0, %s48
    %s63 = sphi 0, %s49
    %s67 = sphi 0, %s67
    %s69 = sphi 0, %s67
    %s70 = sphi 0, %s69
    %s84 = sphi 0, %s70
    %s88 = sphi 0, %s88
    %s90 = sphi 0, %s88
    %s91 = sphi 0, %s90
    %s105 = sphi 0, %s91
    %s109 = sphi 0, %s109
    %s111 = sphi 0, %s109
    %s112 = sphi 0, %s111
    %s126 = sphi 0, %s112
    %s130 = sphi 0, %s130
    %s132 = sphi 0, %s130
    %s133 = sphi 0, %s132
    %s147 = sphi 0, %s133
    %s153 = sphi 0, %s155
    %s156 = sphi 0, %s153
    %s157 = sphi 0, %s156
    %s173 = sphi 0, %s157
  $region4: #{tpu_custom_call.1} parent=0 // loop_header_branch
    %15 = sbr.rel (%p13) target = $region8
  $region5: #{tpu_custom_call.1} parent=0 // loop_body
    %s17 = ssub.s32 %s12, 1
    %s18 = ssub.s32 %s12, 2
    %s19 = sadd.s32 %s12, 1
    %s20 = ssub.s32 %s12, %s19
    %p21 = scmp.eq.s32.totalorder %s20, 0
    %s23 = sadd.s32 %s22, 1
    %s24 = scalar_select %p21, %s22, %s23
    %p27 = pneg %p21
    %p28 = scmp.eq.s32.totalorder %s12, 1
    %p29 = por %p27, %p28
    %p30 = scmp.ne.s32.totalorder %s22, %s25
    %p31 = scmp.eq.s32.totalorder %s12, 0
    %p32 = por %p30, %p31
    %p33 = scmp.ne.s32.totalorder %s22, %s25
    %p34 = scmp.eq.s32.totalorder %s17, 1
    %p35 = por %p33, %p34
    %p36 = scmp.ne.s32.totalorder %s25, %s26
    %p37 = scmp.eq.s32.totalorder %s17, 0
    %p38 = por %p36, %p37
    %p39 = scmp.ne.s32.totalorder %s25, %s26
    %p40 = scmp.eq.s32.totalorder %s18, 1
    %p41 = por %p39, %p40
    %p43 = scmp.ne.s32.totalorder %s26, %s42
    %p44 = scmp.eq.s32.totalorder %s18, 0
    %p45 = por %p43, %p44
    %s47 = sadd.s32 %s46, 1
    %p50 = scmp.eq.s32.totalorder %s12, 1
    %p51 = scmp.ne.s32.totalorder %s46, %s48
    %p52 = scmp.eq.s32.totalorder %s12, 0
    %p53 = por %p51, %p52
    %p54 = scmp.ne.s32.totalorder %s46, %s48
    %p55 = scmp.eq.s32.totalorder %s17, 1
    %p56 = por %p54, %p55
    %p57 = scmp.ne.s32.totalorder %s48, %s49
    %p58 = scmp.eq.s32.totalorder %s17, 0
    %p59 = por %p57, %p58
    %p60 = scmp.ne.s32.totalorder %s48, %s49
    %p61 = scmp.eq.s32.totalorder %s18, 1
    %p62 = por %p60, %p61
    %p64 = scmp.ne.s32.totalorder %s49, %s63
    %p65 = scmp.eq.s32.totalorder %s18, 0
    %p66 = por %p64, %p65
    %s68 = sadd.s32 %s67, 1
    %p71 = scmp.eq.s32.totalorder %s12, 1
    %p72 = scmp.ne.s32.totalorder %s67, %s69
    %p73 = scmp.eq.s32.totalorder %s12, 0
    %p74 = por %p72, %p73
    %p75 = scmp.ne.s32.totalorder %s67, %s69
    %p76 = scmp.eq.s32.totalorder %s17, 1
    %p77 = por %p75, %p76
    %p78 = scmp.ne.s32.totalorder %s69, %s70
    %p79 = scmp.eq.s32.totalorder %s17, 0
    %p80 = por %p78, %p79
    %p81 = scmp.ne.s32.totalorder %s69, %s70
    %p82 = scmp.eq.s32.totalorder %s18, 1
    %p83 = por %p81, %p82
    %p85 = scmp.ne.s32.totalorder %s70, %s84
    %p86 = scmp.eq.s32.totalorder %s18, 0
    %p87 = por %p85, %p86
    %s89 = sadd.s32 %s88, 1
    %p92 = scmp.eq.s32.totalorder %s12, 1
    %p93 = scmp.ne.s32.totalorder %s88, %s90
    %p94 = scmp.eq.s32.totalorder %s12, 0
    %p95 = por %p93, %p94
    %p96 = scmp.ne.s32.totalorder %s88, %s90
    %p97 = scmp.eq.s32.totalorder %s17, 1
    %p98 = por %p96, %p97
    %p99 = scmp.ne.s32.totalorder %s90, %s91
    %p100 = scmp.eq.s32.totalorder %s17, 0
    %p101 = por %p99, %p100
    %p102 = scmp.ne.s32.totalorder %s90, %s91
    %p103 = scmp.eq.s32.totalorder %s18, 1
    %p104 = por %p102, %p103
    %p106 = scmp.ne.s32.totalorder %s91, %s105
    %p107 = scmp.eq.s32.totalorder %s18, 0
    %p108 = por %p106, %p107
    %s110 = sadd.s32 %s109, 1
    %p113 = scmp.eq.s32.totalorder %s12, 1
    %p114 = scmp.ne.s32.totalorder %s109, %s111
    %p115 = scmp.eq.s32.totalorder %s12, 0
    %p116 = por %p114, %p115
    %p117 = scmp.ne.s32.totalorder %s109, %s111
    %p118 = scmp.eq.s32.totalorder %s17, 1
    %p119 = por %p117, %p118
    %p120 = scmp.ne.s32.totalorder %s111, %s112
    %p121 = scmp.eq.s32.totalorder %s17, 0
    %p122 = por %p120, %p121
    %p123 = scmp.ne.s32.totalorder %s111, %s112
    %p124 = scmp.eq.s32.totalorder %s18, 1
    %p125 = por %p123, %p124
    %p127 = scmp.ne.s32.totalorder %s112, %s126
    %p128 = scmp.eq.s32.totalorder %s18, 0
    %p129 = por %p127, %p128
    %s131 = sadd.s32 %s130, 1
    %p134 = scmp.eq.s32.totalorder %s12, 1
    %p135 = scmp.ne.s32.totalorder %s130, %s132
    %p136 = scmp.eq.s32.totalorder %s12, 0
    %p137 = por %p135, %p136
    %p138 = scmp.ne.s32.totalorder %s130, %s132
    %p139 = scmp.eq.s32.totalorder %s17, 1
    %p140 = por %p138, %p139
    %p141 = scmp.ne.s32.totalorder %s132, %s133
    %p142 = scmp.eq.s32.totalorder %s17, 0
    %p143 = por %p141, %p142
    %p144 = scmp.ne.s32.totalorder %s132, %s133
    %p145 = scmp.eq.s32.totalorder %s18, 1
    %p146 = por %p144, %p145
    %p148 = scmp.ne.s32.totalorder %s133, %s147
    %p149 = scmp.eq.s32.totalorder %s18, 0
    %p150 = por %p148, %p149
    %s151 = ssub.s32 %s12, %s19
    %p152 = scmp.eq.s32.totalorder %s151, 0
    %s154 = sadd.s32 %s153, 1
    %s155 = scalar_select %p152, %s153, %s154
    %p158 = pneg %p152
    %p159 = scmp.eq.s32.totalorder %s12, 1
    %p160 = por %p158, %p159
    %p161 = scmp.ne.s32.totalorder %s153, %s156
    %p162 = scmp.eq.s32.totalorder %s12, 0
    %p163 = por %p161, %p162
    %p164 = scmp.ne.s32.totalorder %s153, %s156
    %p165 = scmp.eq.s32.totalorder %s17, 1
    %p166 = por %p164, %p165
    %p167 = scmp.ne.s32.totalorder %s156, %s157
    %p168 = scmp.eq.s32.totalorder %s17, 0
    %p169 = por %p167, %p168
    %p170 = scmp.ne.s32.totalorder %s156, %s157
    %p171 = scmp.eq.s32.totalorder %s18, 1
    %p172 = por %p170, %p171
    %p174 = scmp.ne.s32.totalorder %s157, %s173
    %p175 = scmp.eq.s32.totalorder %s18, 0
    %p176 = por %p174, %p175
    %p177 = scmp.le.s32.totalorder 1, %s12
    %p178 = scmp.lt.s32.totalorder %s12, 3
    %p179 = pnand %p177, %p178
    %p180 = pneg %p179
    // Predicated region
    $region9: #{tpu_custom_call.1} parent=5 // pred_check
      _
    $region10: #{tpu_custom_call.1} parent=5 // pred_check_branch
      %182 = sbr.rel (%p179) target = $region12
    $region11: #{tpu_custom_call.1} parent=5 // pred_region
      %s183 = ssub.s32 %s12, 1
      // Predicated region
      $region13: #{tpu_custom_call.1} parent=11 // pred_check
        %p184 = pneg %p59
      $region14: #{tpu_custom_call.1} parent=11 // pred_check_branch
        %186 = sbr.rel (%p184) target = $region16
      $region15: #{tpu_custom_call.1} parent=11 // pred_region
        _
      $region16: #{tpu_custom_call.1} parent=11 // pred_fallthru
        _
      // Predicated region
      $region17: #{tpu_custom_call.1} parent=11 // pred_check
        %p187 = pneg %p80
      $region18: #{tpu_custom_call.1} parent=11 // pred_check_branch
        %189 = sbr.rel (%p187) target = $region20
      $region19: #{tpu_custom_call.1} parent=11 // pred_region
        _
      $region20: #{tpu_custom_call.1} parent=11 // pred_fallthru
        _
      // Predicated region
      $region21: #{tpu_custom_call.1} parent=11 // pred_check
        %p190 = pneg %p101
      $region22: #{tpu_custom_call.1} parent=11 // pred_check_branch
        %192 = sbr.rel (%p190) target = $region24
      $region23: #{tpu_custom_call.1} parent=11 // pred_region
        _
      $region24: #{tpu_custom_call.1} parent=11 // pred_fallthru
        _
      // Predicated region
      $region25: #{tpu_custom_call.1} parent=11 // pred_check
        %p193 = pneg %p122
      $region26: #{tpu_custom_call.1} parent=11 // pred_check_branch
        %195 = sbr.rel (%p193) target = $region28
      $region27: #{tpu_custom_call.1} parent=11 // pred_region
        _
      $region28: #{tpu_custom_call.1} parent=11 // pred_fallthru
        _
      // Predicated region
      $region29: #{tpu_custom_call.1} parent=11 // pred_check
        %p196 = pneg %p143
      $region30: #{tpu_custom_call.1} parent=11 // pred_check_branch
        %198 = sbr.rel (%p196) target = $region32
      $region31: #{tpu_custom_call.1} parent=11 // pred_region
        _
      $region32: #{tpu_custom_call.1} parent=11 // pred_fallthru
        _
    $region12: #{tpu_custom_call.1} parent=5 // pred_fallthru
      _
    %p199 = scmp.lt.s32.totalorder %s12, 2
    // Predicated region
    $region33: #{tpu_custom_call.1} parent=5 // pred_check
      %p200 = pneg %p199
    $region34: #{tpu_custom_call.1} parent=5 // pred_check_branch
      %202 = sbr.rel (%p200) target = $region36
    $region35: #{tpu_custom_call.1} parent=5 // pred_region
      // Predicated region
      $region37: #{tpu_custom_call.1} parent=35 // pred_check
        %p203 = pneg %p32
      $region38: #{tpu_custom_call.1} parent=35 // pred_check_branch
        %205 = sbr.rel (%p203) target = $region40
      $region39: #{tpu_custom_call.1} parent=35 // pred_region
        %p206 = scmp.lt.s32.totalorder %s12, 1
        %s207 = scalar_select %p206, %s12, 1
        %s208 = smul.addr %s207, 8
        %s209 = smul.addr %s208, 8
        %s210 = scalar_lea.vmem %s0, %s209
      $region40: #{tpu_custom_call.1} parent=35 // pred_fallthru
        _
    $region36: #{tpu_custom_call.1} parent=5 // pred_fallthru
      _
    %p211 = scmp.le.s32.totalorder 1, %s12
    %p212 = scmp.lt.s32.totalorder %s12, 3
    %p213 = pnand %p211, %p212
    %p214 = pneg %p213
    // Predicated region
    $region41: #{tpu_custom_call.1} parent=5 // pred_check
      _
    $region42: #{tpu_custom_call.1} parent=5 // pred_check_branch
      %216 = sbr.rel (%p213) target = $region44
    $region43: #{tpu_custom_call.1} parent=5 // pred_region
      %s217 = ssub.s32 %s12, 1
      %p218 = scmp.lt.s32.totalorder %s17, 1
      %s219 = scalar_select %p218, %s17, 1
      %s220 = smul.addr %s219, 8
      %s221 = smul.addr %s220, 8
      %s222 = scalar_lea.vmem %s0, %s221
      %p223 = pneg %p38
      %p224 = pneg %p35
      %p225 = pneg %p59
      %p226 = pneg %p56
      %p227 = pneg %p80
      %p228 = pneg %p77
      %p229 = pneg %p101
      %p230 = pneg %p98
      %p231 = pneg %p122
      %p232 = pneg %p119
      %p233 = pneg %p143
      %p234 = pneg %p140
      %p235 = pneg %p169
      %p236 = pneg %p166
      %p237 = scmp.lt.s32.totalorder %s17, 1
      %s238 = scalar_select %p237, %s17, 1
      %s239 = smul.addr %s238, 8
      %s240 = smul.addr %s239, 8
      %s241 = scalar_lea.vmem %s6, %s240
      %p242 = scmp.lt.s32.totalorder %s17, 1
      %s243 = scalar_select %p242, %s17, 1
      %s244 = smul.addr %s243, 8
      %s245 = smul.addr %s244, 8
      %s246 = scalar_lea.vmem %s0, %s245
      %p247 = scmp.lt.s32.totalorder %s17, 1
      %s248 = scalar_select %p247, %s17, 1
      %s249 = smul.addr %s248, 8
      %s250 = smul.addr %s249, 8
      %s251 = scalar_lea.vmem %s6, %s250
      %v252 = vld [vmem:[%s246] sm:$0xff]
      %v253 = vld [vmem:[%s246 + $0x8] sm:$0xff]
      %v254 = vld [vmem:[%s246 + $0x10] sm:$0xff]
      %v255 = vld [vmem:[%s246 + $0x18] sm:$0xff]
      %v256 = vld [vmem:[%s246 + $0x20] sm:$0xff]
      %v257 = vld [vmem:[%s246 + $0x28] sm:$0xff]
      %v258 = vld [vmem:[%s246 + $0x30] sm:$0xff]
      %v259 = vld [vmem:[%s246 + $0x38] sm:$0xff]
      %vm260 = vcmask 261120
      %v261 = vsel %vm260, %v252, 0.0
      %v262 = vsel %vm260, %v253, 0.0
      %v263 = vadd.f32 %v261, %v262
      %v264 = vsel %vm260, %v254, 0.0
      %v265 = vadd.f32 %v263, %v264
      %v266 = vsel %vm260, %v255, 0.0
      %v267 = vadd.f32 %v265, %v266
      %v268 = vsel %vm260, %v256, 0.0
      %v269 = vadd.f32 %v267, %v268
      %v270 = vsel %vm260, %v257, 0.0
      %v271 = vadd.f32 %v269, %v270
      %v272 = vsel %vm260, %v258, 0.0
      %v273 = vadd.f32 %v271, %v272
      %v274 = vsel %vm260, %v259, 0.0
      %v275 = vadd.f32 %v273, %v274
      %v276 = vrot.slane %v275, 4
      %v277 = vadd.f32 %v275, %v276
      %v278 = vrot.slane %v277, 2
      %v279 = vadd.f32 %v277, %v278
      %v280 = vrot.slane %v279, 1
      %v281 = vadd.f32 %v279, %v280
      %v282 = vmul.f32 %v252, %v252
      %v283 = vmul.f32 %v253, %v253
      %v284 = vmul.f32 %v254, %v254
      %v285 = vmul.f32 %v255, %v255
      %v286 = vmul.f32 %v256, %v256
      %v287 = vmul.f32 %v257, %v257
      %v288 = vmul.f32 %v258, %v258
      %v289 = vmul.f32 %v259, %v259
      %v290 = vsel %vm260, %v282, 0.0
      %v291 = vsel %vm260, %v283, 0.0
      %v292 = vadd.f32 %v290, %v291
      %v293 = vsel %vm260, %v284, 0.0
      %v294 = vadd.f32 %v292, %v293
      %v295 = vsel %vm260, %v285, 0.0
      %v296 = vadd.f32 %v294, %v295
      %v297 = vsel %vm260, %v286, 0.0
      %v298 = vadd.f32 %v296, %v297
      %v299 = vsel %vm260, %v287, 0.0
      %v300 = vadd.f32 %v298, %v299
      %v301 = vsel %vm260, %v288, 0.0
      %v302 = vadd.f32 %v300, %v301
      %v303 = vsel %vm260, %v289, 0.0
      %v304 = vadd.f32 %v302, %v303
      %v305 = vrot.slane %v304, 4
      %v306 = vadd.f32 %v304, %v305
      %v307 = vrot.slane %v306, 2
      %v308 = vadd.f32 %v306, %v307
      %v309 = vrot.slane %v308, 1
      %v310 = vadd.f32 %v308, %v309
      %v311 = vld [vmem:[%s1] sm:$0xff]
      %v312 = vld [vmem:[%s1 + $0x8] sm:$0xff]
      %v313 = vld [vmem:[%s1 + $0x10] sm:$0xff]
      %v314 = vld [vmem:[%s1 + $0x18] sm:$0xff]
      %v316 = vsel %vm260, %v281, 0
      %318 = vmatprep.subr.mxu0 0.0
      %319 = vmatpush1.msra.mxu0 0.0
      %320 = vmatprep.subr.mxu0 0.0
      %321 = vmatpush1.msra.mxu0 0.0
      %322 = vmatprep.subr.mxu0 0.0
      %323 = vmatpush1.msra.mxu0 0.0
      %324 = vmatprep.subr.mxu0 0.0
      %325 = vmatpush1.msra.mxu0 0.0
      %326 = vmatprep.subr.mxu0 0.0
      %327 = vmatpush1.msra.mxu0 0.0
      %328 = vmatprep.subr.mxu0 0.0
      %329 = vmatpush1.msra.mxu0 0.0
      %330 = vmatprep.subr.mxu0 0.0
      %331 = vmatpush1.msra.mxu0 0.0
      %332 = vmatprep.subr.mxu0 0.0
      %333 = vmatpush1.msra.mxu0 0.0
      %334 = vmatprep.subr.mxu0 0.0
      %335 = vmatpush1.msra.mxu0 0.0
      %336 = vmatprep.subr.mxu0 0.0
      %337 = vmatpush1.msra.mxu0 0.0
      %338 = vmatprep.subr.mxu0 0.0
      %339 = vmatpush1.msra.mxu0 0.0
      %340 = vmatprep.subr.mxu0 0.0
      %341 = vmatpush1.msra.mxu0 0.0
      %342 = vmatprep.subr.mxu0 0.0
      %v343 = vand.u32 %v314, 4294901760
      %344 = vmatpush1.msra.mxu0 %v343
      %345 = vmatprep.subr.mxu0 0.0
      %v346 = vand.u32 %v313, 4294901760
      %347 = vmatpush1.msra.mxu0 %v346
      %348 = vmatprep.subr.mxu0 0.0
      %v349 = vand.u32 %v312, 4294901760
      %350 = vmatpush1.msra.mxu0 %v349
      %351 = vmatprep.subr.mxu0 0.0
      %v352 = vand.u32 %v311, 4294901760
      %353 = vmatpush1.msra.mxu0 %v352
      %354 = vmatprep.subr.mxu0 0.0
      %355 = vmatpush2.msra.mxu0 0.0
      %356 = vmatprep.subr.mxu0 0.0
      %357 = vmatpush2.msra.mxu0 0.0
      %358 = vmatprep.subr.mxu0 0.0
      %359 = vmatpush2.msra.mxu0 0.0
      %360 = vmatprep.subr.mxu0 0.0
      %361 = vmatpush2.msra.mxu0 0.0
      %362 = vmatprep.subr.mxu0 0.0
      %363 = vmatpush2.msra.mxu0 0.0
      %364 = vmatprep.subr.mxu0 0.0
      %365 = vmatpush2.msra.mxu0 0.0
      %366 = vmatprep.subr.mxu0 0.0
      %367 = vmatpush2.msra.mxu0 0.0
      %368 = vmatprep.subr.mxu0 0.0
      %369 = vmatpush2.msra.mxu0 0.0
      %370 = vmatprep.subr.mxu0 0.0
      %371 = vmatpush2.msra.mxu0 0.0
      %372 = vmatprep.subr.mxu0 0.0
      %373 = vmatpush2.msra.mxu0 0.0
      %374 = vmatprep.subr.mxu0 0.0
      %375 = vmatpush2.msra.mxu0 0.0
      %376 = vmatprep.subr.mxu0 0.0
      %377 = vmatpush2.msra.mxu0 0.0
      %378 = vmatprep.subr.mxu0 0.0
      %379 = vmatpush2.msra.mxu0 0.0
      %380 = vmatprep.subr.mxu0 0.0
      %381 = vmatpush2.msra.mxu0 0.0
      %382 = vmatprep.subr.mxu0 0.0
      %383 = vmatpush2.msra.mxu0 0.0
      %384 = vmatprep.subr.mxu0 0.0
      %385 = vmatpush2.msra.mxu0 0.0
      %386 = vmatprep.mubr.f32.mxu0 0.0
      %v387 = vand.u32 %v316, 4294901760
      %v388 = vsub.f32 %v316, %v387
      %v389 = vand.u32 %v388, 4294901760
      %v390 = vsub.f32 %v388, %v389
      %v391 = vand.u32 %v390, 4294901760
      %392 = vmatmul.mubr.f32.gmra.mxu0 %v391
      %v393 = vpop.f32.mrf.mxu0
      %v394 = vadd.f32 0.0, %v393
      %v395 = vpop.f32.mrf.mxu0
      %396 = vdwg.mxu0
      %397 = vmatprep.subr.mxu0 0.0
      %398 = vmatpush1.msra.mxu0 0.0
      %399 = vmatprep.subr.mxu0 0.0
      %400 = vmatpush1.msra.mxu0 0.0
      %401 = vmatprep.subr.mxu0 0.0
      %402 = vmatpush1.msra.mxu0 0.0
      %403 = vmatprep.subr.mxu0 0.0
      %404 = vmatpush1.msra.mxu0 0.0
      %405 = vmatprep.subr.mxu0 0.0
      %406 = vmatpush1.msra.mxu0 0.0
      %407 = vmatprep.subr.mxu0 0.0
      %408 = vmatpush1.msra.mxu0 0.0
      %409 = vmatprep.subr.mxu0 0.0
      %410 = vmatpush1.msra.mxu0 0.0
      %411 = vmatprep.subr.mxu0 0.0
      %412 = vmatpush1.msra.mxu0 0.0
      %413 = vmatprep.subr.mxu0 0.0
      %414 = vmatpush1.msra.mxu0 0.0
      %415 = vmatprep.subr.mxu0 0.0
      %416 = vmatpush1.msra.mxu0 0.0
      %417 = vmatprep.subr.mxu0 0.0
      %418 = vmatpush1.msra.mxu0 0.0
      %419 = vmatprep.subr.mxu0 0.0
      %420 = vmatpush1.msra.mxu0 0.0
      %421 = vmatprep.subr.mxu0 0.0
      %v422 = vand.u32 %v314, 4294901760
      %v423 = vsub.f32 %v314, %v422
      %v424 = vand.u32 %v423, 4294901760
      %v425 = vsub.f32 %v423, %v424
      %v426 = vand.u32 %v425, 4294901760
      %427 = vmatpush1.msra.mxu0 %v426
      %428 = vmatprep.subr.mxu0 0.0
      %v429 = vand.u32 %v313, 4294901760
      %v430 = vsub.f32 %v313, %v429
      %v431 = vand.u32 %v430, 4294901760
      %v432 = vsub.f32 %v430, %v431
      %v433 = vand.u32 %v432, 4294901760
      %434 = vmatpush1.msra.mxu0 %v433
      %435 = vmatprep.subr.mxu0 0.0
      %v436 = vand.u32 %v312, 4294901760
      %v437 = vsub.f32 %v312, %v436
      %v438 = vand.u32 %v437, 4294901760
      %v439 = vsub.f32 %v437, %v438
      %v440 = vand.u32 %v439, 4294901760
      %441 = vmatpush1.msra.mxu0 %v440
      %442 = vmatprep.subr.mxu0 0.0
      %v443 = vand.u32 %v311, 4294901760
      %v444 = vsub.f32 %v311, %v443
      %v445 = vand.u32 %v444, 4294901760
      %v446 = vsub.f32 %v444, %v445
      %v447 = vand.u32 %v446, 4294901760
      %448 = vmatpush1.msra.mxu0 %v447
      %449 = vmatprep.subr.mxu0 0.0
      %450 = vmatpush2.msra.mxu0 0.0
      %451 = vmatprep.subr.mxu0 0.0
      %452 = vmatpush2.msra.mxu0 0.0
      %453 = vmatprep.subr.mxu0 0.0
      %454 = vmatpush2.msra.mxu0 0.0
      %455 = vmatprep.subr.mxu0 0.0
      %456 = vmatpush2.msra.mxu0 0.0
      %457 = vmatprep.subr.mxu0 0.0
      %458 = vmatpush2.msra.mxu0 0.0
      %459 = vmatprep.subr.mxu0 0.0
      %460 = vmatpush2.msra.mxu0 0.0
      %461 = vmatprep.subr.mxu0 0.0
      %462 = vmatpush2.msra.mxu0 0.0
      %463 = vmatprep.subr.mxu0 0.0
      %464 = vmatpush2.msra.mxu0 0.0
      %465 = vmatprep.subr.mxu0 0.0
      %466 = vmatpush2.msra.mxu0 0.0
      %467 = vmatprep.subr.mxu0 0.0
      %468 = vmatpush2.msra.mxu0 0.0
      %469 = vmatprep.subr.mxu0 0.0
      %470 = vmatpush2.msra.mxu0 0.0
      %471 = vmatprep.subr.mxu0 0.0
      %472 = vmatpush2.msra.mxu0 0.0
      %473 = vmatprep.subr.mxu0 0.0
      %474 = vmatpush2.msra.mxu0 0.0
      %475 = vmatprep.subr.mxu0 0.0
      %476 = vmatpush2.msra.mxu0 0.0
      %477 = vmatprep.subr.mxu0 0.0
      %478 = vmatpush2.msra.mxu0 0.0
      %479 = vmatprep.subr.mxu0 0.0
      %480 = vmatpush2.msra.mxu0 0.0
      %481 = vmatprep.mubr.f32.mxu0 0.0
      %v482 = vand.u32 %v316, 4294901760
      %483 = vmatmul.mubr.f32.gmra.mxu0 %v482
      %v484 = vpop.f32.mrf.mxu0
      %v485 = vadd.f32 %v394, %v484
      %v486 = vpop.f32.mrf.mxu0
      %487 = vdwg.mxu0
      %488 = vmatprep.subr.mxu0 0.0
      %489 = vmatpush1.msra.mxu0 0.0
      %490 = vmatprep.subr.mxu0 0.0
      %491 = vmatpush1.msra.mxu0 0.0
      %492 = vmatprep.subr.mxu0 0.0
      %493 = vmatpush1.msra.mxu0 0.0
      %494 = vmatprep.subr.mxu0 0.0
      %495 = vmatpush1.msra.mxu0 0.0
      %496 = vmatprep.subr.mxu0 0.0
      %497 = vmatpush1.msra.mxu0 0.0
      %498 = vmatprep.subr.mxu0 0.0
      %499 = vmatpush1.msra.mxu0 0.0
      %500 = vmatprep.subr.mxu0 0.0
      %501 = vmatpush1.msra.mxu0 0.0
      %502 = vmatprep.subr.mxu0 0.0
      %503 = vmatpush1.msra.mxu0 0.0
      %504 = vmatprep.subr.mxu0 0.0
      %505 = vmatpush1.msra.mxu0 0.0
      %506 = vmatprep.subr.mxu0 0.0
      %507 = vmatpush1.msra.mxu0 0.0
      %508 = vmatprep.subr.mxu0 0.0
      %509 = vmatpush1.msra.mxu0 0.0
      %510 = vmatprep.subr.mxu0 0.0
      %511 = vmatpush1.msra.mxu0 0.0
      %512 = vmatprep.subr.mxu0 0.0
      %v513 = vand.u32 %v314, 4294901760
      %v514 = vsub.f32 %v314, %v513
      %515 = vmatpush1.msra.mxu0 %v514
      %516 = vmatprep.subr.mxu0 0.0
      %v517 = vand.u32 %v313, 4294901760
      %v518 = vsub.f32 %v313, %v517
      %519 = vmatpush1.msra.mxu0 %v518
      %520 = vmatprep.subr.mxu0 0.0
      %v521 = vand.u32 %v312, 4294901760
      %v522 = vsub.f32 %v312, %v521
      %523 = vmatpush1.msra.mxu0 %v522
      %524 = vmatprep.subr.mxu0 0.0
      %v525 = vand.u32 %v311, 4294901760
      %v526 = vsub.f32 %v311, %v525
      %527 = vmatpush1.msra.mxu0 %v526
      %528 = vmatprep.subr.mxu0 0.0
      %529 = vmatpush2.msra.mxu0 0.0
      %530 = vmatprep.subr.mxu0 0.0
      %531 = vmatpush2.msra.mxu0 0.0
      %532 = vmatprep.subr.mxu0 0.0
      %533 = vmatpush2.msra.mxu0 0.0
      %534 = vmatprep.subr.mxu0 0.0
      %535 = vmatpush2.msra.mxu0 0.0
      %536 = vmatprep.subr.mxu0 0.0
      %537 = vmatpush2.msra.mxu0 0.0
      %538 = vmatprep.subr.mxu0 0.0
      %539 = vmatpush2.msra.mxu0 0.0
      %540 = vmatprep.subr.mxu0 0.0
      %541 = vmatpush2.msra.mxu0 0.0
      %542 = vmatprep.subr.mxu0 0.0
      %543 = vmatpush2.msra.mxu0 0.0
      %544 = vmatprep.subr.mxu0 0.0
      %545 = vmatpush2.msra.mxu0 0.0
      %546 = vmatprep.subr.mxu0 0.0
      %547 = vmatpush2.msra.mxu0 0.0
      %548 = vmatprep.subr.mxu0 0.0
      %549 = vmatpush2.msra.mxu0 0.0
      %550 = vmatprep.subr.mxu0 0.0
      %551 = vmatpush2.msra.mxu0 0.0
      %552 = vmatprep.subr.mxu0 0.0
      %553 = vmatpush2.msra.mxu0 0.0
      %554 = vmatprep.subr.mxu0 0.0
      %555 = vmatpush2.msra.mxu0 0.0
      %556 = vmatprep.subr.mxu0 0.0
      %557 = vmatpush2.msra.mxu0 0.0
      %558 = vmatprep.subr.mxu0 0.0
      %559 = vmatpush2.msra.mxu0 0.0
      %560 = vmatprep.mubr.f32.mxu0 0.0
      %v561 = vand.u32 %v316, 4294901760
      %v562 = vsub.f32 %v316, %v561
      %563 = vmatmul.mubr.f32.gmra.mxu0 %v562
      %v564 = vpop.f32.mrf.mxu0
      %v565 = vadd.f32 %v485, %v564
      %v566 = vpop.f32.mrf.mxu0
      %567 = vdwg.mxu0
      %568 = vmatprep.subr.mxu0 0.0
      %569 = vmatpush1.msra.mxu0 0.0
      %570 = vmatprep.subr.mxu0 0.0
      %571 = vmatpush1.msra.mxu0 0.0
      %572 = vmatprep.subr.mxu0 0.0
      %573 = vmatpush1.msra.mxu0 0.0
      %574 = vmatprep.subr.mxu0 0.0
      %575 = vmatpush1.msra.mxu0 0.0
      %576 = vmatprep.subr.mxu0 0.0
      %577 = vmatpush1.msra.mxu0 0.0
      %578 = vmatprep.subr.mxu0 0.0
      %579 = vmatpush1.msra.mxu0 0.0
      %580 = vmatprep.subr.mxu0 0.0
      %581 = vmatpush1.msra.mxu0 0.0
      %582 = vmatprep.subr.mxu0 0.0
      %583 = vmatpush1.msra.mxu0 0.0
      %584 = vmatprep.subr.mxu0 0.0
      %585 = vmatpush1.msra.mxu0 0.0
      %586 = vmatprep.subr.mxu0 0.0
      %587 = vmatpush1.msra.mxu0 0.0
      %588 = vmatprep.subr.mxu0 0.0
      %589 = vmatpush1.msra.mxu0 0.0
      %590 = vmatprep.subr.mxu0 0.0
      %591 = vmatpush1.msra.mxu0 0.0
      %592 = vmatprep.subr.mxu0 0.0
      %v593 = vand.u32 %v314, 4294901760
      %594 = vmatpush1.msra.mxu0 %v593
      %595 = vmatprep.subr.mxu0 0.0
      %v596 = vand.u32 %v313, 4294901760
      %597 = vmatpush1.msra.mxu0 %v596
      %598 = vmatprep.subr.mxu0 0.0
      %v599 = vand.u32 %v312, 4294901760
      %600 = vmatpush1.msra.mxu0 %v599
      %601 = vmatprep.subr.mxu0 0.0
      %v602 = vand.u32 %v311, 4294901760
      %603 = vmatpush1.msra.mxu0 %v602
      %604 = vmatprep.subr.mxu0 0.0
      %605 = vmatpush2.msra.mxu0 0.0
      %606 = vmatprep.subr.mxu0 0.0
      %607 = vmatpush2.msra.mxu0 0.0
      %608 = vmatprep.subr.mxu0 0.0
      %609 = vmatpush2.msra.mxu0 0.0
      %610 = vmatprep.subr.mxu0 0.0
      %611 = vmatpush2.msra.mxu0 0.0
      %612 = vmatprep.subr.mxu0 0.0
      %613 = vmatpush2.msra.mxu0 0.0
      %614 = vmatprep.subr.mxu0 0.0
      %615 = vmatpush2.msra.mxu0 0.0
      %616 = vmatprep.subr.mxu0 0.0
      %617 = vmatpush2.msra.mxu0 0.0
      %618 = vmatprep.subr.mxu0 0.0
      %619 = vmatpush2.msra.mxu0 0.0
      %620 = vmatprep.subr.mxu0 0.0
      %621 = vmatpush2.msra.mxu0 0.0
      %622 = vmatprep.subr.mxu0 0.0
      %623 = vmatpush2.msra.mxu0 0.0
      %624 = vmatprep.subr.mxu0 0.0
      %625 = vmatpush2.msra.mxu0 0.0
      %626 = vmatprep.subr.mxu0 0.0
      %627 = vmatpush2.msra.mxu0 0.0
      %628 = vmatprep.subr.mxu0 0.0
      %629 = vmatpush2.msra.mxu0 0.0
      %630 = vmatprep.subr.mxu0 0.0
      %631 = vmatpush2.msra.mxu0 0.0
      %632 = vmatprep.subr.mxu0 0.0
      %633 = vmatpush2.msra.mxu0 0.0
      %634 = vmatprep.subr.mxu0 0.0
      %635 = vmatpush2.msra.mxu0 0.0
      %636 = vmatprep.mubr.f32.mxu0 0.0
      %v637 = vand.u32 %v316, 4294901760
      %v638 = vsub.f32 %v316, %v637
      %v639 = vand.u32 %v638, 4294901760
      %640 = vmatmul.mubr.f32.gmra.mxu0 %v639
      %v641 = vpop.f32.mrf.mxu0
      %v642 = vadd.f32 %v565, %v641
      %v643 = vpop.f32.mrf.mxu0
      %644 = vdwg.mxu0
      %645 = vmatprep.subr.mxu0 0.0
      %646 = vmatpush1.msra.mxu0 0.0
      %647 = vmatprep.subr.mxu0 0.0
      %648 = vmatpush1.msra.mxu0 0.0
      %649 = vmatprep.subr.mxu0 0.0
      %650 = vmatpush1.msra.mxu0 0.0
      %651 = vmatprep.subr.mxu0 0.0
      %652 = vmatpush1.msra.mxu0 0.0
      %653 = vmatprep.subr.mxu0 0.0
      %654 = vmatpush1.msra.mxu0 0.0
      %655 = vmatprep.subr.mxu0 0.0
      %656 = vmatpush1.msra.mxu0 0.0
      %657 = vmatprep.subr.mxu0 0.0
      %658 = vmatpush1.msra.mxu0 0.0
      %659 = vmatprep.subr.mxu0 0.0
      %660 = vmatpush1.msra.mxu0 0.0
      %661 = vmatprep.subr.mxu0 0.0
      %662 = vmatpush1.msra.mxu0 0.0
      %663 = vmatprep.subr.mxu0 0.0
      %664 = vmatpush1.msra.mxu0 0.0
      %665 = vmatprep.subr.mxu0 0.0
      %666 = vmatpush1.msra.mxu0 0.0
      %667 = vmatprep.subr.mxu0 0.0
      %668 = vmatpush1.msra.mxu0 0.0
      %669 = vmatprep.subr.mxu0 0.0
      %v670 = vand.u32 %v314, 4294901760
      %v671 = vsub.f32 %v314, %v670
      %v672 = vand.u32 %v671, 4294901760
      %673 = vmatpush1.msra.mxu0 %v672
      %674 = vmatprep.subr.mxu0 0.0
      %v675 = vand.u32 %v313, 4294901760
      %v676 = vsub.f32 %v313, %v675
      %v677 = vand.u32 %v676, 4294901760
      %678 = vmatpush1.msra.mxu0 %v677
      %679 = vmatprep.subr.mxu0 0.0
      %v680 = vand.u32 %v312, 4294901760
      %v681 = vsub.f32 %v312, %v680
      %v682 = vand.u32 %v681, 4294901760
      %683 = vmatpush1.msra.mxu0 %v682
      %684 = vmatprep.subr.mxu0 0.0
      %v685 = vand.u32 %v311, 4294901760
      %v686 = vsub.f32 %v311, %v685
      %v687 = vand.u32 %v686, 4294901760
      %688 = vmatpush1.msra.mxu0 %v687
      %689 = vmatprep.subr.mxu0 0.0
      %690 = vmatpush2.msra.mxu0 0.0
      %691 = vmatprep.subr.mxu0 0.0
      %692 = vmatpush2.msra.mxu0 0.0
      %693 = vmatprep.subr.mxu0 0.0
      %694 = vmatpush2.msra.mxu0 0.0
      %695 = vmatprep.subr.mxu0 0.0
      %696 = vmatpush2.msra.mxu0 0.0
      %697 = vmatprep.subr.mxu0 0.0
      %698 = vmatpush2.msra.mxu0 0.0
      %699 = vmatprep.subr.mxu0 0.0
      %700 = vmatpush2.msra.mxu0 0.0
      %701 = vmatprep.subr.mxu0 0.0
      %702 = vmatpush2.msra.mxu0 0.0
      %703 = vmatprep.subr.mxu0 0.0
      %704 = vmatpush2.msra.mxu0 0.0
      %705 = vmatprep.subr.mxu0 0.0
      %706 = vmatpush2.msra.mxu0 0.0
      %707 = vmatprep.subr.mxu0 0.0
      %708 = vmatpush2.msra.mxu0 0.0
      %709 = vmatprep.subr.mxu0 0.0
      %710 = vmatpush2.msra.mxu0 0.0
      %711 = vmatprep.subr.mxu0 0.0
      %712 = vmatpush2.msra.mxu0 0.0
      %713 = vmatprep.subr.mxu0 0.0
      %714 = vmatpush2.msra.mxu0 0.0
      %715 = vmatprep.subr.mxu0 0.0
      %716 = vmatpush2.msra.mxu0 0.0
      %717 = vmatprep.subr.mxu0 0.0
      %718 = vmatpush2.msra.mxu0 0.0
      %719 = vmatprep.subr.mxu0 0.0
      %720 = vmatpush2.msra.mxu0 0.0
      %721 = vmatprep.mubr.f32.mxu0 0.0
      %v722 = vand.u32 %v316, 4294901760
      %723 = vmatmul.mubr.f32.gmra.mxu0 %v722
      %v724 = vpop.f32.mrf.mxu0
      %v725 = vadd.f32 %v642, %v724
      %v726 = vpop.f32.mrf.mxu0
      %727 = vdwg.mxu0
      %728 = vmatprep.subr.mxu0 0.0
      %729 = vmatpush1.msra.mxu0 0.0
      %730 = vmatprep.subr.mxu0 0.0
      %731 = vmatpush1.msra.mxu0 0.0
      %732 = vmatprep.subr.mxu0 0.0
      %733 = vmatpush1.msra.mxu0 0.0
      %734 = vmatprep.subr.mxu0 0.0
      %735 = vmatpush1.msra.mxu0 0.0
      %736 = vmatprep.subr.mxu0 0.0
      %737 = vmatpush1.msra.mxu0 0.0
      %738 = vmatprep.subr.mxu0 0.0
      %739 = vmatpush1.msra.mxu0 0.0
      %740 = vmatprep.subr.mxu0 0.0
      %741 = vmatpush1.msra.mxu0 0.0
      %742 = vmatprep.subr.mxu0 0.0
      %743 = vmatpush1.msra.mxu0 0.0
      %744 = vmatprep.subr.mxu0 0.0
      %745 = vmatpush1.msra.mxu0 0.0
      %746 = vmatprep.subr.mxu0 0.0
      %747 = vmatpush1.msra.mxu0 0.0
      %748 = vmatprep.subr.mxu0 0.0
      %749 = vmatpush1.msra.mxu0 0.0
      %750 = vmatprep.subr.mxu0 0.0
      %751 = vmatpush1.msra.mxu0 0.0
      %752 = vmatprep.subr.mxu0 0.0
      %v753 = vand.u32 %v314, 4294901760
      %754 = vmatpush1.msra.mxu0 %v753
      %755 = vmatprep.subr.mxu0 0.0
      %v756 = vand.u32 %v313, 4294901760
      %757 = vmatpush1.msra.mxu0 %v756
      %758 = vmatprep.subr.mxu0 0.0
      %v759 = vand.u32 %v312, 4294901760
      %760 = vmatpush1.msra.mxu0 %v759
      %761 = vmatprep.subr.mxu0 0.0
      %v762 = vand.u32 %v311, 4294901760
      %763 = vmatpush1.msra.mxu0 %v762
      %764 = vmatprep.subr.mxu0 0.0
      %765 = vmatpush2.msra.mxu0 0.0
      %766 = vmatprep.subr.mxu0 0.0
      %767 = vmatpush2.msra.mxu0 0.0
      %768 = vmatprep.subr.mxu0 0.0
      %769 = vmatpush2.msra.mxu0 0.0
      %770 = vmatprep.subr.mxu0 0.0
      %771 = vmatpush2.msra.mxu0 0.0
      %772 = vmatprep.subr.mxu0 0.0
      %773 = vmatpush2.msra.mxu0 0.0
      %774 = vmatprep.subr.mxu0 0.0
      %775 = vmatpush2.msra.mxu0 0.0
      %776 = vmatprep.subr.mxu0 0.0
      %777 = vmatpush2.msra.mxu0 0.0
      %778 = vmatprep.subr.mxu0 0.0
      %779 = vmatpush2.msra.mxu0 0.0
      %780 = vmatprep.subr.mxu0 0.0
      %781 = vmatpush2.msra.mxu0 0.0
      %782 = vmatprep.subr.mxu0 0.0
      %783 = vmatpush2.msra.mxu0 0.0
      %784 = vmatprep.subr.mxu0 0.0
      %785 = vmatpush2.msra.mxu0 0.0
      %786 = vmatprep.subr.mxu0 0.0
      %787 = vmatpush2.msra.mxu0 0.0
      %788 = vmatprep.subr.mxu0 0.0
      %789 = vmatpush2.msra.mxu0 0.0
      %790 = vmatprep.subr.mxu0 0.0
      %791 = vmatpush2.msra.mxu0 0.0
      %792 = vmatprep.subr.mxu0 0.0
      %793 = vmatpush2.msra.mxu0 0.0
      %794 = vmatprep.subr.mxu0 0.0
      %795 = vmatpush2.msra.mxu0 0.0
      %796 = vmatprep.mubr.f32.mxu0 0.0
      %v797 = vand.u32 %v316, 4294901760
      %798 = vmatmul.mubr.f32.gmra.mxu0 %v797
      %v799 = vpop.f32.mrf.mxu0
      %v800 = vadd.f32 %v725, %v799
      %v801 = vpop.f32.mrf.mxu0
      %802 = vdwg.mxu0
      %v804 = vsel %vm260, %v310, 0
      %806 = vmatprep.subr.mxu0 0.0
      %807 = vmatpush1.msra.mxu0 0.0
      %808 = vmatprep.subr.mxu0 0.0
      %809 = vmatpush1.msra.mxu0 0.0
      %810 = vmatprep.subr.mxu0 0.0
      %811 = vmatpush1.msra.mxu0 0.0
      %812 = vmatprep.subr.mxu0 0.0
      %813 = vmatpush1.msra.mxu0 0.0
      %814 = vmatprep.subr.mxu0 0.0
      %815 = vmatpush1.msra.mxu0 0.0
      %816 = vmatprep.subr.mxu0 0.0
      %817 = vmatpush1.msra.mxu0 0.0
      %818 = vmatprep.subr.mxu0 0.0
      %819 = vmatpush1.msra.mxu0 0.0
      %820 = vmatprep.subr.mxu0 0.0
      %821 = vmatpush1.msra.mxu0 0.0
      %822 = vmatprep.subr.mxu0 0.0
      %823 = vmatpush1.msra.mxu0 0.0
      %824 = vmatprep.subr.mxu0 0.0
      %825 = vmatpush1.msra.mxu0 0.0
      %826 = vmatprep.subr.mxu0 0.0
      %827 = vmatpush1.msra.mxu0 0.0
      %828 = vmatprep.subr.mxu0 0.0
      %829 = vmatpush1.msra.mxu0 0.0
      %830 = vmatprep.subr.mxu0 0.0
      %v831 = vand.u32 %v314, 4294901760
      %832 = vmatpush1.msra.mxu0 %v831
      %833 = vmatprep.subr.mxu0 0.0
      %v834 = vand.u32 %v313, 4294901760
      %835 = vmatpush1.msra.mxu0 %v834
      %836 = vmatprep.subr.mxu0 0.0
      %v837 = vand.u32 %v312, 4294901760
      %838 = vmatpush1.msra.mxu0 %v837
      %839 = vmatprep.subr.mxu0 0.0
      %v840 = vand.u32 %v311, 4294901760
      %841 = vmatpush1.msra.mxu0 %v840
      %842 = vmatprep.subr.mxu0 0.0
      %843 = vmatpush2.msra.mxu0 0.0
      %844 = vmatprep.subr.mxu0 0.0
      %845 = vmatpush2.msra.mxu0 0.0
      %846 = vmatprep.subr.mxu0 0.0
      %847 = vmatpush2.msra.mxu0 0.0
      %848 = vmatprep.subr.mxu0 0.0
      %849 = vmatpush2.msra.mxu0 0.0
      %850 = vmatprep.subr.mxu0 0.0
      %851 = vmatpush2.msra.mxu0 0.0
      %852 = vmatprep.subr.mxu0 0.0
      %853 = vmatpush2.msra.mxu0 0.0
      %854 = vmatprep.subr.mxu0 0.0
      %855 = vmatpush2.msra.mxu0 0.0
      %856 = vmatprep.subr.mxu0 0.0
      %857 = vmatpush2.msra.mxu0 0.0
      %858 = vmatprep.subr.mxu0 0.0
      %859 = vmatpush2.msra.mxu0 0.0
      %860 = vmatprep.subr.mxu0 0.0
      %861 = vmatpush2.msra.mxu0 0.0
      %862 = vmatprep.subr.mxu0 0.0
      %863 = vmatpush2.msra.mxu0 0.0
      %864 = vmatprep.subr.mxu0 0.0
      %865 = vmatpush2.msra.mxu0 0.0
      %866 = vmatprep.subr.mxu0 0.0
      %867 = vmatpush2.msra.mxu0 0.0
      %868 = vmatprep.subr.mxu0 0.0
      %869 = vmatpush2.msra.mxu0 0.0
      %870 = vmatprep.subr.mxu0 0.0
      %871 = vmatpush2.msra.mxu0 0.0
      %872 = vmatprep.subr.mxu0 0.0
      %873 = vmatpush2.msra.mxu0 0.0
      %874 = vmatprep.mubr.f32.mxu0 0.0
      %v875 = vand.u32 %v804, 4294901760
      %v876 = vsub.f32 %v804, %v875
      %v877 = vand.u32 %v876, 4294901760
      %v878 = vsub.f32 %v876, %v877
      %v879 = vand.u32 %v878, 4294901760
      %880 = vmatmul.mubr.f32.gmra.mxu0 %v879
      %v881 = vpop.f32.mrf.mxu0
      %v882 = vadd.f32 0.0, %v881
      %v883 = vpop.f32.mrf.mxu0
      %884 = vdwg.mxu0
      %885 = vmatprep.subr.mxu0 0.0
      %886 = vmatpush1.msra.mxu0 0.0
      %887 = vmatprep.subr.mxu0 0.0
      %888 = vmatpush1.msra.mxu0 0.0
      %889 = vmatprep.subr.mxu0 0.0
      %890 = vmatpush1.msra.mxu0 0.0
      %891 = vmatprep.subr.mxu0 0.0
      %892 = vmatpush1.msra.mxu0 0.0
      %893 = vmatprep.subr.mxu0 0.0
      %894 = vmatpush1.msra.mxu0 0.0
      %895 = vmatprep.subr.mxu0 0.0
      %896 = vmatpush1.msra.mxu0 0.0
      %897 = vmatprep.subr.mxu0 0.0
      %898 = vmatpush1.msra.mxu0 0.0
      %899 = vmatprep.subr.mxu0 0.0
      %900 = vmatpush1.msra.mxu0 0.0
      %901 = vmatprep.subr.mxu0 0.0
      %902 = vmatpush1.msra.mxu0 0.0
      %903 = vmatprep.subr.mxu0 0.0
      %904 = vmatpush1.msra.mxu0 0.0
      %905 = vmatprep.subr.mxu0 0.0
      %906 = vmatpush1.msra.mxu0 0.0
      %907 = vmatprep.subr.mxu0 0.0
      %908 = vmatpush1.msra.mxu0 0.0
      %909 = vmatprep.subr.mxu0 0.0
      %v910 = vand.u32 %v314, 4294901760
      %v911 = vsub.f32 %v314, %v910
      %v912 = vand.u32 %v911, 4294901760
      %v913 = vsub.f32 %v911, %v912
      %v914 = vand.u32 %v913, 4294901760
      %915 = vmatpush1.msra.mxu0 %v914
      %916 = vmatprep.subr.mxu0 0.0
      %v917 = vand.u32 %v313, 4294901760
      %v918 = vsub.f32 %v313, %v917
      %v919 = vand.u32 %v918, 4294901760
      %v920 = vsub.f32 %v918, %v919
      %v921 = vand.u32 %v920, 4294901760
      %922 = vmatpush1.msra.mxu0 %v921
      %923 = vmatprep.subr.mxu0 0.0
      %v924 = vand.u32 %v312, 4294901760
      %v925 = vsub.f32 %v312, %v924
      %v926 = vand.u32 %v925, 4294901760
      %v927 = vsub.f32 %v925, %v926
      %v928 = vand.u32 %v927, 4294901760
      %929 = vmatpush1.msra.mxu0 %v928
      %930 = vmatprep.subr.mxu0 0.0
      %v931 = vand.u32 %v311, 4294901760
      %v932 = vsub.f32 %v311, %v931
      %v933 = vand.u32 %v932, 4294901760
      %v934 = vsub.f32 %v932, %v933
      %v935 = vand.u32 %v934, 4294901760
      %936 = vmatpush1.msra.mxu0 %v935
      %937 = vmatprep.subr.mxu0 0.0
      %938 = vmatpush2.msra.mxu0 0.0
      %939 = vmatprep.subr.mxu0 0.0
      %940 = vmatpush2.msra.mxu0 0.0
      %941 = vmatprep.subr.mxu0 0.0
      %942 = vmatpush2.msra.mxu0 0.0
      %943 = vmatprep.subr.mxu0 0.0
      %944 = vmatpush2.msra.mxu0 0.0
      %945 = vmatprep.subr.mxu0 0.0
      %946 = vmatpush2.msra.mxu0 0.0
      %947 = vmatprep.subr.mxu0 0.0
      %948 = vmatpush2.msra.mxu0 0.0
      %949 = vmatprep.subr.mxu0 0.0
      %950 = vmatpush2.msra.mxu0 0.0
      %951 = vmatprep.subr.mxu0 0.0
      %952 = vmatpush2.msra.mxu0 0.0
      %953 = vmatprep.subr.mxu0 0.0
      %954 = vmatpush2.msra.mxu0 0.0
      %955 = vmatprep.subr.mxu0 0.0
      %956 = vmatpush2.msra.mxu0 0.0
      %957 = vmatprep.subr.mxu0 0.0
      %958 = vmatpush2.msra.mxu0 0.0
      %959 = vmatprep.subr.mxu0 0.0
      %960 = vmatpush2.msra.mxu0 0.0
      %961 = vmatprep.subr.mxu0 0.0
      %962 = vmatpush2.msra.mxu0 0.0
      %963 = vmatprep.subr.mxu0 0.0
      %964 = vmatpush2.msra.mxu0 0.0
      %965 = vmatprep.subr.mxu0 0.0
      %966 = vmatpush2.msra.mxu0 0.0
      %967 = vmatprep.subr.mxu0 0.0
      %968 = vmatpush2.msra.mxu0 0.0
      %969 = vmatprep.mubr.f32.mxu0 0.0
      %v970 = vand.u32 %v804, 4294901760
      %971 = vmatmul.mubr.f32.gmra.mxu0 %v970
      %v972 = vpop.f32.mrf.mxu0
      %v973 = vadd.f32 %v882, %v972
      %v974 = vpop.f32.mrf.mxu0
      %975 = vdwg.mxu0
      %976 = vmatprep.subr.mxu0 0.0
      %977 = vmatpush1.msra.mxu0 0.0
      %978 = vmatprep.subr.mxu0 0.0
      %979 = vmatpush1.msra.mxu0 0.0
      %980 = vmatprep.subr.mxu0 0.0
      %981 = vmatpush1.msra.mxu0 0.0
      %982 = vmatprep.subr.mxu0 0.0
      %983 = vmatpush1.msra.mxu0 0.0
      %984 = vmatprep.subr.mxu0 0.0
      %985 = vmatpush1.msra.mxu0 0.0
      %986 = vmatprep.subr.mxu0 0.0
      %987 = vmatpush1.msra.mxu0 0.0
      %988 = vmatprep.subr.mxu0 0.0
      %989 = vmatpush1.msra.mxu0 0.0
      %990 = vmatprep.subr.mxu0 0.0
      %991 = vmatpush1.msra.mxu0 0.0
      %992 = vmatprep.subr.mxu0 0.0
      %993 = vmatpush1.msra.mxu0 0.0
      %994 = vmatprep.subr.mxu0 0.0
      %995 = vmatpush1.msra.mxu0 0.0
      %996 = vmatprep.subr.mxu0 0.0
      %997 = vmatpush1.msra.mxu0 0.0
      %998 = vmatprep.subr.mxu0 0.0
      %999 = vmatpush1.msra.mxu0 0.0
      %1000 = vmatprep.subr.mxu0 0.0
      %v1001 = vand.u32 %v314, 4294901760
      %v1002 = vsub.f32 %v314, %v1001
      %1003 = vmatpush1.msra.mxu0 %v1002
      %1004 = vmatprep.subr.mxu0 0.0
      %v1005 = vand.u32 %v313, 4294901760
      %v1006 = vsub.f32 %v313, %v1005
      %1007 = vmatpush1.msra.mxu0 %v1006
      %1008 = vmatprep.subr.mxu0 0.0
      %v1009 = vand.u32 %v312, 4294901760
      %v1010 = vsub.f32 %v312, %v1009
      %1011 = vmatpush1.msra.mxu0 %v1010
      %1012 = vmatprep.subr.mxu0 0.0
      %v1013 = vand.u32 %v311, 4294901760
      %v1014 = vsub.f32 %v311, %v1013
      %1015 = vmatpush1.msra.mxu0 %v1014
      %1016 = vmatprep.subr.mxu0 0.0
      %1017 = vmatpush2.msra.mxu0 0.0
      %1018 = vmatprep.subr.mxu0 0.0
      %1019 = vmatpush2.msra.mxu0 0.0
      %1020 = vmatprep.subr.mxu0 0.0
      %1021 = vmatpush2.msra.mxu0 0.0
      %1022 = vmatprep.subr.mxu0 0.0
      %1023 = vmatpush2.msra.mxu0 0.0
      %1024 = vmatprep.subr.mxu0 0.0
      %1025 = vmatpush2.msra.mxu0 0.0
      %1026 = vmatprep.subr.mxu0 0.0
      %1027 = vmatpush2.msra.mxu0 0.0
      %1028 = vmatprep.subr.mxu0 0.0
      %1029 = vmatpush2.msra.mxu0 0.0
      %1030 = vmatprep.subr.mxu0 0.0
      %1031 = vmatpush2.msra.mxu0 0.0
      %1032 = vmatprep.subr.mxu0 0.0
      %1033 = vmatpush2.msra.mxu0 0.0
      %1034 = vmatprep.subr.mxu0 0.0
      %1035 = vmatpush2.msra.mxu0 0.0
      %1036 = vmatprep.subr.mxu0 0.0
      %1037 = vmatpush2.msra.mxu0 0.0
      %1038 = vmatprep.subr.mxu0 0.0
      %1039 = vmatpush2.msra.mxu0 0.0
      %1040 = vmatprep.subr.mxu0 0.0
      %1041 = vmatpush2.msra.mxu0 0.0
      %1042 = vmatprep.subr.mxu0 0.0
      %1043 = vmatpush2.msra.mxu0 0.0
      %1044 = vmatprep.subr.mxu0 0.0
      %1045 = vmatpush2.msra.mxu0 0.0
      %1046 = vmatprep.subr.mxu0 0.0
      %1047 = vmatpush2.msra.mxu0 0.0
      %1048 = vmatprep.mubr.f32.mxu0 0.0
      %v1049 = vand.u32 %v804, 4294901760
      %v1050 = vsub.f32 %v804, %v1049
      %1051 = vmatmul.mubr.f32.gmra.mxu0 %v1050
      %v1052 = vpop.f32.mrf.mxu0
      %v1053 = vadd.f32 %v973, %v1052
      %v1054 = vpop.f32.mrf.mxu0
      %1055 = vdwg.mxu0
      %1056 = vmatprep.subr.mxu0 0.0
      %1057 = vmatpush1.msra.mxu0 0.0
      %1058 = vmatprep.subr.mxu0 0.0
      %1059 = vmatpush1.msra.mxu0 0.0
      %1060 = vmatprep.subr.mxu0 0.0
      %1061 = vmatpush1.msra.mxu0 0.0
      %1062 = vmatprep.subr.mxu0 0.0
      %1063 = vmatpush1.msra.mxu0 0.0
      %1064 = vmatprep.subr.mxu0 0.0
      %1065 = vmatpush1.msra.mxu0 0.0
      %1066 = vmatprep.subr.mxu0 0.0
      %1067 = vmatpush1.msra.mxu0 0.0
      %1068 = vmatprep.subr.mxu0 0.0
      %1069 = vmatpush1.msra.mxu0 0.0
      %1070 = vmatprep.subr.mxu0 0.0
      %1071 = vmatpush1.msra.mxu0 0.0
      %1072 = vmatprep.subr.mxu0 0.0
      %1073 = vmatpush1.msra.mxu0 0.0
      %1074 = vmatprep.subr.mxu0 0.0
      %1075 = vmatpush1.msra.mxu0 0.0
      %1076 = vmatprep.subr.mxu0 0.0
      %1077 = vmatpush1.msra.mxu0 0.0
      %1078 = vmatprep.subr.mxu0 0.0
      %1079 = vmatpush1.msra.mxu0 0.0
      %1080 = vmatprep.subr.mxu0 0.0
      %v1081 = vand.u32 %v314, 4294901760
      %1082 = vmatpush1.msra.mxu0 %v1081
      %1083 = vmatprep.subr.mxu0 0.0
      %v1084 = vand.u32 %v313, 4294901760
      %1085 = vmatpush1.msra.mxu0 %v1084
      %1086 = vmatprep.subr.mxu0 0.0
      %v1087 = vand.u32 %v312, 4294901760
      %1088 = vmatpush1.msra.mxu0 %v1087
      %1089 = vmatprep.subr.mxu0 0.0
      %v1090 = vand.u32 %v311, 4294901760
      %1091 = vmatpush1.msra.mxu0 %v1090
      %1092 = vmatprep.subr.mxu0 0.0
      %1093 = vmatpush2.msra.mxu0 0.0
      %1094 = vmatprep.subr.mxu0 0.0
      %1095 = vmatpush2.msra.mxu0 0.0
      %1096 = vmatprep.subr.mxu0 0.0
      %1097 = vmatpush2.msra.mxu0 0.0
      %1098 = vmatprep.subr.mxu0 0.0
      %1099 = vmatpush2.msra.mxu0 0.0
      %1100 = vmatprep.subr.mxu0 0.0
      %1101 = vmatpush2.msra.mxu0 0.0
      %1102 = vmatprep.subr.mxu0 0.0
      %1103 = vmatpush2.msra.mxu0 0.0
      %1104 = vmatprep.subr.mxu0 0.0
      %1105 = vmatpush2.msra.mxu0 0.0
      %1106 = vmatprep.subr.mxu0 0.0
      %1107 = vmatpush2.msra.mxu0 0.0
      %1108 = vmatprep.subr.mxu0 0.0
      %1109 = vmatpush2.msra.mxu0 0.0
      %1110 = vmatprep.subr.mxu0 0.0
      %1111 = vmatpush2.msra.mxu0 0.0
      %1112 = vmatprep.subr.mxu0 0.0
      %1113 = vmatpush2.msra.mxu0 0.0
      %1114 = vmatprep.subr.mxu0 0.0
      %1115 = vmatpush2.msra.mxu0 0.0
      %1116 = vmatprep.subr.mxu0 0.0
      %1117 = vmatpush2.msra.mxu0 0.0
      %1118 = vmatprep.subr.mxu0 0.0
      %1119 = vmatpush2.msra.mxu0 0.0
      %1120 = vmatprep.subr.mxu0 0.0
      %1121 = vmatpush2.msra.mxu0 0.0
      %1122 = vmatprep.subr.mxu0 0.0
      %1123 = vmatpush2.msra.mxu0 0.0
      %1124 = vmatprep.mubr.f32.mxu0 0.0
      %v1125 = vand.u32 %v804, 4294901760
      %v1126 = vsub.f32 %v804, %v1125
      %v1127 = vand.u32 %v1126, 4294901760
      %1128 = vmatmul.mubr.f32.gmra.mxu0 %v1127
      %v1129 = vpop.f32.mrf.mxu0
      %v1130 = vadd.f32 %v1053, %v1129
      %v1131 = vpop.f32.mrf.mxu0
      %1132 = vdwg.mxu0
      %1133 = vmatprep.subr.mxu0 0.0
      %1134 = vmatpush1.msra.mxu0 0.0
      %1135 = vmatprep.subr.mxu0 0.0
      %1136 = vmatpush1.msra.mxu0 0.0
      %1137 = vmatprep.subr.mxu0 0.0
      %1138 = vmatpush1.msra.mxu0 0.0
      %1139 = vmatprep.subr.mxu0 0.0
      %1140 = vmatpush1.msra.mxu0 0.0
      %1141 = vmatprep.subr.mxu0 0.0
      %1142 = vmatpush1.msra.mxu0 0.0
      %1143 = vmatprep.subr.mxu0 0.0
      %1144 = vmatpush1.msra.mxu0 0.0
      %1145 = vmatprep.subr.mxu0 0.0
      %1146 = vmatpush1.msra.mxu0 0.0
      %1147 = vmatprep.subr.mxu0 0.0
      %1148 = vmatpush1.msra.mxu0 0.0
      %1149 = vmatprep.subr.mxu0 0.0
      %1150 = vmatpush1.msra.mxu0 0.0
      %1151 = vmatprep.subr.mxu0 0.0
      %1152 = vmatpush1.msra.mxu0 0.0
      %1153 = vmatprep.subr.mxu0 0.0
      %1154 = vmatpush1.msra.mxu0 0.0
      %1155 = vmatprep.subr.mxu0 0.0
      %1156 = vmatpush1.msra.mxu0 0.0
      %1157 = vmatprep.subr.mxu0 0.0
      %v1158 = vand.u32 %v314, 4294901760
      %v1159 = vsub.f32 %v314, %v1158
      %v1160 = vand.u32 %v1159, 4294901760
      %1161 = vmatpush1.msra.mxu0 %v1160
      %1162 = vmatprep.subr.mxu0 0.0
      %v1163 = vand.u32 %v313, 4294901760
      %v1164 = vsub.f32 %v313, %v1163
      %v1165 = vand.u32 %v1164, 4294901760
      %1166 = vmatpush1.msra.mxu0 %v1165
      %1167 = vmatprep.subr.mxu0 0.0
      %v1168 = vand.u32 %v312, 4294901760
      %v1169 = vsub.f32 %v312, %v1168
      %v1170 = vand.u32 %v1169, 4294901760
      %1171 = vmatpush1.msra.mxu0 %v1170
      %1172 = vmatprep.subr.mxu0 0.0
      %v1173 = vand.u32 %v311, 4294901760
      %v1174 = vsub.f32 %v311, %v1173
      %v1175 = vand.u32 %v1174, 4294901760
      %1176 = vmatpush1.msra.mxu0 %v1175
      %1177 = vmatprep.subr.mxu0 0.0
      %1178 = vmatpush2.msra.mxu0 0.0
      %1179 = vmatprep.subr.mxu0 0.0
      %1180 = vmatpush2.msra.mxu0 0.0
      %1181 = vmatprep.subr.mxu0 0.0
      %1182 = vmatpush2.msra.mxu0 0.0
      %1183 = vmatprep.subr.mxu0 0.0
      %1184 = vmatpush2.msra.mxu0 0.0
      %1185 = vmatprep.subr.mxu0 0.0
      %1186 = vmatpush2.msra.mxu0 0.0
      %1187 = vmatprep.subr.mxu0 0.0
      %1188 = vmatpush2.msra.mxu0 0.0
      %1189 = vmatprep.subr.mxu0 0.0
      %1190 = vmatpush2.msra.mxu0 0.0
      %1191 = vmatprep.subr.mxu0 0.0
      %1192 = vmatpush2.msra.mxu0 0.0
      %1193 = vmatprep.subr.mxu0 0.0
      %1194 = vmatpush2.msra.mxu0 0.0
      %1195 = vmatprep.subr.mxu0 0.0
      %1196 = vmatpush2.msra.mxu0 0.0
      %1197 = vmatprep.subr.mxu0 0.0
      %1198 = vmatpush2.msra.mxu0 0.0
      %1199 = vmatprep.subr.mxu0 0.0
      %1200 = vmatpush2.msra.mxu0 0.0
      %1201 = vmatprep.subr.mxu0 0.0
      %1202 = vmatpush2.msra.mxu0 0.0
      %1203 = vmatprep.subr.mxu0 0.0
      %1204 = vmatpush2.msra.mxu0 0.0
      %1205 = vmatprep.subr.mxu0 0.0
      %1206 = vmatpush2.msra.mxu0 0.0
      %1207 = vmatprep.subr.mxu0 0.0
      %1208 = vmatpush2.msra.mxu0 0.0
      %1209 = vmatprep.mubr.f32.mxu0 0.0
      %v1210 = vand.u32 %v804, 4294901760
      %1211 = vmatmul.mubr.f32.gmra.mxu0 %v1210
      %v1212 = vpop.f32.mrf.mxu0
      %v1213 = vadd.f32 %v1130, %v1212
      %v1214 = vpop.f32.mrf.mxu0
      %1215 = vdwg.mxu0
      %1216 = vmatprep.subr.mxu0 0.0
      %1217 = vmatpush1.msra.mxu0 0.0
      %1218 = vmatprep.subr.mxu0 0.0
      %1219 = vmatpush1.msra.mxu0 0.0
      %1220 = vmatprep.subr.mxu0 0.0
      %1221 = vmatpush1.msra.mxu0 0.0
      %1222 = vmatprep.subr.mxu0 0.0
      %1223 = vmatpush1.msra.mxu0 0.0
      %1224 = vmatprep.subr.mxu0 0.0
      %1225 = vmatpush1.msra.mxu0 0.0
      %1226 = vmatprep.subr.mxu0 0.0
      %1227 = vmatpush1.msra.mxu0 0.0
      %1228 = vmatprep.subr.mxu0 0.0
      %1229 = vmatpush1.msra.mxu0 0.0
      %1230 = vmatprep.subr.mxu0 0.0
      %1231 = vmatpush1.msra.mxu0 0.0
      %1232 = vmatprep.subr.mxu0 0.0
      %1233 = vmatpush1.msra.mxu0 0.0
      %1234 = vmatprep.subr.mxu0 0.0
      %1235 = vmatpush1.msra.mxu0 0.0
      %1236 = vmatprep.subr.mxu0 0.0
      %1237 = vmatpush1.msra.mxu0 0.0
      %1238 = vmatprep.subr.mxu0 0.0
      %1239 = vmatpush1.msra.mxu0 0.0
      %1240 = vmatprep.subr.mxu0 0.0
      %v1241 = vand.u32 %v314, 4294901760
      %1242 = vmatpush1.msra.mxu0 %v1241
      %1243 = vmatprep.subr.mxu0 0.0
      %v1244 = vand.u32 %v313, 4294901760
      %1245 = vmatpush1.msra.mxu0 %v1244
      %1246 = vmatprep.subr.mxu0 0.0
      %v1247 = vand.u32 %v312, 4294901760
      %1248 = vmatpush1.msra.mxu0 %v1247
      %1249 = vmatprep.subr.mxu0 0.0
      %v1250 = vand.u32 %v311, 4294901760
      %1251 = vmatpush1.msra.mxu0 %v1250
      %1252 = vmatprep.subr.mxu0 0.0
      %1253 = vmatpush2.msra.mxu0 0.0
      %1254 = vmatprep.subr.mxu0 0.0
      %1255 = vmatpush2.msra.mxu0 0.0
      %1256 = vmatprep.subr.mxu0 0.0
      %1257 = vmatpush2.msra.mxu0 0.0
      %1258 = vmatprep.subr.mxu0 0.0
      %1259 = vmatpush2.msra.mxu0 0.0
      %1260 = vmatprep.subr.mxu0 0.0
      %1261 = vmatpush2.msra.mxu0 0.0
      %1262 = vmatprep.subr.mxu0 0.0
      %1263 = vmatpush2.msra.mxu0 0.0
      %1264 = vmatprep.subr.mxu0 0.0
      %1265 = vmatpush2.msra.mxu0 0.0
      %1266 = vmatprep.subr.mxu0 0.0
      %1267 = vmatpush2.msra.mxu0 0.0
      %1268 = vmatprep.subr.mxu0 0.0
      %1269 = vmatpush2.msra.mxu0 0.0
      %1270 = vmatprep.subr.mxu0 0.0
      %1271 = vmatpush2.msra.mxu0 0.0
      %1272 = vmatprep.subr.mxu0 0.0
      %1273 = vmatpush2.msra.mxu0 0.0
      %1274 = vmatprep.subr.mxu0 0.0
      %1275 = vmatpush2.msra.mxu0 0.0
      %1276 = vmatprep.subr.mxu0 0.0
      %1277 = vmatpush2.msra.mxu0 0.0
      %1278 = vmatprep.subr.mxu0 0.0
      %1279 = vmatpush2.msra.mxu0 0.0
      %1280 = vmatprep.subr.mxu0 0.0
      %1281 = vmatpush2.msra.mxu0 0.0
      %1282 = vmatprep.subr.mxu0 0.0
      %1283 = vmatpush2.msra.mxu0 0.0
      %1284 = vmatprep.mubr.f32.mxu0 0.0
      %v1285 = vand.u32 %v804, 4294901760
      %1286 = vmatmul.mubr.f32.gmra.mxu0 %v1285
      %v1287 = vpop.f32.mrf.mxu0
      %v1288 = vadd.f32 %v1213, %v1287
      %v1289 = vpop.f32.mrf.mxu0
      %1290 = vdwg.mxu0
      %v1291 = vmul.f32 %v800, %v800
      %v1292 = vsub.f32 %v1288, %v1291
      %v1293 = vadd.f32 %v1292, 1e-05
      %v1294 = vrsqrt.pop %v1293
      %v1295 = vlaneseq
      %v1296 = vshrl.u32 %v1295, 7
      %v1297 = vsub.s32 0, %v1296
      %v1298 = vrot.slane %v800, %v1297
      %v1299 = vsub.f32 %v252, %v1298
      %v1300 = vsub.f32 %v253, %v1298
      %v1301 = vsub.f32 %v254, %v1298
      %v1302 = vsub.f32 %v255, %v1298
      %v1303 = vsub.f32 %v256, %v1298
      %v1304 = vsub.f32 %v257, %v1298
      %v1305 = vsub.f32 %v258, %v1298
      %v1306 = vsub.f32 %v259, %v1298
      %v1307 = vlaneseq
      %v1308 = vshrl.u32 %v1307, 7
      %v1309 = vsub.s32 0, %v1308
      %v1310 = vrot.slane %v1294, %v1309
      %v1311 = vmul.f32 %v1299, %v1310
      %v1312 = vmul.f32 %v1300, %v1310
      %v1313 = vmul.f32 %v1301, %v1310
      %v1314 = vmul.f32 %v1302, %v1310
      %v1315 = vmul.f32 %v1303, %v1310
      %v1316 = vmul.f32 %v1304, %v1310
      %v1317 = vmul.f32 %v1305, %v1310
      %v1318 = vmul.f32 %v1306, %v1310
      %v1319 = vld [vmem:[%s2] sm:$0xff]
      %v1320 = vld [vmem:[%s2 + $0x8] sm:$0xff]
      %v1321 = vld [vmem:[%s2 + $0x10] sm:$0xff]
      %v1322 = vld [vmem:[%s2 + $0x18] sm:$0xff]
      %v1323 = vld [vmem:[%s3] sm:$0x1]
      %v1325 = vlaneseq
      %v1326 = vshrl.u32 %v1325, 7
      %v1327 = vsub.s32 0, %v1326
      %v1328 = vrot.slane %v1323, %v1327
      %v1331 = vsel %vm260, %v1311, 0
      %v1334 = vsel %vm260, %v1312, 0
      %v1337 = vsel %vm260, %v1313, 0
      %v1340 = vsel %vm260, %v1314, 0
      %v1343 = vsel %vm260, %v1315, 0
      %v1346 = vsel %vm260, %v1316, 0
      %v1349 = vsel %vm260, %v1317, 0
      %v1352 = vsel %vm260, %v1318, 0
      %1354 = vmatprep.subr.mxu0 0.0
      %1355 = vmatpush1.msra.mxu0 0.0
      %1356 = vmatprep.subr.mxu0 0.0
      %1357 = vmatpush1.msra.mxu0 0.0
      %1358 = vmatprep.subr.mxu0 0.0
      %1359 = vmatpush1.msra.mxu0 0.0
      %1360 = vmatprep.subr.mxu0 0.0
      %1361 = vmatpush1.msra.mxu0 0.0
      %1362 = vmatprep.subr.mxu0 0.0
      %1363 = vmatpush1.msra.mxu0 0.0
      %1364 = vmatprep.subr.mxu0 0.0
      %1365 = vmatpush1.msra.mxu0 0.0
      %1366 = vmatprep.subr.mxu0 0.0
      %1367 = vmatpush1.msra.mxu0 0.0
      %1368 = vmatprep.subr.mxu0 0.0
      %1369 = vmatpush1.msra.mxu0 0.0
      %1370 = vmatprep.subr.mxu0 0.0
      %1371 = vmatpush1.msra.mxu0 0.0
      %1372 = vmatprep.subr.mxu0 0.0
      %1373 = vmatpush1.msra.mxu0 0.0
      %1374 = vmatprep.subr.mxu0 0.0
      %1375 = vmatpush1.msra.mxu0 0.0
      %1376 = vmatprep.subr.mxu0 0.0
      %1377 = vmatpush1.msra.mxu0 0.0
      %1378 = vmatprep.subr.mxu0 0.0
      %v1379 = vand.u32 %v1322, 4294901760
      %1380 = vmatpush1.msra.mxu0 %v1379
      %1381 = vmatprep.subr.mxu0 0.0
      %v1382 = vand.u32 %v1321, 4294901760
      %1383 = vmatpush1.msra.mxu0 %v1382
      %1384 = vmatprep.subr.mxu0 0.0
      %v1385 = vand.u32 %v1320, 4294901760
      %1386 = vmatpush1.msra.mxu0 %v1385
      %1387 = vmatprep.subr.mxu0 0.0
      %v1388 = vand.u32 %v1319, 4294901760
      %1389 = vmatpush1.msra.mxu0 %v1388
      %1390 = vmatprep.subr.mxu0 0.0
      %1391 = vmatpush2.msra.mxu0 0.0
      %1392 = vmatprep.subr.mxu0 0.0
      %1393 = vmatpush2.msra.mxu0 0.0
      %1394 = vmatprep.subr.mxu0 0.0
      %1395 = vmatpush2.msra.mxu0 0.0
      %1396 = vmatprep.subr.mxu0 0.0
      %1397 = vmatpush2.msra.mxu0 0.0
      %1398 = vmatprep.subr.mxu0 0.0
      %1399 = vmatpush2.msra.mxu0 0.0
      %1400 = vmatprep.subr.mxu0 0.0
      %1401 = vmatpush2.msra.mxu0 0.0
      %1402 = vmatprep.subr.mxu0 0.0
      %1403 = vmatpush2.msra.mxu0 0.0
      %1404 = vmatprep.subr.mxu0 0.0
      %1405 = vmatpush2.msra.mxu0 0.0
      %1406 = vmatprep.subr.mxu0 0.0
      %1407 = vmatpush2.msra.mxu0 0.0
      %1408 = vmatprep.subr.mxu0 0.0
      %1409 = vmatpush2.msra.mxu0 0.0
      %1410 = vmatprep.subr.mxu0 0.0
      %1411 = vmatpush2.msra.mxu0 0.0
      %1412 = vmatprep.subr.mxu0 0.0
      %1413 = vmatpush2.msra.mxu0 0.0
      %1414 = vmatprep.subr.mxu0 0.0
      %1415 = vmatpush2.msra.mxu0 0.0
      %1416 = vmatprep.subr.mxu0 0.0
      %1417 = vmatpush2.msra.mxu0 0.0
      %1418 = vmatprep.subr.mxu0 0.0
      %1419 = vmatpush2.msra.mxu0 0.0
      %1420 = vmatprep.subr.mxu0 0.0
      %1421 = vmatpush2.msra.mxu0 0.0
      %1422 = vmatprep.mubr.f32.mxu0 0.0
      %v1423 = vand.u32 %v1331, 4294901760
      %v1424 = vsub.f32 %v1331, %v1423
      %v1425 = vand.u32 %v1424, 4294901760
      %v1426 = vsub.f32 %v1424, %v1425
      %v1427 = vand.u32 %v1426, 4294901760
      %1428 = vmatmul.mubr.f32.gmra.mxu0 %v1427
      %v1429 = vpop.f32.mrf.mxu0
      %v1430 = vadd.f32 %v1328, %v1429
      %v1431 = vpop.f32.mrf.mxu0
      %1432 = vmatprep.mubr.f32.mxu0 0.0
      %v1433 = vand.u32 %v1334, 4294901760
      %v1434 = vsub.f32 %v1334, %v1433
      %v1435 = vand.u32 %v1434, 4294901760
      %v1436 = vsub.f32 %v1434, %v1435
      %v1437 = vand.u32 %v1436, 4294901760
      %1438 = vmatmul.mubr.f32.gmra.mxu0 %v1437
      %v1439 = vpop.f32.mrf.mxu0
      %v1440 = vadd.f32 %v1328, %v1439
      %v1441 = vpop.f32.mrf.mxu0
      %1442 = vmatprep.mubr.f32.mxu0 0.0
      %v1443 = vand.u32 %v1337, 4294901760
      %v1444 = vsub.f32 %v1337, %v1443
      %v1445 = vand.u32 %v1444, 4294901760
      %v1446 = vsub.f32 %v1444, %v1445
      %v1447 = vand.u32 %v1446, 4294901760
      %1448 = vmatmul.mubr.f32.gmra.mxu0 %v1447
      %v1449 = vpop.f32.mrf.mxu0
      %v1450 = vadd.f32 %v1328, %v1449
      %v1451 = vpop.f32.mrf.mxu0
      %1452 = vmatprep.mubr.f32.mxu0 0.0
      %v1453 = vand.u32 %v1340, 4294901760
      %v1454 = vsub.f32 %v1340, %v1453
      %v1455 = vand.u32 %v1454, 4294901760
      %v1456 = vsub.f32 %v1454, %v1455
      %v1457 = vand.u32 %v1456, 4294901760
      %1458 = vmatmul.mubr.f32.gmra.mxu0 %v1457
      %v1459 = vpop.f32.mrf.mxu0
      %v1460 = vadd.f32 %v1328, %v1459
      %v1461 = vpop.f32.mrf.mxu0
      %1462 = vmatprep.mubr.f32.mxu0 0.0
      %v1463 = vand.u32 %v1343, 4294901760
      %v1464 = vsub.f32 %v1343, %v1463
      %v1465 = vand.u32 %v1464, 4294901760
      %v1466 = vsub.f32 %v1464, %v1465
      %v1467 = vand.u32 %v1466, 4294901760
      %1468 = vmatmul.mubr.f32.gmra.mxu0 %v1467
      %v1469 = vpop.f32.mrf.mxu0
      %v1470 = vadd.f32 %v1328, %v1469
      %v1471 = vpop.f32.mrf.mxu0
      %1472 = vmatprep.mubr.f32.mxu0 0.0
      %v1473 = vand.u32 %v1346, 4294901760
      %v1474 = vsub.f32 %v1346, %v1473
      %v1475 = vand.u32 %v1474, 4294901760
      %v1476 = vsub.f32 %v1474, %v1475
      %v1477 = vand.u32 %v1476, 4294901760
      %1478 = vmatmul.mubr.f32.gmra.mxu0 %v1477
      %v1479 = vpop.f32.mrf.mxu0
      %v1480 = vadd.f32 %v1328, %v1479
      %v1481 = vpop.f32.mrf.mxu0
      %1482 = vmatprep.mubr.f32.mxu0 0.0
      %v1483 = vand.u32 %v1349, 4294901760
      %v1484 = vsub.f32 %v1349, %v1483
      %v1485 = vand.u32 %v1484, 4294901760
      %v1486 = vsub.f32 %v1484, %v1485
      %v1487 = vand.u32 %v1486, 4294901760
      %1488 = vmatmul.mubr.f32.gmra.mxu0 %v1487
      %v1489 = vpop.f32.mrf.mxu0
      %v1490 = vadd.f32 %v1328, %v1489
      %v1491 = vpop.f32.mrf.mxu0
      %1492 = vmatprep.mubr.f32.mxu0 0.0
      %v1493 = vand.u32 %v1352, 4294901760
      %v1494 = vsub.f32 %v1352, %v1493
      %v1495 = vand.u32 %v1494, 4294901760
      %v1496 = vsub.f32 %v1494, %v1495
      %v1497 = vand.u32 %v1496, 4294901760
      %1498 = vmatmul.mubr.f32.gmra.mxu0 %v1497
      %v1499 = vpop.f32.mrf.mxu0
      %v1500 = vadd.f32 %v1328, %v1499
      %v1501 = vpop.f32.mrf.mxu0
      %1502 = vdwg.mxu0
      %1503 = vmatprep.subr.mxu0 0.0
      %1504 = vmatpush1.msra.mxu0 0.0
      %1505 = vmatprep.subr.mxu0 0.0
      %1506 = vmatpush1.msra.mxu0 0.0
      %1507 = vmatprep.subr.mxu0 0.0
      %1508 = vmatpush1.msra.mxu0 0.0
      %1509 = vmatprep.subr.mxu0 0.0
      %1510 = vmatpush1.msra.mxu0 0.0
      %1511 = vmatprep.subr.mxu0 0.0
      %1512 = vmatpush1.msra.mxu0 0.0
      %1513 = vmatprep.subr.mxu0 0.0
      %1514 = vmatpush1.msra.mxu0 0.0
      %1515 = vmatprep.subr.mxu0 0.0
      %1516 = vmatpush1.msra.mxu0 0.0
      %1517 = vmatprep.subr.mxu0 0.0
      %1518 = vmatpush1.msra.mxu0 0.0
      %1519 = vmatprep.subr.mxu0 0.0
      %1520 = vmatpush1.msra.mxu0 0.0
      %1521 = vmatprep.subr.mxu0 0.0
      %1522 = vmatpush1.msra.mxu0 0.0
      %1523 = vmatprep.subr.mxu0 0.0
      %1524 = vmatpush1.msra.mxu0 0.0
      %1525 = vmatprep.subr.mxu0 0.0
      %1526 = vmatpush1.msra.mxu0 0.0
      %1527 = vmatprep.subr.mxu0 0.0
      %v1528 = vand.u32 %v1322, 4294901760
      %v1529 = vsub.f32 %v1322, %v1528
      %v1530 = vand.u32 %v1529, 4294901760
      %v1531 = vsub.f32 %v1529, %v1530
      %v1532 = vand.u32 %v1531, 4294901760
      %1533 = vmatpush1.msra.mxu0 %v1532
      %1534 = vmatprep.subr.mxu0 0.0
      %v1535 = vand.u32 %v1321, 4294901760
      %v1536 = vsub.f32 %v1321, %v1535
      %v1537 = vand.u32 %v1536, 4294901760
      %v1538 = vsub.f32 %v1536, %v1537
      %v1539 = vand.u32 %v1538, 4294901760
      %1540 = vmatpush1.msra.mxu0 %v1539
      %1541 = vmatprep.subr.mxu0 0.0
      %v1542 = vand.u32 %v1320, 4294901760
      %v1543 = vsub.f32 %v1320, %v1542
      %v1544 = vand.u32 %v1543, 4294901760
      %v1545 = vsub.f32 %v1543, %v1544
      %v1546 = vand.u32 %v1545, 4294901760
      %1547 = vmatpush1.msra.mxu0 %v1546
      %1548 = vmatprep.subr.mxu0 0.0
      %v1549 = vand.u32 %v1319, 4294901760
      %v1550 = vsub.f32 %v1319, %v1549
      %v1551 = vand.u32 %v1550, 4294901760
      %v1552 = vsub.f32 %v1550, %v1551
      %v1553 = vand.u32 %v1552, 4294901760
      %1554 = vmatpush1.msra.mxu0 %v1553
      %1555 = vmatprep.subr.mxu0 0.0
      %1556 = vmatpush2.msra.mxu0 0.0
      %1557 = vmatprep.subr.mxu0 0.0
      %1558 = vmatpush2.msra.mxu0 0.0
      %1559 = vmatprep.subr.mxu0 0.0
      %1560 = vmatpush2.msra.mxu0 0.0
      %1561 = vmatprep.subr.mxu0 0.0
      %1562 = vmatpush2.msra.mxu0 0.0
      %1563 = vmatprep.subr.mxu0 0.0
      %1564 = vmatpush2.msra.mxu0 0.0
      %1565 = vmatprep.subr.mxu0 0.0
      %1566 = vmatpush2.msra.mxu0 0.0
      %1567 = vmatprep.subr.mxu0 0.0
      %1568 = vmatpush2.msra.mxu0 0.0
      %1569 = vmatprep.subr.mxu0 0.0
      %1570 = vmatpush2.msra.mxu0 0.0
      %1571 = vmatprep.subr.mxu0 0.0
      %1572 = vmatpush2.msra.mxu0 0.0
      %1573 = vmatprep.subr.mxu0 0.0
      %1574 = vmatpush2.msra.mxu0 0.0
      %1575 = vmatprep.subr.mxu0 0.0
      %1576 = vmatpush2.msra.mxu0 0.0
      %1577 = vmatprep.subr.mxu0 0.0
      %1578 = vmatpush2.msra.mxu0 0.0
      %1579 = vmatprep.subr.mxu0 0.0
      %1580 = vmatpush2.msra.mxu0 0.0
      %1581 = vmatprep.subr.mxu0 0.0
      %1582 = vmatpush2.msra.mxu0 0.0
      %1583 = vmatprep.subr.mxu0 0.0
      %1584 = vmatpush2.msra.mxu0 0.0
      %1585 = vmatprep.subr.mxu0 0.0
      %1586 = vmatpush2.msra.mxu0 0.0
      %1587 = vmatprep.mubr.f32.mxu0 0.0
      %v1588 = vand.u32 %v1331, 4294901760
      %1589 = vmatmul.mubr.f32.gmra.mxu0 %v1588
      %v1590 = vpop.f32.mrf.mxu0
      %v1591 = vadd.f32 %v1430, %v1590
      %v1592 = vpop.f32.mrf.mxu0
      %1593 = vmatprep.mubr.f32.mxu0 0.0
      %v1594 = vand.u32 %v1334, 4294901760
      %1595 = vmatmul.mubr.f32.gmra.mxu0 %v1594
      %v1596 = vpop.f32.mrf.mxu0
      %v1597 = vadd.f32 %v1440, %v1596
      %v1598 = vpop.f32.mrf.mxu0
      %1599 = vmatprep.mubr.f32.mxu0 0.0
      %v1600 = vand.u32 %v1337, 4294901760
      %1601 = vmatmul.mubr.f32.gmra.mxu0 %v1600
      %v1602 = vpop.f32.mrf.mxu0
      %v1603 = vadd.f32 %v1450, %v1602
      %v1604 = vpop.f32.mrf.mxu0
      %1605 = vmatprep.mubr.f32.mxu0 0.0
      %v1606 = vand.u32 %v1340, 4294901760
      %1607 = vmatmul.mubr.f32.gmra.mxu0 %v1606
      %v1608 = vpop.f32.mrf.mxu0
      %v1609 = vadd.f32 %v1460, %v1608
      %v1610 = vpop.f32.mrf.mxu0
      %1611 = vmatprep.mubr.f32.mxu0 0.0
      %v1612 = vand.u32 %v1343, 4294901760
      %1613 = vmatmul.mubr.f32.gmra.mxu0 %v1612
      %v1614 = vpop.f32.mrf.mxu0
      %v1615 = vadd.f32 %v1470, %v1614
      %v1616 = vpop.f32.mrf.mxu0
      %1617 = vmatprep.mubr.f32.mxu0 0.0
      %v1618 = vand.u32 %v1346, 4294901760
      %1619 = vmatmul.mubr.f32.gmra.mxu0 %v1618
      %v1620 = vpop.f32.mrf.mxu0
      %v1621 = vadd.f32 %v1480, %v1620
      %v1622 = vpop.f32.mrf.mxu0
      %1623 = vmatprep.mubr.f32.mxu0 0.0
      %v1624 = vand.u32 %v1349, 4294901760
      %1625 = vmatmul.mubr.f32.gmra.mxu0 %v1624
      %v1626 = vpop.f32.mrf.mxu0
      %v1627 = vadd.f32 %v1490, %v1626
      %v1628 = vpop.f32.mrf.mxu0
      %1629 = vmatprep.mubr.f32.mxu0 0.0
      %v1630 = vand.u32 %v1352, 4294901760
      %1631 = vmatmul.mubr.f32.gmra.mxu0 %v1630
      %v1632 = vpop.f32.mrf.mxu0
      %v1633 = vadd.f32 %v1500, %v1632
      %v1634 = vpop.f32.mrf.mxu0
      %1635 = vdwg.mxu0
      %1636 = vmatprep.subr.mxu0 0.0
      %1637 = vmatpush1.msra.mxu0 0.0
      %1638 = vmatprep.subr.mxu0 0.0
      %1639 = vmatpush1.msra.mxu0 0.0
      %1640 = vmatprep.subr.mxu0 0.0
      %1641 = vmatpush1.msra.mxu0 0.0
      %1642 = vmatprep.subr.mxu0 0.0
      %1643 = vmatpush1.msra.mxu0 0.0
      %1644 = vmatprep.subr.mxu0 0.0
      %1645 = vmatpush1.msra.mxu0 0.0
      %1646 = vmatprep.subr.mxu0 0.0
      %1647 = vmatpush1.msra.mxu0 0.0
      %1648 = vmatprep.subr.mxu0 0.0
      %1649 = vmatpush1.msra.mxu0 0.0
      %1650 = vmatprep.subr.mxu0 0.0
      %1651 = vmatpush1.msra.mxu0 0.0
      %1652 = vmatprep.subr.mxu0 0.0
      %1653 = vmatpush1.msra.mxu0 0.0
      %1654 = vmatprep.subr.mxu0 0.0
      %1655 = vmatpush1.msra.mxu0 0.0
      %1656 = vmatprep.subr.mxu0 0.0
      %1657 = vmatpush1.msra.mxu0 0.0
      %1658 = vmatprep.subr.mxu0 0.0
      %1659 = vmatpush1.msra.mxu0 0.0
      %1660 = vmatprep.subr.mxu0 0.0
      %v1661 = vand.u32 %v1322, 4294901760
      %v1662 = vsub.f32 %v1322, %v1661
      %1663 = vmatpush1.msra.mxu0 %v1662
      %1664 = vmatprep.subr.mxu0 0.0
      %v1665 = vand.u32 %v1321, 4294901760
      %v1666 = vsub.f32 %v1321, %v1665
      %1667 = vmatpush1.msra.mxu0 %v1666
      %1668 = vmatprep.subr.mxu0 0.0
      %v1669 = vand.u32 %v1320, 4294901760
      %v1670 = vsub.f32 %v1320, %v1669
      %1671 = vmatpush1.msra.mxu0 %v1670
      %1672 = vmatprep.subr.mxu0 0.0
      %v1673 = vand.u32 %v1319, 4294901760
      %v1674 = vsub.f32 %v1319, %v1673
      %1675 = vmatpush1.msra.mxu0 %v1674
      %1676 = vmatprep.subr.mxu0 0.0
      %1677 = vmatpush2.msra.mxu0 0.0
      %1678 = vmatprep.subr.mxu0 0.0
      %1679 = vmatpush2.msra.mxu0 0.0
      %1680 = vmatprep.subr.mxu0 0.0
      %1681 = vmatpush2.msra.mxu0 0.0
      %1682 = vmatprep.subr.mxu0 0.0
      %1683 = vmatpush2.msra.mxu0 0.0
      %1684 = vmatprep.subr.mxu0 0.0
      %1685 = vmatpush2.msra.mxu0 0.0
      %1686 = vmatprep.subr.mxu0 0.0
      %1687 = vmatpush2.msra.mxu0 0.0
      %1688 = vmatprep.subr.mxu0 0.0
      %1689 = vmatpush2.msra.mxu0 0.0
      %1690 = vmatprep.subr.mxu0 0.0
      %1691 = vmatpush2.msra.mxu0 0.0
      %1692 = vmatprep.subr.mxu0 0.0
      %1693 = vmatpush2.msra.mxu0 0.0
      %1694 = vmatprep.subr.mxu0 0.0
      %1695 = vmatpush2.msra.mxu0 0.0
      %1696 = vmatprep.subr.mxu0 0.0
      %1697 = vmatpush2.msra.mxu0 0.0
      %1698 = vmatprep.subr.mxu0 0.0
      %1699 = vmatpush2.msra.mxu0 0.0
      %1700 = vmatprep.subr.mxu0 0.0
      %1701 = vmatpush2.msra.mxu0 0.0
      %1702 = vmatprep.subr.mxu0 0.0
      %1703 = vmatpush2.msra.mxu0 0.0
      %1704 = vmatprep.subr.mxu0 0.0
      %1705 = vmatpush2.msra.mxu0 0.0
      %1706 = vmatprep.subr.mxu0 0.0
      %1707 = vmatpush2.msra.mxu0 0.0
      %1708 = vmatprep.mubr.f32.mxu0 0.0
      %v1709 = vand.u32 %v1331, 4294901760
      %v1710 = vsub.f32 %v1331, %v1709
      %1711 = vmatmul.mubr.f32.gmra.mxu0 %v1710
      %v1712 = vpop.f32.mrf.mxu0
      %v1713 = vadd.f32 %v1591, %v1712
      %v1714 = vpop.f32.mrf.mxu0
      %1715 = vmatprep.mubr.f32.mxu0 0.0
      %v1716 = vand.u32 %v1334, 4294901760
      %v1717 = vsub.f32 %v1334, %v1716
      %1718 = vmatmul.mubr.f32.gmra.mxu0 %v1717
      %v1719 = vpop.f32.mrf.mxu0
      %v1720 = vadd.f32 %v1597, %v1719
      %v1721 = vpop.f32.mrf.mxu0
      %1722 = vmatprep.mubr.f32.mxu0 0.0
      %v1723 = vand.u32 %v1337, 4294901760
      %v1724 = vsub.f32 %v1337, %v1723
      %1725 = vmatmul.mubr.f32.gmra.mxu0 %v1724
      %v1726 = vpop.f32.mrf.mxu0
      %v1727 = vadd.f32 %v1603, %v1726
      %v1728 = vpop.f32.mrf.mxu0
      %1729 = vmatprep.mubr.f32.mxu0 0.0
      %v1730 = vand.u32 %v1340, 4294901760
      %v1731 = vsub.f32 %v1340, %v1730
      %1732 = vmatmul.mubr.f32.gmra.mxu0 %v1731
      %v1733 = vpop.f32.mrf.mxu0
      %v1734 = vadd.f32 %v1609, %v1733
      %v1735 = vpop.f32.mrf.mxu0
      %1736 = vmatprep.mubr.f32.mxu0 0.0
      %v1737 = vand.u32 %v1343, 4294901760
      %v1738 = vsub.f32 %v1343, %v1737
      %1739 = vmatmul.mubr.f32.gmra.mxu0 %v1738
      %v1740 = vpop.f32.mrf.mxu0
      %v1741 = vadd.f32 %v1615, %v1740
      %v1742 = vpop.f32.mrf.mxu0
      %1743 = vmatprep.mubr.f32.mxu0 0.0
      %v1744 = vand.u32 %v1346, 4294901760
      %v1745 = vsub.f32 %v1346, %v1744
      %1746 = vmatmul.mubr.f32.gmra.mxu0 %v1745
      %v1747 = vpop.f32.mrf.mxu0
      %v1748 = vadd.f32 %v1621, %v1747
      %v1749 = vpop.f32.mrf.mxu0
      %1750 = vmatprep.mubr.f32.mxu0 0.0
      %v1751 = vand.u32 %v1349, 4294901760
      %v1752 = vsub.f32 %v1349, %v1751
      %1753 = vmatmul.mubr.f32.gmra.mxu0 %v1752
      %v1754 = vpop.f32.mrf.mxu0
      %v1755 = vadd.f32 %v1627, %v1754
      %v1756 = vpop.f32.mrf.mxu0
      %1757 = vmatprep.mubr.f32.mxu0 0.0
      %v1758 = vand.u32 %v1352, 4294901760
      %v1759 = vsub.f32 %v1352, %v1758
      %1760 = vmatmul.mubr.f32.gmra.mxu0 %v1759
      %v1761 = vpop.f32.mrf.mxu0
      %v1762 = vadd.f32 %v1633, %v1761
      %v1763 = vpop.f32.mrf.mxu0
      %1764 = vdwg.mxu0
      %1765 = vmatprep.subr.mxu0 0.0
      %1766 = vmatpush1.msra.mxu0 0.0
      %1767 = vmatprep.subr.mxu0 0.0
      %1768 = vmatpush1.msra.mxu0 0.0
      %1769 = vmatprep.subr.mxu0 0.0
      %1770 = vmatpush1.msra.mxu0 0.0
      %1771 = vmatprep.subr.mxu0 0.0
      %1772 = vmatpush1.msra.mxu0 0.0
      %1773 = vmatprep.subr.mxu0 0.0
      %1774 = vmatpush1.msra.mxu0 0.0
      %1775 = vmatprep.subr.mxu0 0.0
      %1776 = vmatpush1.msra.mxu0 0.0
      %1777 = vmatprep.subr.mxu0 0.0
      %1778 = vmatpush1.msra.mxu0 0.0
      %1779 = vmatprep.subr.mxu0 0.0
      %1780 = vmatpush1.msra.mxu0 0.0
      %1781 = vmatprep.subr.mxu0 0.0
      %1782 = vmatpush1.msra.mxu0 0.0
      %1783 = vmatprep.subr.mxu0 0.0
      %1784 = vmatpush1.msra.mxu0 0.0
      %1785 = vmatprep.subr.mxu0 0.0
      %1786 = vmatpush1.msra.mxu0 0.0
      %1787 = vmatprep.subr.mxu0 0.0
      %1788 = vmatpush1.msra.mxu0 0.0
      %1789 = vmatprep.subr.mxu0 0.0
      %v1790 = vand.u32 %v1322, 4294901760
      %1791 = vmatpush1.msra.mxu0 %v1790
      %1792 = vmatprep.subr.mxu0 0.0
      %v1793 = vand.u32 %v1321, 4294901760
      %1794 = vmatpush1.msra.mxu0 %v1793
      %1795 = vmatprep.subr.mxu0 0.0
      %v1796 = vand.u32 %v1320, 4294901760
      %1797 = vmatpush1.msra.mxu0 %v1796
      %1798 = vmatprep.subr.mxu0 0.0
      %v1799 = vand.u32 %v1319, 4294901760
      %1800 = vmatpush1.msra.mxu0 %v1799
      %1801 = vmatprep.subr.mxu0 0.0
      %1802 = vmatpush2.msra.mxu0 0.0
      %1803 = vmatprep.subr.mxu0 0.0
      %1804 = vmatpush2.msra.mxu0 0.0
      %1805 = vmatprep.subr.mxu0 0.0
      %1806 = vmatpush2.msra.mxu0 0.0
      %1807 = vmatprep.subr.mxu0 0.0
      %1808 = vmatpush2.msra.mxu0 0.0
      %1809 = vmatprep.subr.mxu0 0.0
      %1810 = vmatpush2.msra.mxu0 0.0
      %1811 = vmatprep.subr.mxu0 0.0
      %1812 = vmatpush2.msra.mxu0 0.0
      %1813 = vmatprep.subr.mxu0 0.0
      %1814 = vmatpush2.msra.mxu0 0.0
      %1815 = vmatprep.subr.mxu0 0.0
      %1816 = vmatpush2.msra.mxu0 0.0
      %1817 = vmatprep.subr.mxu0 0.0
      %1818 = vmatpush2.msra.mxu0 0.0
      %1819 = vmatprep.subr.mxu0 0.0
      %1820 = vmatpush2.msra.mxu0 0.0
      %1821 = vmatprep.subr.mxu0 0.0
      %1822 = vmatpush2.msra.mxu0 0.0
      %1823 = vmatprep.subr.mxu0 0.0
      %1824 = vmatpush2.msra.mxu0 0.0
      %1825 = vmatprep.subr.mxu0 0.0
      %1826 = vmatpush2.msra.mxu0 0.0
      %1827 = vmatprep.subr.mxu0 0.0
      %1828 = vmatpush2.msra.mxu0 0.0
      %1829 = vmatprep.subr.mxu0 0.0
      %1830 = vmatpush2.msra.mxu0 0.0
      %1831 = vmatprep.subr.mxu0 0.0
      %1832 = vmatpush2.msra.mxu0 0.0
      %1833 = vmatprep.mubr.f32.mxu0 0.0
      %v1834 = vand.u32 %v1331, 4294901760
      %v1835 = vsub.f32 %v1331, %v1834
      %v1836 = vand.u32 %v1835, 4294901760
      %1837 = vmatmul.mubr.f32.gmra.mxu0 %v1836
      %v1838 = vpop.f32.mrf.mxu0
      %v1839 = vadd.f32 %v1713, %v1838
      %v1840 = vpop.f32.mrf.mxu0
      %1841 = vmatprep.mubr.f32.mxu0 0.0
      %v1842 = vand.u32 %v1334, 4294901760
      %v1843 = vsub.f32 %v1334, %v1842
      %v1844 = vand.u32 %v1843, 4294901760
      %1845 = vmatmul.mubr.f32.gmra.mxu0 %v1844
      %v1846 = vpop.f32.mrf.mxu0
      %v1847 = vadd.f32 %v1720, %v1846
      %v1848 = vpop.f32.mrf.mxu0
      %1849 = vmatprep.mubr.f32.mxu0 0.0
      %v1850 = vand.u32 %v1337, 4294901760
      %v1851 = vsub.f32 %v1337, %v1850
      %v1852 = vand.u32 %v1851, 4294901760
      %1853 = vmatmul.mubr.f32.gmra.mxu0 %v1852
      %v1854 = vpop.f32.mrf.mxu0
      %v1855 = vadd.f32 %v1727, %v1854
      %v1856 = vpop.f32.mrf.mxu0
      %1857 = vmatprep.mubr.f32.mxu0 0.0
      %v1858 = vand.u32 %v1340, 4294901760
      %v1859 = vsub.f32 %v1340, %v1858
      %v1860 = vand.u32 %v1859, 4294901760
      %1861 = vmatmul.mubr.f32.gmra.mxu0 %v1860
      %v1862 = vpop.f32.mrf.mxu0
      %v1863 = vadd.f32 %v1734, %v1862
      %v1864 = vpop.f32.mrf.mxu0
      %1865 = vmatprep.mubr.f32.mxu0 0.0
      %v1866 = vand.u32 %v1343, 4294901760
      %v1867 = vsub.f32 %v1343, %v1866
      %v1868 = vand.u32 %v1867, 4294901760
      %1869 = vmatmul.mubr.f32.gmra.mxu0 %v1868
      %v1870 = vpop.f32.mrf.mxu0
      %v1871 = vadd.f32 %v1741, %v1870
      %v1872 = vpop.f32.mrf.mxu0
      %1873 = vmatprep.mubr.f32.mxu0 0.0
      %v1874 = vand.u32 %v1346, 4294901760
      %v1875 = vsub.f32 %v1346, %v1874
      %v1876 = vand.u32 %v1875, 4294901760
      %1877 = vmatmul.mubr.f32.gmra.mxu0 %v1876
      %v1878 = vpop.f32.mrf.mxu0
      %v1879 = vadd.f32 %v1748, %v1878
      %v1880 = vpop.f32.mrf.mxu0
      %1881 = vmatprep.mubr.f32.mxu0 0.0
      %v1882 = vand.u32 %v1349, 4294901760
      %v1883 = vsub.f32 %v1349, %v1882
      %v1884 = vand.u32 %v1883, 4294901760
      %1885 = vmatmul.mubr.f32.gmra.mxu0 %v1884
      %v1886 = vpop.f32.mrf.mxu0
      %v1887 = vadd.f32 %v1755, %v1886
      %v1888 = vpop.f32.mrf.mxu0
      %1889 = vmatprep.mubr.f32.mxu0 0.0
      %v1890 = vand.u32 %v1352, 4294901760
      %v1891 = vsub.f32 %v1352, %v1890
      %v1892 = vand.u32 %v1891, 4294901760
      %1893 = vmatmul.mubr.f32.gmra.mxu0 %v1892
      %v1894 = vpop.f32.mrf.mxu0
      %v1895 = vadd.f32 %v1762, %v1894
      %v1896 = vpop.f32.mrf.mxu0
      %1897 = vdwg.mxu0
      %1898 = vmatprep.subr.mxu0 0.0
      %1899 = vmatpush1.msra.mxu0 0.0
      %1900 = vmatprep.subr.mxu0 0.0
      %1901 = vmatpush1.msra.mxu0 0.0
      %1902 = vmatprep.subr.mxu0 0.0
      %1903 = vmatpush1.msra.mxu0 0.0
      %1904 = vmatprep.subr.mxu0 0.0
      %1905 = vmatpush1.msra.mxu0 0.0
      %1906 = vmatprep.subr.mxu0 0.0
      %1907 = vmatpush1.msra.mxu0 0.0
      %1908 = vmatprep.subr.mxu0 0.0
      %1909 = vmatpush1.msra.mxu0 0.0
      %1910 = vmatprep.subr.mxu0 0.0
      %1911 = vmatpush1.msra.mxu0 0.0
      %1912 = vmatprep.subr.mxu0 0.0
      %1913 = vmatpush1.msra.mxu0 0.0
      %1914 = vmatprep.subr.mxu0 0.0
      %1915 = vmatpush1.msra.mxu0 0.0
      %1916 = vmatprep.subr.mxu0 0.0
      %1917 = vmatpush1.msra.mxu0 0.0
      %1918 = vmatprep.subr.mxu0 0.0
      %1919 = vmatpush1.msra.mxu0 0.0
      %1920 = vmatprep.subr.mxu0 0.0
      %1921 = vmatpush1.msra.mxu0 0.0
      %1922 = vmatprep.subr.mxu0 0.0
      %v1923 = vand.u32 %v1322, 4294901760
      %v1924 = vsub.f32 %v1322, %v1923
      %v1925 = vand.u32 %v1924, 4294901760
      %1926 = vmatpush1.msra.mxu0 %v1925
      %1927 = vmatprep.subr.mxu0 0.0
      %v1928 = vand.u32 %v1321, 4294901760
      %v1929 = vsub.f32 %v1321, %v1928
      %v1930 = vand.u32 %v1929, 4294901760
      %1931 = vmatpush1.msra.mxu0 %v1930
      %1932 = vmatprep.subr.mxu0 0.0
      %v1933 = vand.u32 %v1320, 4294901760
      %v1934 = vsub.f32 %v1320, %v1933
      %v1935 = vand.u32 %v1934, 4294901760
      %1936 = vmatpush1.msra.mxu0 %v1935
      %1937 = vmatprep.subr.mxu0 0.0
      %v1938 = vand.u32 %v1319, 4294901760
      %v1939 = vsub.f32 %v1319, %v1938
      %v1940 = vand.u32 %v1939, 4294901760
      %1941 = vmatpush1.msra.mxu0 %v1940
      %1942 = vmatprep.subr.mxu0 0.0
      %1943 = vmatpush2.msra.mxu0 0.0
      %1944 = vmatprep.subr.mxu0 0.0
      %1945 = vmatpush2.msra.mxu0 0.0
      %1946 = vmatprep.subr.mxu0 0.0
      %1947 = vmatpush2.msra.mxu0 0.0
      %1948 = vmatprep.subr.mxu0 0.0
      %1949 = vmatpush2.msra.mxu0 0.0
      %1950 = vmatprep.subr.mxu0 0.0
      %1951 = vmatpush2.msra.mxu0 0.0
      %1952 = vmatprep.subr.mxu0 0.0
      %1953 = vmatpush2.msra.mxu0 0.0
      %1954 = vmatprep.subr.mxu0 0.0
      %1955 = vmatpush2.msra.mxu0 0.0
      %1956 = vmatprep.subr.mxu0 0.0
      %1957 = vmatpush2.msra.mxu0 0.0
      %1958 = vmatprep.subr.mxu0 0.0
      %1959 = vmatpush2.msra.mxu0 0.0
      %1960 = vmatprep.subr.mxu0 0.0
      %1961 = vmatpush2.msra.mxu0 0.0
      %1962 = vmatprep.subr.mxu0 0.0
      %1963 = vmatpush2.msra.mxu0 0.0
      %1964 = vmatprep.subr.mxu0 0.0
      %1965 = vmatpush2.msra.mxu0 0.0
      %1966 = vmatprep.subr.mxu0 0.0
      %1967 = vmatpush2.msra.mxu0 0.0
      %1968 = vmatprep.subr.mxu0 0.0
      %1969 = vmatpush2.msra.mxu0 0.0
      %1970 = vmatprep.subr.mxu0 0.0
      %1971 = vmatpush2.msra.mxu0 0.0
      %1972 = vmatprep.subr.mxu0 0.0
      %1973 = vmatpush2.msra.mxu0 0.0
      %1974 = vmatprep.mubr.f32.mxu0 0.0
      %v1975 = vand.u32 %v1331, 4294901760
      %1976 = vmatmul.mubr.f32.gmra.mxu0 %v1975
      %v1977 = vpop.f32.mrf.mxu0
      %v1978 = vadd.f32 %v1839, %v1977
      %v1979 = vpop.f32.mrf.mxu0
      %1980 = vmatprep.mubr.f32.mxu0 0.0
      %v1981 = vand.u32 %v1334, 4294901760
      %1982 = vmatmul.mubr.f32.gmra.mxu0 %v1981
      %v1983 = vpop.f32.mrf.mxu0
      %v1984 = vadd.f32 %v1847, %v1983
      %v1985 = vpop.f32.mrf.mxu0
      %1986 = vmatprep.mubr.f32.mxu0 0.0
      %v1987 = vand.u32 %v1337, 4294901760
      %1988 = vmatmul.mubr.f32.gmra.mxu0 %v1987
      %v1989 = vpop.f32.mrf.mxu0
      %v1990 = vadd.f32 %v1855, %v1989
      %v1991 = vpop.f32.mrf.mxu0
      %1992 = vmatprep.mubr.f32.mxu0 0.0
      %v1993 = vand.u32 %v1340, 4294901760
      %1994 = vmatmul.mubr.f32.gmra.mxu0 %v1993
      %v1995 = vpop.f32.mrf.mxu0
      %v1996 = vadd.f32 %v1863, %v1995
      %v1997 = vpop.f32.mrf.mxu0
      %1998 = vmatprep.mubr.f32.mxu0 0.0
      %v1999 = vand.u32 %v1343, 4294901760
      %2000 = vmatmul.mubr.f32.gmra.mxu0 %v1999
      %v2001 = vpop.f32.mrf.mxu0
      %v2002 = vadd.f32 %v1871, %v2001
      %v2003 = vpop.f32.mrf.mxu0
      %2004 = vmatprep.mubr.f32.mxu0 0.0
      %v2005 = vand.u32 %v1346, 4294901760
      %2006 = vmatmul.mubr.f32.gmra.mxu0 %v2005
      %v2007 = vpop.f32.mrf.mxu0
      %v2008 = vadd.f32 %v1879, %v2007
      %v2009 = vpop.f32.mrf.mxu0
      %2010 = vmatprep.mubr.f32.mxu0 0.0
      %v2011 = vand.u32 %v1349, 4294901760
      %2012 = vmatmul.mubr.f32.gmra.mxu0 %v2011
      %v2013 = vpop.f32.mrf.mxu0
      %v2014 = vadd.f32 %v1887, %v2013
      %v2015 = vpop.f32.mrf.mxu0
      %2016 = vmatprep.mubr.f32.mxu0 0.0
      %v2017 = vand.u32 %v1352, 4294901760
      %2018 = vmatmul.mubr.f32.gmra.mxu0 %v2017
      %v2019 = vpop.f32.mrf.mxu0
      %v2020 = vadd.f32 %v1895, %v2019
      %v2021 = vpop.f32.mrf.mxu0
      %2022 = vdwg.mxu0
      %2023 = vmatprep.subr.mxu0 0.0
      %2024 = vmatpush1.msra.mxu0 0.0
      %2025 = vmatprep.subr.mxu0 0.0
      %2026 = vmatpush1.msra.mxu0 0.0
      %2027 = vmatprep.subr.mxu0 0.0
      %2028 = vmatpush1.msra.mxu0 0.0
      %2029 = vmatprep.subr.mxu0 0.0
      %2030 = vmatpush1.msra.mxu0 0.0
      %2031 = vmatprep.subr.mxu0 0.0
      %2032 = vmatpush1.msra.mxu0 0.0
      %2033 = vmatprep.subr.mxu0 0.0
      %2034 = vmatpush1.msra.mxu0 0.0
      %2035 = vmatprep.subr.mxu0 0.0
      %2036 = vmatpush1.msra.mxu0 0.0
      %2037 = vmatprep.subr.mxu0 0.0
      %2038 = vmatpush1.msra.mxu0 0.0
      %2039 = vmatprep.subr.mxu0 0.0
      %2040 = vmatpush1.msra.mxu0 0.0
      %2041 = vmatprep.subr.mxu0 0.0
      %2042 = vmatpush1.msra.mxu0 0.0
      %2043 = vmatprep.subr.mxu0 0.0
      %2044 = vmatpush1.msra.mxu0 0.0
      %2045 = vmatprep.subr.mxu0 0.0
      %2046 = vmatpush1.msra.mxu0 0.0
      %2047 = vmatprep.subr.mxu0 0.0
      %v2048 = vand.u32 %v1322, 4294901760
      %2049 = vmatpush1.msra.mxu0 %v2048
      %2050 = vmatprep.subr.mxu0 0.0
      %v2051 = vand.u32 %v1321, 4294901760
      %2052 = vmatpush1.msra.mxu0 %v2051
      %2053 = vmatprep.subr.mxu0 0.0
      %v2054 = vand.u32 %v1320, 4294901760
      %2055 = vmatpush1.msra.mxu0 %v2054
      %2056 = vmatprep.subr.mxu0 0.0
      %v2057 = vand.u32 %v1319, 4294901760
      %2058 = vmatpush1.msra.mxu0 %v2057
      %2059 = vmatprep.subr.mxu0 0.0
      %2060 = vmatpush2.msra.mxu0 0.0
      %2061 = vmatprep.subr.mxu0 0.0
      %2062 = vmatpush2.msra.mxu0 0.0
      %2063 = vmatprep.subr.mxu0 0.0
      %2064 = vmatpush2.msra.mxu0 0.0
      %2065 = vmatprep.subr.mxu0 0.0
      %2066 = vmatpush2.msra.mxu0 0.0
      %2067 = vmatprep.subr.mxu0 0.0
      %2068 = vmatpush2.msra.mxu0 0.0
      %2069 = vmatprep.subr.mxu0 0.0
      %2070 = vmatpush2.msra.mxu0 0.0
      %2071 = vmatprep.subr.mxu0 0.0
      %2072 = vmatpush2.msra.mxu0 0.0
      %2073 = vmatprep.subr.mxu0 0.0
      %2074 = vmatpush2.msra.mxu0 0.0
      %2075 = vmatprep.subr.mxu0 0.0
      %2076 = vmatpush2.msra.mxu0 0.0
      %2077 = vmatprep.subr.mxu0 0.0
      %2078 = vmatpush2.msra.mxu0 0.0
      %2079 = vmatprep.subr.mxu0 0.0
      %2080 = vmatpush2.msra.mxu0 0.0
      %2081 = vmatprep.subr.mxu0 0.0
      %2082 = vmatpush2.msra.mxu0 0.0
      %2083 = vmatprep.subr.mxu0 0.0
      %2084 = vmatpush2.msra.mxu0 0.0
      %2085 = vmatprep.subr.mxu0 0.0
      %2086 = vmatpush2.msra.mxu0 0.0
      %2087 = vmatprep.subr.mxu0 0.0
      %2088 = vmatpush2.msra.mxu0 0.0
      %2089 = vmatprep.subr.mxu0 0.0
      %2090 = vmatpush2.msra.mxu0 0.0
      %2091 = vmatprep.mubr.f32.mxu0 0.0
      %v2092 = vand.u32 %v1331, 4294901760
      %2093 = vmatmul.mubr.f32.gmra.mxu0 %v2092
      %v2094 = vpop.f32.mrf.mxu0
      %v2095 = vadd.f32 %v1978, %v2094
      %v2096 = vpop.f32.mrf.mxu0
      %2097 = vmatprep.mubr.f32.mxu0 0.0
      %v2098 = vand.u32 %v1334, 4294901760
      %2099 = vmatmul.mubr.f32.gmra.mxu0 %v2098
      %v2100 = vpop.f32.mrf.mxu0
      %v2101 = vadd.f32 %v1984, %v2100
      %v2102 = vpop.f32.mrf.mxu0
      %2103 = vmatprep.mubr.f32.mxu0 0.0
      %v2104 = vand.u32 %v1337, 4294901760
      %2105 = vmatmul.mubr.f32.gmra.mxu0 %v2104
      %v2106 = vpop.f32.mrf.mxu0
      %v2107 = vadd.f32 %v1990, %v2106
      %v2108 = vpop.f32.mrf.mxu0
      %2109 = vmatprep.mubr.f32.mxu0 0.0
      %v2110 = vand.u32 %v1340, 4294901760
      %2111 = vmatmul.mubr.f32.gmra.mxu0 %v2110
      %v2112 = vpop.f32.mrf.mxu0
      %v2113 = vadd.f32 %v1996, %v2112
      %v2114 = vpop.f32.mrf.mxu0
      %2115 = vmatprep.mubr.f32.mxu0 0.0
      %v2116 = vand.u32 %v1343, 4294901760
      %2117 = vmatmul.mubr.f32.gmra.mxu0 %v2116
      %v2118 = vpop.f32.mrf.mxu0
      %v2119 = vadd.f32 %v2002, %v2118
      %v2120 = vpop.f32.mrf.mxu0
      %2121 = vmatprep.mubr.f32.mxu0 0.0
      %v2122 = vand.u32 %v1346, 4294901760
      %2123 = vmatmul.mubr.f32.gmra.mxu0 %v2122
      %v2124 = vpop.f32.mrf.mxu0
      %v2125 = vadd.f32 %v2008, %v2124
      %v2126 = vpop.f32.mrf.mxu0
      %2127 = vmatprep.mubr.f32.mxu0 0.0
      %v2128 = vand.u32 %v1349, 4294901760
      %2129 = vmatmul.mubr.f32.gmra.mxu0 %v2128
      %v2130 = vpop.f32.mrf.mxu0
      %v2131 = vadd.f32 %v2014, %v2130
      %v2132 = vpop.f32.mrf.mxu0
      %2133 = vmatprep.mubr.f32.mxu0 0.0
      %v2134 = vand.u32 %v1352, 4294901760
      %2135 = vmatmul.mubr.f32.gmra.mxu0 %v2134
      %v2136 = vpop.f32.mrf.mxu0
      %v2137 = vadd.f32 %v2020, %v2136
      %v2138 = vpop.f32.mrf.mxu0
      %2139 = vdwg.mxu0
      %2148 = vrot.lane.b32.xlu0 %v2095, 112
      %v2149 = vpop.permute.xlu0 %2148
      %2150 = vrot.lane.b32.xlu0 %v2101, 112
      %v2151 = vpop.permute.xlu0 %2150
      %2152 = vrot.lane.b32.xlu0 %v2107, 112
      %v2153 = vpop.permute.xlu0 %2152
      %2154 = vrot.lane.b32.xlu0 %v2113, 112
      %v2155 = vpop.permute.xlu0 %2154
      %2156 = vrot.lane.b32.xlu0 %v2119, 112
      %v2157 = vpop.permute.xlu0 %2156
      %2158 = vrot.lane.b32.xlu0 %v2125, 112
      %v2159 = vpop.permute.xlu0 %2158
      %2160 = vrot.lane.b32.xlu0 %v2131, 112
      %v2161 = vpop.permute.xlu0 %2160
      %2162 = vrot.lane.b32.xlu0 %v2137, 112
      %v2163 = vpop.permute.xlu0 %2162
      %vm2164 = vcmask 130048
      %v2165 = vsel %vm2164, %v2095, 0
      %v2167 = vsel %vm2164, %v2101, 0
      %v2169 = vsel %vm2164, %v2107, 0
      %v2171 = vsel %vm2164, %v2113, 0
      %v2173 = vsel %vm2164, %v2119, 0
      %v2175 = vsel %vm2164, %v2125, 0
      %v2177 = vsel %vm2164, %v2131, 0
      %v2179 = vsel %vm2164, %v2137, 0
      %v2181 = vsel %vm2164, %v2149, 0
      %v2183 = vsel %vm2164, %v2151, 0
      %v2185 = vsel %vm2164, %v2153, 0
      %v2187 = vsel %vm2164, %v2155, 0
      %v2189 = vsel %vm2164, %v2157, 0
      %v2191 = vsel %vm2164, %v2159, 0
      %v2193 = vsel %vm2164, %v2161, 0
      %v2195 = vsel %vm2164, %v2163, 0
      %2197 = vmatprep.subr.mxu0 0.0
      %2198 = vmatpush1.xpose.msra.mxu0 0.0
      %2199 = vmatprep.subr.mxu0 0.0
      %2200 = vmatpush1.xpose.msra.mxu0 0.0
      %2201 = vmatprep.subr.mxu0 0.0
      %2202 = vmatpush1.xpose.msra.mxu0 0.0
      %2203 = vmatprep.subr.mxu0 0.0
      %2204 = vmatpush1.xpose.msra.mxu0 0.0
      %2205 = vmatprep.subr.mxu0 0.0
      %2206 = vmatpush1.xpose.msra.mxu0 0.0
      %2207 = vmatprep.subr.mxu0 0.0
      %2208 = vmatpush1.xpose.msra.mxu0 0.0
      %2209 = vmatprep.subr.mxu0 0.0
      %2210 = vmatpush1.xpose.msra.mxu0 0.0
      %2211 = vmatprep.subr.mxu0 0.0
      %2212 = vmatpush1.xpose.msra.mxu0 0.0
      %2213 = vmatprep.subr.mxu0 0.0
      %v2214 = vand.u32 %v2195, 4294901760
      %2215 = vmatpush1.xpose.msra.mxu0 %v2214
      %2216 = vmatprep.subr.mxu0 0.0
      %v2217 = vand.u32 %v2193, 4294901760
      %2218 = vmatpush1.xpose.msra.mxu0 %v2217
      %2219 = vmatprep.subr.mxu0 0.0
      %v2220 = vand.u32 %v2191, 4294901760
      %2221 = vmatpush1.xpose.msra.mxu0 %v2220
      %2222 = vmatprep.subr.mxu0 0.0
      %v2223 = vand.u32 %v2189, 4294901760
      %2224 = vmatpush1.xpose.msra.mxu0 %v2223
      %2225 = vmatprep.subr.mxu0 0.0
      %v2226 = vand.u32 %v2187, 4294901760
      %2227 = vmatpush1.xpose.msra.mxu0 %v2226
      %2228 = vmatprep.subr.mxu0 0.0
      %v2229 = vand.u32 %v2185, 4294901760
      %2230 = vmatpush1.xpose.msra.mxu0 %v2229
      %2231 = vmatprep.subr.mxu0 0.0
      %v2232 = vand.u32 %v2183, 4294901760
      %2233 = vmatpush1.xpose.msra.mxu0 %v2232
      %2234 = vmatprep.subr.mxu0 0.0
      %v2235 = vand.u32 %v2181, 4294901760
      %2236 = vmatpush1.xpose.msra.mxu0 %v2235
      %2237 = vmatprep.subr.mxu0 0.0
      %2238 = vmatpush2.xpose.msra.mxu0 0.0
      %2239 = vmatprep.subr.mxu0 0.0
      %2240 = vmatpush2.xpose.msra.mxu0 0.0
      %2241 = vmatprep.subr.mxu0 0.0
      %2242 = vmatpush2.xpose.msra.mxu0 0.0
      %2243 = vmatprep.subr.mxu0 0.0
      %2244 = vmatpush2.xpose.msra.mxu0 0.0
      %2245 = vmatprep.subr.mxu0 0.0
      %2246 = vmatpush2.xpose.msra.mxu0 0.0
      %2247 = vmatprep.subr.mxu0 0.0
      %2248 = vmatpush2.xpose.msra.mxu0 0.0
      %2249 = vmatprep.subr.mxu0 0.0
      %2250 = vmatpush2.xpose.msra.mxu0 0.0
      %2251 = vmatprep.subr.mxu0 0.0
      %2252 = vmatpush2.xpose.msra.mxu0 0.0
      %2253 = vmatprep.subr.mxu0 0.0
      %2254 = vmatpush2.xpose.msra.mxu0 0.0
      %2255 = vmatprep.subr.mxu0 0.0
      %2256 = vmatpush2.xpose.msra.mxu0 0.0
      %2257 = vmatprep.subr.mxu0 0.0
      %2258 = vmatpush2.xpose.msra.mxu0 0.0
      %2259 = vmatprep.subr.mxu0 0.0
      %2260 = vmatpush2.xpose.msra.mxu0 0.0
      %2261 = vmatprep.subr.mxu0 0.0
      %2262 = vmatpush2.xpose.msra.mxu0 0.0
      %2263 = vmatprep.subr.mxu0 0.0
      %2264 = vmatpush2.xpose.msra.mxu0 0.0
      %2265 = vmatprep.subr.mxu0 0.0
      %2266 = vmatpush2.xpose.msra.mxu0 0.0
      %2267 = vmatprep.subr.mxu0 0.0
      %2268 = vmatpush2.xpose.msra.mxu0 0.0
      %2269 = vmatprep.mubr.f32.mxu0 0.0
      %v2270 = vand.u32 %v2165, 4294901760
      %v2271 = vsub.f32 %v2165, %v2270
      %v2272 = vand.u32 %v2271, 4294901760
      %v2273 = vsub.f32 %v2271, %v2272
      %v2274 = vand.u32 %v2273, 4294901760
      %2275 = vmatmul.mubr.f32.gmra.mxu0 %v2274
      %v2276 = vpop.f32.mrf.mxu0
      %v2277 = vadd.f32 0.0, %v2276
      %v2278 = vpop.f32.mrf.mxu0
      %2279 = vmatprep.mubr.f32.mxu0 0.0
      %v2280 = vand.u32 %v2167, 4294901760
      %v2281 = vsub.f32 %v2167, %v2280
      %v2282 = vand.u32 %v2281, 4294901760
      %v2283 = vsub.f32 %v2281, %v2282
      %v2284 = vand.u32 %v2283, 4294901760
      %2285 = vmatmul.mubr.f32.gmra.mxu0 %v2284
      %v2286 = vpop.f32.mrf.mxu0
      %v2287 = vadd.f32 0.0, %v2286
      %v2288 = vpop.f32.mrf.mxu0
      %2289 = vmatprep.mubr.f32.mxu0 0.0
      %v2290 = vand.u32 %v2169, 4294901760
      %v2291 = vsub.f32 %v2169, %v2290
      %v2292 = vand.u32 %v2291, 4294901760
      %v2293 = vsub.f32 %v2291, %v2292
      %v2294 = vand.u32 %v2293, 4294901760
      %2295 = vmatmul.mubr.f32.gmra.mxu0 %v2294
      %v2296 = vpop.f32.mrf.mxu0
      %v2297 = vadd.f32 0.0, %v2296
      %v2298 = vpop.f32.mrf.mxu0
      %2299 = vmatprep.mubr.f32.mxu0 0.0
      %v2300 = vand.u32 %v2171, 4294901760
      %v2301 = vsub.f32 %v2171, %v2300
      %v2302 = vand.u32 %v2301, 4294901760
      %v2303 = vsub.f32 %v2301, %v2302
      %v2304 = vand.u32 %v2303, 4294901760
      %2305 = vmatmul.mubr.f32.gmra.mxu0 %v2304
      %v2306 = vpop.f32.mrf.mxu0
      %v2307 = vadd.f32 0.0, %v2306
      %v2308 = vpop.f32.mrf.mxu0
      %2309 = vmatprep.mubr.f32.mxu0 0.0
      %v2310 = vand.u32 %v2173, 4294901760
      %v2311 = vsub.f32 %v2173, %v2310
      %v2312 = vand.u32 %v2311, 4294901760
      %v2313 = vsub.f32 %v2311, %v2312
      %v2314 = vand.u32 %v2313, 4294901760
      %2315 = vmatmul.mubr.f32.gmra.mxu0 %v2314
      %v2316 = vpop.f32.mrf.mxu0
      %v2317 = vadd.f32 0.0, %v2316
      %v2318 = vpop.f32.mrf.mxu0
      %2319 = vmatprep.mubr.f32.mxu0 0.0
      %v2320 = vand.u32 %v2175, 4294901760
      %v2321 = vsub.f32 %v2175, %v2320
      %v2322 = vand.u32 %v2321, 4294901760
      %v2323 = vsub.f32 %v2321, %v2322
      %v2324 = vand.u32 %v2323, 4294901760
      %2325 = vmatmul.mubr.f32.gmra.mxu0 %v2324
      %v2326 = vpop.f32.mrf.mxu0
      %v2327 = vadd.f32 0.0, %v2326
      %v2328 = vpop.f32.mrf.mxu0
      %2329 = vmatprep.mubr.f32.mxu0 0.0
      %v2330 = vand.u32 %v2177, 4294901760
      %v2331 = vsub.f32 %v2177, %v2330
      %v2332 = vand.u32 %v2331, 4294901760
      %v2333 = vsub.f32 %v2331, %v2332
      %v2334 = vand.u32 %v2333, 4294901760
      %2335 = vmatmul.mubr.f32.gmra.mxu0 %v2334
      %v2336 = vpop.f32.mrf.mxu0
      %v2337 = vadd.f32 0.0, %v2336
      %v2338 = vpop.f32.mrf.mxu0
      %2339 = vmatprep.mubr.f32.mxu0 0.0
      %v2340 = vand.u32 %v2179, 4294901760
      %v2341 = vsub.f32 %v2179, %v2340
      %v2342 = vand.u32 %v2341, 4294901760
      %v2343 = vsub.f32 %v2341, %v2342
      %v2344 = vand.u32 %v2343, 4294901760
      %2345 = vmatmul.mubr.f32.gmra.mxu0 %v2344
      %v2346 = vpop.f32.mrf.mxu0
      %v2347 = vadd.f32 0.0, %v2346
      %v2348 = vpop.f32.mrf.mxu0
      %2349 = vdwg.mxu0
      %2350 = vmatprep.subr.mxu0 0.0
      %2351 = vmatpush1.xpose.msra.mxu0 0.0
      %2352 = vmatprep.subr.mxu0 0.0
      %2353 = vmatpush1.xpose.msra.mxu0 0.0
      %2354 = vmatprep.subr.mxu0 0.0
      %2355 = vmatpush1.xpose.msra.mxu0 0.0
      %2356 = vmatprep.subr.mxu0 0.0
      %2357 = vmatpush1.xpose.msra.mxu0 0.0
      %2358 = vmatprep.subr.mxu0 0.0
      %2359 = vmatpush1.xpose.msra.mxu0 0.0
      %2360 = vmatprep.subr.mxu0 0.0
      %2361 = vmatpush1.xpose.msra.mxu0 0.0
      %2362 = vmatprep.subr.mxu0 0.0
      %2363 = vmatpush1.xpose.msra.mxu0 0.0
      %2364 = vmatprep.subr.mxu0 0.0
      %2365 = vmatpush1.xpose.msra.mxu0 0.0
      %2366 = vmatprep.subr.mxu0 0.0
      %v2367 = vand.u32 %v2195, 4294901760
      %v2368 = vsub.f32 %v2195, %v2367
      %v2369 = vand.u32 %v2368, 4294901760
      %v2370 = vsub.f32 %v2368, %v2369
      %v2371 = vand.u32 %v2370, 4294901760
      %2372 = vmatpush1.xpose.msra.mxu0 %v2371
      %2373 = vmatprep.subr.mxu0 0.0
      %v2374 = vand.u32 %v2193, 4294901760
      %v2375 = vsub.f32 %v2193, %v2374
      %v2376 = vand.u32 %v2375, 4294901760
      %v2377 = vsub.f32 %v2375, %v2376
      %v2378 = vand.u32 %v2377, 4294901760
      %2379 = vmatpush1.xpose.msra.mxu0 %v2378
      %2380 = vmatprep.subr.mxu0 0.0
      %v2381 = vand.u32 %v2191, 4294901760
      %v2382 = vsub.f32 %v2191, %v2381
      %v2383 = vand.u32 %v2382, 4294901760
      %v2384 = vsub.f32 %v2382, %v2383
      %v2385 = vand.u32 %v2384, 4294901760
      %2386 = vmatpush1.xpose.msra.mxu0 %v2385
      %2387 = vmatprep.subr.mxu0 0.0
      %v2388 = vand.u32 %v2189, 4294901760
      %v2389 = vsub.f32 %v2189, %v2388
      %v2390 = vand.u32 %v2389, 4294901760
      %v2391 = vsub.f32 %v2389, %v2390
      %v2392 = vand.u32 %v2391, 4294901760
      %2393 = vmatpush1.xpose.msra.mxu0 %v2392
      %2394 = vmatprep.subr.mxu0 0.0
      %v2395 = vand.u32 %v2187, 4294901760
      %v2396 = vsub.f32 %v2187, %v2395
      %v2397 = vand.u32 %v2396, 4294901760
      %v2398 = vsub.f32 %v2396, %v2397
      %v2399 = vand.u32 %v2398, 4294901760
      %2400 = vmatpush1.xpose.msra.mxu0 %v2399
      %2401 = vmatprep.subr.mxu0 0.0
      %v2402 = vand.u32 %v2185, 4294901760
      %v2403 = vsub.f32 %v2185, %v2402
      %v2404 = vand.u32 %v2403, 4294901760
      %v2405 = vsub.f32 %v2403, %v2404
      %v2406 = vand.u32 %v2405, 4294901760
      %2407 = vmatpush1.xpose.msra.mxu0 %v2406
      %2408 = vmatprep.subr.mxu0 0.0
      %v2409 = vand.u32 %v2183, 4294901760
      %v2410 = vsub.f32 %v2183, %v2409
      %v2411 = vand.u32 %v2410, 4294901760
      %v2412 = vsub.f32 %v2410, %v2411
      %v2413 = vand.u32 %v2412, 4294901760
      %2414 = vmatpush1.xpose.msra.mxu0 %v2413
      %2415 = vmatprep.subr.mxu0 0.0
      %v2416 = vand.u32 %v2181, 4294901760
      %v2417 = vsub.f32 %v2181, %v2416
      %v2418 = vand.u32 %v2417, 4294901760
      %v2419 = vsub.f32 %v2417, %v2418
      %v2420 = vand.u32 %v2419, 4294901760
      %2421 = vmatpush1.xpose.msra.mxu0 %v2420
      %2422 = vmatprep.subr.mxu0 0.0
      %2423 = vmatpush2.xpose.msra.mxu0 0.0
      %2424 = vmatprep.subr.mxu0 0.0
      %2425 = vmatpush2.xpose.msra.mxu0 0.0
      %2426 = vmatprep.subr.mxu0 0.0
      %2427 = vmatpush2.xpose.msra.mxu0 0.0
      %2428 = vmatprep.subr.mxu0 0.0
      %2429 = vmatpush2.xpose.msra.mxu0 0.0
      %2430 = vmatprep.subr.mxu0 0.0
      %2431 = vmatpush2.xpose.msra.mxu0 0.0
      %2432 = vmatprep.subr.mxu0 0.0
      %2433 = vmatpush2.xpose.msra.mxu0 0.0
      %2434 = vmatprep.subr.mxu0 0.0
      %2435 = vmatpush2.xpose.msra.mxu0 0.0
      %2436 = vmatprep.subr.mxu0 0.0
      %2437 = vmatpush2.xpose.msra.mxu0 0.0
      %2438 = vmatprep.subr.mxu0 0.0
      %2439 = vmatpush2.xpose.msra.mxu0 0.0
      %2440 = vmatprep.subr.mxu0 0.0
      %2441 = vmatpush2.xpose.msra.mxu0 0.0
      %2442 = vmatprep.subr.mxu0 0.0
      %2443 = vmatpush2.xpose.msra.mxu0 0.0
      %2444 = vmatprep.subr.mxu0 0.0
      %2445 = vmatpush2.xpose.msra.mxu0 0.0
      %2446 = vmatprep.subr.mxu0 0.0
      %2447 = vmatpush2.xpose.msra.mxu0 0.0
      %2448 = vmatprep.subr.mxu0 0.0
      %2449 = vmatpush2.xpose.msra.mxu0 0.0
      %2450 = vmatprep.subr.mxu0 0.0
      %2451 = vmatpush2.xpose.msra.mxu0 0.0
      %2452 = vmatprep.subr.mxu0 0.0
      %2453 = vmatpush2.xpose.msra.mxu0 0.0
      %2454 = vmatprep.mubr.f32.mxu0 0.0
      %v2455 = vand.u32 %v2165, 4294901760
      %2456 = vmatmul.mubr.f32.gmra.mxu0 %v2455
      %v2457 = vpop.f32.mrf.mxu0
      %v2458 = vadd.f32 %v2277, %v2457
      %v2459 = vpop.f32.mrf.mxu0
      %2460 = vmatprep.mubr.f32.mxu0 0.0
      %v2461 = vand.u32 %v2167, 4294901760
      %2462 = vmatmul.mubr.f32.gmra.mxu0 %v2461
      %v2463 = vpop.f32.mrf.mxu0
      %v2464 = vadd.f32 %v2287, %v2463
      %v2465 = vpop.f32.mrf.mxu0
      %2466 = vmatprep.mubr.f32.mxu0 0.0
      %v2467 = vand.u32 %v2169, 4294901760
      %2468 = vmatmul.mubr.f32.gmra.mxu0 %v2467
      %v2469 = vpop.f32.mrf.mxu0
      %v2470 = vadd.f32 %v2297, %v2469
      %v2471 = vpop.f32.mrf.mxu0
      %2472 = vmatprep.mubr.f32.mxu0 0.0
      %v2473 = vand.u32 %v2171, 4294901760
      %2474 = vmatmul.mubr.f32.gmra.mxu0 %v2473
      %v2475 = vpop.f32.mrf.mxu0
      %v2476 = vadd.f32 %v2307, %v2475
      %v2477 = vpop.f32.mrf.mxu0
      %2478 = vmatprep.mubr.f32.mxu0 0.0
      %v2479 = vand.u32 %v2173, 4294901760
      %2480 = vmatmul.mubr.f32.gmra.mxu0 %v2479
      %v2481 = vpop.f32.mrf.mxu0
      %v2482 = vadd.f32 %v2317, %v2481
      %v2483 = vpop.f32.mrf.mxu0
      %2484 = vmatprep.mubr.f32.mxu0 0.0
      %v2485 = vand.u32 %v2175, 4294901760
      %2486 = vmatmul.mubr.f32.gmra.mxu0 %v2485
      %v2487 = vpop.f32.mrf.mxu0
      %v2488 = vadd.f32 %v2327, %v2487
      %v2489 = vpop.f32.mrf.mxu0
      %2490 = vmatprep.mubr.f32.mxu0 0.0
      %v2491 = vand.u32 %v2177, 4294901760
      %2492 = vmatmul.mubr.f32.gmra.mxu0 %v2491
      %v2493 = vpop.f32.mrf.mxu0
      %v2494 = vadd.f32 %v2337, %v2493
      %v2495 = vpop.f32.mrf.mxu0
      %2496 = vmatprep.mubr.f32.mxu0 0.0
      %v2497 = vand.u32 %v2179, 4294901760
      %2498 = vmatmul.mubr.f32.gmra.mxu0 %v2497
      %v2499 = vpop.f32.mrf.mxu0
      %v2500 = vadd.f32 %v2347, %v2499
      %v2501 = vpop.f32.mrf.mxu0
      %2502 = vdwg.mxu0
      %2503 = vmatprep.subr.mxu0 0.0
      %2504 = vmatpush1.xpose.msra.mxu0 0.0
      %2505 = vmatprep.subr.mxu0 0.0
      %2506 = vmatpush1.xpose.msra.mxu0 0.0
      %2507 = vmatprep.subr.mxu0 0.0
      %2508 = vmatpush1.xpose.msra.mxu0 0.0
      %2509 = vmatprep.subr.mxu0 0.0
      %2510 = vmatpush1.xpose.msra.mxu0 0.0
      %2511 = vmatprep.subr.mxu0 0.0
      %2512 = vmatpush1.xpose.msra.mxu0 0.0
      %2513 = vmatprep.subr.mxu0 0.0
      %2514 = vmatpush1.xpose.msra.mxu0 0.0
      %2515 = vmatprep.subr.mxu0 0.0
      %2516 = vmatpush1.xpose.msra.mxu0 0.0
      %2517 = vmatprep.subr.mxu0 0.0
      %2518 = vmatpush1.xpose.msra.mxu0 0.0
      %2519 = vmatprep.subr.mxu0 0.0
      %v2520 = vand.u32 %v2195, 4294901760
      %v2521 = vsub.f32 %v2195, %v2520
      %2522 = vmatpush1.xpose.msra.mxu0 %v2521
      %2523 = vmatprep.subr.mxu0 0.0
      %v2524 = vand.u32 %v2193, 4294901760
      %v2525 = vsub.f32 %v2193, %v2524
      %2526 = vmatpush1.xpose.msra.mxu0 %v2525
      %2527 = vmatprep.subr.mxu0 0.0
      %v2528 = vand.u32 %v2191, 4294901760
      %v2529 = vsub.f32 %v2191, %v2528
      %2530 = vmatpush1.xpose.msra.mxu0 %v2529
      %2531 = vmatprep.subr.mxu0 0.0
      %v2532 = vand.u32 %v2189, 4294901760
      %v2533 = vsub.f32 %v2189, %v2532
      %2534 = vmatpush1.xpose.msra.mxu0 %v2533
      %2535 = vmatprep.subr.mxu0 0.0
      %v2536 = vand.u32 %v2187, 4294901760
      %v2537 = vsub.f32 %v2187, %v2536
      %2538 = vmatpush1.xpose.msra.mxu0 %v2537
      %2539 = vmatprep.subr.mxu0 0.0
      %v2540 = vand.u32 %v2185, 4294901760
      %v2541 = vsub.f32 %v2185, %v2540
      %2542 = vmatpush1.xpose.msra.mxu0 %v2541
      %2543 = vmatprep.subr.mxu0 0.0
      %v2544 = vand.u32 %v2183, 4294901760
      %v2545 = vsub.f32 %v2183, %v2544
      %2546 = vmatpush1.xpose.msra.mxu0 %v2545
      %2547 = vmatprep.subr.mxu0 0.0
      %v2548 = vand.u32 %v2181, 4294901760
      %v2549 = vsub.f32 %v2181, %v2548
      %2550 = vmatpush1.xpose.msra.mxu0 %v2549
      %2551 = vmatprep.subr.mxu0 0.0
      %2552 = vmatpush2.xpose.msra.mxu0 0.0
      %2553 = vmatprep.subr.mxu0 0.0
      %2554 = vmatpush2.xpose.msra.mxu0 0.0
      %2555 = vmatprep.subr.mxu0 0.0
      %2556 = vmatpush2.xpose.msra.mxu0 0.0
      %2557 = vmatprep.subr.mxu0 0.0
      %2558 = vmatpush2.xpose.msra.mxu0 0.0
      %2559 = vmatprep.subr.mxu0 0.0
      %2560 = vmatpush2.xpose.msra.mxu0 0.0
      %2561 = vmatprep.subr.mxu0 0.0
      %2562 = vmatpush2.xpose.msra.mxu0 0.0
      %2563 = vmatprep.subr.mxu0 0.0
      %2564 = vmatpush2.xpose.msra.mxu0 0.0
      %2565 = vmatprep.subr.mxu0 0.0
      %2566 = vmatpush2.xpose.msra.mxu0 0.0
      %2567 = vmatprep.subr.mxu0 0.0
      %2568 = vmatpush2.xpose.msra.mxu0 0.0
      %2569 = vmatprep.subr.mxu0 0.0
      %2570 = vmatpush2.xpose.msra.mxu0 0.0
      %2571 = vmatprep.subr.mxu0 0.0
      %2572 = vmatpush2.xpose.msra.mxu0 0.0
      %2573 = vmatprep.subr.mxu0 0.0
      %2574 = vmatpush2.xpose.msra.mxu0 0.0
      %2575 = vmatprep.subr.mxu0 0.0
      %2576 = vmatpush2.xpose.msra.mxu0 0.0
      %2577 = vmatprep.subr.mxu0 0.0
      %2578 = vmatpush2.xpose.msra.mxu0 0.0
      %2579 = vmatprep.subr.mxu0 0.0
      %2580 = vmatpush2.xpose.msra.mxu0 0.0
      %2581 = vmatprep.subr.mxu0 0.0
      %2582 = vmatpush2.xpose.msra.mxu0 0.0
      %2583 = vmatprep.mubr.f32.mxu0 0.0
      %v2584 = vand.u32 %v2165, 4294901760
      %v2585 = vsub.f32 %v2165, %v2584
      %2586 = vmatmul.mubr.f32.gmra.mxu0 %v2585
      %v2587 = vpop.f32.mrf.mxu0
      %v2588 = vadd.f32 %v2458, %v2587
      %v2589 = vpop.f32.mrf.mxu0
      %2590 = vmatprep.mubr.f32.mxu0 0.0
      %v2591 = vand.u32 %v2167, 4294901760
      %v2592 = vsub.f32 %v2167, %v2591
      %2593 = vmatmul.mubr.f32.gmra.mxu0 %v2592
      %v2594 = vpop.f32.mrf.mxu0
      %v2595 = vadd.f32 %v2464, %v2594
      %v2596 = vpop.f32.mrf.mxu0
      %2597 = vmatprep.mubr.f32.mxu0 0.0
      %v2598 = vand.u32 %v2169, 4294901760
      %v2599 = vsub.f32 %v2169, %v2598
      %2600 = vmatmul.mubr.f32.gmra.mxu0 %v2599
      %v2601 = vpop.f32.mrf.mxu0
      %v2602 = vadd.f32 %v2470, %v2601
      %v2603 = vpop.f32.mrf.mxu0
      %2604 = vmatprep.mubr.f32.mxu0 0.0
      %v2605 = vand.u32 %v2171, 4294901760
      %v2606 = vsub.f32 %v2171, %v2605
      %2607 = vmatmul.mubr.f32.gmra.mxu0 %v2606
      %v2608 = vpop.f32.mrf.mxu0
      %v2609 = vadd.f32 %v2476, %v2608
      %v2610 = vpop.f32.mrf.mxu0
      %2611 = vmatprep.mubr.f32.mxu0 0.0
      %v2612 = vand.u32 %v2173, 4294901760
      %v2613 = vsub.f32 %v2173, %v2612
      %2614 = vmatmul.mubr.f32.gmra.mxu0 %v2613
      %v2615 = vpop.f32.mrf.mxu0
      %v2616 = vadd.f32 %v2482, %v2615
      %v2617 = vpop.f32.mrf.mxu0
      %2618 = vmatprep.mubr.f32.mxu0 0.0
      %v2619 = vand.u32 %v2175, 4294901760
      %v2620 = vsub.f32 %v2175, %v2619
      %2621 = vmatmul.mubr.f32.gmra.mxu0 %v2620
      %v2622 = vpop.f32.mrf.mxu0
      %v2623 = vadd.f32 %v2488, %v2622
      %v2624 = vpop.f32.mrf.mxu0
      %2625 = vmatprep.mubr.f32.mxu0 0.0
      %v2626 = vand.u32 %v2177, 4294901760
      %v2627 = vsub.f32 %v2177, %v2626
      %2628 = vmatmul.mubr.f32.gmra.mxu0 %v2627
      %v2629 = vpop.f32.mrf.mxu0
      %v2630 = vadd.f32 %v2494, %v2629
      %v2631 = vpop.f32.mrf.mxu0
      %2632 = vmatprep.mubr.f32.mxu0 0.0
      %v2633 = vand.u32 %v2179, 4294901760
      %v2634 = vsub.f32 %v2179, %v2633
      %2635 = vmatmul.mubr.f32.gmra.mxu0 %v2634
      %v2636 = vpop.f32.mrf.mxu0
      %v2637 = vadd.f32 %v2500, %v2636
      %v2638 = vpop.f32.mrf.mxu0
      %2639 = vdwg.mxu0
      %2640 = vmatprep.subr.mxu0 0.0
      %2641 = vmatpush1.xpose.msra.mxu0 0.0
      %2642 = vmatprep.subr.mxu0 0.0
      %2643 = vmatpush1.xpose.msra.mxu0 0.0
      %2644 = vmatprep.subr.mxu0 0.0
      %2645 = vmatpush1.xpose.msra.mxu0 0.0
      %2646 = vmatprep.subr.mxu0 0.0
      %2647 = vmatpush1.xpose.msra.mxu0 0.0
      %2648 = vmatprep.subr.mxu0 0.0
      %2649 = vmatpush1.xpose.msra.mxu0 0.0
      %2650 = vmatprep.subr.mxu0 0.0
      %2651 = vmatpush1.xpose.msra.mxu0 0.0
      %2652 = vmatprep.subr.mxu0 0.0
      %2653 = vmatpush1.xpose.msra.mxu0 0.0
      %2654 = vmatprep.subr.mxu0 0.0
      %2655 = vmatpush1.xpose.msra.mxu0 0.0
      %2656 = vmatprep.subr.mxu0 0.0
      %v2657 = vand.u32 %v2195, 4294901760
      %2658 = vmatpush1.xpose.msra.mxu0 %v2657
      %2659 = vmatprep.subr.mxu0 0.0
      %v2660 = vand.u32 %v2193, 4294901760
      %2661 = vmatpush1.xpose.msra.mxu0 %v2660
      %2662 = vmatprep.subr.mxu0 0.0
      %v2663 = vand.u32 %v2191, 4294901760
      %2664 = vmatpush1.xpose.msra.mxu0 %v2663
      %2665 = vmatprep.subr.mxu0 0.0
      %v2666 = vand.u32 %v2189, 4294901760
      %2667 = vmatpush1.xpose.msra.mxu0 %v2666
      %2668 = vmatprep.subr.mxu0 0.0
      %v2669 = vand.u32 %v2187, 4294901760
      %2670 = vmatpush1.xpose.msra.mxu0 %v2669
      %2671 = vmatprep.subr.mxu0 0.0
      %v2672 = vand.u32 %v2185, 4294901760
      %2673 = vmatpush1.xpose.msra.mxu0 %v2672
      %2674 = vmatprep.subr.mxu0 0.0
      %v2675 = vand.u32 %v2183, 4294901760
      %2676 = vmatpush1.xpose.msra.mxu0 %v2675
      %2677 = vmatprep.subr.mxu0 0.0
      %v2678 = vand.u32 %v2181, 4294901760
      %2679 = vmatpush1.xpose.msra.mxu0 %v2678
      %2680 = vmatprep.subr.mxu0 0.0
      %2681 = vmatpush2.xpose.msra.mxu0 0.0
      %2682 = vmatprep.subr.mxu0 0.0
      %2683 = vmatpush2.xpose.msra.mxu0 0.0
      %2684 = vmatprep.subr.mxu0 0.0
      %2685 = vmatpush2.xpose.msra.mxu0 0.0
      %2686 = vmatprep.subr.mxu0 0.0
      %2687 = vmatpush2.xpose.msra.mxu0 0.0
      %2688 = vmatprep.subr.mxu0 0.0
      %2689 = vmatpush2.xpose.msra.mxu0 0.0
      %2690 = vmatprep.subr.mxu0 0.0
      %2691 = vmatpush2.xpose.msra.mxu0 0.0
      %2692 = vmatprep.subr.mxu0 0.0
      %2693 = vmatpush2.xpose.msra.mxu0 0.0
      %2694 = vmatprep.subr.mxu0 0.0
      %2695 = vmatpush2.xpose.msra.mxu0 0.0
      %2696 = vmatprep.subr.mxu0 0.0
      %2697 = vmatpush2.xpose.msra.mxu0 0.0
      %2698 = vmatprep.subr.mxu0 0.0
      %2699 = vmatpush2.xpose.msra.mxu0 0.0
      %2700 = vmatprep.subr.mxu0 0.0
      %2701 = vmatpush2.xpose.msra.mxu0 0.0
      %2702 = vmatprep.subr.mxu0 0.0
      %2703 = vmatpush2.xpose.msra.mxu0 0.0
      %2704 = vmatprep.subr.mxu0 0.0
      %2705 = vmatpush2.xpose.msra.mxu0 0.0
      %2706 = vmatprep.subr.mxu0 0.0
      %2707 = vmatpush2.xpose.msra.mxu0 0.0
      %2708 = vmatprep.subr.mxu0 0.0
      %2709 = vmatpush2.xpose.msra.mxu0 0.0
      %2710 = vmatprep.subr.mxu0 0.0
      %2711 = vmatpush2.xpose.msra.mxu0 0.0
      %2712 = vmatprep.mubr.f32.mxu0 0.0
      %v2713 = vand.u32 %v2165, 4294901760
      %v2714 = vsub.f32 %v2165, %v2713
      %v2715 = vand.u32 %v2714, 4294901760
      %2716 = vmatmul.mubr.f32.gmra.mxu0 %v2715
      %v2717 = vpop.f32.mrf.mxu0
      %v2718 = vadd.f32 %v2588, %v2717
      %v2719 = vpop.f32.mrf.mxu0
      %2720 = vmatprep.mubr.f32.mxu0 0.0
      %v2721 = vand.u32 %v2167, 4294901760
      %v2722 = vsub.f32 %v2167, %v2721
      %v2723 = vand.u32 %v2722, 4294901760
      %2724 = vmatmul.mubr.f32.gmra.mxu0 %v2723
      %v2725 = vpop.f32.mrf.mxu0
      %v2726 = vadd.f32 %v2595, %v2725
      %v2727 = vpop.f32.mrf.mxu0
      %2728 = vmatprep.mubr.f32.mxu0 0.0
      %v2729 = vand.u32 %v2169, 4294901760
      %v2730 = vsub.f32 %v2169, %v2729
      %v2731 = vand.u32 %v2730, 4294901760
      %2732 = vmatmul.mubr.f32.gmra.mxu0 %v2731
      %v2733 = vpop.f32.mrf.mxu0
      %v2734 = vadd.f32 %v2602, %v2733
      %v2735 = vpop.f32.mrf.mxu0
      %2736 = vmatprep.mubr.f32.mxu0 0.0
      %v2737 = vand.u32 %v2171, 4294901760
      %v2738 = vsub.f32 %v2171, %v2737
      %v2739 = vand.u32 %v2738, 4294901760
      %2740 = vmatmul.mubr.f32.gmra.mxu0 %v2739
      %v2741 = vpop.f32.mrf.mxu0
      %v2742 = vadd.f32 %v2609, %v2741
      %v2743 = vpop.f32.mrf.mxu0
      %2744 = vmatprep.mubr.f32.mxu0 0.0
      %v2745 = vand.u32 %v2173, 4294901760
      %v2746 = vsub.f32 %v2173, %v2745
      %v2747 = vand.u32 %v2746, 4294901760
      %2748 = vmatmul.mubr.f32.gmra.mxu0 %v2747
      %v2749 = vpop.f32.mrf.mxu0
      %v2750 = vadd.f32 %v2616, %v2749
      %v2751 = vpop.f32.mrf.mxu0
      %2752 = vmatprep.mubr.f32.mxu0 0.0
      %v2753 = vand.u32 %v2175, 4294901760
      %v2754 = vsub.f32 %v2175, %v2753
      %v2755 = vand.u32 %v2754, 4294901760
      %2756 = vmatmul.mubr.f32.gmra.mxu0 %v2755
      %v2757 = vpop.f32.mrf.mxu0
      %v2758 = vadd.f32 %v2623, %v2757
      %v2759 = vpop.f32.mrf.mxu0
      %2760 = vmatprep.mubr.f32.mxu0 0.0
      %v2761 = vand.u32 %v2177, 4294901760
      %v2762 = vsub.f32 %v2177, %v2761
      %v2763 = vand.u32 %v2762, 4294901760
      %2764 = vmatmul.mubr.f32.gmra.mxu0 %v2763
      %v2765 = vpop.f32.mrf.mxu0
      %v2766 = vadd.f32 %v2630, %v2765
      %v2767 = vpop.f32.mrf.mxu0
      %2768 = vmatprep.mubr.f32.mxu0 0.0
      %v2769 = vand.u32 %v2179, 4294901760
      %v2770 = vsub.f32 %v2179, %v2769
      %v2771 = vand.u32 %v2770, 4294901760
      %2772 = vmatmul.mubr.f32.gmra.mxu0 %v2771
      %v2773 = vpop.f32.mrf.mxu0
      %v2774 = vadd.f32 %v2637, %v2773
      %v2775 = vpop.f32.mrf.mxu0
      %2776 = vdwg.mxu0
      %2777 = vmatprep.subr.mxu0 0.0
      %2778 = vmatpush1.xpose.msra.mxu0 0.0
      %2779 = vmatprep.subr.mxu0 0.0
      %2780 = vmatpush1.xpose.msra.mxu0 0.0
      %2781 = vmatprep.subr.mxu0 0.0
      %2782 = vmatpush1.xpose.msra.mxu0 0.0
      %2783 = vmatprep.subr.mxu0 0.0
      %2784 = vmatpush1.xpose.msra.mxu0 0.0
      %2785 = vmatprep.subr.mxu0 0.0
      %2786 = vmatpush1.xpose.msra.mxu0 0.0
      %2787 = vmatprep.subr.mxu0 0.0
      %2788 = vmatpush1.xpose.msra.mxu0 0.0
      %2789 = vmatprep.subr.mxu0 0.0
      %2790 = vmatpush1.xpose.msra.mxu0 0.0
      %2791 = vmatprep.subr.mxu0 0.0
      %2792 = vmatpush1.xpose.msra.mxu0 0.0
      %2793 = vmatprep.subr.mxu0 0.0
      %v2794 = vand.u32 %v2195, 4294901760
      %v2795 = vsub.f32 %v2195, %v2794
      %v2796 = vand.u32 %v2795, 4294901760
      %2797 = vmatpush1.xpose.msra.mxu0 %v2796
      %2798 = vmatprep.subr.mxu0 0.0
      %v2799 = vand.u32 %v2193, 4294901760
      %v2800 = vsub.f32 %v2193, %v2799
      %v2801 = vand.u32 %v2800, 4294901760
      %2802 = vmatpush1.xpose.msra.mxu0 %v2801
      %2803 = vmatprep.subr.mxu0 0.0
      %v2804 = vand.u32 %v2191, 4294901760
      %v2805 = vsub.f32 %v2191, %v2804
      %v2806 = vand.u32 %v2805, 4294901760
      %2807 = vmatpush1.xpose.msra.mxu0 %v2806
      %2808 = vmatprep.subr.mxu0 0.0
      %v2809 = vand.u32 %v2189, 4294901760
      %v2810 = vsub.f32 %v2189, %v2809
      %v2811 = vand.u32 %v2810, 4294901760
      %2812 = vmatpush1.xpose.msra.mxu0 %v2811
      %2813 = vmatprep.subr.mxu0 0.0
      %v2814 = vand.u32 %v2187, 4294901760
      %v2815 = vsub.f32 %v2187, %v2814
      %v2816 = vand.u32 %v2815, 4294901760
      %2817 = vmatpush1.xpose.msra.mxu0 %v2816
      %2818 = vmatprep.subr.mxu0 0.0
      %v2819 = vand.u32 %v2185, 4294901760
      %v2820 = vsub.f32 %v2185, %v2819
      %v2821 = vand.u32 %v2820, 4294901760
      %2822 = vmatpush1.xpose.msra.mxu0 %v2821
      %2823 = vmatprep.subr.mxu0 0.0
      %v2824 = vand.u32 %v2183, 4294901760
      %v2825 = vsub.f32 %v2183, %v2824
      %v2826 = vand.u32 %v2825, 4294901760
      %2827 = vmatpush1.xpose.msra.mxu0 %v2826
      %2828 = vmatprep.subr.mxu0 0.0
      %v2829 = vand.u32 %v2181, 4294901760
      %v2830 = vsub.f32 %v2181, %v2829
      %v2831 = vand.u32 %v2830, 4294901760
      %2832 = vmatpush1.xpose.msra.mxu0 %v2831
      %2833 = vmatprep.subr.mxu0 0.0
      %2834 = vmatpush2.xpose.msra.mxu0 0.0
      %2835 = vmatprep.subr.mxu0 0.0
      %2836 = vmatpush2.xpose.msra.mxu0 0.0
      %2837 = vmatprep.subr.mxu0 0.0
      %2838 = vmatpush2.xpose.msra.mxu0 0.0
      %2839 = vmatprep.subr.mxu0 0.0
      %2840 = vmatpush2.xpose.msra.mxu0 0.0
      %2841 = vmatprep.subr.mxu0 0.0
      %2842 = vmatpush2.xpose.msra.mxu0 0.0
      %2843 = vmatprep.subr.mxu0 0.0
      %2844 = vmatpush2.xpose.msra.mxu0 0.0
      %2845 = vmatprep.subr.mxu0 0.0
      %2846 = vmatpush2.xpose.msra.mxu0 0.0
      %2847 = vmatprep.subr.mxu0 0.0
      %2848 = vmatpush2.xpose.msra.mxu0 0.0
      %2849 = vmatprep.subr.mxu0 0.0
      %2850 = vmatpush2.xpose.msra.mxu0 0.0
      %2851 = vmatprep.subr.mxu0 0.0
      %2852 = vmatpush2.xpose.msra.mxu0 0.0
      %2853 = vmatprep.subr.mxu0 0.0
      %2854 = vmatpush2.xpose.msra.mxu0 0.0
      %2855 = vmatprep.subr.mxu0 0.0
      %2856 = vmatpush2.xpose.msra.mxu0 0.0
      %2857 = vmatprep.subr.mxu0 0.0
      %2858 = vmatpush2.xpose.msra.mxu0 0.0
      %2859 = vmatprep.subr.mxu0 0.0
      %2860 = vmatpush2.xpose.msra.mxu0 0.0
      %2861 = vmatprep.subr.mxu0 0.0
      %2862 = vmatpush2.xpose.msra.mxu0 0.0
      %2863 = vmatprep.subr.mxu0 0.0
      %2864 = vmatpush2.xpose.msra.mxu0 0.0
      %2865 = vmatprep.mubr.f32.mxu0 0.0
      %v2866 = vand.u32 %v2165, 4294901760
      %2867 = vmatmul.mubr.f32.gmra.mxu0 %v2866
      %v2868 = vpop.f32.mrf.mxu0
      %v2869 = vadd.f32 %v2718, %v2868
      %v2870 = vpop.f32.mrf.mxu0
      %2871 = vmatprep.mubr.f32.mxu0 0.0
      %v2872 = vand.u32 %v2167, 4294901760
      %2873 = vmatmul.mubr.f32.gmra.mxu0 %v2872
      %v2874 = vpop.f32.mrf.mxu0
      %v2875 = vadd.f32 %v2726, %v2874
      %v2876 = vpop.f32.mrf.mxu0
      %2877 = vmatprep.mubr.f32.mxu0 0.0
      %v2878 = vand.u32 %v2169, 4294901760
      %2879 = vmatmul.mubr.f32.gmra.mxu0 %v2878
      %v2880 = vpop.f32.mrf.mxu0
      %v2881 = vadd.f32 %v2734, %v2880
      %v2882 = vpop.f32.mrf.mxu0
      %2883 = vmatprep.mubr.f32.mxu0 0.0
      %v2884 = vand.u32 %v2171, 4294901760
      %2885 = vmatmul.mubr.f32.gmra.mxu0 %v2884
      %v2886 = vpop.f32.mrf.mxu0
      %v2887 = vadd.f32 %v2742, %v2886
      %v2888 = vpop.f32.mrf.mxu0
      %2889 = vmatprep.mubr.f32.mxu0 0.0
      %v2890 = vand.u32 %v2173, 4294901760
      %2891 = vmatmul.mubr.f32.gmra.mxu0 %v2890
      %v2892 = vpop.f32.mrf.mxu0
      %v2893 = vadd.f32 %v2750, %v2892
      %v2894 = vpop.f32.mrf.mxu0
      %2895 = vmatprep.mubr.f32.mxu0 0.0
      %v2896 = vand.u32 %v2175, 4294901760
      %2897 = vmatmul.mubr.f32.gmra.mxu0 %v2896
      %v2898 = vpop.f32.mrf.mxu0
      %v2899 = vadd.f32 %v2758, %v2898
      %v2900 = vpop.f32.mrf.mxu0
      %2901 = vmatprep.mubr.f32.mxu0 0.0
      %v2902 = vand.u32 %v2177, 4294901760
      %2903 = vmatmul.mubr.f32.gmra.mxu0 %v2902
      %v2904 = vpop.f32.mrf.mxu0
      %v2905 = vadd.f32 %v2766, %v2904
      %v2906 = vpop.f32.mrf.mxu0
      %2907 = vmatprep.mubr.f32.mxu0 0.0
      %v2908 = vand.u32 %v2179, 4294901760
      %2909 = vmatmul.mubr.f32.gmra.mxu0 %v2908
      %v2910 = vpop.f32.mrf.mxu0
      %v2911 = vadd.f32 %v2774, %v2910
      %v2912 = vpop.f32.mrf.mxu0
      %2913 = vdwg.mxu0
      %2914 = vmatprep.subr.mxu0 0.0
      %2915 = vmatpush1.xpose.msra.mxu0 0.0
      %2916 = vmatprep.subr.mxu0 0.0
      %2917 = vmatpush1.xpose.msra.mxu0 0.0
      %2918 = vmatprep.subr.mxu0 0.0
      %2919 = vmatpush1.xpose.msra.mxu0 0.0
      %2920 = vmatprep.subr.mxu0 0.0
      %2921 = vmatpush1.xpose.msra.mxu0 0.0
      %2922 = vmatprep.subr.mxu0 0.0
      %2923 = vmatpush1.xpose.msra.mxu0 0.0
      %2924 = vmatprep.subr.mxu0 0.0
      %2925 = vmatpush1.xpose.msra.mxu0 0.0
      %2926 = vmatprep.subr.mxu0 0.0
      %2927 = vmatpush1.xpose.msra.mxu0 0.0
      %2928 = vmatprep.subr.mxu0 0.0
      %2929 = vmatpush1.xpose.msra.mxu0 0.0
      %2930 = vmatprep.subr.mxu0 0.0
      %v2931 = vand.u32 %v2195, 4294901760
      %2932 = vmatpush1.xpose.msra.mxu0 %v2931
      %2933 = vmatprep.subr.mxu0 0.0
      %v2934 = vand.u32 %v2193, 4294901760
      %2935 = vmatpush1.xpose.msra.mxu0 %v2934
      %2936 = vmatprep.subr.mxu0 0.0
      %v2937 = vand.u32 %v2191, 4294901760
      %2938 = vmatpush1.xpose.msra.mxu0 %v2937
      %2939 = vmatprep.subr.mxu0 0.0
      %v2940 = vand.u32 %v2189, 4294901760
      %2941 = vmatpush1.xpose.msra.mxu0 %v2940
      %2942 = vmatprep.subr.mxu0 0.0
      %v2943 = vand.u32 %v2187, 4294901760
      %2944 = vmatpush1.xpose.msra.mxu0 %v2943
      %2945 = vmatprep.subr.mxu0 0.0
      %v2946 = vand.u32 %v2185, 4294901760
      %2947 = vmatpush1.xpose.msra.mxu0 %v2946
      %2948 = vmatprep.subr.mxu0 0.0
      %v2949 = vand.u32 %v2183, 4294901760
      %2950 = vmatpush1.xpose.msra.mxu0 %v2949
      %2951 = vmatprep.subr.mxu0 0.0
      %v2952 = vand.u32 %v2181, 4294901760
      %2953 = vmatpush1.xpose.msra.mxu0 %v2952
      %2954 = vmatprep.subr.mxu0 0.0
      %2955 = vmatpush2.xpose.msra.mxu0 0.0
      %2956 = vmatprep.subr.mxu0 0.0
      %2957 = vmatpush2.xpose.msra.mxu0 0.0
      %2958 = vmatprep.subr.mxu0 0.0
      %2959 = vmatpush2.xpose.msra.mxu0 0.0
      %2960 = vmatprep.subr.mxu0 0.0
      %2961 = vmatpush2.xpose.msra.mxu0 0.0
      %2962 = vmatprep.subr.mxu0 0.0
      %2963 = vmatpush2.xpose.msra.mxu0 0.0
      %2964 = vmatprep.subr.mxu0 0.0
      %2965 = vmatpush2.xpose.msra.mxu0 0.0
      %2966 = vmatprep.subr.mxu0 0.0
      %2967 = vmatpush2.xpose.msra.mxu0 0.0
      %2968 = vmatprep.subr.mxu0 0.0
      %2969 = vmatpush2.xpose.msra.mxu0 0.0
      %2970 = vmatprep.subr.mxu0 0.0
      %2971 = vmatpush2.xpose.msra.mxu0 0.0
      %2972 = vmatprep.subr.mxu0 0.0
      %2973 = vmatpush2.xpose.msra.mxu0 0.0
      %2974 = vmatprep.subr.mxu0 0.0
      %2975 = vmatpush2.xpose.msra.mxu0 0.0
      %2976 = vmatprep.subr.mxu0 0.0
      %2977 = vmatpush2.xpose.msra.mxu0 0.0
      %2978 = vmatprep.subr.mxu0 0.0
      %2979 = vmatpush2.xpose.msra.mxu0 0.0
      %2980 = vmatprep.subr.mxu0 0.0
      %2981 = vmatpush2.xpose.msra.mxu0 0.0
      %2982 = vmatprep.subr.mxu0 0.0
      %2983 = vmatpush2.xpose.msra.mxu0 0.0
      %2984 = vmatprep.subr.mxu0 0.0
      %2985 = vmatpush2.xpose.msra.mxu0 0.0
      %2986 = vmatprep.mubr.f32.mxu0 0.0
      %v2987 = vand.u32 %v2165, 4294901760
      %2988 = vmatmul.mubr.f32.gmra.mxu0 %v2987
      %v2989 = vpop.f32.mrf.mxu0
      %v2990 = vadd.f32 %v2869, %v2989
      %v2991 = vpop.f32.mrf.mxu0
      %2992 = vmatprep.mubr.f32.mxu0 0.0
      %v2993 = vand.u32 %v2167, 4294901760
      %2994 = vmatmul.mubr.f32.gmra.mxu0 %v2993
      %v2995 = vpop.f32.mrf.mxu0
      %v2996 = vadd.f32 %v2875, %v2995
      %v2997 = vpop.f32.mrf.mxu0
      %2998 = vmatprep.mubr.f32.mxu0 0.0
      %v2999 = vand.u32 %v2169, 4294901760
      %3000 = vmatmul.mubr.f32.gmra.mxu0 %v2999
      %v3001 = vpop.f32.mrf.mxu0
      %v3002 = vadd.f32 %v2881, %v3001
      %v3003 = vpop.f32.mrf.mxu0
      %3004 = vmatprep.mubr.f32.mxu0 0.0
      %v3005 = vand.u32 %v2171, 4294901760
      %3006 = vmatmul.mubr.f32.gmra.mxu0 %v3005
      %v3007 = vpop.f32.mrf.mxu0
      %v3008 = vadd.f32 %v2887, %v3007
      %v3009 = vpop.f32.mrf.mxu0
      %3010 = vmatprep.mubr.f32.mxu0 0.0
      %v3011 = vand.u32 %v2173, 4294901760
      %3012 = vmatmul.mubr.f32.gmra.mxu0 %v3011
      %v3013 = vpop.f32.mrf.mxu0
      %v3014 = vadd.f32 %v2893, %v3013
      %v3015 = vpop.f32.mrf.mxu0
      %3016 = vmatprep.mubr.f32.mxu0 0.0
      %v3017 = vand.u32 %v2175, 4294901760
      %3018 = vmatmul.mubr.f32.gmra.mxu0 %v3017
      %v3019 = vpop.f32.mrf.mxu0
      %v3020 = vadd.f32 %v2899, %v3019
      %v3021 = vpop.f32.mrf.mxu0
      %3022 = vmatprep.mubr.f32.mxu0 0.0
      %v3023 = vand.u32 %v2177, 4294901760
      %3024 = vmatmul.mubr.f32.gmra.mxu0 %v3023
      %v3025 = vpop.f32.mrf.mxu0
      %v3026 = vadd.f32 %v2905, %v3025
      %v3027 = vpop.f32.mrf.mxu0
      %3028 = vmatprep.mubr.f32.mxu0 0.0
      %v3029 = vand.u32 %v2179, 4294901760
      %3030 = vmatmul.mubr.f32.gmra.mxu0 %v3029
      %v3031 = vpop.f32.mrf.mxu0
      %v3032 = vadd.f32 %v2911, %v3031
      %v3033 = vpop.f32.mrf.mxu0
      %3034 = vdwg.mxu0
      %vm3035 = vcmask 523264
      %v3036 = vsel %vm3035, %v2990, -inf
      %3037 = vmax.xlane.f32.xlu0 %v3036
      %v3038 = vpop.xlane.xlu0 %3037
      %v3039 = vsel %vm3035, %v2996, -inf
      %3040 = vmax.xlane.f32.xlu0 %v3039
      %v3041 = vpop.xlane.xlu0 %3040
      %v3042 = vsel %vm3035, %v3002, -inf
      %3043 = vmax.xlane.f32.xlu0 %v3042
      %v3044 = vpop.xlane.xlu0 %3043
      %v3045 = vsel %vm3035, %v3008, -inf
      %3046 = vmax.xlane.f32.xlu0 %v3045
      %v3047 = vpop.xlane.xlu0 %3046
      %v3048 = vsel %vm3035, %v3014, -inf
      %3049 = vmax.xlane.f32.xlu0 %v3048
      %v3050 = vpop.xlane.xlu0 %3049
      %v3051 = vsel %vm3035, %v3020, -inf
      %3052 = vmax.xlane.f32.xlu0 %v3051
      %v3053 = vpop.xlane.xlu0 %3052
      %v3054 = vsel %vm3035, %v3026, -inf
      %3055 = vmax.xlane.f32.xlu0 %v3054
      %v3056 = vpop.xlane.xlu0 %3055
      %v3057 = vsel %vm3035, %v3032, -inf
      %3058 = vmax.xlane.f32.xlu0 %v3057
      %v3059 = vpop.xlane.xlu0 %3058
      %v3060 = vsub.f32 %v2990, %v3038
      %v3061 = vsub.f32 %v2996, %v3041
      %v3062 = vsub.f32 %v3002, %v3044
      %v3063 = vsub.f32 %v3008, %v3047
      %v3064 = vsub.f32 %v3014, %v3050
      %v3065 = vsub.f32 %v3020, %v3053
      %v3066 = vsub.f32 %v3026, %v3056
      %v3067 = vsub.f32 %v3032, %v3059
      %v3068 = vmul.f32 %v3060, 1.442695
      %v3069 = vpow.pop %v3068
      %v3070 = vmul.f32 %v3061, 1.442695
      %v3071 = vpow.pop %v3070
      %v3072 = vmul.f32 %v3062, 1.442695
      %v3073 = vpow.pop %v3072
      %v3074 = vmul.f32 %v3063, 1.442695
      %v3075 = vpow.pop %v3074
      %v3076 = vmul.f32 %v3064, 1.442695
      %v3077 = vpow.pop %v3076
      %v3078 = vmul.f32 %v3065, 1.442695
      %v3079 = vpow.pop %v3078
      %v3080 = vmul.f32 %v3066, 1.442695
      %v3081 = vpow.pop %v3080
      %v3082 = vmul.f32 %v3067, 1.442695
      %v3083 = vpow.pop %v3082
      %v3084 = vsel %vm3035, %v3069, 0.0
      %3085 = vadd.xlane.f32.xlu0 %v3084
      %v3086 = vpop.xlane.xlu0 %3085
      %v3087 = vsel %vm3035, %v3071, 0.0
      %3088 = vadd.xlane.f32.xlu0 %v3087
      %v3089 = vpop.xlane.xlu0 %3088
      %v3090 = vsel %vm3035, %v3073, 0.0
      %3091 = vadd.xlane.f32.xlu0 %v3090
      %v3092 = vpop.xlane.xlu0 %3091
      %v3093 = vsel %vm3035, %v3075, 0.0
      %3094 = vadd.xlane.f32.xlu0 %v3093
      %v3095 = vpop.xlane.xlu0 %3094
      %v3096 = vsel %vm3035, %v3077, 0.0
      %3097 = vadd.xlane.f32.xlu0 %v3096
      %v3098 = vpop.xlane.xlu0 %3097
      %v3099 = vsel %vm3035, %v3079, 0.0
      %3100 = vadd.xlane.f32.xlu0 %v3099
      %v3101 = vpop.xlane.xlu0 %3100
      %v3102 = vsel %vm3035, %v3081, 0.0
      %3103 = vadd.xlane.f32.xlu0 %v3102
      %v3104 = vpop.xlane.xlu0 %3103
      %v3105 = vsel %vm3035, %v3083, 0.0
      %3106 = vadd.xlane.f32.xlu0 %v3105
      %v3107 = vpop.xlane.xlu0 %3106
      %v3108 = vrcp.pop %v3086
      %v3109 = vrcp.pop %v3089
      %v3110 = vrcp.pop %v3092
      %v3111 = vrcp.pop %v3095
      %v3112 = vrcp.pop %v3098
      %v3113 = vrcp.pop %v3101
      %v3114 = vrcp.pop %v3104
      %v3115 = vrcp.pop %v3107
      %v3116 = vmul.f32 %v3069, %v3108
      %v3117 = vmul.f32 %v3071, %v3109
      %v3118 = vmul.f32 %v3073, %v3110
      %v3119 = vmul.f32 %v3075, %v3111
      %v3120 = vmul.f32 %v3077, %v3112
      %v3121 = vmul.f32 %v3079, %v3113
      %v3122 = vmul.f32 %v3081, %v3114
      %v3123 = vmul.f32 %v3083, %v3115
      %3124 = vrot.lane.b32.xlu0 %v2095, 96
      %v3125 = vpop.permute.xlu0 %3124
      %3126 = vrot.lane.b32.xlu0 %v2101, 96
      %v3127 = vpop.permute.xlu0 %3126
      %3128 = vrot.lane.b32.xlu0 %v2107, 96
      %v3129 = vpop.permute.xlu0 %3128
      %3130 = vrot.lane.b32.xlu0 %v2113, 96
      %v3131 = vpop.permute.xlu0 %3130
      %3132 = vrot.lane.b32.xlu0 %v2119, 96
      %v3133 = vpop.permute.xlu0 %3132
      %3134 = vrot.lane.b32.xlu0 %v2125, 96
      %v3135 = vpop.permute.xlu0 %3134
      %3136 = vrot.lane.b32.xlu0 %v2131, 96
      %v3137 = vpop.permute.xlu0 %3136
      %3138 = vrot.lane.b32.xlu0 %v2137, 96
      %v3139 = vpop.permute.xlu0 %3138
      %v3149 = vsel %vm3035, %v3116, 0
      %v3152 = vsel %vm3035, %v3117, 0
      %v3155 = vsel %vm3035, %v3118, 0
      %v3158 = vsel %vm3035, %v3119, 0
      %v3161 = vsel %vm3035, %v3120, 0
      %v3164 = vsel %vm3035, %v3121, 0
      %v3167 = vsel %vm3035, %v3122, 0
      %v3170 = vsel %vm3035, %v3123, 0
      %3172 = vmatprep.subr.mxu0 0.0
      %3173 = vmatpush1.msra.mxu0 0.0
      %3174 = vmatprep.subr.mxu0 0.0
      %3175 = vmatpush1.msra.mxu0 0.0
      %3176 = vmatprep.subr.mxu0 0.0
      %3177 = vmatpush1.msra.mxu0 0.0
      %3178 = vmatprep.subr.mxu0 0.0
      %3179 = vmatpush1.msra.mxu0 0.0
      %3180 = vmatprep.subr.mxu0 0.0
      %3181 = vmatpush1.msra.mxu0 0.0
      %3182 = vmatprep.subr.mxu0 0.0
      %3183 = vmatpush1.msra.mxu0 0.0
      %3184 = vmatprep.subr.mxu0 0.0
      %3185 = vmatpush1.msra.mxu0 0.0
      %3186 = vmatprep.subr.mxu0 0.0
      %3187 = vmatpush1.msra.mxu0 0.0
      %3188 = vmatprep.subr.mxu0 0.0
      %v3189 = vand.u32 %v3139, 4294901760
      %3190 = vmatpush1.msra.mxu0 %v3189
      %3191 = vmatprep.subr.mxu0 0.0
      %v3192 = vand.u32 %v3137, 4294901760
      %3193 = vmatpush1.msra.mxu0 %v3192
      %3194 = vmatprep.subr.mxu0 0.0
      %v3195 = vand.u32 %v3135, 4294901760
      %3196 = vmatpush1.msra.mxu0 %v3195
      %3197 = vmatprep.subr.mxu0 0.0
      %v3198 = vand.u32 %v3133, 4294901760
      %3199 = vmatpush1.msra.mxu0 %v3198
      %3200 = vmatprep.subr.mxu0 0.0
      %v3201 = vand.u32 %v3131, 4294901760
      %3202 = vmatpush1.msra.mxu0 %v3201
      %3203 = vmatprep.subr.mxu0 0.0
      %v3204 = vand.u32 %v3129, 4294901760
      %3205 = vmatpush1.msra.mxu0 %v3204
      %3206 = vmatprep.subr.mxu0 0.0
      %v3207 = vand.u32 %v3127, 4294901760
      %3208 = vmatpush1.msra.mxu0 %v3207
      %3209 = vmatprep.subr.mxu0 0.0
      %v3210 = vand.u32 %v3125, 4294901760
      %3211 = vmatpush1.msra.mxu0 %v3210
      %3212 = vmatprep.subr.mxu0 0.0
      %3213 = vmatpush2.msra.mxu0 0.0
      %3214 = vmatprep.subr.mxu0 0.0
      %3215 = vmatpush2.msra.mxu0 0.0
      %3216 = vmatprep.subr.mxu0 0.0
      %3217 = vmatpush2.msra.mxu0 0.0
      %3218 = vmatprep.subr.mxu0 0.0
      %3219 = vmatpush2.msra.mxu0 0.0
      %3220 = vmatprep.subr.mxu0 0.0
      %3221 = vmatpush2.msra.mxu0 0.0
      %3222 = vmatprep.subr.mxu0 0.0
      %3223 = vmatpush2.msra.mxu0 0.0
      %3224 = vmatprep.subr.mxu0 0.0
      %3225 = vmatpush2.msra.mxu0 0.0
      %3226 = vmatprep.subr.mxu0 0.0
      %3227 = vmatpush2.msra.mxu0 0.0
      %3228 = vmatprep.subr.mxu0 0.0
      %3229 = vmatpush2.msra.mxu0 0.0
      %3230 = vmatprep.subr.mxu0 0.0
      %3231 = vmatpush2.msra.mxu0 0.0
      %3232 = vmatprep.subr.mxu0 0.0
      %3233 = vmatpush2.msra.mxu0 0.0
      %3234 = vmatprep.subr.mxu0 0.0
      %3235 = vmatpush2.msra.mxu0 0.0
      %3236 = vmatprep.subr.mxu0 0.0
      %3237 = vmatpush2.msra.mxu0 0.0
      %3238 = vmatprep.subr.mxu0 0.0
      %3239 = vmatpush2.msra.mxu0 0.0
      %3240 = vmatprep.subr.mxu0 0.0
      %3241 = vmatpush2.msra.mxu0 0.0
      %3242 = vmatprep.subr.mxu0 0.0
      %3243 = vmatpush2.msra.mxu0 0.0
      %3244 = vmatprep.mubr.f32.mxu0 0.0
      %v3245 = vand.u32 %v3149, 4294901760
      %v3246 = vsub.f32 %v3149, %v3245
      %v3247 = vand.u32 %v3246, 4294901760
      %v3248 = vsub.f32 %v3246, %v3247
      %v3249 = vand.u32 %v3248, 4294901760
      %3250 = vmatmul.mubr.f32.gmra.mxu0 %v3249
      %v3251 = vpop.f32.mrf.mxu0
      %v3252 = vadd.f32 0.0, %v3251
      %v3253 = vpop.f32.mrf.mxu0
      %3254 = vmatprep.mubr.f32.mxu0 0.0
      %v3255 = vand.u32 %v3152, 4294901760
      %v3256 = vsub.f32 %v3152, %v3255
      %v3257 = vand.u32 %v3256, 4294901760
      %v3258 = vsub.f32 %v3256, %v3257
      %v3259 = vand.u32 %v3258, 4294901760
      %3260 = vmatmul.mubr.f32.gmra.mxu0 %v3259
      %v3261 = vpop.f32.mrf.mxu0
      %v3262 = vadd.f32 0.0, %v3261
      %v3263 = vpop.f32.mrf.mxu0
      %3264 = vmatprep.mubr.f32.mxu0 0.0
      %v3265 = vand.u32 %v3155, 4294901760
      %v3266 = vsub.f32 %v3155, %v3265
      %v3267 = vand.u32 %v3266, 4294901760
      %v3268 = vsub.f32 %v3266, %v3267
      %v3269 = vand.u32 %v3268, 4294901760
      %3270 = vmatmul.mubr.f32.gmra.mxu0 %v3269
      %v3271 = vpop.f32.mrf.mxu0
      %v3272 = vadd.f32 0.0, %v3271
      %v3273 = vpop.f32.mrf.mxu0
      %3274 = vmatprep.mubr.f32.mxu0 0.0
      %v3275 = vand.u32 %v3158, 4294901760
      %v3276 = vsub.f32 %v3158, %v3275
      %v3277 = vand.u32 %v3276, 4294901760
      %v3278 = vsub.f32 %v3276, %v3277
      %v3279 = vand.u32 %v3278, 4294901760
      %3280 = vmatmul.mubr.f32.gmra.mxu0 %v3279
      %v3281 = vpop.f32.mrf.mxu0
      %v3282 = vadd.f32 0.0, %v3281
      %v3283 = vpop.f32.mrf.mxu0
      %3284 = vmatprep.mubr.f32.mxu0 0.0
      %v3285 = vand.u32 %v3161, 4294901760
      %v3286 = vsub.f32 %v3161, %v3285
      %v3287 = vand.u32 %v3286, 4294901760
      %v3288 = vsub.f32 %v3286, %v3287
      %v3289 = vand.u32 %v3288, 4294901760
      %3290 = vmatmul.mubr.f32.gmra.mxu0 %v3289
      %v3291 = vpop.f32.mrf.mxu0
      %v3292 = vadd.f32 0.0, %v3291
      %v3293 = vpop.f32.mrf.mxu0
      %3294 = vmatprep.mubr.f32.mxu0 0.0
      %v3295 = vand.u32 %v3164, 4294901760
      %v3296 = vsub.f32 %v3164, %v3295
      %v3297 = vand.u32 %v3296, 4294901760
      %v3298 = vsub.f32 %v3296, %v3297
      %v3299 = vand.u32 %v3298, 4294901760
      %3300 = vmatmul.mubr.f32.gmra.mxu0 %v3299
      %v3301 = vpop.f32.mrf.mxu0
      %v3302 = vadd.f32 0.0, %v3301
      %v3303 = vpop.f32.mrf.mxu0
      %3304 = vmatprep.mubr.f32.mxu0 0.0
      %v3305 = vand.u32 %v3167, 4294901760
      %v3306 = vsub.f32 %v3167, %v3305
      %v3307 = vand.u32 %v3306, 4294901760
      %v3308 = vsub.f32 %v3306, %v3307
      %v3309 = vand.u32 %v3308, 4294901760
      %3310 = vmatmul.mubr.f32.gmra.mxu0 %v3309
      %v3311 = vpop.f32.mrf.mxu0
      %v3312 = vadd.f32 0.0, %v3311
      %v3313 = vpop.f32.mrf.mxu0
      %3314 = vmatprep.mubr.f32.mxu0 0.0
      %v3315 = vand.u32 %v3170, 4294901760
      %v3316 = vsub.f32 %v3170, %v3315
      %v3317 = vand.u32 %v3316, 4294901760
      %v3318 = vsub.f32 %v3316, %v3317
      %v3319 = vand.u32 %v3318, 4294901760
      %3320 = vmatmul.mubr.f32.gmra.mxu0 %v3319
      %v3321 = vpop.f32.mrf.mxu0
      %v3322 = vadd.f32 0.0, %v3321
      %v3323 = vpop.f32.mrf.mxu0
      %3324 = vdwg.mxu0
      %3325 = vmatprep.subr.mxu0 0.0
      %3326 = vmatpush1.msra.mxu0 0.0
      %3327 = vmatprep.subr.mxu0 0.0
      %3328 = vmatpush1.msra.mxu0 0.0
      %3329 = vmatprep.subr.mxu0 0.0
      %3330 = vmatpush1.msra.mxu0 0.0
      %3331 = vmatprep.subr.mxu0 0.0
      %3332 = vmatpush1.msra.mxu0 0.0
      %3333 = vmatprep.subr.mxu0 0.0
      %3334 = vmatpush1.msra.mxu0 0.0
      %3335 = vmatprep.subr.mxu0 0.0
      %3336 = vmatpush1.msra.mxu0 0.0
      %3337 = vmatprep.subr.mxu0 0.0
      %3338 = vmatpush1.msra.mxu0 0.0
      %3339 = vmatprep.subr.mxu0 0.0
      %3340 = vmatpush1.msra.mxu0 0.0
      %3341 = vmatprep.subr.mxu0 0.0
      %v3342 = vand.u32 %v3139, 4294901760
      %v3343 = vsub.f32 %v3139, %v3342
      %v3344 = vand.u32 %v3343, 4294901760
      %v3345 = vsub.f32 %v3343, %v3344
      %v3346 = vand.u32 %v3345, 4294901760
      %3347 = vmatpush1.msra.mxu0 %v3346
      %3348 = vmatprep.subr.mxu0 0.0
      %v3349 = vand.u32 %v3137, 4294901760
      %v3350 = vsub.f32 %v3137, %v3349
      %v3351 = vand.u32 %v3350, 4294901760
      %v3352 = vsub.f32 %v3350, %v3351
      %v3353 = vand.u32 %v3352, 4294901760
      %3354 = vmatpush1.msra.mxu0 %v3353
      %3355 = vmatprep.subr.mxu0 0.0
      %v3356 = vand.u32 %v3135, 4294901760
      %v3357 = vsub.f32 %v3135, %v3356
      %v3358 = vand.u32 %v3357, 4294901760
      %v3359 = vsub.f32 %v3357, %v3358
      %v3360 = vand.u32 %v3359, 4294901760
      %3361 = vmatpush1.msra.mxu0 %v3360
      %3362 = vmatprep.subr.mxu0 0.0
      %v3363 = vand.u32 %v3133, 4294901760
      %v3364 = vsub.f32 %v3133, %v3363
      %v3365 = vand.u32 %v3364, 4294901760
      %v3366 = vsub.f32 %v3364, %v3365
      %v3367 = vand.u32 %v3366, 4294901760
      %3368 = vmatpush1.msra.mxu0 %v3367
      %3369 = vmatprep.subr.mxu0 0.0
      %v3370 = vand.u32 %v3131, 4294901760
      %v3371 = vsub.f32 %v3131, %v3370
      %v3372 = vand.u32 %v3371, 4294901760
      %v3373 = vsub.f32 %v3371, %v3372
      %v3374 = vand.u32 %v3373, 4294901760
      %3375 = vmatpush1.msra.mxu0 %v3374
      %3376 = vmatprep.subr.mxu0 0.0
      %v3377 = vand.u32 %v3129, 4294901760
      %v3378 = vsub.f32 %v3129, %v3377
      %v3379 = vand.u32 %v3378, 4294901760
      %v3380 = vsub.f32 %v3378, %v3379
      %v3381 = vand.u32 %v3380, 4294901760
      %3382 = vmatpush1.msra.mxu0 %v3381
      %3383 = vmatprep.subr.mxu0 0.0
      %v3384 = vand.u32 %v3127, 4294901760
      %v3385 = vsub.f32 %v3127, %v3384
      %v3386 = vand.u32 %v3385, 4294901760
      %v3387 = vsub.f32 %v3385, %v3386
      %v3388 = vand.u32 %v3387, 4294901760
      %3389 = vmatpush1.msra.mxu0 %v3388
      %3390 = vmatprep.subr.mxu0 0.0
      %v3391 = vand.u32 %v3125, 4294901760
      %v3392 = vsub.f32 %v3125, %v3391
      %v3393 = vand.u32 %v3392, 4294901760
      %v3394 = vsub.f32 %v3392, %v3393
      %v3395 = vand.u32 %v3394, 4294901760
      %3396 = vmatpush1.msra.mxu0 %v3395
      %3397 = vmatprep.subr.mxu0 0.0
      %3398 = vmatpush2.msra.mxu0 0.0
      %3399 = vmatprep.subr.mxu0 0.0
      %3400 = vmatpush2.msra.mxu0 0.0
      %3401 = vmatprep.subr.mxu0 0.0
      %3402 = vmatpush2.msra.mxu0 0.0
      %3403 = vmatprep.subr.mxu0 0.0
      %3404 = vmatpush2.msra.mxu0 0.0
      %3405 = vmatprep.subr.mxu0 0.0
      %3406 = vmatpush2.msra.mxu0 0.0
      %3407 = vmatprep.subr.mxu0 0.0
      %3408 = vmatpush2.msra.mxu0 0.0
      %3409 = vmatprep.subr.mxu0 0.0
      %3410 = vmatpush2.msra.mxu0 0.0
      %3411 = vmatprep.subr.mxu0 0.0
      %3412 = vmatpush2.msra.mxu0 0.0
      %3413 = vmatprep.subr.mxu0 0.0
      %3414 = vmatpush2.msra.mxu0 0.0
      %3415 = vmatprep.subr.mxu0 0.0
      %3416 = vmatpush2.msra.mxu0 0.0
      %3417 = vmatprep.subr.mxu0 0.0
      %3418 = vmatpush2.msra.mxu0 0.0
      %3419 = vmatprep.subr.mxu0 0.0
      %3420 = vmatpush2.msra.mxu0 0.0
      %3421 = vmatprep.subr.mxu0 0.0
      %3422 = vmatpush2.msra.mxu0 0.0
      %3423 = vmatprep.subr.mxu0 0.0
      %3424 = vmatpush2.msra.mxu0 0.0
      %3425 = vmatprep.subr.mxu0 0.0
      %3426 = vmatpush2.msra.mxu0 0.0
      %3427 = vmatprep.subr.mxu0 0.0
      %3428 = vmatpush2.msra.mxu0 0.0
      %3429 = vmatprep.mubr.f32.mxu0 0.0
      %v3430 = vand.u32 %v3149, 4294901760
      %3431 = vmatmul.mubr.f32.gmra.mxu0 %v3430
      %v3432 = vpop.f32.mrf.mxu0
      %v3433 = vadd.f32 %v3252, %v3432
      %v3434 = vpop.f32.mrf.mxu0
      %3435 = vmatprep.mubr.f32.mxu0 0.0
      %v3436 = vand.u32 %v3152, 4294901760
      %3437 = vmatmul.mubr.f32.gmra.mxu0 %v3436
      %v3438 = vpop.f32.mrf.mxu0
      %v3439 = vadd.f32 %v3262, %v3438
      %v3440 = vpop.f32.mrf.mxu0
      %3441 = vmatprep.mubr.f32.mxu0 0.0
      %v3442 = vand.u32 %v3155, 4294901760
      %3443 = vmatmul.mubr.f32.gmra.mxu0 %v3442
      %v3444 = vpop.f32.mrf.mxu0
      %v3445 = vadd.f32 %v3272, %v3444
      %v3446 = vpop.f32.mrf.mxu0
      %3447 = vmatprep.mubr.f32.mxu0 0.0
      %v3448 = vand.u32 %v3158, 4294901760
      %3449 = vmatmul.mubr.f32.gmra.mxu0 %v3448
      %v3450 = vpop.f32.mrf.mxu0
      %v3451 = vadd.f32 %v3282, %v3450
      %v3452 = vpop.f32.mrf.mxu0
      %3453 = vmatprep.mubr.f32.mxu0 0.0
      %v3454 = vand.u32 %v3161, 4294901760
      %3455 = vmatmul.mubr.f32.gmra.mxu0 %v3454
      %v3456 = vpop.f32.mrf.mxu0
      %v3457 = vadd.f32 %v3292, %v3456
      %v3458 = vpop.f32.mrf.mxu0
      %3459 = vmatprep.mubr.f32.mxu0 0.0
      %v3460 = vand.u32 %v3164, 4294901760
      %3461 = vmatmul.mubr.f32.gmra.mxu0 %v3460
      %v3462 = vpop.f32.mrf.mxu0
      %v3463 = vadd.f32 %v3302, %v3462
      %v3464 = vpop.f32.mrf.mxu0
      %3465 = vmatprep.mubr.f32.mxu0 0.0
      %v3466 = vand.u32 %v3167, 4294901760
      %3467 = vmatmul.mubr.f32.gmra.mxu0 %v3466
      %v3468 = vpop.f32.mrf.mxu0
      %v3469 = vadd.f32 %v3312, %v3468
      %v3470 = vpop.f32.mrf.mxu0
      %3471 = vmatprep.mubr.f32.mxu0 0.0
      %v3472 = vand.u32 %v3170, 4294901760
      %3473 = vmatmul.mubr.f32.gmra.mxu0 %v3472
      %v3474 = vpop.f32.mrf.mxu0
      %v3475 = vadd.f32 %v3322, %v3474
      %v3476 = vpop.f32.mrf.mxu0
      %3477 = vdwg.mxu0
      %3478 = vmatprep.subr.mxu0 0.0
      %3479 = vmatpush1.msra.mxu0 0.0
      %3480 = vmatprep.subr.mxu0 0.0
      %3481 = vmatpush1.msra.mxu0 0.0
      %3482 = vmatprep.subr.mxu0 0.0
      %3483 = vmatpush1.msra.mxu0 0.0
      %3484 = vmatprep.subr.mxu0 0.0
      %3485 = vmatpush1.msra.mxu0 0.0
      %3486 = vmatprep.subr.mxu0 0.0
      %3487 = vmatpush1.msra.mxu0 0.0
      %3488 = vmatprep.subr.mxu0 0.0
      %3489 = vmatpush1.msra.mxu0 0.0
      %3490 = vmatprep.subr.mxu0 0.0
      %3491 = vmatpush1.msra.mxu0 0.0
      %3492 = vmatprep.subr.mxu0 0.0
      %3493 = vmatpush1.msra.mxu0 0.0
      %3494 = vmatprep.subr.mxu0 0.0
      %v3495 = vand.u32 %v3139, 4294901760
      %v3496 = vsub.f32 %v3139, %v3495
      %3497 = vmatpush1.msra.mxu0 %v3496
      %3498 = vmatprep.subr.mxu0 0.0
      %v3499 = vand.u32 %v3137, 4294901760
      %v3500 = vsub.f32 %v3137, %v3499
      %3501 = vmatpush1.msra.mxu0 %v3500
      %3502 = vmatprep.subr.mxu0 0.0
      %v3503 = vand.u32 %v3135, 4294901760
      %v3504 = vsub.f32 %v3135, %v3503
      %3505 = vmatpush1.msra.mxu0 %v3504
      %3506 = vmatprep.subr.mxu0 0.0
      %v3507 = vand.u32 %v3133, 4294901760
      %v3508 = vsub.f32 %v3133, %v3507
      %3509 = vmatpush1.msra.mxu0 %v3508
      %3510 = vmatprep.subr.mxu0 0.0
      %v3511 = vand.u32 %v3131, 4294901760
      %v3512 = vsub.f32 %v3131, %v3511
      %3513 = vmatpush1.msra.mxu0 %v3512
      %3514 = vmatprep.subr.mxu0 0.0
      %v3515 = vand.u32 %v3129, 4294901760
      %v3516 = vsub.f32 %v3129, %v3515
      %3517 = vmatpush1.msra.mxu0 %v3516
      %3518 = vmatprep.subr.mxu0 0.0
      %v3519 = vand.u32 %v3127, 4294901760
      %v3520 = vsub.f32 %v3127, %v3519
      %3521 = vmatpush1.msra.mxu0 %v3520
      %3522 = vmatprep.subr.mxu0 0.0
      %v3523 = vand.u32 %v3125, 4294901760
      %v3524 = vsub.f32 %v3125, %v3523
      %3525 = vmatpush1.msra.mxu0 %v3524
      %3526 = vmatprep.subr.mxu0 0.0
      %3527 = vmatpush2.msra.mxu0 0.0
      %3528 = vmatprep.subr.mxu0 0.0
      %3529 = vmatpush2.msra.mxu0 0.0
      %3530 = vmatprep.subr.mxu0 0.0
      %3531 = vmatpush2.msra.mxu0 0.0
      %3532 = vmatprep.subr.mxu0 0.0
      %3533 = vmatpush2.msra.mxu0 0.0
      %3534 = vmatprep.subr.mxu0 0.0
      %3535 = vmatpush2.msra.mxu0 0.0
      %3536 = vmatprep.subr.mxu0 0.0
      %3537 = vmatpush2.msra.mxu0 0.0
      %3538 = vmatprep.subr.mxu0 0.0
      %3539 = vmatpush2.msra.mxu0 0.0
      %3540 = vmatprep.subr.mxu0 0.0
      %3541 = vmatpush2.msra.mxu0 0.0
      %3542 = vmatprep.subr.mxu0 0.0
      %3543 = vmatpush2.msra.mxu0 0.0
      %3544 = vmatprep.subr.mxu0 0.0
      %3545 = vmatpush2.msra.mxu0 0.0
      %3546 = vmatprep.subr.mxu0 0.0
      %3547 = vmatpush2.msra.mxu0 0.0
      %3548 = vmatprep.subr.mxu0 0.0
      %3549 = vmatpush2.msra.mxu0 0.0
      %3550 = vmatprep.subr.mxu0 0.0
      %3551 = vmatpush2.msra.mxu0 0.0
      %3552 = vmatprep.subr.mxu0 0.0
      %3553 = vmatpush2.msra.mxu0 0.0
      %3554 = vmatprep.subr.mxu0 0.0
      %3555 = vmatpush2.msra.mxu0 0.0
      %3556 = vmatprep.subr.mxu0 0.0
      %3557 = vmatpush2.msra.mxu0 0.0
      %3558 = vmatprep.mubr.f32.mxu0 0.0
      %v3559 = vand.u32 %v3149, 4294901760
      %v3560 = vsub.f32 %v3149, %v3559
      %3561 = vmatmul.mubr.f32.gmra.mxu0 %v3560
      %v3562 = vpop.f32.mrf.mxu0
      %v3563 = vadd.f32 %v3433, %v3562
      %v3564 = vpop.f32.mrf.mxu0
      %3565 = vmatprep.mubr.f32.mxu0 0.0
      %v3566 = vand.u32 %v3152, 4294901760
      %v3567 = vsub.f32 %v3152, %v3566
      %3568 = vmatmul.mubr.f32.gmra.mxu0 %v3567
      %v3569 = vpop.f32.mrf.mxu0
      %v3570 = vadd.f32 %v3439, %v3569
      %v3571 = vpop.f32.mrf.mxu0
      %3572 = vmatprep.mubr.f32.mxu0 0.0
      %v3573 = vand.u32 %v3155, 4294901760
      %v3574 = vsub.f32 %v3155, %v3573
      %3575 = vmatmul.mubr.f32.gmra.mxu0 %v3574
      %v3576 = vpop.f32.mrf.mxu0
      %v3577 = vadd.f32 %v3445, %v3576
      %v3578 = vpop.f32.mrf.mxu0
      %3579 = vmatprep.mubr.f32.mxu0 0.0
      %v3580 = vand.u32 %v3158, 4294901760
      %v3581 = vsub.f32 %v3158, %v3580
      %3582 = vmatmul.mubr.f32.gmra.mxu0 %v3581
      %v3583 = vpop.f32.mrf.mxu0
      %v3584 = vadd.f32 %v3451, %v3583
      %v3585 = vpop.f32.mrf.mxu0
      %3586 = vmatprep.mubr.f32.mxu0 0.0
      %v3587 = vand.u32 %v3161, 4294901760
      %v3588 = vsub.f32 %v3161, %v3587
      %3589 = vmatmul.mubr.f32.gmra.mxu0 %v3588
      %v3590 = vpop.f32.mrf.mxu0
      %v3591 = vadd.f32 %v3457, %v3590
      %v3592 = vpop.f32.mrf.mxu0
      %3593 = vmatprep.mubr.f32.mxu0 0.0
      %v3594 = vand.u32 %v3164, 4294901760
      %v3595 = vsub.f32 %v3164, %v3594
      %3596 = vmatmul.mubr.f32.gmra.mxu0 %v3595
      %v3597 = vpop.f32.mrf.mxu0
      %v3598 = vadd.f32 %v3463, %v3597
      %v3599 = vpop.f32.mrf.mxu0
      %3600 = vmatprep.mubr.f32.mxu0 0.0
      %v3601 = vand.u32 %v3167, 4294901760
      %v3602 = vsub.f32 %v3167, %v3601
      %3603 = vmatmul.mubr.f32.gmra.mxu0 %v3602
      %v3604 = vpop.f32.mrf.mxu0
      %v3605 = vadd.f32 %v3469, %v3604
      %v3606 = vpop.f32.mrf.mxu0
      %3607 = vmatprep.mubr.f32.mxu0 0.0
      %v3608 = vand.u32 %v3170, 4294901760
      %v3609 = vsub.f32 %v3170, %v3608
      %3610 = vmatmul.mubr.f32.gmra.mxu0 %v3609
      %v3611 = vpop.f32.mrf.mxu0
      %v3612 = vadd.f32 %v3475, %v3611
      %v3613 = vpop.f32.mrf.mxu0
      %3614 = vdwg.mxu0
      %3615 = vmatprep.subr.mxu0 0.0
      %3616 = vmatpush1.msra.mxu0 0.0
      %3617 = vmatprep.subr.mxu0 0.0
      %3618 = vmatpush1.msra.mxu0 0.0
      %3619 = vmatprep.subr.mxu0 0.0
      %3620 = vmatpush1.msra.mxu0 0.0
      %3621 = vmatprep.subr.mxu0 0.0
      %3622 = vmatpush1.msra.mxu0 0.0
      %3623 = vmatprep.subr.mxu0 0.0
      %3624 = vmatpush1.msra.mxu0 0.0
      %3625 = vmatprep.subr.mxu0 0.0
      %3626 = vmatpush1.msra.mxu0 0.0
      %3627 = vmatprep.subr.mxu0 0.0
      %3628 = vmatpush1.msra.mxu0 0.0
      %3629 = vmatprep.subr.mxu0 0.0
      %3630 = vmatpush1.msra.mxu0 0.0
      %3631 = vmatprep.subr.mxu0 0.0
      %v3632 = vand.u32 %v3139, 4294901760
      %3633 = vmatpush1.msra.mxu0 %v3632
      %3634 = vmatprep.subr.mxu0 0.0
      %v3635 = vand.u32 %v3137, 4294901760
      %3636 = vmatpush1.msra.mxu0 %v3635
      %3637 = vmatprep.subr.mxu0 0.0
      %v3638 = vand.u32 %v3135, 4294901760
      %3639 = vmatpush1.msra.mxu0 %v3638
      %3640 = vmatprep.subr.mxu0 0.0
      %v3641 = vand.u32 %v3133, 4294901760
      %3642 = vmatpush1.msra.mxu0 %v3641
      %3643 = vmatprep.subr.mxu0 0.0
      %v3644 = vand.u32 %v3131, 4294901760
      %3645 = vmatpush1.msra.mxu0 %v3644
      %3646 = vmatprep.subr.mxu0 0.0
      %v3647 = vand.u32 %v3129, 4294901760
      %3648 = vmatpush1.msra.mxu0 %v3647
      %3649 = vmatprep.subr.mxu0 0.0
      %v3650 = vand.u32 %v3127, 4294901760
      %3651 = vmatpush1.msra.mxu0 %v3650
      %3652 = vmatprep.subr.mxu0 0.0
      %v3653 = vand.u32 %v3125, 4294901760
      %3654 = vmatpush1.msra.mxu0 %v3653
      %3655 = vmatprep.subr.mxu0 0.0
      %3656 = vmatpush2.msra.mxu0 0.0
      %3657 = vmatprep.subr.mxu0 0.0
      %3658 = vmatpush2.msra.mxu0 0.0
      %3659 = vmatprep.subr.mxu0 0.0
      %3660 = vmatpush2.msra.mxu0 0.0
      %3661 = vmatprep.subr.mxu0 0.0
      %3662 = vmatpush2.msra.mxu0 0.0
      %3663 = vmatprep.subr.mxu0 0.0
      %3664 = vmatpush2.msra.mxu0 0.0
      %3665 = vmatprep.subr.mxu0 0.0
      %3666 = vmatpush2.msra.mxu0 0.0
      %3667 = vmatprep.subr.mxu0 0.0
      %3668 = vmatpush2.msra.mxu0 0.0
      %3669 = vmatprep.subr.mxu0 0.0
      %3670 = vmatpush2.msra.mxu0 0.0
      %3671 = vmatprep.subr.mxu0 0.0
      %3672 = vmatpush2.msra.mxu0 0.0
      %3673 = vmatprep.subr.mxu0 0.0
      %3674 = vmatpush2.msra.mxu0 0.0
      %3675 = vmatprep.subr.mxu0 0.0
      %3676 = vmatpush2.msra.mxu0 0.0
      %3677 = vmatprep.subr.mxu0 0.0
      %3678 = vmatpush2.msra.mxu0 0.0
      %3679 = vmatprep.subr.mxu0 0.0
      %3680 = vmatpush2.msra.mxu0 0.0
      %3681 = vmatprep.subr.mxu0 0.0
      %3682 = vmatpush2.msra.mxu0 0.0
      %3683 = vmatprep.subr.mxu0 0.0
      %3684 = vmatpush2.msra.mxu0 0.0
      %3685 = vmatprep.subr.mxu0 0.0
      %3686 = vmatpush2.msra.mxu0 0.0
      %3687 = vmatprep.mubr.f32.mxu0 0.0
      %v3688 = vand.u32 %v3149, 4294901760
      %v3689 = vsub.f32 %v3149, %v3688
      %v3690 = vand.u32 %v3689, 4294901760
      %3691 = vmatmul.mubr.f32.gmra.mxu0 %v3690
      %v3692 = vpop.f32.mrf.mxu0
      %v3693 = vadd.f32 %v3563, %v3692
      %v3694 = vpop.f32.mrf.mxu0
      %3695 = vmatprep.mubr.f32.mxu0 0.0
      %v3696 = vand.u32 %v3152, 4294901760
      %v3697 = vsub.f32 %v3152, %v3696
      %v3698 = vand.u32 %v3697, 4294901760
      %3699 = vmatmul.mubr.f32.gmra.mxu0 %v3698
      %v3700 = vpop.f32.mrf.mxu0
      %v3701 = vadd.f32 %v3570, %v3700
      %v3702 = vpop.f32.mrf.mxu0
      %3703 = vmatprep.mubr.f32.mxu0 0.0
      %v3704 = vand.u32 %v3155, 4294901760
      %v3705 = vsub.f32 %v3155, %v3704
      %v3706 = vand.u32 %v3705, 4294901760
      %3707 = vmatmul.mubr.f32.gmra.mxu0 %v3706
      %v3708 = vpop.f32.mrf.mxu0
      %v3709 = vadd.f32 %v3577, %v3708
      %v3710 = vpop.f32.mrf.mxu0
      %3711 = vmatprep.mubr.f32.mxu0 0.0
      %v3712 = vand.u32 %v3158, 4294901760
      %v3713 = vsub.f32 %v3158, %v3712
      %v3714 = vand.u32 %v3713, 4294901760
      %3715 = vmatmul.mubr.f32.gmra.mxu0 %v3714
      %v3716 = vpop.f32.mrf.mxu0
      %v3717 = vadd.f32 %v3584, %v3716
      %v3718 = vpop.f32.mrf.mxu0
      %3719 = vmatprep.mubr.f32.mxu0 0.0
      %v3720 = vand.u32 %v3161, 4294901760
      %v3721 = vsub.f32 %v3161, %v3720
      %v3722 = vand.u32 %v3721, 4294901760
      %3723 = vmatmul.mubr.f32.gmra.mxu0 %v3722
      %v3724 = vpop.f32.mrf.mxu0
      %v3725 = vadd.f32 %v3591, %v3724
      %v3726 = vpop.f32.mrf.mxu0
      %3727 = vmatprep.mubr.f32.mxu0 0.0
      %v3728 = vand.u32 %v3164, 4294901760
      %v3729 = vsub.f32 %v3164, %v3728
      %v3730 = vand.u32 %v3729, 4294901760
      %3731 = vmatmul.mubr.f32.gmra.mxu0 %v3730
      %v3732 = vpop.f32.mrf.mxu0
      %v3733 = vadd.f32 %v3598, %v3732
      %v3734 = vpop.f32.mrf.mxu0
      %3735 = vmatprep.mubr.f32.mxu0 0.0
      %v3736 = vand.u32 %v3167, 4294901760
      %v3737 = vsub.f32 %v3167, %v3736
      %v3738 = vand.u32 %v3737, 4294901760
      %3739 = vmatmul.mubr.f32.gmra.mxu0 %v3738
      %v3740 = vpop.f32.mrf.mxu0
      %v3741 = vadd.f32 %v3605, %v3740
      %v3742 = vpop.f32.mrf.mxu0
      %3743 = vmatprep.mubr.f32.mxu0 0.0
      %v3744 = vand.u32 %v3170, 4294901760
      %v3745 = vsub.f32 %v3170, %v3744
      %v3746 = vand.u32 %v3745, 4294901760
      %3747 = vmatmul.mubr.f32.gmra.mxu0 %v3746
      %v3748 = vpop.f32.mrf.mxu0
      %v3749 = vadd.f32 %v3612, %v3748
      %v3750 = vpop.f32.mrf.mxu0
      %3751 = vdwg.mxu0
      %3752 = vmatprep.subr.mxu0 0.0
      %3753 = vmatpush1.msra.mxu0 0.0
      %3754 = vmatprep.subr.mxu0 0.0
      %3755 = vmatpush1.msra.mxu0 0.0
      %3756 = vmatprep.subr.mxu0 0.0
      %3757 = vmatpush1.msra.mxu0 0.0
      %3758 = vmatprep.subr.mxu0 0.0
      %3759 = vmatpush1.msra.mxu0 0.0
      %3760 = vmatprep.subr.mxu0 0.0
      %3761 = vmatpush1.msra.mxu0 0.0
      %3762 = vmatprep.subr.mxu0 0.0
      %3763 = vmatpush1.msra.mxu0 0.0
      %3764 = vmatprep.subr.mxu0 0.0
      %3765 = vmatpush1.msra.mxu0 0.0
      %3766 = vmatprep.subr.mxu0 0.0
      %3767 = vmatpush1.msra.mxu0 0.0
      %3768 = vmatprep.subr.mxu0 0.0
      %v3769 = vand.u32 %v3139, 4294901760
      %v3770 = vsub.f32 %v3139, %v3769
      %v3771 = vand.u32 %v3770, 4294901760
      %3772 = vmatpush1.msra.mxu0 %v3771
      %3773 = vmatprep.subr.mxu0 0.0
      %v3774 = vand.u32 %v3137, 4294901760
      %v3775 = vsub.f32 %v3137, %v3774
      %v3776 = vand.u32 %v3775, 4294901760
      %3777 = vmatpush1.msra.mxu0 %v3776
      %3778 = vmatprep.subr.mxu0 0.0
      %v3779 = vand.u32 %v3135, 4294901760
      %v3780 = vsub.f32 %v3135, %v3779
      %v3781 = vand.u32 %v3780, 4294901760
      %3782 = vmatpush1.msra.mxu0 %v3781
      %3783 = vmatprep.subr.mxu0 0.0
      %v3784 = vand.u32 %v3133, 4294901760
      %v3785 = vsub.f32 %v3133, %v3784
      %v3786 = vand.u32 %v3785, 4294901760
      %3787 = vmatpush1.msra.mxu0 %v3786
      %3788 = vmatprep.subr.mxu0 0.0
      %v3789 = vand.u32 %v3131, 4294901760
      %v3790 = vsub.f32 %v3131, %v3789
      %v3791 = vand.u32 %v3790, 4294901760
      %3792 = vmatpush1.msra.mxu0 %v3791
      %3793 = vmatprep.subr.mxu0 0.0
      %v3794 = vand.u32 %v3129, 4294901760
      %v3795 = vsub.f32 %v3129, %v3794
      %v3796 = vand.u32 %v3795, 4294901760
      %3797 = vmatpush1.msra.mxu0 %v3796
      %3798 = vmatprep.subr.mxu0 0.0
      %v3799 = vand.u32 %v3127, 4294901760
      %v3800 = vsub.f32 %v3127, %v3799
      %v3801 = vand.u32 %v3800, 4294901760
      %3802 = vmatpush1.msra.mxu0 %v3801
      %3803 = vmatprep.subr.mxu0 0.0
      %v3804 = vand.u32 %v3125, 4294901760
      %v3805 = vsub.f32 %v3125, %v3804
      %v3806 = vand.u32 %v3805, 4294901760
      %3807 = vmatpush1.msra.mxu0 %v3806
      %3808 = vmatprep.subr.mxu0 0.0
      %3809 = vmatpush2.msra.mxu0 0.0
      %3810 = vmatprep.subr.mxu0 0.0
      %3811 = vmatpush2.msra.mxu0 0.0
      %3812 = vmatprep.subr.mxu0 0.0
      %3813 = vmatpush2.msra.mxu0 0.0
      %3814 = vmatprep.subr.mxu0 0.0
      %3815 = vmatpush2.msra.mxu0 0.0
      %3816 = vmatprep.subr.mxu0 0.0
      %3817 = vmatpush2.msra.mxu0 0.0
      %3818 = vmatprep.subr.mxu0 0.0
      %3819 = vmatpush2.msra.mxu0 0.0
      %3820 = vmatprep.subr.mxu0 0.0
      %3821 = vmatpush2.msra.mxu0 0.0
      %3822 = vmatprep.subr.mxu0 0.0
      %3823 = vmatpush2.msra.mxu0 0.0
      %3824 = vmatprep.subr.mxu0 0.0
      %3825 = vmatpush2.msra.mxu0 0.0
      %3826 = vmatprep.subr.mxu0 0.0
      %3827 = vmatpush2.msra.mxu0 0.0
      %3828 = vmatprep.subr.mxu0 0.0
      %3829 = vmatpush2.msra.mxu0 0.0
      %3830 = vmatprep.subr.mxu0 0.0
      %3831 = vmatpush2.msra.mxu0 0.0
      %3832 = vmatprep.subr.mxu0 0.0
      %3833 = vmatpush2.msra.mxu0 0.0
      %3834 = vmatprep.subr.mxu0 0.0
      %3835 = vmatpush2.msra.mxu0 0.0
      %3836 = vmatprep.subr.mxu0 0.0
      %3837 = vmatpush2.msra.mxu0 0.0
      %3838 = vmatprep.subr.mxu0 0.0
      %3839 = vmatpush2.msra.mxu0 0.0
      %3840 = vmatprep.mubr.f32.mxu0 0.0
      %v3841 = vand.u32 %v3149, 4294901760
      %3842 = vmatmul.mubr.f32.gmra.mxu0 %v3841
      %v3843 = vpop.f32.mrf.mxu0
      %v3844 = vadd.f32 %v3693, %v3843
      %v3845 = vpop.f32.mrf.mxu0
      %3846 = vmatprep.mubr.f32.mxu0 0.0
      %v3847 = vand.u32 %v3152, 4294901760
      %3848 = vmatmul.mubr.f32.gmra.mxu0 %v3847
      %v3849 = vpop.f32.mrf.mxu0
      %v3850 = vadd.f32 %v3701, %v3849
      %v3851 = vpop.f32.mrf.mxu0
      %3852 = vmatprep.mubr.f32.mxu0 0.0
      %v3853 = vand.u32 %v3155, 4294901760
      %3854 = vmatmul.mubr.f32.gmra.mxu0 %v3853
      %v3855 = vpop.f32.mrf.mxu0
      %v3856 = vadd.f32 %v3709, %v3855
      %v3857 = vpop.f32.mrf.mxu0
      %3858 = vmatprep.mubr.f32.mxu0 0.0
      %v3859 = vand.u32 %v3158, 4294901760
      %3860 = vmatmul.mubr.f32.gmra.mxu0 %v3859
      %v3861 = vpop.f32.mrf.mxu0
      %v3862 = vadd.f32 %v3717, %v3861
      %v3863 = vpop.f32.mrf.mxu0
      %3864 = vmatprep.mubr.f32.mxu0 0.0
      %v3865 = vand.u32 %v3161, 4294901760
      %3866 = vmatmul.mubr.f32.gmra.mxu0 %v3865
      %v3867 = vpop.f32.mrf.mxu0
      %v3868 = vadd.f32 %v3725, %v3867
      %v3869 = vpop.f32.mrf.mxu0
      %3870 = vmatprep.mubr.f32.mxu0 0.0
      %v3871 = vand.u32 %v3164, 4294901760
      %3872 = vmatmul.mubr.f32.gmra.mxu0 %v3871
      %v3873 = vpop.f32.mrf.mxu0
      %v3874 = vadd.f32 %v3733, %v3873
      %v3875 = vpop.f32.mrf.mxu0
      %3876 = vmatprep.mubr.f32.mxu0 0.0
      %v3877 = vand.u32 %v3167, 4294901760
      %3878 = vmatmul.mubr.f32.gmra.mxu0 %v3877
      %v3879 = vpop.f32.mrf.mxu0
      %v3880 = vadd.f32 %v3741, %v3879
      %v3881 = vpop.f32.mrf.mxu0
      %3882 = vmatprep.mubr.f32.mxu0 0.0
      %v3883 = vand.u32 %v3170, 4294901760
      %3884 = vmatmul.mubr.f32.gmra.mxu0 %v3883
      %v3885 = vpop.f32.mrf.mxu0
      %v3886 = vadd.f32 %v3749, %v3885
      %v3887 = vpop.f32.mrf.mxu0
      %3888 = vdwg.mxu0
      %3889 = vmatprep.subr.mxu0 0.0
      %3890 = vmatpush1.msra.mxu0 0.0
      %3891 = vmatprep.subr.mxu0 0.0
      %3892 = vmatpush1.msra.mxu0 0.0
      %3893 = vmatprep.subr.mxu0 0.0
      %3894 = vmatpush1.msra.mxu0 0.0
      %3895 = vmatprep.subr.mxu0 0.0
      %3896 = vmatpush1.msra.mxu0 0.0
      %3897 = vmatprep.subr.mxu0 0.0
      %3898 = vmatpush1.msra.mxu0 0.0
      %3899 = vmatprep.subr.mxu0 0.0
      %3900 = vmatpush1.msra.mxu0 0.0
      %3901 = vmatprep.subr.mxu0 0.0
      %3902 = vmatpush1.msra.mxu0 0.0
      %3903 = vmatprep.subr.mxu0 0.0
      %3904 = vmatpush1.msra.mxu0 0.0
      %3905 = vmatprep.subr.mxu0 0.0
      %v3906 = vand.u32 %v3139, 4294901760
      %3907 = vmatpush1.msra.mxu0 %v3906
      %3908 = vmatprep.subr.mxu0 0.0
      %v3909 = vand.u32 %v3137, 4294901760
      %3910 = vmatpush1.msra.mxu0 %v3909
      %3911 = vmatprep.subr.mxu0 0.0
      %v3912 = vand.u32 %v3135, 4294901760
      %3913 = vmatpush1.msra.mxu0 %v3912
      %3914 = vmatprep.subr.mxu0 0.0
      %v3915 = vand.u32 %v3133, 4294901760
      %3916 = vmatpush1.msra.mxu0 %v3915
      %3917 = vmatprep.subr.mxu0 0.0
      %v3918 = vand.u32 %v3131, 4294901760
      %3919 = vmatpush1.msra.mxu0 %v3918
      %3920 = vmatprep.subr.mxu0 0.0
      %v3921 = vand.u32 %v3129, 4294901760
      %3922 = vmatpush1.msra.mxu0 %v3921
      %3923 = vmatprep.subr.mxu0 0.0
      %v3924 = vand.u32 %v3127, 4294901760
      %3925 = vmatpush1.msra.mxu0 %v3924
      %3926 = vmatprep.subr.mxu0 0.0
      %v3927 = vand.u32 %v3125, 4294901760
      %3928 = vmatpush1.msra.mxu0 %v3927
      %3929 = vmatprep.subr.mxu0 0.0
      %3930 = vmatpush2.msra.mxu0 0.0
      %3931 = vmatprep.subr.mxu0 0.0
      %3932 = vmatpush2.msra.mxu0 0.0
      %3933 = vmatprep.subr.mxu0 0.0
      %3934 = vmatpush2.msra.mxu0 0.0
      %3935 = vmatprep.subr.mxu0 0.0
      %3936 = vmatpush2.msra.mxu0 0.0
      %3937 = vmatprep.subr.mxu0 0.0
      %3938 = vmatpush2.msra.mxu0 0.0
      %3939 = vmatprep.subr.mxu0 0.0
      %3940 = vmatpush2.msra.mxu0 0.0
      %3941 = vmatprep.subr.mxu0 0.0
      %3942 = vmatpush2.msra.mxu0 0.0
      %3943 = vmatprep.subr.mxu0 0.0
      %3944 = vmatpush2.msra.mxu0 0.0
      %3945 = vmatprep.subr.mxu0 0.0
      %3946 = vmatpush2.msra.mxu0 0.0
      %3947 = vmatprep.subr.mxu0 0.0
      %3948 = vmatpush2.msra.mxu0 0.0
      %3949 = vmatprep.subr.mxu0 0.0
      %3950 = vmatpush2.msra.mxu0 0.0
      %3951 = vmatprep.subr.mxu0 0.0
      %3952 = vmatpush2.msra.mxu0 0.0
      %3953 = vmatprep.subr.mxu0 0.0
      %3954 = vmatpush2.msra.mxu0 0.0
      %3955 = vmatprep.subr.mxu0 0.0
      %3956 = vmatpush2.msra.mxu0 0.0
      %3957 = vmatprep.subr.mxu0 0.0
      %3958 = vmatpush2.msra.mxu0 0.0
      %3959 = vmatprep.subr.mxu0 0.0
      %3960 = vmatpush2.msra.mxu0 0.0
      %3961 = vmatprep.mubr.f32.mxu0 0.0
      %v3962 = vand.u32 %v3149, 4294901760
      %3963 = vmatmul.mubr.f32.gmra.mxu0 %v3962
      %v3964 = vpop.f32.mrf.mxu0
      %v3965 = vadd.f32 %v3844, %v3964
      %v3966 = vpop.f32.mrf.mxu0
      %3967 = vmatprep.mubr.f32.mxu0 0.0
      %v3968 = vand.u32 %v3152, 4294901760
      %3969 = vmatmul.mubr.f32.gmra.mxu0 %v3968
      %v3970 = vpop.f32.mrf.mxu0
      %v3971 = vadd.f32 %v3850, %v3970
      %v3972 = vpop.f32.mrf.mxu0
      %3973 = vmatprep.mubr.f32.mxu0 0.0
      %v3974 = vand.u32 %v3155, 4294901760
      %3975 = vmatmul.mubr.f32.gmra.mxu0 %v3974
      %v3976 = vpop.f32.mrf.mxu0
      %v3977 = vadd.f32 %v3856, %v3976
      %v3978 = vpop.f32.mrf.mxu0
      %3979 = vmatprep.mubr.f32.mxu0 0.0
      %v3980 = vand.u32 %v3158, 4294901760
      %3981 = vmatmul.mubr.f32.gmra.mxu0 %v3980
      %v3982 = vpop.f32.mrf.mxu0
      %v3983 = vadd.f32 %v3862, %v3982
      %v3984 = vpop.f32.mrf.mxu0
      %3985 = vmatprep.mubr.f32.mxu0 0.0
      %v3986 = vand.u32 %v3161, 4294901760
      %3987 = vmatmul.mubr.f32.gmra.mxu0 %v3986
      %v3988 = vpop.f32.mrf.mxu0
      %v3989 = vadd.f32 %v3868, %v3988
      %v3990 = vpop.f32.mrf.mxu0
      %3991 = vmatprep.mubr.f32.mxu0 0.0
      %v3992 = vand.u32 %v3164, 4294901760
      %3993 = vmatmul.mubr.f32.gmra.mxu0 %v3992
      %v3994 = vpop.f32.mrf.mxu0
      %v3995 = vadd.f32 %v3874, %v3994
      %v3996 = vpop.f32.mrf.mxu0
      %3997 = vmatprep.mubr.f32.mxu0 0.0
      %v3998 = vand.u32 %v3167, 4294901760
      %3999 = vmatmul.mubr.f32.gmra.mxu0 %v3998
      %v4000 = vpop.f32.mrf.mxu0
      %v4001 = vadd.f32 %v3880, %v4000
      %v4002 = vpop.f32.mrf.mxu0
      %4003 = vmatprep.mubr.f32.mxu0 0.0
      %v4004 = vand.u32 %v3170, 4294901760
      %4005 = vmatmul.mubr.f32.gmra.mxu0 %v4004
      %v4006 = vpop.f32.mrf.mxu0
      %v4007 = vadd.f32 %v3886, %v4006
      %v4008 = vpop.f32.mrf.mxu0
      %4009 = vdwg.mxu0
      %4010 = vrot.lane.b32.xlu0 %v2095, 80
      %v4011 = vpop.permute.xlu0 %4010
      %4012 = vrot.lane.b32.xlu0 %v2101, 80
      %v4013 = vpop.permute.xlu0 %4012
      %4014 = vrot.lane.b32.xlu0 %v2107, 80
      %v4015 = vpop.permute.xlu0 %4014
      %4016 = vrot.lane.b32.xlu0 %v2113, 80
      %v4017 = vpop.permute.xlu0 %4016
      %4018 = vrot.lane.b32.xlu0 %v2119, 80
      %v4019 = vpop.permute.xlu0 %4018
      %4020 = vrot.lane.b32.xlu0 %v2125, 80
      %v4021 = vpop.permute.xlu0 %4020
      %4022 = vrot.lane.b32.xlu0 %v2131, 80
      %v4023 = vpop.permute.xlu0 %4022
      %4024 = vrot.lane.b32.xlu0 %v2137, 80
      %v4025 = vpop.permute.xlu0 %4024
      %4026 = vrot.lane.b32.xlu0 %v2095, 64
      %v4027 = vpop.permute.xlu0 %4026
      %4028 = vrot.lane.b32.xlu0 %v2101, 64
      %v4029 = vpop.permute.xlu0 %4028
      %4030 = vrot.lane.b32.xlu0 %v2107, 64
      %v4031 = vpop.permute.xlu0 %4030
      %4032 = vrot.lane.b32.xlu0 %v2113, 64
      %v4033 = vpop.permute.xlu0 %4032
      %4034 = vrot.lane.b32.xlu0 %v2119, 64
      %v4035 = vpop.permute.xlu0 %4034
      %4036 = vrot.lane.b32.xlu0 %v2125, 64
      %v4037 = vpop.permute.xlu0 %4036
      %4038 = vrot.lane.b32.xlu0 %v2131, 64
      %v4039 = vpop.permute.xlu0 %4038
      %4040 = vrot.lane.b32.xlu0 %v2137, 64
      %v4041 = vpop.permute.xlu0 %4040
      %v4042 = vsel %vm2164, %v4011, 0
      %v4044 = vsel %vm2164, %v4013, 0
      %v4046 = vsel %vm2164, %v4015, 0
      %v4048 = vsel %vm2164, %v4017, 0
      %v4050 = vsel %vm2164, %v4019, 0
      %v4052 = vsel %vm2164, %v4021, 0
      %v4054 = vsel %vm2164, %v4023, 0
      %v4056 = vsel %vm2164, %v4025, 0
      %v4058 = vsel %vm2164, %v4027, 0
      %v4060 = vsel %vm2164, %v4029, 0
      %v4062 = vsel %vm2164, %v4031, 0
      %v4064 = vsel %vm2164, %v4033, 0
      %v4066 = vsel %vm2164, %v4035, 0
      %v4068 = vsel %vm2164, %v4037, 0
      %v4070 = vsel %vm2164, %v4039, 0
      %v4072 = vsel %vm2164, %v4041, 0
      %4074 = vmatprep.subr.mxu0 0.0
      %4075 = vmatpush1.xpose.msra.mxu0 0.0
      %4076 = vmatprep.subr.mxu0 0.0
      %4077 = vmatpush1.xpose.msra.mxu0 0.0
      %4078 = vmatprep.subr.mxu0 0.0
      %4079 = vmatpush1.xpose.msra.mxu0 0.0
      %4080 = vmatprep.subr.mxu0 0.0
      %4081 = vmatpush1.xpose.msra.mxu0 0.0
      %4082 = vmatprep.subr.mxu0 0.0
      %4083 = vmatpush1.xpose.msra.mxu0 0.0
      %4084 = vmatprep.subr.mxu0 0.0
      %4085 = vmatpush1.xpose.msra.mxu0 0.0
      %4086 = vmatprep.subr.mxu0 0.0
      %4087 = vmatpush1.xpose.msra.mxu0 0.0
      %4088 = vmatprep.subr.mxu0 0.0
      %4089 = vmatpush1.xpose.msra.mxu0 0.0
      %4090 = vmatprep.subr.mxu0 0.0
      %v4091 = vand.u32 %v4072, 4294901760
      %4092 = vmatpush1.xpose.msra.mxu0 %v4091
      %4093 = vmatprep.subr.mxu0 0.0
      %v4094 = vand.u32 %v4070, 4294901760
      %4095 = vmatpush1.xpose.msra.mxu0 %v4094
      %4096 = vmatprep.subr.mxu0 0.0
      %v4097 = vand.u32 %v4068, 4294901760
      %4098 = vmatpush1.xpose.msra.mxu0 %v4097
      %4099 = vmatprep.subr.mxu0 0.0
      %v4100 = vand.u32 %v4066, 4294901760
      %4101 = vmatpush1.xpose.msra.mxu0 %v4100
      %4102 = vmatprep.subr.mxu0 0.0
      %v4103 = vand.u32 %v4064, 4294901760
      %4104 = vmatpush1.xpose.msra.mxu0 %v4103
      %4105 = vmatprep.subr.mxu0 0.0
      %v4106 = vand.u32 %v4062, 4294901760
      %4107 = vmatpush1.xpose.msra.mxu0 %v4106
      %4108 = vmatprep.subr.mxu0 0.0
      %v4109 = vand.u32 %v4060, 4294901760
      %4110 = vmatpush1.xpose.msra.mxu0 %v4109
      %4111 = vmatprep.subr.mxu0 0.0
      %v4112 = vand.u32 %v4058, 4294901760
      %4113 = vmatpush1.xpose.msra.mxu0 %v4112
      %4114 = vmatprep.subr.mxu0 0.0
      %4115 = vmatpush2.xpose.msra.mxu0 0.0
      %4116 = vmatprep.subr.mxu0 0.0
      %4117 = vmatpush2.xpose.msra.mxu0 0.0
      %4118 = vmatprep.subr.mxu0 0.0
      %4119 = vmatpush2.xpose.msra.mxu0 0.0
      %4120 = vmatprep.subr.mxu0 0.0
      %4121 = vmatpush2.xpose.msra.mxu0 0.0
      %4122 = vmatprep.subr.mxu0 0.0
      %4123 = vmatpush2.xpose.msra.mxu0 0.0
      %4124 = vmatprep.subr.mxu0 0.0
      %4125 = vmatpush2.xpose.msra.mxu0 0.0
      %4126 = vmatprep.subr.mxu0 0.0
      %4127 = vmatpush2.xpose.msra.mxu0 0.0
      %4128 = vmatprep.subr.mxu0 0.0
      %4129 = vmatpush2.xpose.msra.mxu0 0.0
      %4130 = vmatprep.subr.mxu0 0.0
      %4131 = vmatpush2.xpose.msra.mxu0 0.0
      %4132 = vmatprep.subr.mxu0 0.0
      %4133 = vmatpush2.xpose.msra.mxu0 0.0
      %4134 = vmatprep.subr.mxu0 0.0
      %4135 = vmatpush2.xpose.msra.mxu0 0.0
      %4136 = vmatprep.subr.mxu0 0.0
      %4137 = vmatpush2.xpose.msra.mxu0 0.0
      %4138 = vmatprep.subr.mxu0 0.0
      %4139 = vmatpush2.xpose.msra.mxu0 0.0
      %4140 = vmatprep.subr.mxu0 0.0
      %4141 = vmatpush2.xpose.msra.mxu0 0.0
      %4142 = vmatprep.subr.mxu0 0.0
      %4143 = vmatpush2.xpose.msra.mxu0 0.0
      %4144 = vmatprep.subr.mxu0 0.0
      %4145 = vmatpush2.xpose.msra.mxu0 0.0
      %4146 = vmatprep.mubr.f32.mxu0 0.0
      %v4147 = vand.u32 %v4042, 4294901760
      %v4148 = vsub.f32 %v4042, %v4147
      %v4149 = vand.u32 %v4148, 4294901760
      %v4150 = vsub.f32 %v4148, %v4149
      %v4151 = vand.u32 %v4150, 4294901760
      %4152 = vmatmul.mubr.f32.gmra.mxu0 %v4151
      %v4153 = vpop.f32.mrf.mxu0
      %v4154 = vadd.f32 0.0, %v4153
      %v4155 = vpop.f32.mrf.mxu0
      %4156 = vmatprep.mubr.f32.mxu0 0.0
      %v4157 = vand.u32 %v4044, 4294901760
      %v4158 = vsub.f32 %v4044, %v4157
      %v4159 = vand.u32 %v4158, 4294901760
      %v4160 = vsub.f32 %v4158, %v4159
      %v4161 = vand.u32 %v4160, 4294901760
      %4162 = vmatmul.mubr.f32.gmra.mxu0 %v4161
      %v4163 = vpop.f32.mrf.mxu0
      %v4164 = vadd.f32 0.0, %v4163
      %v4165 = vpop.f32.mrf.mxu0
      %4166 = vmatprep.mubr.f32.mxu0 0.0
      %v4167 = vand.u32 %v4046, 4294901760
      %v4168 = vsub.f32 %v4046, %v4167
      %v4169 = vand.u32 %v4168, 4294901760
      %v4170 = vsub.f32 %v4168, %v4169
      %v4171 = vand.u32 %v4170, 4294901760
      %4172 = vmatmul.mubr.f32.gmra.mxu0 %v4171
      %v4173 = vpop.f32.mrf.mxu0
      %v4174 = vadd.f32 0.0, %v4173
      %v4175 = vpop.f32.mrf.mxu0
      %4176 = vmatprep.mubr.f32.mxu0 0.0
      %v4177 = vand.u32 %v4048, 4294901760
      %v4178 = vsub.f32 %v4048, %v4177
      %v4179 = vand.u32 %v4178, 4294901760
      %v4180 = vsub.f32 %v4178, %v4179
      %v4181 = vand.u32 %v4180, 4294901760
      %4182 = vmatmul.mubr.f32.gmra.mxu0 %v4181
      %v4183 = vpop.f32.mrf.mxu0
      %v4184 = vadd.f32 0.0, %v4183
      %v4185 = vpop.f32.mrf.mxu0
      %4186 = vmatprep.mubr.f32.mxu0 0.0
      %v4187 = vand.u32 %v4050, 4294901760
      %v4188 = vsub.f32 %v4050, %v4187
      %v4189 = vand.u32 %v4188, 4294901760
      %v4190 = vsub.f32 %v4188, %v4189
      %v4191 = vand.u32 %v4190, 4294901760
      %4192 = vmatmul.mubr.f32.gmra.mxu0 %v4191
      %v4193 = vpop.f32.mrf.mxu0
      %v4194 = vadd.f32 0.0, %v4193
      %v4195 = vpop.f32.mrf.mxu0
      %4196 = vmatprep.mubr.f32.mxu0 0.0
      %v4197 = vand.u32 %v4052, 4294901760
      %v4198 = vsub.f32 %v4052, %v4197
      %v4199 = vand.u32 %v4198, 4294901760
      %v4200 = vsub.f32 %v4198, %v4199
      %v4201 = vand.u32 %v4200, 4294901760
      %4202 = vmatmul.mubr.f32.gmra.mxu0 %v4201
      %v4203 = vpop.f32.mrf.mxu0
      %v4204 = vadd.f32 0.0, %v4203
      %v4205 = vpop.f32.mrf.mxu0
      %4206 = vmatprep.mubr.f32.mxu0 0.0
      %v4207 = vand.u32 %v4054, 4294901760
      %v4208 = vsub.f32 %v4054, %v4207
      %v4209 = vand.u32 %v4208, 4294901760
      %v4210 = vsub.f32 %v4208, %v4209
      %v4211 = vand.u32 %v4210, 4294901760
      %4212 = vmatmul.mubr.f32.gmra.mxu0 %v4211
      %v4213 = vpop.f32.mrf.mxu0
      %v4214 = vadd.f32 0.0, %v4213
      %v4215 = vpop.f32.mrf.mxu0
      %4216 = vmatprep.mubr.f32.mxu0 0.0
      %v4217 = vand.u32 %v4056, 4294901760
      %v4218 = vsub.f32 %v4056, %v4217
      %v4219 = vand.u32 %v4218, 4294901760
      %v4220 = vsub.f32 %v4218, %v4219
      %v4221 = vand.u32 %v4220, 4294901760
      %4222 = vmatmul.mubr.f32.gmra.mxu0 %v4221
      %v4223 = vpop.f32.mrf.mxu0
      %v4224 = vadd.f32 0.0, %v4223
      %v4225 = vpop.f32.mrf.mxu0
      %4226 = vdwg.mxu0
      %4227 = vmatprep.subr.mxu0 0.0
      %4228 = vmatpush1.xpose.msra.mxu0 0.0
      %4229 = vmatprep.subr.mxu0 0.0
      %4230 = vmatpush1.xpose.msra.mxu0 0.0
      %4231 = vmatprep.subr.mxu0 0.0
      %4232 = vmatpush1.xpose.msra.mxu0 0.0
      %4233 = vmatprep.subr.mxu0 0.0
      %4234 = vmatpush1.xpose.msra.mxu0 0.0
      %4235 = vmatprep.subr.mxu0 0.0
      %4236 = vmatpush1.xpose.msra.mxu0 0.0
      %4237 = vmatprep.subr.mxu0 0.0
      %4238 = vmatpush1.xpose.msra.mxu0 0.0
      %4239 = vmatprep.subr.mxu0 0.0
      %4240 = vmatpush1.xpose.msra.mxu0 0.0
      %4241 = vmatprep.subr.mxu0 0.0
      %4242 = vmatpush1.xpose.msra.mxu0 0.0
      %4243 = vmatprep.subr.mxu0 0.0
      %v4244 = vand.u32 %v4072, 4294901760
      %v4245 = vsub.f32 %v4072, %v4244
      %v4246 = vand.u32 %v4245, 4294901760
      %v4247 = vsub.f32 %v4245, %v4246
      %v4248 = vand.u32 %v4247, 4294901760
      %4249 = vmatpush1.xpose.msra.mxu0 %v4248
      %4250 = vmatprep.subr.mxu0 0.0
      %v4251 = vand.u32 %v4070, 4294901760
      %v4252 = vsub.f32 %v4070, %v4251
      %v4253 = vand.u32 %v4252, 4294901760
      %v4254 = vsub.f32 %v4252, %v4253
      %v4255 = vand.u32 %v4254, 4294901760
      %4256 = vmatpush1.xpose.msra.mxu0 %v4255
      %4257 = vmatprep.subr.mxu0 0.0
      %v4258 = vand.u32 %v4068, 4294901760
      %v4259 = vsub.f32 %v4068, %v4258
      %v4260 = vand.u32 %v4259, 4294901760
      %v4261 = vsub.f32 %v4259, %v4260
      %v4262 = vand.u32 %v4261, 4294901760
      %4263 = vmatpush1.xpose.msra.mxu0 %v4262
      %4264 = vmatprep.subr.mxu0 0.0
      %v4265 = vand.u32 %v4066, 4294901760
      %v4266 = vsub.f32 %v4066, %v4265
      %v4267 = vand.u32 %v4266, 4294901760
      %v4268 = vsub.f32 %v4266, %v4267
      %v4269 = vand.u32 %v4268, 4294901760
      %4270 = vmatpush1.xpose.msra.mxu0 %v4269
      %4271 = vmatprep.subr.mxu0 0.0
      %v4272 = vand.u32 %v4064, 4294901760
      %v4273 = vsub.f32 %v4064, %v4272
      %v4274 = vand.u32 %v4273, 4294901760
      %v4275 = vsub.f32 %v4273, %v4274
      %v4276 = vand.u32 %v4275, 4294901760
      %4277 = vmatpush1.xpose.msra.mxu0 %v4276
      %4278 = vmatprep.subr.mxu0 0.0
      %v4279 = vand.u32 %v4062, 4294901760
      %v4280 = vsub.f32 %v4062, %v4279
      %v4281 = vand.u32 %v4280, 4294901760
      %v4282 = vsub.f32 %v4280, %v4281
      %v4283 = vand.u32 %v4282, 4294901760
      %4284 = vmatpush1.xpose.msra.mxu0 %v4283
      %4285 = vmatprep.subr.mxu0 0.0
      %v4286 = vand.u32 %v4060, 4294901760
      %v4287 = vsub.f32 %v4060, %v4286
      %v4288 = vand.u32 %v4287, 4294901760
      %v4289 = vsub.f32 %v4287, %v4288
      %v4290 = vand.u32 %v4289, 4294901760
      %4291 = vmatpush1.xpose.msra.mxu0 %v4290
      %4292 = vmatprep.subr.mxu0 0.0
      %v4293 = vand.u32 %v4058, 4294901760
      %v4294 = vsub.f32 %v4058, %v4293
      %v4295 = vand.u32 %v4294, 4294901760
      %v4296 = vsub.f32 %v4294, %v4295
      %v4297 = vand.u32 %v4296, 4294901760
      %4298 = vmatpush1.xpose.msra.mxu0 %v4297
      %4299 = vmatprep.subr.mxu0 0.0
      %4300 = vmatpush2.xpose.msra.mxu0 0.0
      %4301 = vmatprep.subr.mxu0 0.0
      %4302 = vmatpush2.xpose.msra.mxu0 0.0
      %4303 = vmatprep.subr.mxu0 0.0
      %4304 = vmatpush2.xpose.msra.mxu0 0.0
      %4305 = vmatprep.subr.mxu0 0.0
      %4306 = vmatpush2.xpose.msra.mxu0 0.0
      %4307 = vmatprep.subr.mxu0 0.0
      %4308 = vmatpush2.xpose.msra.mxu0 0.0
      %4309 = vmatprep.subr.mxu0 0.0
      %4310 = vmatpush2.xpose.msra.mxu0 0.0
      %4311 = vmatprep.subr.mxu0 0.0
      %4312 = vmatpush2.xpose.msra.mxu0 0.0
      %4313 = vmatprep.subr.mxu0 0.0
      %4314 = vmatpush2.xpose.msra.mxu0 0.0
      %4315 = vmatprep.subr.mxu0 0.0
      %4316 = vmatpush2.xpose.msra.mxu0 0.0
      %4317 = vmatprep.subr.mxu0 0.0
      %4318 = vmatpush2.xpose.msra.mxu0 0.0
      %4319 = vmatprep.subr.mxu0 0.0
      %4320 = vmatpush2.xpose.msra.mxu0 0.0
      %4321 = vmatprep.subr.mxu0 0.0
      %4322 = vmatpush2.xpose.msra.mxu0 0.0
      %4323 = vmatprep.subr.mxu0 0.0
      %4324 = vmatpush2.xpose.msra.mxu0 0.0
      %4325 = vmatprep.subr.mxu0 0.0
      %4326 = vmatpush2.xpose.msra.mxu0 0.0
      %4327 = vmatprep.subr.mxu0 0.0
      %4328 = vmatpush2.xpose.msra.mxu0 0.0
      %4329 = vmatprep.subr.mxu0 0.0
      %4330 = vmatpush2.xpose.msra.mxu0 0.0
      %4331 = vmatprep.mubr.f32.mxu0 0.0
      %v4332 = vand.u32 %v4042, 4294901760
      %4333 = vmatmul.mubr.f32.gmra.mxu0 %v4332
      %v4334 = vpop.f32.mrf.mxu0
      %v4335 = vadd.f32 %v4154, %v4334
      %v4336 = vpop.f32.mrf.mxu0
      %4337 = vmatprep.mubr.f32.mxu0 0.0
      %v4338 = vand.u32 %v4044, 4294901760
      %4339 = vmatmul.mubr.f32.gmra.mxu0 %v4338
      %v4340 = vpop.f32.mrf.mxu0
      %v4341 = vadd.f32 %v4164, %v4340
      %v4342 = vpop.f32.mrf.mxu0
      %4343 = vmatprep.mubr.f32.mxu0 0.0
      %v4344 = vand.u32 %v4046, 4294901760
      %4345 = vmatmul.mubr.f32.gmra.mxu0 %v4344
      %v4346 = vpop.f32.mrf.mxu0
      %v4347 = vadd.f32 %v4174, %v4346
      %v4348 = vpop.f32.mrf.mxu0
      %4349 = vmatprep.mubr.f32.mxu0 0.0
      %v4350 = vand.u32 %v4048, 4294901760
      %4351 = vmatmul.mubr.f32.gmra.mxu0 %v4350
      %v4352 = vpop.f32.mrf.mxu0
      %v4353 = vadd.f32 %v4184, %v4352
      %v4354 = vpop.f32.mrf.mxu0
      %4355 = vmatprep.mubr.f32.mxu0 0.0
      %v4356 = vand.u32 %v4050, 4294901760
      %4357 = vmatmul.mubr.f32.gmra.mxu0 %v4356
      %v4358 = vpop.f32.mrf.mxu0
      %v4359 = vadd.f32 %v4194, %v4358
      %v4360 = vpop.f32.mrf.mxu0
      %4361 = vmatprep.mubr.f32.mxu0 0.0
      %v4362 = vand.u32 %v4052, 4294901760
      %4363 = vmatmul.mubr.f32.gmra.mxu0 %v4362
      %v4364 = vpop.f32.mrf.mxu0
      %v4365 = vadd.f32 %v4204, %v4364
      %v4366 = vpop.f32.mrf.mxu0
      %4367 = vmatprep.mubr.f32.mxu0 0.0
      %v4368 = vand.u32 %v4054, 4294901760
      %4369 = vmatmul.mubr.f32.gmra.mxu0 %v4368
      %v4370 = vpop.f32.mrf.mxu0
      %v4371 = vadd.f32 %v4214, %v4370
      %v4372 = vpop.f32.mrf.mxu0
      %4373 = vmatprep.mubr.f32.mxu0 0.0
      %v4374 = vand.u32 %v4056, 4294901760
      %4375 = vmatmul.mubr.f32.gmra.mxu0 %v4374
      %v4376 = vpop.f32.mrf.mxu0
      %v4377 = vadd.f32 %v4224, %v4376
      %v4378 = vpop.f32.mrf.mxu0
      %4379 = vdwg.mxu0
      %4380 = vmatprep.subr.mxu0 0.0
      %4381 = vmatpush1.xpose.msra.mxu0 0.0
      %4382 = vmatprep.subr.mxu0 0.0
      %4383 = vmatpush1.xpose.msra.mxu0 0.0
      %4384 = vmatprep.subr.mxu0 0.0
      %4385 = vmatpush1.xpose.msra.mxu0 0.0
      %4386 = vmatprep.subr.mxu0 0.0
      %4387 = vmatpush1.xpose.msra.mxu0 0.0
      %4388 = vmatprep.subr.mxu0 0.0
      %4389 = vmatpush1.xpose.msra.mxu0 0.0
      %4390 = vmatprep.subr.mxu0 0.0
      %4391 = vmatpush1.xpose.msra.mxu0 0.0
      %4392 = vmatprep.subr.mxu0 0.0
      %4393 = vmatpush1.xpose.msra.mxu0 0.0
      %4394 = vmatprep.subr.mxu0 0.0
      %4395 = vmatpush1.xpose.msra.mxu0 0.0
      %4396 = vmatprep.subr.mxu0 0.0
      %v4397 = vand.u32 %v4072, 4294901760
      %v4398 = vsub.f32 %v4072, %v4397
      %4399 = vmatpush1.xpose.msra.mxu0 %v4398
      %4400 = vmatprep.subr.mxu0 0.0
      %v4401 = vand.u32 %v4070, 4294901760
      %v4402 = vsub.f32 %v4070, %v4401
      %4403 = vmatpush1.xpose.msra.mxu0 %v4402
      %4404 = vmatprep.subr.mxu0 0.0
      %v4405 = vand.u32 %v4068, 4294901760
      %v4406 = vsub.f32 %v4068, %v4405
      %4407 = vmatpush1.xpose.msra.mxu0 %v4406
      %4408 = vmatprep.subr.mxu0 0.0
      %v4409 = vand.u32 %v4066, 4294901760
      %v4410 = vsub.f32 %v4066, %v4409
      %4411 = vmatpush1.xpose.msra.mxu0 %v4410
      %4412 = vmatprep.subr.mxu0 0.0
      %v4413 = vand.u32 %v4064, 4294901760
      %v4414 = vsub.f32 %v4064, %v4413
      %4415 = vmatpush1.xpose.msra.mxu0 %v4414
      %4416 = vmatprep.subr.mxu0 0.0
      %v4417 = vand.u32 %v4062, 4294901760
      %v4418 = vsub.f32 %v4062, %v4417
      %4419 = vmatpush1.xpose.msra.mxu0 %v4418
      %4420 = vmatprep.subr.mxu0 0.0
      %v4421 = vand.u32 %v4060, 4294901760
      %v4422 = vsub.f32 %v4060, %v4421
      %4423 = vmatpush1.xpose.msra.mxu0 %v4422
      %4424 = vmatprep.subr.mxu0 0.0
      %v4425 = vand.u32 %v4058, 4294901760
      %v4426 = vsub.f32 %v4058, %v4425
      %4427 = vmatpush1.xpose.msra.mxu0 %v4426
      %4428 = vmatprep.subr.mxu0 0.0
      %4429 = vmatpush2.xpose.msra.mxu0 0.0
      %4430 = vmatprep.subr.mxu0 0.0
      %4431 = vmatpush2.xpose.msra.mxu0 0.0
      %4432 = vmatprep.subr.mxu0 0.0
      %4433 = vmatpush2.xpose.msra.mxu0 0.0
      %4434 = vmatprep.subr.mxu0 0.0
      %4435 = vmatpush2.xpose.msra.mxu0 0.0
      %4436 = vmatprep.subr.mxu0 0.0
      %4437 = vmatpush2.xpose.msra.mxu0 0.0
      %4438 = vmatprep.subr.mxu0 0.0
      %4439 = vmatpush2.xpose.msra.mxu0 0.0
      %4440 = vmatprep.subr.mxu0 0.0
      %4441 = vmatpush2.xpose.msra.mxu0 0.0
      %4442 = vmatprep.subr.mxu0 0.0
      %4443 = vmatpush2.xpose.msra.mxu0 0.0
      %4444 = vmatprep.subr.mxu0 0.0
      %4445 = vmatpush2.xpose.msra.mxu0 0.0
      %4446 = vmatprep.subr.mxu0 0.0
      %4447 = vmatpush2.xpose.msra.mxu0 0.0
      %4448 = vmatprep.subr.mxu0 0.0
      %4449 = vmatpush2.xpose.msra.mxu0 0.0
      %4450 = vmatprep.subr.mxu0 0.0
      %4451 = vmatpush2.xpose.msra.mxu0 0.0
      %4452 = vmatprep.subr.mxu0 0.0
      %4453 = vmatpush2.xpose.msra.mxu0 0.0
      %4454 = vmatprep.subr.mxu0 0.0
      %4455 = vmatpush2.xpose.msra.mxu0 0.0
      %4456 = vmatprep.subr.mxu0 0.0
      %4457 = vmatpush2.xpose.msra.mxu0 0.0
      %4458 = vmatprep.subr.mxu0 0.0
      %4459 = vmatpush2.xpose.msra.mxu0 0.0
      %4460 = vmatprep.mubr.f32.mxu0 0.0
      %v4461 = vand.u32 %v4042, 4294901760
      %v4462 = vsub.f32 %v4042, %v4461
      %4463 = vmatmul.mubr.f32.gmra.mxu0 %v4462
      %v4464 = vpop.f32.mrf.mxu0
      %v4465 = vadd.f32 %v4335, %v4464
      %v4466 = vpop.f32.mrf.mxu0
      %4467 = vmatprep.mubr.f32.mxu0 0.0
      %v4468 = vand.u32 %v4044, 4294901760
      %v4469 = vsub.f32 %v4044, %v4468
      %4470 = vmatmul.mubr.f32.gmra.mxu0 %v4469
      %v4471 = vpop.f32.mrf.mxu0
      %v4472 = vadd.f32 %v4341, %v4471
      %v4473 = vpop.f32.mrf.mxu0
      %4474 = vmatprep.mubr.f32.mxu0 0.0
      %v4475 = vand.u32 %v4046, 4294901760
      %v4476 = vsub.f32 %v4046, %v4475
      %4477 = vmatmul.mubr.f32.gmra.mxu0 %v4476
      %v4478 = vpop.f32.mrf.mxu0
      %v4479 = vadd.f32 %v4347, %v4478
      %v4480 = vpop.f32.mrf.mxu0
      %4481 = vmatprep.mubr.f32.mxu0 0.0
      %v4482 = vand.u32 %v4048, 4294901760
      %v4483 = vsub.f32 %v4048, %v4482
      %4484 = vmatmul.mubr.f32.gmra.mxu0 %v4483
      %v4485 = vpop.f32.mrf.mxu0
      %v4486 = vadd.f32 %v4353, %v4485
      %v4487 = vpop.f32.mrf.mxu0
      %4488 = vmatprep.mubr.f32.mxu0 0.0
      %v4489 = vand.u32 %v4050, 4294901760
      %v4490 = vsub.f32 %v4050, %v4489
      %4491 = vmatmul.mubr.f32.gmra.mxu0 %v4490
      %v4492 = vpop.f32.mrf.mxu0
      %v4493 = vadd.f32 %v4359, %v4492
      %v4494 = vpop.f32.mrf.mxu0
      %4495 = vmatprep.mubr.f32.mxu0 0.0
      %v4496 = vand.u32 %v4052, 4294901760
      %v4497 = vsub.f32 %v4052, %v4496
      %4498 = vmatmul.mubr.f32.gmra.mxu0 %v4497
      %v4499 = vpop.f32.mrf.mxu0
      %v4500 = vadd.f32 %v4365, %v4499
      %v4501 = vpop.f32.mrf.mxu0
      %4502 = vmatprep.mubr.f32.mxu0 0.0
      %v4503 = vand.u32 %v4054, 4294901760
      %v4504 = vsub.f32 %v4054, %v4503
      %4505 = vmatmul.mubr.f32.gmra.mxu0 %v4504
      %v4506 = vpop.f32.mrf.mxu0
      %v4507 = vadd.f32 %v4371, %v4506
      %v4508 = vpop.f32.mrf.mxu0
      %4509 = vmatprep.mubr.f32.mxu0 0.0
      %v4510 = vand.u32 %v4056, 4294901760
      %v4511 = vsub.f32 %v4056, %v4510
      %4512 = vmatmul.mubr.f32.gmra.mxu0 %v4511
      %v4513 = vpop.f32.mrf.mxu0
      %v4514 = vadd.f32 %v4377, %v4513
      %v4515 = vpop.f32.mrf.mxu0
      %4516 = vdwg.mxu0
      %4517 = vmatprep.subr.mxu0 0.0
      %4518 = vmatpush1.xpose.msra.mxu0 0.0
      %4519 = vmatprep.subr.mxu0 0.0
      %4520 = vmatpush1.xpose.msra.mxu0 0.0
      %4521 = vmatprep.subr.mxu0 0.0
      %4522 = vmatpush1.xpose.msra.mxu0 0.0
      %4523 = vmatprep.subr.mxu0 0.0
      %4524 = vmatpush1.xpose.msra.mxu0 0.0
      %4525 = vmatprep.subr.mxu0 0.0
      %4526 = vmatpush1.xpose.msra.mxu0 0.0
      %4527 = vmatprep.subr.mxu0 0.0
      %4528 = vmatpush1.xpose.msra.mxu0 0.0
      %4529 = vmatprep.subr.mxu0 0.0
      %4530 = vmatpush1.xpose.msra.mxu0 0.0
      %4531 = vmatprep.subr.mxu0 0.0
      %4532 = vmatpush1.xpose.msra.mxu0 0.0
      %4533 = vmatprep.subr.mxu0 0.0
      %v4534 = vand.u32 %v4072, 4294901760
      %4535 = vmatpush1.xpose.msra.mxu0 %v4534
      %4536 = vmatprep.subr.mxu0 0.0
      %v4537 = vand.u32 %v4070, 4294901760
      %4538 = vmatpush1.xpose.msra.mxu0 %v4537
      %4539 = vmatprep.subr.mxu0 0.0
      %v4540 = vand.u32 %v4068, 4294901760
      %4541 = vmatpush1.xpose.msra.mxu0 %v4540
      %4542 = vmatprep.subr.mxu0 0.0
      %v4543 = vand.u32 %v4066, 4294901760
      %4544 = vmatpush1.xpose.msra.mxu0 %v4543
      %4545 = vmatprep.subr.mxu0 0.0
      %v4546 = vand.u32 %v4064, 4294901760
      %4547 = vmatpush1.xpose.msra.mxu0 %v4546
      %4548 = vmatprep.subr.mxu0 0.0
      %v4549 = vand.u32 %v4062, 4294901760
      %4550 = vmatpush1.xpose.msra.mxu0 %v4549
      %4551 = vmatprep.subr.mxu0 0.0
      %v4552 = vand.u32 %v4060, 4294901760
      %4553 = vmatpush1.xpose.msra.mxu0 %v4552
      %4554 = vmatprep.subr.mxu0 0.0
      %v4555 = vand.u32 %v4058, 4294901760
      %4556 = vmatpush1.xpose.msra.mxu0 %v4555
      %4557 = vmatprep.subr.mxu0 0.0
      %4558 = vmatpush2.xpose.msra.mxu0 0.0
      %4559 = vmatprep.subr.mxu0 0.0
      %4560 = vmatpush2.xpose.msra.mxu0 0.0
      %4561 = vmatprep.subr.mxu0 0.0
      %4562 = vmatpush2.xpose.msra.mxu0 0.0
      %4563 = vmatprep.subr.mxu0 0.0
      %4564 = vmatpush2.xpose.msra.mxu0 0.0
      %4565 = vmatprep.subr.mxu0 0.0
      %4566 = vmatpush2.xpose.msra.mxu0 0.0
      %4567 = vmatprep.subr.mxu0 0.0
      %4568 = vmatpush2.xpose.msra.mxu0 0.0
      %4569 = vmatprep.subr.mxu0 0.0
      %4570 = vmatpush2.xpose.msra.mxu0 0.0
      %4571 = vmatprep.subr.mxu0 0.0
      %4572 = vmatpush2.xpose.msra.mxu0 0.0
      %4573 = vmatprep.subr.mxu0 0.0
      %4574 = vmatpush2.xpose.msra.mxu0 0.0
      %4575 = vmatprep.subr.mxu0 0.0
      %4576 = vmatpush2.xpose.msra.mxu0 0.0
      %4577 = vmatprep.subr.mxu0 0.0
      %4578 = vmatpush2.xpose.msra.mxu0 0.0
      %4579 = vmatprep.subr.mxu0 0.0
      %4580 = vmatpush2.xpose.msra.mxu0 0.0
      %4581 = vmatprep.subr.mxu0 0.0
      %4582 = vmatpush2.xpose.msra.mxu0 0.0
      %4583 = vmatprep.subr.mxu0 0.0
      %4584 = vmatpush2.xpose.msra.mxu0 0.0
      %4585 = vmatprep.subr.mxu0 0.0
      %4586 = vmatpush2.xpose.msra.mxu0 0.0
      %4587 = vmatprep.subr.mxu0 0.0
      %4588 = vmatpush2.xpose.msra.mxu0 0.0
      %4589 = vmatprep.mubr.f32.mxu0 0.0
      %v4590 = vand.u32 %v4042, 4294901760
      %v4591 = vsub.f32 %v4042, %v4590
      %v4592 = vand.u32 %v4591, 4294901760
      %4593 = vmatmul.mubr.f32.gmra.mxu0 %v4592
      %v4594 = vpop.f32.mrf.mxu0
      %v4595 = vadd.f32 %v4465, %v4594
      %v4596 = vpop.f32.mrf.mxu0
      %4597 = vmatprep.mubr.f32.mxu0 0.0
      %v4598 = vand.u32 %v4044, 4294901760
      %v4599 = vsub.f32 %v4044, %v4598
      %v4600 = vand.u32 %v4599, 4294901760
      %4601 = vmatmul.mubr.f32.gmra.mxu0 %v4600
      %v4602 = vpop.f32.mrf.mxu0
      %v4603 = vadd.f32 %v4472, %v4602
      %v4604 = vpop.f32.mrf.mxu0
      %4605 = vmatprep.mubr.f32.mxu0 0.0
      %v4606 = vand.u32 %v4046, 4294901760
      %v4607 = vsub.f32 %v4046, %v4606
      %v4608 = vand.u32 %v4607, 4294901760
      %4609 = vmatmul.mubr.f32.gmra.mxu0 %v4608
      %v4610 = vpop.f32.mrf.mxu0
      %v4611 = vadd.f32 %v4479, %v4610
      %v4612 = vpop.f32.mrf.mxu0
      %4613 = vmatprep.mubr.f32.mxu0 0.0
      %v4614 = vand.u32 %v4048, 4294901760
      %v4615 = vsub.f32 %v4048, %v4614
      %v4616 = vand.u32 %v4615, 4294901760
      %4617 = vmatmul.mubr.f32.gmra.mxu0 %v4616
      %v4618 = vpop.f32.mrf.mxu0
      %v4619 = vadd.f32 %v4486, %v4618
      %v4620 = vpop.f32.mrf.mxu0
      %4621 = vmatprep.mubr.f32.mxu0 0.0
      %v4622 = vand.u32 %v4050, 4294901760
      %v4623 = vsub.f32 %v4050, %v4622
      %v4624 = vand.u32 %v4623, 4294901760
      %4625 = vmatmul.mubr.f32.gmra.mxu0 %v4624
      %v4626 = vpop.f32.mrf.mxu0
      %v4627 = vadd.f32 %v4493, %v4626
      %v4628 = vpop.f32.mrf.mxu0
      %4629 = vmatprep.mubr.f32.mxu0 0.0
      %v4630 = vand.u32 %v4052, 4294901760
      %v4631 = vsub.f32 %v4052, %v4630
      %v4632 = vand.u32 %v4631, 4294901760
      %4633 = vmatmul.mubr.f32.gmra.mxu0 %v4632
      %v4634 = vpop.f32.mrf.mxu0
      %v4635 = vadd.f32 %v4500, %v4634
      %v4636 = vpop.f32.mrf.mxu0
      %4637 = vmatprep.mubr.f32.mxu0 0.0
      %v4638 = vand.u32 %v4054, 4294901760
      %v4639 = vsub.f32 %v4054, %v4638
      %v4640 = vand.u32 %v4639, 4294901760
      %4641 = vmatmul.mubr.f32.gmra.mxu0 %v4640
      %v4642 = vpop.f32.mrf.mxu0
      %v4643 = vadd.f32 %v4507, %v4642
      %v4644 = vpop.f32.mrf.mxu0
      %4645 = vmatprep.mubr.f32.mxu0 0.0
      %v4646 = vand.u32 %v4056, 4294901760
      %v4647 = vsub.f32 %v4056, %v4646
      %v4648 = vand.u32 %v4647, 4294901760
      %4649 = vmatmul.mubr.f32.gmra.mxu0 %v4648
      %v4650 = vpop.f32.mrf.mxu0
      %v4651 = vadd.f32 %v4514, %v4650
      %v4652 = vpop.f32.mrf.mxu0
      %4653 = vdwg.mxu0
      %4654 = vmatprep.subr.mxu0 0.0
      %4655 = vmatpush1.xpose.msra.mxu0 0.0
      %4656 = vmatprep.subr.mxu0 0.0
      %4657 = vmatpush1.xpose.msra.mxu0 0.0
      %4658 = vmatprep.subr.mxu0 0.0
      %4659 = vmatpush1.xpose.msra.mxu0 0.0
      %4660 = vmatprep.subr.mxu0 0.0
      %4661 = vmatpush1.xpose.msra.mxu0 0.0
      %4662 = vmatprep.subr.mxu0 0.0
      %4663 = vmatpush1.xpose.msra.mxu0 0.0
      %4664 = vmatprep.subr.mxu0 0.0
      %4665 = vmatpush1.xpose.msra.mxu0 0.0
      %4666 = vmatprep.subr.mxu0 0.0
      %4667 = vmatpush1.xpose.msra.mxu0 0.0
      %4668 = vmatprep.subr.mxu0 0.0
      %4669 = vmatpush1.xpose.msra.mxu0 0.0
      %4670 = vmatprep.subr.mxu0 0.0
      %v4671 = vand.u32 %v4072, 4294901760
      %v4672 = vsub.f32 %v4072, %v4671
      %v4673 = vand.u32 %v4672, 4294901760
      %4674 = vmatpush1.xpose.msra.mxu0 %v4673
      %4675 = vmatprep.subr.mxu0 0.0
      %v4676 = vand.u32 %v4070, 4294901760
      %v4677 = vsub.f32 %v4070, %v4676
      %v4678 = vand.u32 %v4677, 4294901760
      %4679 = vmatpush1.xpose.msra.mxu0 %v4678
      %4680 = vmatprep.subr.mxu0 0.0
      %v4681 = vand.u32 %v4068, 4294901760
      %v4682 = vsub.f32 %v4068, %v4681
      %v4683 = vand.u32 %v4682, 4294901760
      %4684 = vmatpush1.xpose.msra.mxu0 %v4683
      %4685 = vmatprep.subr.mxu0 0.0
      %v4686 = vand.u32 %v4066, 4294901760
      %v4687 = vsub.f32 %v4066, %v4686
      %v4688 = vand.u32 %v4687, 4294901760
      %4689 = vmatpush1.xpose.msra.mxu0 %v4688
      %4690 = vmatprep.subr.mxu0 0.0
      %v4691 = vand.u32 %v4064, 4294901760
      %v4692 = vsub.f32 %v4064, %v4691
      %v4693 = vand.u32 %v4692, 4294901760
      %4694 = vmatpush1.xpose.msra.mxu0 %v4693
      %4695 = vmatprep.subr.mxu0 0.0
      %v4696 = vand.u32 %v4062, 4294901760
      %v4697 = vsub.f32 %v4062, %v4696
      %v4698 = vand.u32 %v4697, 4294901760
      %4699 = vmatpush1.xpose.msra.mxu0 %v4698
      %4700 = vmatprep.subr.mxu0 0.0
      %v4701 = vand.u32 %v4060, 4294901760
      %v4702 = vsub.f32 %v4060, %v4701
      %v4703 = vand.u32 %v4702, 4294901760
      %4704 = vmatpush1.xpose.msra.mxu0 %v4703
      %4705 = vmatprep.subr.mxu0 0.0
      %v4706 = vand.u32 %v4058, 4294901760
      %v4707 = vsub.f32 %v4058, %v4706
      %v4708 = vand.u32 %v4707, 4294901760
      %4709 = vmatpush1.xpose.msra.mxu0 %v4708
      %4710 = vmatprep.subr.mxu0 0.0
      %4711 = vmatpush2.xpose.msra.mxu0 0.0
      %4712 = vmatprep.subr.mxu0 0.0
      %4713 = vmatpush2.xpose.msra.mxu0 0.0
      %4714 = vmatprep.subr.mxu0 0.0
      %4715 = vmatpush2.xpose.msra.mxu0 0.0
      %4716 = vmatprep.subr.mxu0 0.0
      %4717 = vmatpush2.xpose.msra.mxu0 0.0
      %4718 = vmatprep.subr.mxu0 0.0
      %4719 = vmatpush2.xpose.msra.mxu0 0.0
      %4720 = vmatprep.subr.mxu0 0.0
      %4721 = vmatpush2.xpose.msra.mxu0 0.0
      %4722 = vmatprep.subr.mxu0 0.0
      %4723 = vmatpush2.xpose.msra.mxu0 0.0
      %4724 = vmatprep.subr.mxu0 0.0
      %4725 = vmatpush2.xpose.msra.mxu0 0.0
      %4726 = vmatprep.subr.mxu0 0.0
      %4727 = vmatpush2.xpose.msra.mxu0 0.0
      %4728 = vmatprep.subr.mxu0 0.0
      %4729 = vmatpush2.xpose.msra.mxu0 0.0
      %4730 = vmatprep.subr.mxu0 0.0
      %4731 = vmatpush2.xpose.msra.mxu0 0.0
      %4732 = vmatprep.subr.mxu0 0.0
      %4733 = vmatpush2.xpose.msra.mxu0 0.0
      %4734 = vmatprep.subr.mxu0 0.0
      %4735 = vmatpush2.xpose.msra.mxu0 0.0
      %4736 = vmatprep.subr.mxu0 0.0
      %4737 = vmatpush2.xpose.msra.mxu0 0.0
      %4738 = vmatprep.subr.mxu0 0.0
      %4739 = vmatpush2.xpose.msra.mxu0 0.0
      %4740 = vmatprep.subr.mxu0 0.0
      %4741 = vmatpush2.xpose.msra.mxu0 0.0
      %4742 = vmatprep.mubr.f32.mxu0 0.0
      %v4743 = vand.u32 %v4042, 4294901760
      %4744 = vmatmul.mubr.f32.gmra.mxu0 %v4743
      %v4745 = vpop.f32.mrf.mxu0
      %v4746 = vadd.f32 %v4595, %v4745
      %v4747 = vpop.f32.mrf.mxu0
      %4748 = vmatprep.mubr.f32.mxu0 0.0
      %v4749 = vand.u32 %v4044, 4294901760
      %4750 = vmatmul.mubr.f32.gmra.mxu0 %v4749
      %v4751 = vpop.f32.mrf.mxu0
      %v4752 = vadd.f32 %v4603, %v4751
      %v4753 = vpop.f32.mrf.mxu0
      %4754 = vmatprep.mubr.f32.mxu0 0.0
      %v4755 = vand.u32 %v4046, 4294901760
      %4756 = vmatmul.mubr.f32.gmra.mxu0 %v4755
      %v4757 = vpop.f32.mrf.mxu0
      %v4758 = vadd.f32 %v4611, %v4757
      %v4759 = vpop.f32.mrf.mxu0
      %4760 = vmatprep.mubr.f32.mxu0 0.0
      %v4761 = vand.u32 %v4048, 4294901760
      %4762 = vmatmul.mubr.f32.gmra.mxu0 %v4761
      %v4763 = vpop.f32.mrf.mxu0
      %v4764 = vadd.f32 %v4619, %v4763
      %v4765 = vpop.f32.mrf.mxu0
      %4766 = vmatprep.mubr.f32.mxu0 0.0
      %v4767 = vand.u32 %v4050, 4294901760
      %4768 = vmatmul.mubr.f32.gmra.mxu0 %v4767
      %v4769 = vpop.f32.mrf.mxu0
      %v4770 = vadd.f32 %v4627, %v4769
      %v4771 = vpop.f32.mrf.mxu0
      %4772 = vmatprep.mubr.f32.mxu0 0.0
      %v4773 = vand.u32 %v4052, 4294901760
      %4774 = vmatmul.mubr.f32.gmra.mxu0 %v4773
      %v4775 = vpop.f32.mrf.mxu0
      %v4776 = vadd.f32 %v4635, %v4775
      %v4777 = vpop.f32.mrf.mxu0
      %4778 = vmatprep.mubr.f32.mxu0 0.0
      %v4779 = vand.u32 %v4054, 4294901760
      %4780 = vmatmul.mubr.f32.gmra.mxu0 %v4779
      %v4781 = vpop.f32.mrf.mxu0
      %v4782 = vadd.f32 %v4643, %v4781
      %v4783 = vpop.f32.mrf.mxu0
      %4784 = vmatprep.mubr.f32.mxu0 0.0
      %v4785 = vand.u32 %v4056, 4294901760
      %4786 = vmatmul.mubr.f32.gmra.mxu0 %v4785
      %v4787 = vpop.f32.mrf.mxu0
      %v4788 = vadd.f32 %v4651, %v4787
      %v4789 = vpop.f32.mrf.mxu0
      %4790 = vdwg.mxu0
      %4791 = vmatprep.subr.mxu0 0.0
      %4792 = vmatpush1.xpose.msra.mxu0 0.0
      %4793 = vmatprep.subr.mxu0 0.0
      %4794 = vmatpush1.xpose.msra.mxu0 0.0
      %4795 = vmatprep.subr.mxu0 0.0
      %4796 = vmatpush1.xpose.msra.mxu0 0.0
      %4797 = vmatprep.subr.mxu0 0.0
      %4798 = vmatpush1.xpose.msra.mxu0 0.0
      %4799 = vmatprep.subr.mxu0 0.0
      %4800 = vmatpush1.xpose.msra.mxu0 0.0
      %4801 = vmatprep.subr.mxu0 0.0
      %4802 = vmatpush1.xpose.msra.mxu0 0.0
      %4803 = vmatprep.subr.mxu0 0.0
      %4804 = vmatpush1.xpose.msra.mxu0 0.0
      %4805 = vmatprep.subr.mxu0 0.0
      %4806 = vmatpush1.xpose.msra.mxu0 0.0
      %4807 = vmatprep.subr.mxu0 0.0
      %v4808 = vand.u32 %v4072, 4294901760
      %4809 = vmatpush1.xpose.msra.mxu0 %v4808
      %4810 = vmatprep.subr.mxu0 0.0
      %v4811 = vand.u32 %v4070, 4294901760
      %4812 = vmatpush1.xpose.msra.mxu0 %v4811
      %4813 = vmatprep.subr.mxu0 0.0
      %v4814 = vand.u32 %v4068, 4294901760
      %4815 = vmatpush1.xpose.msra.mxu0 %v4814
      %4816 = vmatprep.subr.mxu0 0.0
      %v4817 = vand.u32 %v4066, 4294901760
      %4818 = vmatpush1.xpose.msra.mxu0 %v4817
      %4819 = vmatprep.subr.mxu0 0.0
      %v4820 = vand.u32 %v4064, 4294901760
      %4821 = vmatpush1.xpose.msra.mxu0 %v4820
      %4822 = vmatprep.subr.mxu0 0.0
      %v4823 = vand.u32 %v4062, 4294901760
      %4824 = vmatpush1.xpose.msra.mxu0 %v4823
      %4825 = vmatprep.subr.mxu0 0.0
      %v4826 = vand.u32 %v4060, 4294901760
      %4827 = vmatpush1.xpose.msra.mxu0 %v4826
      %4828 = vmatprep.subr.mxu0 0.0
      %v4829 = vand.u32 %v4058, 4294901760
      %4830 = vmatpush1.xpose.msra.mxu0 %v4829
      %4831 = vmatprep.subr.mxu0 0.0
      %4832 = vmatpush2.xpose.msra.mxu0 0.0
      %4833 = vmatprep.subr.mxu0 0.0
      %4834 = vmatpush2.xpose.msra.mxu0 0.0
      %4835 = vmatprep.subr.mxu0 0.0
      %4836 = vmatpush2.xpose.msra.mxu0 0.0
      %4837 = vmatprep.subr.mxu0 0.0
      %4838 = vmatpush2.xpose.msra.mxu0 0.0
      %4839 = vmatprep.subr.mxu0 0.0
      %4840 = vmatpush2.xpose.msra.mxu0 0.0
      %4841 = vmatprep.subr.mxu0 0.0
      %4842 = vmatpush2.xpose.msra.mxu0 0.0
      %4843 = vmatprep.subr.mxu0 0.0
      %4844 = vmatpush2.xpose.msra.mxu0 0.0
      %4845 = vmatprep.subr.mxu0 0.0
      %4846 = vmatpush2.xpose.msra.mxu0 0.0
      %4847 = vmatprep.subr.mxu0 0.0
      %4848 = vmatpush2.xpose.msra.mxu0 0.0
      %4849 = vmatprep.subr.mxu0 0.0
      %4850 = vmatpush2.xpose.msra.mxu0 0.0
      %4851 = vmatprep.subr.mxu0 0.0
      %4852 = vmatpush2.xpose.msra.mxu0 0.0
      %4853 = vmatprep.subr.mxu0 0.0
      %4854 = vmatpush2.xpose.msra.mxu0 0.0
      %4855 = vmatprep.subr.mxu0 0.0
      %4856 = vmatpush2.xpose.msra.mxu0 0.0
      %4857 = vmatprep.subr.mxu0 0.0
      %4858 = vmatpush2.xpose.msra.mxu0 0.0
      %4859 = vmatprep.subr.mxu0 0.0
      %4860 = vmatpush2.xpose.msra.mxu0 0.0
      %4861 = vmatprep.subr.mxu0 0.0
      %4862 = vmatpush2.xpose.msra.mxu0 0.0
      %4863 = vmatprep.mubr.f32.mxu0 0.0
      %v4864 = vand.u32 %v4042, 4294901760
      %4865 = vmatmul.mubr.f32.gmra.mxu0 %v4864
      %v4866 = vpop.f32.mrf.mxu0
      %v4867 = vadd.f32 %v4746, %v4866
      %v4868 = vpop.f32.mrf.mxu0
      %4869 = vmatprep.mubr.f32.mxu0 0.0
      %v4870 = vand.u32 %v4044, 4294901760
      %4871 = vmatmul.mubr.f32.gmra.mxu0 %v4870
      %v4872 = vpop.f32.mrf.mxu0
      %v4873 = vadd.f32 %v4752, %v4872
      %v4874 = vpop.f32.mrf.mxu0
      %4875 = vmatprep.mubr.f32.mxu0 0.0
      %v4876 = vand.u32 %v4046, 4294901760
      %4877 = vmatmul.mubr.f32.gmra.mxu0 %v4876
      %v4878 = vpop.f32.mrf.mxu0
      %v4879 = vadd.f32 %v4758, %v4878
      %v4880 = vpop.f32.mrf.mxu0
      %4881 = vmatprep.mubr.f32.mxu0 0.0
      %v4882 = vand.u32 %v4048, 4294901760
      %4883 = vmatmul.mubr.f32.gmra.mxu0 %v4882
      %v4884 = vpop.f32.mrf.mxu0
      %v4885 = vadd.f32 %v4764, %v4884
      %v4886 = vpop.f32.mrf.mxu0
      %4887 = vmatprep.mubr.f32.mxu0 0.0
      %v4888 = vand.u32 %v4050, 4294901760
      %4889 = vmatmul.mubr.f32.gmra.mxu0 %v4888
      %v4890 = vpop.f32.mrf.mxu0
      %v4891 = vadd.f32 %v4770, %v4890
      %v4892 = vpop.f32.mrf.mxu0
      %4893 = vmatprep.mubr.f32.mxu0 0.0
      %v4894 = vand.u32 %v4052, 4294901760
      %4895 = vmatmul.mubr.f32.gmra.mxu0 %v4894
      %v4896 = vpop.f32.mrf.mxu0
      %v4897 = vadd.f32 %v4776, %v4896
      %v4898 = vpop.f32.mrf.mxu0
      %4899 = vmatprep.mubr.f32.mxu0 0.0
      %v4900 = vand.u32 %v4054, 4294901760
      %4901 = vmatmul.mubr.f32.gmra.mxu0 %v4900
      %v4902 = vpop.f32.mrf.mxu0
      %v4903 = vadd.f32 %v4782, %v4902
      %v4904 = vpop.f32.mrf.mxu0
      %4905 = vmatprep.mubr.f32.mxu0 0.0
      %v4906 = vand.u32 %v4056, 4294901760
      %4907 = vmatmul.mubr.f32.gmra.mxu0 %v4906
      %v4908 = vpop.f32.mrf.mxu0
      %v4909 = vadd.f32 %v4788, %v4908
      %v4910 = vpop.f32.mrf.mxu0
      %4911 = vdwg.mxu0
      %v4912 = vsel %vm3035, %v4867, -inf
      %4913 = vmax.xlane.f32.xlu0 %v4912
      %v4914 = vpop.xlane.xlu0 %4913
      %v4915 = vsel %vm3035, %v4873, -inf
      %4916 = vmax.xlane.f32.xlu0 %v4915
      %v4917 = vpop.xlane.xlu0 %4916
      %v4918 = vsel %vm3035, %v4879, -inf
      %4919 = vmax.xlane.f32.xlu0 %v4918
      %v4920 = vpop.xlane.xlu0 %4919
      %v4921 = vsel %vm3035, %v4885, -inf
      %4922 = vmax.xlane.f32.xlu0 %v4921
      %v4923 = vpop.xlane.xlu0 %4922
      %v4924 = vsel %vm3035, %v4891, -inf
      %4925 = vmax.xlane.f32.xlu0 %v4924
      %v4926 = vpop.xlane.xlu0 %4925
      %v4927 = vsel %vm3035, %v4897, -inf
      %4928 = vmax.xlane.f32.xlu0 %v4927
      %v4929 = vpop.xlane.xlu0 %4928
      %v4930 = vsel %vm3035, %v4903, -inf
      %4931 = vmax.xlane.f32.xlu0 %v4930
      %v4932 = vpop.xlane.xlu0 %4931
      %v4933 = vsel %vm3035, %v4909, -inf
      %4934 = vmax.xlane.f32.xlu0 %v4933
      %v4935 = vpop.xlane.xlu0 %4934
      %v4936 = vsub.f32 %v4867, %v4914
      %v4937 = vsub.f32 %v4873, %v4917
      %v4938 = vsub.f32 %v4879, %v4920
      %v4939 = vsub.f32 %v4885, %v4923
      %v4940 = vsub.f32 %v4891, %v4926
      %v4941 = vsub.f32 %v4897, %v4929
      %v4942 = vsub.f32 %v4903, %v4932
      %v4943 = vsub.f32 %v4909, %v4935
      %v4944 = vmul.f32 %v4936, 1.442695
      %v4945 = vpow.pop %v4944
      %v4946 = vmul.f32 %v4937, 1.442695
      %v4947 = vpow.pop %v4946
      %v4948 = vmul.f32 %v4938, 1.442695
      %v4949 = vpow.pop %v4948
      %v4950 = vmul.f32 %v4939, 1.442695
      %v4951 = vpow.pop %v4950
      %v4952 = vmul.f32 %v4940, 1.442695
      %v4953 = vpow.pop %v4952
      %v4954 = vmul.f32 %v4941, 1.442695
      %v4955 = vpow.pop %v4954
      %v4956 = vmul.f32 %v4942, 1.442695
      %v4957 = vpow.pop %v4956
      %v4958 = vmul.f32 %v4943, 1.442695
      %v4959 = vpow.pop %v4958
      %v4960 = vsel %vm3035, %v4945, 0.0
      %4961 = vadd.xlane.f32.xlu0 %v4960
      %v4962 = vpop.xlane.xlu0 %4961
      %v4963 = vsel %vm3035, %v4947, 0.0
      %4964 = vadd.xlane.f32.xlu0 %v4963
      %v4965 = vpop.xlane.xlu0 %4964
      %v4966 = vsel %vm3035, %v4949, 0.0
      %4967 = vadd.xlane.f32.xlu0 %v4966
      %v4968 = vpop.xlane.xlu0 %4967
      %v4969 = vsel %vm3035, %v4951, 0.0
      %4970 = vadd.xlane.f32.xlu0 %v4969
      %v4971 = vpop.xlane.xlu0 %4970
      %v4972 = vsel %vm3035, %v4953, 0.0
      %4973 = vadd.xlane.f32.xlu0 %v4972
      %v4974 = vpop.xlane.xlu0 %4973
      %v4975 = vsel %vm3035, %v4955, 0.0
      %4976 = vadd.xlane.f32.xlu0 %v4975
      %v4977 = vpop.xlane.xlu0 %4976
      %v4978 = vsel %vm3035, %v4957, 0.0
      %4979 = vadd.xlane.f32.xlu0 %v4978
      %v4980 = vpop.xlane.xlu0 %4979
      %v4981 = vsel %vm3035, %v4959, 0.0
      %4982 = vadd.xlane.f32.xlu0 %v4981
      %v4983 = vpop.xlane.xlu0 %4982
      %v4984 = vrcp.pop %v4962
      %v4985 = vrcp.pop %v4965
      %v4986 = vrcp.pop %v4968
      %v4987 = vrcp.pop %v4971
      %v4988 = vrcp.pop %v4974
      %v4989 = vrcp.pop %v4977
      %v4990 = vrcp.pop %v4980
      %v4991 = vrcp.pop %v4983
      %v4992 = vmul.f32 %v4945, %v4984
      %v4993 = vmul.f32 %v4947, %v4985
      %v4994 = vmul.f32 %v4949, %v4986
      %v4995 = vmul.f32 %v4951, %v4987
      %v4996 = vmul.f32 %v4953, %v4988
      %v4997 = vmul.f32 %v4955, %v4989
      %v4998 = vmul.f32 %v4957, %v4990
      %v4999 = vmul.f32 %v4959, %v4991
      %5000 = vrot.lane.b32.xlu0 %v2095, 48
      %v5001 = vpop.permute.xlu0 %5000
      %5002 = vrot.lane.b32.xlu0 %v2101, 48
      %v5003 = vpop.permute.xlu0 %5002
      %5004 = vrot.lane.b32.xlu0 %v2107, 48
      %v5005 = vpop.permute.xlu0 %5004
      %5006 = vrot.lane.b32.xlu0 %v2113, 48
      %v5007 = vpop.permute.xlu0 %5006
      %5008 = vrot.lane.b32.xlu0 %v2119, 48
      %v5009 = vpop.permute.xlu0 %5008
      %5010 = vrot.lane.b32.xlu0 %v2125, 48
      %v5011 = vpop.permute.xlu0 %5010
      %5012 = vrot.lane.b32.xlu0 %v2131, 48
      %v5013 = vpop.permute.xlu0 %5012
      %5014 = vrot.lane.b32.xlu0 %v2137, 48
      %v5015 = vpop.permute.xlu0 %5014
      %v5025 = vsel %vm3035, %v4992, 0
      %v5028 = vsel %vm3035, %v4993, 0
      %v5031 = vsel %vm3035, %v4994, 0
      %v5034 = vsel %vm3035, %v4995, 0
      %v5037 = vsel %vm3035, %v4996, 0
      %v5040 = vsel %vm3035, %v4997, 0
      %v5043 = vsel %vm3035, %v4998, 0
      %v5046 = vsel %vm3035, %v4999, 0
      %5048 = vmatprep.subr.mxu0 0.0
      %5049 = vmatpush1.msra.mxu0 0.0
      %5050 = vmatprep.subr.mxu0 0.0
      %5051 = vmatpush1.msra.mxu0 0.0
      %5052 = vmatprep.subr.mxu0 0.0
      %5053 = vmatpush1.msra.mxu0 0.0
      %5054 = vmatprep.subr.mxu0 0.0
      %5055 = vmatpush1.msra.mxu0 0.0
      %5056 = vmatprep.subr.mxu0 0.0
      %5057 = vmatpush1.msra.mxu0 0.0
      %5058 = vmatprep.subr.mxu0 0.0
      %5059 = vmatpush1.msra.mxu0 0.0
      %5060 = vmatprep.subr.mxu0 0.0
      %5061 = vmatpush1.msra.mxu0 0.0
      %5062 = vmatprep.subr.mxu0 0.0
      %5063 = vmatpush1.msra.mxu0 0.0
      %5064 = vmatprep.subr.mxu0 0.0
      %v5065 = vand.u32 %v5015, 4294901760
      %5066 = vmatpush1.msra.mxu0 %v5065
      %5067 = vmatprep.subr.mxu0 0.0
      %v5068 = vand.u32 %v5013, 4294901760
      %5069 = vmatpush1.msra.mxu0 %v5068
      %5070 = vmatprep.subr.mxu0 0.0
      %v5071 = vand.u32 %v5011, 4294901760
      %5072 = vmatpush1.msra.mxu0 %v5071
      %5073 = vmatprep.subr.mxu0 0.0
      %v5074 = vand.u32 %v5009, 4294901760
      %5075 = vmatpush1.msra.mxu0 %v5074
      %5076 = vmatprep.subr.mxu0 0.0
      %v5077 = vand.u32 %v5007, 4294901760
      %5078 = vmatpush1.msra.mxu0 %v5077
      %5079 = vmatprep.subr.mxu0 0.0
      %v5080 = vand.u32 %v5005, 4294901760
      %5081 = vmatpush1.msra.mxu0 %v5080
      %5082 = vmatprep.subr.mxu0 0.0
      %v5083 = vand.u32 %v5003, 4294901760
      %5084 = vmatpush1.msra.mxu0 %v5083
      %5085 = vmatprep.subr.mxu0 0.0
      %v5086 = vand.u32 %v5001, 4294901760
      %5087 = vmatpush1.msra.mxu0 %v5086
      %5088 = vmatprep.subr.mxu0 0.0
      %5089 = vmatpush2.msra.mxu0 0.0
      %5090 = vmatprep.subr.mxu0 0.0
      %5091 = vmatpush2.msra.mxu0 0.0
      %5092 = vmatprep.subr.mxu0 0.0
      %5093 = vmatpush2.msra.mxu0 0.0
      %5094 = vmatprep.subr.mxu0 0.0
      %5095 = vmatpush2.msra.mxu0 0.0
      %5096 = vmatprep.subr.mxu0 0.0
      %5097 = vmatpush2.msra.mxu0 0.0
      %5098 = vmatprep.subr.mxu0 0.0
      %5099 = vmatpush2.msra.mxu0 0.0
      %5100 = vmatprep.subr.mxu0 0.0
      %5101 = vmatpush2.msra.mxu0 0.0
      %5102 = vmatprep.subr.mxu0 0.0
      %5103 = vmatpush2.msra.mxu0 0.0
      %5104 = vmatprep.subr.mxu0 0.0
      %5105 = vmatpush2.msra.mxu0 0.0
      %5106 = vmatprep.subr.mxu0 0.0
      %5107 = vmatpush2.msra.mxu0 0.0
      %5108 = vmatprep.subr.mxu0 0.0
      %5109 = vmatpush2.msra.mxu0 0.0
      %5110 = vmatprep.subr.mxu0 0.0
      %5111 = vmatpush2.msra.mxu0 0.0
      %5112 = vmatprep.subr.mxu0 0.0
      %5113 = vmatpush2.msra.mxu0 0.0
      %5114 = vmatprep.subr.mxu0 0.0
      %5115 = vmatpush2.msra.mxu0 0.0
      %5116 = vmatprep.subr.mxu0 0.0
      %5117 = vmatpush2.msra.mxu0 0.0
      %5118 = vmatprep.subr.mxu0 0.0
      %5119 = vmatpush2.msra.mxu0 0.0
      %5120 = vmatprep.mubr.f32.mxu0 0.0
      %v5121 = vand.u32 %v5025, 4294901760
      %v5122 = vsub.f32 %v5025, %v5121
      %v5123 = vand.u32 %v5122, 4294901760
      %v5124 = vsub.f32 %v5122, %v5123
      %v5125 = vand.u32 %v5124, 4294901760
      %5126 = vmatmul.mubr.f32.gmra.mxu0 %v5125
      %v5127 = vpop.f32.mrf.mxu0
      %v5128 = vadd.f32 0.0, %v5127
      %v5129 = vpop.f32.mrf.mxu0
      %5130 = vmatprep.mubr.f32.mxu0 0.0
      %v5131 = vand.u32 %v5028, 4294901760
      %v5132 = vsub.f32 %v5028, %v5131
      %v5133 = vand.u32 %v5132, 4294901760
      %v5134 = vsub.f32 %v5132, %v5133
      %v5135 = vand.u32 %v5134, 4294901760
      %5136 = vmatmul.mubr.f32.gmra.mxu0 %v5135
      %v5137 = vpop.f32.mrf.mxu0
      %v5138 = vadd.f32 0.0, %v5137
      %v5139 = vpop.f32.mrf.mxu0
      %5140 = vmatprep.mubr.f32.mxu0 0.0
      %v5141 = vand.u32 %v5031, 4294901760
      %v5142 = vsub.f32 %v5031, %v5141
      %v5143 = vand.u32 %v5142, 4294901760
      %v5144 = vsub.f32 %v5142, %v5143
      %v5145 = vand.u32 %v5144, 4294901760
      %5146 = vmatmul.mubr.f32.gmra.mxu0 %v5145
      %v5147 = vpop.f32.mrf.mxu0
      %v5148 = vadd.f32 0.0, %v5147
      %v5149 = vpop.f32.mrf.mxu0
      %5150 = vmatprep.mubr.f32.mxu0 0.0
      %v5151 = vand.u32 %v5034, 4294901760
      %v5152 = vsub.f32 %v5034, %v5151
      %v5153 = vand.u32 %v5152, 4294901760
      %v5154 = vsub.f32 %v5152, %v5153
      %v5155 = vand.u32 %v5154, 4294901760
      %5156 = vmatmul.mubr.f32.gmra.mxu0 %v5155
      %v5157 = vpop.f32.mrf.mxu0
      %v5158 = vadd.f32 0.0, %v5157
      %v5159 = vpop.f32.mrf.mxu0
      %5160 = vmatprep.mubr.f32.mxu0 0.0
      %v5161 = vand.u32 %v5037, 4294901760
      %v5162 = vsub.f32 %v5037, %v5161
      %v5163 = vand.u32 %v5162, 4294901760
      %v5164 = vsub.f32 %v5162, %v5163
      %v5165 = vand.u32 %v5164, 4294901760
      %5166 = vmatmul.mubr.f32.gmra.mxu0 %v5165
      %v5167 = vpop.f32.mrf.mxu0
      %v5168 = vadd.f32 0.0, %v5167
      %v5169 = vpop.f32.mrf.mxu0
      %5170 = vmatprep.mubr.f32.mxu0 0.0
      %v5171 = vand.u32 %v5040, 4294901760
      %v5172 = vsub.f32 %v5040, %v5171
      %v5173 = vand.u32 %v5172, 4294901760
      %v5174 = vsub.f32 %v5172, %v5173
      %v5175 = vand.u32 %v5174, 4294901760
      %5176 = vmatmul.mubr.f32.gmra.mxu0 %v5175
      %v5177 = vpop.f32.mrf.mxu0
      %v5178 = vadd.f32 0.0, %v5177
      %v5179 = vpop.f32.mrf.mxu0
      %5180 = vmatprep.mubr.f32.mxu0 0.0
      %v5181 = vand.u32 %v5043, 4294901760
      %v5182 = vsub.f32 %v5043, %v5181
      %v5183 = vand.u32 %v5182, 4294901760
      %v5184 = vsub.f32 %v5182, %v5183
      %v5185 = vand.u32 %v5184, 4294901760
      %5186 = vmatmul.mubr.f32.gmra.mxu0 %v5185
      %v5187 = vpop.f32.mrf.mxu0
      %v5188 = vadd.f32 0.0, %v5187
      %v5189 = vpop.f32.mrf.mxu0
      %5190 = vmatprep.mubr.f32.mxu0 0.0
      %v5191 = vand.u32 %v5046, 4294901760
      %v5192 = vsub.f32 %v5046, %v5191
      %v5193 = vand.u32 %v5192, 4294901760
      %v5194 = vsub.f32 %v5192, %v5193
      %v5195 = vand.u32 %v5194, 4294901760
      %5196 = vmatmul.mubr.f32.gmra.mxu0 %v5195
      %v5197 = vpop.f32.mrf.mxu0
      %v5198 = vadd.f32 0.0, %v5197
      %v5199 = vpop.f32.mrf.mxu0
      %5200 = vdwg.mxu0
      %5201 = vmatprep.subr.mxu0 0.0
      %5202 = vmatpush1.msra.mxu0 0.0
      %5203 = vmatprep.subr.mxu0 0.0
      %5204 = vmatpush1.msra.mxu0 0.0
      %5205 = vmatprep.subr.mxu0 0.0
      %5206 = vmatpush1.msra.mxu0 0.0
      %5207 = vmatprep.subr.mxu0 0.0
      %5208 = vmatpush1.msra.mxu0 0.0
      %5209 = vmatprep.subr.mxu0 0.0
      %5210 = vmatpush1.msra.mxu0 0.0
      %5211 = vmatprep.subr.mxu0 0.0
      %5212 = vmatpush1.msra.mxu0 0.0
      %5213 = vmatprep.subr.mxu0 0.0
      %5214 = vmatpush1.msra.mxu0 0.0
      %5215 = vmatprep.subr.mxu0 0.0
      %5216 = vmatpush1.msra.mxu0 0.0
      %5217 = vmatprep.subr.mxu0 0.0
      %v5218 = vand.u32 %v5015, 4294901760
      %v5219 = vsub.f32 %v5015, %v5218
      %v5220 = vand.u32 %v5219, 4294901760
      %v5221 = vsub.f32 %v5219, %v5220
      %v5222 = vand.u32 %v5221, 4294901760
      %5223 = vmatpush1.msra.mxu0 %v5222
      %5224 = vmatprep.subr.mxu0 0.0
      %v5225 = vand.u32 %v5013, 4294901760
      %v5226 = vsub.f32 %v5013, %v5225
      %v5227 = vand.u32 %v5226, 4294901760
      %v5228 = vsub.f32 %v5226, %v5227
      %v5229 = vand.u32 %v5228, 4294901760
      %5230 = vmatpush1.msra.mxu0 %v5229
      %5231 = vmatprep.subr.mxu0 0.0
      %v5232 = vand.u32 %v5011, 4294901760
      %v5233 = vsub.f32 %v5011, %v5232
      %v5234 = vand.u32 %v5233, 4294901760
      %v5235 = vsub.f32 %v5233, %v5234
      %v5236 = vand.u32 %v5235, 4294901760
      %5237 = vmatpush1.msra.mxu0 %v5236
      %5238 = vmatprep.subr.mxu0 0.0
      %v5239 = vand.u32 %v5009, 4294901760
      %v5240 = vsub.f32 %v5009, %v5239
      %v5241 = vand.u32 %v5240, 4294901760
      %v5242 = vsub.f32 %v5240, %v5241
      %v5243 = vand.u32 %v5242, 4294901760
      %5244 = vmatpush1.msra.mxu0 %v5243
      %5245 = vmatprep.subr.mxu0 0.0
      %v5246 = vand.u32 %v5007, 4294901760
      %v5247 = vsub.f32 %v5007, %v5246
      %v5248 = vand.u32 %v5247, 4294901760
      %v5249 = vsub.f32 %v5247, %v5248
      %v5250 = vand.u32 %v5249, 4294901760
      %5251 = vmatpush1.msra.mxu0 %v5250
      %5252 = vmatprep.subr.mxu0 0.0
      %v5253 = vand.u32 %v5005, 4294901760
      %v5254 = vsub.f32 %v5005, %v5253
      %v5255 = vand.u32 %v5254, 4294901760
      %v5256 = vsub.f32 %v5254, %v5255
      %v5257 = vand.u32 %v5256, 4294901760
      %5258 = vmatpush1.msra.mxu0 %v5257
      %5259 = vmatprep.subr.mxu0 0.0
      %v5260 = vand.u32 %v5003, 4294901760
      %v5261 = vsub.f32 %v5003, %v5260
      %v5262 = vand.u32 %v5261, 4294901760
      %v5263 = vsub.f32 %v5261, %v5262
      %v5264 = vand.u32 %v5263, 4294901760
      %5265 = vmatpush1.msra.mxu0 %v5264
      %5266 = vmatprep.subr.mxu0 0.0
      %v5267 = vand.u32 %v5001, 4294901760
      %v5268 = vsub.f32 %v5001, %v5267
      %v5269 = vand.u32 %v5268, 4294901760
      %v5270 = vsub.f32 %v5268, %v5269
      %v5271 = vand.u32 %v5270, 4294901760
      %5272 = vmatpush1.msra.mxu0 %v5271
      %5273 = vmatprep.subr.mxu0 0.0
      %5274 = vmatpush2.msra.mxu0 0.0
      %5275 = vmatprep.subr.mxu0 0.0
      %5276 = vmatpush2.msra.mxu0 0.0
      %5277 = vmatprep.subr.mxu0 0.0
      %5278 = vmatpush2.msra.mxu0 0.0
      %5279 = vmatprep.subr.mxu0 0.0
      %5280 = vmatpush2.msra.mxu0 0.0
      %5281 = vmatprep.subr.mxu0 0.0
      %5282 = vmatpush2.msra.mxu0 0.0
      %5283 = vmatprep.subr.mxu0 0.0
      %5284 = vmatpush2.msra.mxu0 0.0
      %5285 = vmatprep.subr.mxu0 0.0
      %5286 = vmatpush2.msra.mxu0 0.0
      %5287 = vmatprep.subr.mxu0 0.0
      %5288 = vmatpush2.msra.mxu0 0.0
      %5289 = vmatprep.subr.mxu0 0.0
      %5290 = vmatpush2.msra.mxu0 0.0
      %5291 = vmatprep.subr.mxu0 0.0
      %5292 = vmatpush2.msra.mxu0 0.0
      %5293 = vmatprep.subr.mxu0 0.0
      %5294 = vmatpush2.msra.mxu0 0.0
      %5295 = vmatprep.subr.mxu0 0.0
      %5296 = vmatpush2.msra.mxu0 0.0
      %5297 = vmatprep.subr.mxu0 0.0
      %5298 = vmatpush2.msra.mxu0 0.0
      %5299 = vmatprep.subr.mxu0 0.0
      %5300 = vmatpush2.msra.mxu0 0.0
      %5301 = vmatprep.subr.mxu0 0.0
      %5302 = vmatpush2.msra.mxu0 0.0
      %5303 = vmatprep.subr.mxu0 0.0
      %5304 = vmatpush2.msra.mxu0 0.0
      %5305 = vmatprep.mubr.f32.mxu0 0.0
      %v5306 = vand.u32 %v5025, 4294901760
      %5307 = vmatmul.mubr.f32.gmra.mxu0 %v5306
      %v5308 = vpop.f32.mrf.mxu0
      %v5309 = vadd.f32 %v5128, %v5308
      %v5310 = vpop.f32.mrf.mxu0
      %5311 = vmatprep.mubr.f32.mxu0 0.0
      %v5312 = vand.u32 %v5028, 4294901760
      %5313 = vmatmul.mubr.f32.gmra.mxu0 %v5312
      %v5314 = vpop.f32.mrf.mxu0
      %v5315 = vadd.f32 %v5138, %v5314
      %v5316 = vpop.f32.mrf.mxu0
      %5317 = vmatprep.mubr.f32.mxu0 0.0
      %v5318 = vand.u32 %v5031, 4294901760
      %5319 = vmatmul.mubr.f32.gmra.mxu0 %v5318
      %v5320 = vpop.f32.mrf.mxu0
      %v5321 = vadd.f32 %v5148, %v5320
      %v5322 = vpop.f32.mrf.mxu0
      %5323 = vmatprep.mubr.f32.mxu0 0.0
      %v5324 = vand.u32 %v5034, 4294901760
      %5325 = vmatmul.mubr.f32.gmra.mxu0 %v5324
      %v5326 = vpop.f32.mrf.mxu0
      %v5327 = vadd.f32 %v5158, %v5326
      %v5328 = vpop.f32.mrf.mxu0
      %5329 = vmatprep.mubr.f32.mxu0 0.0
      %v5330 = vand.u32 %v5037, 4294901760
      %5331 = vmatmul.mubr.f32.gmra.mxu0 %v5330
      %v5332 = vpop.f32.mrf.mxu0
      %v5333 = vadd.f32 %v5168, %v5332
      %v5334 = vpop.f32.mrf.mxu0
      %5335 = vmatprep.mubr.f32.mxu0 0.0
      %v5336 = vand.u32 %v5040, 4294901760
      %5337 = vmatmul.mubr.f32.gmra.mxu0 %v5336
      %v5338 = vpop.f32.mrf.mxu0
      %v5339 = vadd.f32 %v5178, %v5338
      %v5340 = vpop.f32.mrf.mxu0
      %5341 = vmatprep.mubr.f32.mxu0 0.0
      %v5342 = vand.u32 %v5043, 4294901760
      %5343 = vmatmul.mubr.f32.gmra.mxu0 %v5342
      %v5344 = vpop.f32.mrf.mxu0
      %v5345 = vadd.f32 %v5188, %v5344
      %v5346 = vpop.f32.mrf.mxu0
      %5347 = vmatprep.mubr.f32.mxu0 0.0
      %v5348 = vand.u32 %v5046, 4294901760
      %5349 = vmatmul.mubr.f32.gmra.mxu0 %v5348
      %v5350 = vpop.f32.mrf.mxu0
      %v5351 = vadd.f32 %v5198, %v5350
      %v5352 = vpop.f32.mrf.mxu0
      %5353 = vdwg.mxu0
      %5354 = vmatprep.subr.mxu0 0.0
      %5355 = vmatpush1.msra.mxu0 0.0
      %5356 = vmatprep.subr.mxu0 0.0
      %5357 = vmatpush1.msra.mxu0 0.0
      %5358 = vmatprep.subr.mxu0 0.0
      %5359 = vmatpush1.msra.mxu0 0.0
      %5360 = vmatprep.subr.mxu0 0.0
      %5361 = vmatpush1.msra.mxu0 0.0
      %5362 = vmatprep.subr.mxu0 0.0
      %5363 = vmatpush1.msra.mxu0 0.0
      %5364 = vmatprep.subr.mxu0 0.0
      %5365 = vmatpush1.msra.mxu0 0.0
      %5366 = vmatprep.subr.mxu0 0.0
      %5367 = vmatpush1.msra.mxu0 0.0
      %5368 = vmatprep.subr.mxu0 0.0
      %5369 = vmatpush1.msra.mxu0 0.0
      %5370 = vmatprep.subr.mxu0 0.0
      %v5371 = vand.u32 %v5015, 4294901760
      %v5372 = vsub.f32 %v5015, %v5371
      %5373 = vmatpush1.msra.mxu0 %v5372
      %5374 = vmatprep.subr.mxu0 0.0
      %v5375 = vand.u32 %v5013, 4294901760
      %v5376 = vsub.f32 %v5013, %v5375
      %5377 = vmatpush1.msra.mxu0 %v5376
      %5378 = vmatprep.subr.mxu0 0.0
      %v5379 = vand.u32 %v5011, 4294901760
      %v5380 = vsub.f32 %v5011, %v5379
      %5381 = vmatpush1.msra.mxu0 %v5380
      %5382 = vmatprep.subr.mxu0 0.0
      %v5383 = vand.u32 %v5009, 4294901760
      %v5384 = vsub.f32 %v5009, %v5383
      %5385 = vmatpush1.msra.mxu0 %v5384
      %5386 = vmatprep.subr.mxu0 0.0
      %v5387 = vand.u32 %v5007, 4294901760
      %v5388 = vsub.f32 %v5007, %v5387
      %5389 = vmatpush1.msra.mxu0 %v5388
      %5390 = vmatprep.subr.mxu0 0.0
      %v5391 = vand.u32 %v5005, 4294901760
      %v5392 = vsub.f32 %v5005, %v5391
      %5393 = vmatpush1.msra.mxu0 %v5392
      %5394 = vmatprep.subr.mxu0 0.0
      %v5395 = vand.u32 %v5003, 4294901760
      %v5396 = vsub.f32 %v5003, %v5395
      %5397 = vmatpush1.msra.mxu0 %v5396
      %5398 = vmatprep.subr.mxu0 0.0
      %v5399 = vand.u32 %v5001, 4294901760
      %v5400 = vsub.f32 %v5001, %v5399
      %5401 = vmatpush1.msra.mxu0 %v5400
      %5402 = vmatprep.subr.mxu0 0.0
      %5403 = vmatpush2.msra.mxu0 0.0
      %5404 = vmatprep.subr.mxu0 0.0
      %5405 = vmatpush2.msra.mxu0 0.0
      %5406 = vmatprep.subr.mxu0 0.0
      %5407 = vmatpush2.msra.mxu0 0.0
      %5408 = vmatprep.subr.mxu0 0.0
      %5409 = vmatpush2.msra.mxu0 0.0
      %5410 = vmatprep.subr.mxu0 0.0
      %5411 = vmatpush2.msra.mxu0 0.0
      %5412 = vmatprep.subr.mxu0 0.0
      %5413 = vmatpush2.msra.mxu0 0.0
      %5414 = vmatprep.subr.mxu0 0.0
      %5415 = vmatpush2.msra.mxu0 0.0
      %5416 = vmatprep.subr.mxu0 0.0
      %5417 = vmatpush2.msra.mxu0 0.0
      %5418 = vmatprep.subr.mxu0 0.0
      %5419 = vmatpush2.msra.mxu0 0.0
      %5420 = vmatprep.subr.mxu0 0.0
      %5421 = vmatpush2.msra.mxu0 0.0
      %5422 = vmatprep.subr.mxu0 0.0
      %5423 = vmatpush2.msra.mxu0 0.0
      %5424 = vmatprep.subr.mxu0 0.0
      %5425 = vmatpush2.msra.mxu0 0.0
      %5426 = vmatprep.subr.mxu0 0.0
      %5427 = vmatpush2.msra.mxu0 0.0
      %5428 = vmatprep.subr.mxu0 0.0
      %5429 = vmatpush2.msra.mxu0 0.0
      %5430 = vmatprep.subr.mxu0 0.0
      %5431 = vmatpush2.msra.mxu0 0.0
      %5432 = vmatprep.subr.mxu0 0.0
      %5433 = vmatpush2.msra.mxu0 0.0
      %5434 = vmatprep.mubr.f32.mxu0 0.0
      %v5435 = vand.u32 %v5025, 4294901760
      %v5436 = vsub.f32 %v5025, %v5435
      %5437 = vmatmul.mubr.f32.gmra.mxu0 %v5436
      %v5438 = vpop.f32.mrf.mxu0
      %v5439 = vadd.f32 %v5309, %v5438
      %v5440 = vpop.f32.mrf.mxu0
      %5441 = vmatprep.mubr.f32.mxu0 0.0
      %v5442 = vand.u32 %v5028, 4294901760
      %v5443 = vsub.f32 %v5028, %v5442
      %5444 = vmatmul.mubr.f32.gmra.mxu0 %v5443
      %v5445 = vpop.f32.mrf.mxu0
      %v5446 = vadd.f32 %v5315, %v5445
      %v5447 = vpop.f32.mrf.mxu0
      %5448 = vmatprep.mubr.f32.mxu0 0.0
      %v5449 = vand.u32 %v5031, 4294901760
      %v5450 = vsub.f32 %v5031, %v5449
      %5451 = vmatmul.mubr.f32.gmra.mxu0 %v5450
      %v5452 = vpop.f32.mrf.mxu0
      %v5453 = vadd.f32 %v5321, %v5452
      %v5454 = vpop.f32.mrf.mxu0
      %5455 = vmatprep.mubr.f32.mxu0 0.0
      %v5456 = vand.u32 %v5034, 4294901760
      %v5457 = vsub.f32 %v5034, %v5456
      %5458 = vmatmul.mubr.f32.gmra.mxu0 %v5457
      %v5459 = vpop.f32.mrf.mxu0
      %v5460 = vadd.f32 %v5327, %v5459
      %v5461 = vpop.f32.mrf.mxu0
      %5462 = vmatprep.mubr.f32.mxu0 0.0
      %v5463 = vand.u32 %v5037, 4294901760
      %v5464 = vsub.f32 %v5037, %v5463
      %5465 = vmatmul.mubr.f32.gmra.mxu0 %v5464
      %v5466 = vpop.f32.mrf.mxu0
      %v5467 = vadd.f32 %v5333, %v5466
      %v5468 = vpop.f32.mrf.mxu0
      %5469 = vmatprep.mubr.f32.mxu0 0.0
      %v5470 = vand.u32 %v5040, 4294901760
      %v5471 = vsub.f32 %v5040, %v5470
      %5472 = vmatmul.mubr.f32.gmra.mxu0 %v5471
      %v5473 = vpop.f32.mrf.mxu0
      %v5474 = vadd.f32 %v5339, %v5473
      %v5475 = vpop.f32.mrf.mxu0
      %5476 = vmatprep.mubr.f32.mxu0 0.0
      %v5477 = vand.u32 %v5043, 4294901760
      %v5478 = vsub.f32 %v5043, %v5477
      %5479 = vmatmul.mubr.f32.gmra.mxu0 %v5478
      %v5480 = vpop.f32.mrf.mxu0
      %v5481 = vadd.f32 %v5345, %v5480
      %v5482 = vpop.f32.mrf.mxu0
      %5483 = vmatprep.mubr.f32.mxu0 0.0
      %v5484 = vand.u32 %v5046, 4294901760
      %v5485 = vsub.f32 %v5046, %v5484
      %5486 = vmatmul.mubr.f32.gmra.mxu0 %v5485
      %v5487 = vpop.f32.mrf.mxu0
      %v5488 = vadd.f32 %v5351, %v5487
      %v5489 = vpop.f32.mrf.mxu0
      %5490 = vdwg.mxu0
      %5491 = vmatprep.subr.mxu0 0.0
      %5492 = vmatpush1.msra.mxu0 0.0
      %5493 = vmatprep.subr.mxu0 0.0
      %5494 = vmatpush1.msra.mxu0 0.0
      %5495 = vmatprep.subr.mxu0 0.0
      %5496 = vmatpush1.msra.mxu0 0.0
      %5497 = vmatprep.subr.mxu0 0.0
      %5498 = vmatpush1.msra.mxu0 0.0
      %5499 = vmatprep.subr.mxu0 0.0
      %5500 = vmatpush1.msra.mxu0 0.0
      %5501 = vmatprep.subr.mxu0 0.0
      %5502 = vmatpush1.msra.mxu0 0.0
      %5503 = vmatprep.subr.mxu0 0.0
      %5504 = vmatpush1.msra.mxu0 0.0
      %5505 = vmatprep.subr.mxu0 0.0
      %5506 = vmatpush1.msra.mxu0 0.0
      %5507 = vmatprep.subr.mxu0 0.0
      %v5508 = vand.u32 %v5015, 4294901760
      %5509 = vmatpush1.msra.mxu0 %v5508
      %5510 = vmatprep.subr.mxu0 0.0
      %v5511 = vand.u32 %v5013, 4294901760
      %5512 = vmatpush1.msra.mxu0 %v5511
      %5513 = vmatprep.subr.mxu0 0.0
      %v5514 = vand.u32 %v5011, 4294901760
      %5515 = vmatpush1.msra.mxu0 %v5514
      %5516 = vmatprep.subr.mxu0 0.0
      %v5517 = vand.u32 %v5009, 4294901760
      %5518 = vmatpush1.msra.mxu0 %v5517
      %5519 = vmatprep.subr.mxu0 0.0
      %v5520 = vand.u32 %v5007, 4294901760
      %5521 = vmatpush1.msra.mxu0 %v5520
      %5522 = vmatprep.subr.mxu0 0.0
      %v5523 = vand.u32 %v5005, 4294901760
      %5524 = vmatpush1.msra.mxu0 %v5523
      %5525 = vmatprep.subr.mxu0 0.0
      %v5526 = vand.u32 %v5003, 4294901760
      %5527 = vmatpush1.msra.mxu0 %v5526
      %5528 = vmatprep.subr.mxu0 0.0
      %v5529 = vand.u32 %v5001, 4294901760
      %5530 = vmatpush1.msra.mxu0 %v5529
      %5531 = vmatprep.subr.mxu0 0.0
      %5532 = vmatpush2.msra.mxu0 0.0
      %5533 = vmatprep.subr.mxu0 0.0
      %5534 = vmatpush2.msra.mxu0 0.0
      %5535 = vmatprep.subr.mxu0 0.0
      %5536 = vmatpush2.msra.mxu0 0.0
      %5537 = vmatprep.subr.mxu0 0.0
      %5538 = vmatpush2.msra.mxu0 0.0
      %5539 = vmatprep.subr.mxu0 0.0
      %5540 = vmatpush2.msra.mxu0 0.0
      %5541 = vmatprep.subr.mxu0 0.0
      %5542 = vmatpush2.msra.mxu0 0.0
      %5543 = vmatprep.subr.mxu0 0.0
      %5544 = vmatpush2.msra.mxu0 0.0
      %5545 = vmatprep.subr.mxu0 0.0
      %5546 = vmatpush2.msra.mxu0 0.0
      %5547 = vmatprep.subr.mxu0 0.0
      %5548 = vmatpush2.msra.mxu0 0.0
      %5549 = vmatprep.subr.mxu0 0.0
      %5550 = vmatpush2.msra.mxu0 0.0
      %5551 = vmatprep.subr.mxu0 0.0
      %5552 = vmatpush2.msra.mxu0 0.0
      %5553 = vmatprep.subr.mxu0 0.0
      %5554 = vmatpush2.msra.mxu0 0.0
      %5555 = vmatprep.subr.mxu0 0.0
      %5556 = vmatpush2.msra.mxu0 0.0
      %5557 = vmatprep.subr.mxu0 0.0
      %5558 = vmatpush2.msra.mxu0 0.0
      %5559 = vmatprep.subr.mxu0 0.0
      %5560 = vmatpush2.msra.mxu0 0.0
      %5561 = vmatprep.subr.mxu0 0.0
      %5562 = vmatpush2.msra.mxu0 0.0
      %5563 = vmatprep.mubr.f32.mxu0 0.0
      %v5564 = vand.u32 %v5025, 4294901760
      %v5565 = vsub.f32 %v5025, %v5564
      %v5566 = vand.u32 %v5565, 4294901760
      %5567 = vmatmul.mubr.f32.gmra.mxu0 %v5566
      %v5568 = vpop.f32.mrf.mxu0
      %v5569 = vadd.f32 %v5439, %v5568
      %v5570 = vpop.f32.mrf.mxu0
      %5571 = vmatprep.mubr.f32.mxu0 0.0
      %v5572 = vand.u32 %v5028, 4294901760
      %v5573 = vsub.f32 %v5028, %v5572
      %v5574 = vand.u32 %v5573, 4294901760
      %5575 = vmatmul.mubr.f32.gmra.mxu0 %v5574
      %v5576 = vpop.f32.mrf.mxu0
      %v5577 = vadd.f32 %v5446, %v5576
      %v5578 = vpop.f32.mrf.mxu0
      %5579 = vmatprep.mubr.f32.mxu0 0.0
      %v5580 = vand.u32 %v5031, 4294901760
      %v5581 = vsub.f32 %v5031, %v5580
      %v5582 = vand.u32 %v5581, 4294901760
      %5583 = vmatmul.mubr.f32.gmra.mxu0 %v5582
      %v5584 = vpop.f32.mrf.mxu0
      %v5585 = vadd.f32 %v5453, %v5584
      %v5586 = vpop.f32.mrf.mxu0
      %5587 = vmatprep.mubr.f32.mxu0 0.0
      %v5588 = vand.u32 %v5034, 4294901760
      %v5589 = vsub.f32 %v5034, %v5588
      %v5590 = vand.u32 %v5589, 4294901760
      %5591 = vmatmul.mubr.f32.gmra.mxu0 %v5590
      %v5592 = vpop.f32.mrf.mxu0
      %v5593 = vadd.f32 %v5460, %v5592
      %v5594 = vpop.f32.mrf.mxu0
      %5595 = vmatprep.mubr.f32.mxu0 0.0
      %v5596 = vand.u32 %v5037, 4294901760
      %v5597 = vsub.f32 %v5037, %v5596
      %v5598 = vand.u32 %v5597, 4294901760
      %5599 = vmatmul.mubr.f32.gmra.mxu0 %v5598
      %v5600 = vpop.f32.mrf.mxu0
      %v5601 = vadd.f32 %v5467, %v5600
      %v5602 = vpop.f32.mrf.mxu0
      %5603 = vmatprep.mubr.f32.mxu0 0.0
      %v5604 = vand.u32 %v5040, 4294901760
      %v5605 = vsub.f32 %v5040, %v5604
      %v5606 = vand.u32 %v5605, 4294901760
      %5607 = vmatmul.mubr.f32.gmra.mxu0 %v5606
      %v5608 = vpop.f32.mrf.mxu0
      %v5609 = vadd.f32 %v5474, %v5608
      %v5610 = vpop.f32.mrf.mxu0
      %5611 = vmatprep.mubr.f32.mxu0 0.0
      %v5612 = vand.u32 %v5043, 4294901760
      %v5613 = vsub.f32 %v5043, %v5612
      %v5614 = vand.u32 %v5613, 4294901760
      %5615 = vmatmul.mubr.f32.gmra.mxu0 %v5614
      %v5616 = vpop.f32.mrf.mxu0
      %v5617 = vadd.f32 %v5481, %v5616
      %v5618 = vpop.f32.mrf.mxu0
      %5619 = vmatprep.mubr.f32.mxu0 0.0
      %v5620 = vand.u32 %v5046, 4294901760
      %v5621 = vsub.f32 %v5046, %v5620
      %v5622 = vand.u32 %v5621, 4294901760
      %5623 = vmatmul.mubr.f32.gmra.mxu0 %v5622
      %v5624 = vpop.f32.mrf.mxu0
      %v5625 = vadd.f32 %v5488, %v5624
      %v5626 = vpop.f32.mrf.mxu0
      %5627 = vdwg.mxu0
      %5628 = vmatprep.subr.mxu0 0.0
      %5629 = vmatpush1.msra.mxu0 0.0
      %5630 = vmatprep.subr.mxu0 0.0
      %5631 = vmatpush1.msra.mxu0 0.0
      %5632 = vmatprep.subr.mxu0 0.0
      %5633 = vmatpush1.msra.mxu0 0.0
      %5634 = vmatprep.subr.mxu0 0.0
      %5635 = vmatpush1.msra.mxu0 0.0
      %5636 = vmatprep.subr.mxu0 0.0
      %5637 = vmatpush1.msra.mxu0 0.0
      %5638 = vmatprep.subr.mxu0 0.0
      %5639 = vmatpush1.msra.mxu0 0.0
      %5640 = vmatprep.subr.mxu0 0.0
      %5641 = vmatpush1.msra.mxu0 0.0
      %5642 = vmatprep.subr.mxu0 0.0
      %5643 = vmatpush1.msra.mxu0 0.0
      %5644 = vmatprep.subr.mxu0 0.0
      %v5645 = vand.u32 %v5015, 4294901760
      %v5646 = vsub.f32 %v5015, %v5645
      %v5647 = vand.u32 %v5646, 4294901760
      %5648 = vmatpush1.msra.mxu0 %v5647
      %5649 = vmatprep.subr.mxu0 0.0
      %v5650 = vand.u32 %v5013, 4294901760
      %v5651 = vsub.f32 %v5013, %v5650
      %v5652 = vand.u32 %v5651, 4294901760
      %5653 = vmatpush1.msra.mxu0 %v5652
      %5654 = vmatprep.subr.mxu0 0.0
      %v5655 = vand.u32 %v5011, 4294901760
      %v5656 = vsub.f32 %v5011, %v5655
      %v5657 = vand.u32 %v5656, 4294901760
      %5658 = vmatpush1.msra.mxu0 %v5657
      %5659 = vmatprep.subr.mxu0 0.0
      %v5660 = vand.u32 %v5009, 4294901760
      %v5661 = vsub.f32 %v5009, %v5660
      %v5662 = vand.u32 %v5661, 4294901760
      %5663 = vmatpush1.msra.mxu0 %v5662
      %5664 = vmatprep.subr.mxu0 0.0
      %v5665 = vand.u32 %v5007, 4294901760
      %v5666 = vsub.f32 %v5007, %v5665
      %v5667 = vand.u32 %v5666, 4294901760
      %5668 = vmatpush1.msra.mxu0 %v5667
      %5669 = vmatprep.subr.mxu0 0.0
      %v5670 = vand.u32 %v5005, 4294901760
      %v5671 = vsub.f32 %v5005, %v5670
      %v5672 = vand.u32 %v5671, 4294901760
      %5673 = vmatpush1.msra.mxu0 %v5672
      %5674 = vmatprep.subr.mxu0 0.0
      %v5675 = vand.u32 %v5003, 4294901760
      %v5676 = vsub.f32 %v5003, %v5675
      %v5677 = vand.u32 %v5676, 4294901760
      %5678 = vmatpush1.msra.mxu0 %v5677
      %5679 = vmatprep.subr.mxu0 0.0
      %v5680 = vand.u32 %v5001, 4294901760
      %v5681 = vsub.f32 %v5001, %v5680
      %v5682 = vand.u32 %v5681, 4294901760
      %5683 = vmatpush1.msra.mxu0 %v5682
      %5684 = vmatprep.subr.mxu0 0.0
      %5685 = vmatpush2.msra.mxu0 0.0
      %5686 = vmatprep.subr.mxu0 0.0
      %5687 = vmatpush2.msra.mxu0 0.0
      %5688 = vmatprep.subr.mxu0 0.0
      %5689 = vmatpush2.msra.mxu0 0.0
      %5690 = vmatprep.subr.mxu0 0.0
      %5691 = vmatpush2.msra.mxu0 0.0
      %5692 = vmatprep.subr.mxu0 0.0
      %5693 = vmatpush2.msra.mxu0 0.0
      %5694 = vmatprep.subr.mxu0 0.0
      %5695 = vmatpush2.msra.mxu0 0.0
      %5696 = vmatprep.subr.mxu0 0.0
      %5697 = vmatpush2.msra.mxu0 0.0
      %5698 = vmatprep.subr.mxu0 0.0
      %5699 = vmatpush2.msra.mxu0 0.0
      %5700 = vmatprep.subr.mxu0 0.0
      %5701 = vmatpush2.msra.mxu0 0.0
      %5702 = vmatprep.subr.mxu0 0.0
      %5703 = vmatpush2.msra.mxu0 0.0
      %5704 = vmatprep.subr.mxu0 0.0
      %5705 = vmatpush2.msra.mxu0 0.0
      %5706 = vmatprep.subr.mxu0 0.0
      %5707 = vmatpush2.msra.mxu0 0.0
      %5708 = vmatprep.subr.mxu0 0.0
      %5709 = vmatpush2.msra.mxu0 0.0
      %5710 = vmatprep.subr.mxu0 0.0
      %5711 = vmatpush2.msra.mxu0 0.0
      %5712 = vmatprep.subr.mxu0 0.0
      %5713 = vmatpush2.msra.mxu0 0.0
      %5714 = vmatprep.subr.mxu0 0.0
      %5715 = vmatpush2.msra.mxu0 0.0
      %5716 = vmatprep.mubr.f32.mxu0 0.0
      %v5717 = vand.u32 %v5025, 4294901760
      %5718 = vmatmul.mubr.f32.gmra.mxu0 %v5717
      %v5719 = vpop.f32.mrf.mxu0
      %v5720 = vadd.f32 %v5569, %v5719
      %v5721 = vpop.f32.mrf.mxu0
      %5722 = vmatprep.mubr.f32.mxu0 0.0
      %v5723 = vand.u32 %v5028, 4294901760
      %5724 = vmatmul.mubr.f32.gmra.mxu0 %v5723
      %v5725 = vpop.f32.mrf.mxu0
      %v5726 = vadd.f32 %v5577, %v5725
      %v5727 = vpop.f32.mrf.mxu0
      %5728 = vmatprep.mubr.f32.mxu0 0.0
      %v5729 = vand.u32 %v5031, 4294901760
      %5730 = vmatmul.mubr.f32.gmra.mxu0 %v5729
      %v5731 = vpop.f32.mrf.mxu0
      %v5732 = vadd.f32 %v5585, %v5731
      %v5733 = vpop.f32.mrf.mxu0
      %5734 = vmatprep.mubr.f32.mxu0 0.0
      %v5735 = vand.u32 %v5034, 4294901760
      %5736 = vmatmul.mubr.f32.gmra.mxu0 %v5735
      %v5737 = vpop.f32.mrf.mxu0
      %v5738 = vadd.f32 %v5593, %v5737
      %v5739 = vpop.f32.mrf.mxu0
      %5740 = vmatprep.mubr.f32.mxu0 0.0
      %v5741 = vand.u32 %v5037, 4294901760
      %5742 = vmatmul.mubr.f32.gmra.mxu0 %v5741
      %v5743 = vpop.f32.mrf.mxu0
      %v5744 = vadd.f32 %v5601, %v5743
      %v5745 = vpop.f32.mrf.mxu0
      %5746 = vmatprep.mubr.f32.mxu0 0.0
      %v5747 = vand.u32 %v5040, 4294901760
      %5748 = vmatmul.mubr.f32.gmra.mxu0 %v5747
      %v5749 = vpop.f32.mrf.mxu0
      %v5750 = vadd.f32 %v5609, %v5749
      %v5751 = vpop.f32.mrf.mxu0
      %5752 = vmatprep.mubr.f32.mxu0 0.0
      %v5753 = vand.u32 %v5043, 4294901760
      %5754 = vmatmul.mubr.f32.gmra.mxu0 %v5753
      %v5755 = vpop.f32.mrf.mxu0
      %v5756 = vadd.f32 %v5617, %v5755
      %v5757 = vpop.f32.mrf.mxu0
      %5758 = vmatprep.mubr.f32.mxu0 0.0
      %v5759 = vand.u32 %v5046, 4294901760
      %5760 = vmatmul.mubr.f32.gmra.mxu0 %v5759
      %v5761 = vpop.f32.mrf.mxu0
      %v5762 = vadd.f32 %v5625, %v5761
      %v5763 = vpop.f32.mrf.mxu0
      %5764 = vdwg.mxu0
      %5765 = vmatprep.subr.mxu0 0.0
      %5766 = vmatpush1.msra.mxu0 0.0
      %5767 = vmatprep.subr.mxu0 0.0
      %5768 = vmatpush1.msra.mxu0 0.0
      %5769 = vmatprep.subr.mxu0 0.0
      %5770 = vmatpush1.msra.mxu0 0.0
      %5771 = vmatprep.subr.mxu0 0.0
      %5772 = vmatpush1.msra.mxu0 0.0
      %5773 = vmatprep.subr.mxu0 0.0
      %5774 = vmatpush1.msra.mxu0 0.0
      %5775 = vmatprep.subr.mxu0 0.0
      %5776 = vmatpush1.msra.mxu0 0.0
      %5777 = vmatprep.subr.mxu0 0.0
      %5778 = vmatpush1.msra.mxu0 0.0
      %5779 = vmatprep.subr.mxu0 0.0
      %5780 = vmatpush1.msra.mxu0 0.0
      %5781 = vmatprep.subr.mxu0 0.0
      %v5782 = vand.u32 %v5015, 4294901760
      %5783 = vmatpush1.msra.mxu0 %v5782
      %5784 = vmatprep.subr.mxu0 0.0
      %v5785 = vand.u32 %v5013, 4294901760
      %5786 = vmatpush1.msra.mxu0 %v5785
      %5787 = vmatprep.subr.mxu0 0.0
      %v5788 = vand.u32 %v5011, 4294901760
      %5789 = vmatpush1.msra.mxu0 %v5788
      %5790 = vmatprep.subr.mxu0 0.0
      %v5791 = vand.u32 %v5009, 4294901760
      %5792 = vmatpush1.msra.mxu0 %v5791
      %5793 = vmatprep.subr.mxu0 0.0
      %v5794 = vand.u32 %v5007, 4294901760
      %5795 = vmatpush1.msra.mxu0 %v5794
      %5796 = vmatprep.subr.mxu0 0.0
      %v5797 = vand.u32 %v5005, 4294901760
      %5798 = vmatpush1.msra.mxu0 %v5797
      %5799 = vmatprep.subr.mxu0 0.0
      %v5800 = vand.u32 %v5003, 4294901760
      %5801 = vmatpush1.msra.mxu0 %v5800
      %5802 = vmatprep.subr.mxu0 0.0
      %v5803 = vand.u32 %v5001, 4294901760
      %5804 = vmatpush1.msra.mxu0 %v5803
      %5805 = vmatprep.subr.mxu0 0.0
      %5806 = vmatpush2.msra.mxu0 0.0
      %5807 = vmatprep.subr.mxu0 0.0
      %5808 = vmatpush2.msra.mxu0 0.0
      %5809 = vmatprep.subr.mxu0 0.0
      %5810 = vmatpush2.msra.mxu0 0.0
      %5811 = vmatprep.subr.mxu0 0.0
      %5812 = vmatpush2.msra.mxu0 0.0
      %5813 = vmatprep.subr.mxu0 0.0
      %5814 = vmatpush2.msra.mxu0 0.0
      %5815 = vmatprep.subr.mxu0 0.0
      %5816 = vmatpush2.msra.mxu0 0.0
      %5817 = vmatprep.subr.mxu0 0.0
      %5818 = vmatpush2.msra.mxu0 0.0
      %5819 = vmatprep.subr.mxu0 0.0
      %5820 = vmatpush2.msra.mxu0 0.0
      %5821 = vmatprep.subr.mxu0 0.0
      %5822 = vmatpush2.msra.mxu0 0.0
      %5823 = vmatprep.subr.mxu0 0.0
      %5824 = vmatpush2.msra.mxu0 0.0
      %5825 = vmatprep.subr.mxu0 0.0
      %5826 = vmatpush2.msra.mxu0 0.0
      %5827 = vmatprep.subr.mxu0 0.0
      %5828 = vmatpush2.msra.mxu0 0.0
      %5829 = vmatprep.subr.mxu0 0.0
      %5830 = vmatpush2.msra.mxu0 0.0
      %5831 = vmatprep.subr.mxu0 0.0
      %5832 = vmatpush2.msra.mxu0 0.0
      %5833 = vmatprep.subr.mxu0 0.0
      %5834 = vmatpush2.msra.mxu0 0.0
      %5835 = vmatprep.subr.mxu0 0.0
      %5836 = vmatpush2.msra.mxu0 0.0
      %5837 = vmatprep.mubr.f32.mxu0 0.0
      %v5838 = vand.u32 %v5025, 4294901760
      %5839 = vmatmul.mubr.f32.gmra.mxu0 %v5838
      %v5840 = vpop.f32.mrf.mxu0
      %v5841 = vadd.f32 %v5720, %v5840
      %v5842 = vpop.f32.mrf.mxu0
      %5843 = vmatprep.mubr.f32.mxu0 0.0
      %v5844 = vand.u32 %v5028, 4294901760
      %5845 = vmatmul.mubr.f32.gmra.mxu0 %v5844
      %v5846 = vpop.f32.mrf.mxu0
      %v5847 = vadd.f32 %v5726, %v5846
      %v5848 = vpop.f32.mrf.mxu0
      %5849 = vmatprep.mubr.f32.mxu0 0.0
      %v5850 = vand.u32 %v5031, 4294901760
      %5851 = vmatmul.mubr.f32.gmra.mxu0 %v5850
      %v5852 = vpop.f32.mrf.mxu0
      %v5853 = vadd.f32 %v5732, %v5852
      %v5854 = vpop.f32.mrf.mxu0
      %5855 = vmatprep.mubr.f32.mxu0 0.0
      %v5856 = vand.u32 %v5034, 4294901760
      %5857 = vmatmul.mubr.f32.gmra.mxu0 %v5856
      %v5858 = vpop.f32.mrf.mxu0
      %v5859 = vadd.f32 %v5738, %v5858
      %v5860 = vpop.f32.mrf.mxu0
      %5861 = vmatprep.mubr.f32.mxu0 0.0
      %v5862 = vand.u32 %v5037, 4294901760
      %5863 = vmatmul.mubr.f32.gmra.mxu0 %v5862
      %v5864 = vpop.f32.mrf.mxu0
      %v5865 = vadd.f32 %v5744, %v5864
      %v5866 = vpop.f32.mrf.mxu0
      %5867 = vmatprep.mubr.f32.mxu0 0.0
      %v5868 = vand.u32 %v5040, 4294901760
      %5869 = vmatmul.mubr.f32.gmra.mxu0 %v5868
      %v5870 = vpop.f32.mrf.mxu0
      %v5871 = vadd.f32 %v5750, %v5870
      %v5872 = vpop.f32.mrf.mxu0
      %5873 = vmatprep.mubr.f32.mxu0 0.0
      %v5874 = vand.u32 %v5043, 4294901760
      %5875 = vmatmul.mubr.f32.gmra.mxu0 %v5874
      %v5876 = vpop.f32.mrf.mxu0
      %v5877 = vadd.f32 %v5756, %v5876
      %v5878 = vpop.f32.mrf.mxu0
      %5879 = vmatprep.mubr.f32.mxu0 0.0
      %v5880 = vand.u32 %v5046, 4294901760
      %5881 = vmatmul.mubr.f32.gmra.mxu0 %v5880
      %v5882 = vpop.f32.mrf.mxu0
      %v5883 = vadd.f32 %v5762, %v5882
      %v5884 = vpop.f32.mrf.mxu0
      %5885 = vdwg.mxu0
      %5894 = vrot.lane.b32.xlu0 %v5841, 16
      %v5895 = vpop.permute.xlu0 %5894
      %5896 = vrot.lane.b32.xlu0 %v5847, 16
      %v5897 = vpop.permute.xlu0 %5896
      %5898 = vrot.lane.b32.xlu0 %v5853, 16
      %v5899 = vpop.permute.xlu0 %5898
      %5900 = vrot.lane.b32.xlu0 %v5859, 16
      %v5901 = vpop.permute.xlu0 %5900
      %5902 = vrot.lane.b32.xlu0 %v5865, 16
      %v5903 = vpop.permute.xlu0 %5902
      %5904 = vrot.lane.b32.xlu0 %v5871, 16
      %v5905 = vpop.permute.xlu0 %5904
      %5906 = vrot.lane.b32.xlu0 %v5877, 16
      %v5907 = vpop.permute.xlu0 %5906
      %5908 = vrot.lane.b32.xlu0 %v5883, 16
      %v5909 = vpop.permute.xlu0 %5908
      %v5918 = vsel %vm2164, %v3965, %v5895
      %v5919 = vsel %vm2164, %v3971, %v5897
      %v5920 = vsel %vm2164, %v3977, %v5899
      %v5921 = vsel %vm2164, %v3983, %v5901
      %v5922 = vsel %vm2164, %v3989, %v5903
      %v5923 = vsel %vm2164, %v3995, %v5905
      %v5924 = vsel %vm2164, %v4001, %v5907
      %v5925 = vsel %vm2164, %v4007, %v5909
      %v5926 = vld [vmem:[%s4] sm:$0xff]
      %v5927 = vld [vmem:[%s4 + $0x8] sm:$0xff]
      %v5928 = vld [vmem:[%s4 + $0x10] sm:$0xff]
      %v5929 = vld [vmem:[%s4 + $0x18] sm:$0xff]
      %v5930 = vld [vmem:[%s5] sm:$0x1]
      %v5932 = vlaneseq
      %v5933 = vshrl.u32 %v5932, 7
      %v5934 = vsub.s32 0, %v5933
      %v5935 = vrot.slane %v5930, %v5934
      %v5938 = vsel %vm260, %v5918, 0
      %v5941 = vsel %vm260, %v5919, 0
      %v5944 = vsel %vm260, %v5920, 0
      %v5947 = vsel %vm260, %v5921, 0
      %v5950 = vsel %vm260, %v5922, 0
      %v5953 = vsel %vm260, %v5923, 0
      %v5956 = vsel %vm260, %v5924, 0
      %v5959 = vsel %vm260, %v5925, 0
      %5961 = vmatprep.subr.mxu0 0.0
      %5962 = vmatpush1.msra.mxu0 0.0
      %5963 = vmatprep.subr.mxu0 0.0
      %5964 = vmatpush1.msra.mxu0 0.0
      %5965 = vmatprep.subr.mxu0 0.0
      %5966 = vmatpush1.msra.mxu0 0.0
      %5967 = vmatprep.subr.mxu0 0.0
      %5968 = vmatpush1.msra.mxu0 0.0
      %5969 = vmatprep.subr.mxu0 0.0
      %5970 = vmatpush1.msra.mxu0 0.0
      %5971 = vmatprep.subr.mxu0 0.0
      %5972 = vmatpush1.msra.mxu0 0.0
      %5973 = vmatprep.subr.mxu0 0.0
      %5974 = vmatpush1.msra.mxu0 0.0
      %5975 = vmatprep.subr.mxu0 0.0
      %5976 = vmatpush1.msra.mxu0 0.0
      %5977 = vmatprep.subr.mxu0 0.0
      %5978 = vmatpush1.msra.mxu0 0.0
      %5979 = vmatprep.subr.mxu0 0.0
      %5980 = vmatpush1.msra.mxu0 0.0
      %5981 = vmatprep.subr.mxu0 0.0
      %5982 = vmatpush1.msra.mxu0 0.0
      %5983 = vmatprep.subr.mxu0 0.0
      %5984 = vmatpush1.msra.mxu0 0.0
      %5985 = vmatprep.subr.mxu0 0.0
      %v5986 = vand.u32 %v5929, 4294901760
      %5987 = vmatpush1.msra.mxu0 %v5986
      %5988 = vmatprep.subr.mxu0 0.0
      %v5989 = vand.u32 %v5928, 4294901760
      %5990 = vmatpush1.msra.mxu0 %v5989
      %5991 = vmatprep.subr.mxu0 0.0
      %v5992 = vand.u32 %v5927, 4294901760
      %5993 = vmatpush1.msra.mxu0 %v5992
      %5994 = vmatprep.subr.mxu0 0.0
      %v5995 = vand.u32 %v5926, 4294901760
      %5996 = vmatpush1.msra.mxu0 %v5995
      %5997 = vmatprep.subr.mxu0 0.0
      %5998 = vmatpush2.msra.mxu0 0.0
      %5999 = vmatprep.subr.mxu0 0.0
      %6000 = vmatpush2.msra.mxu0 0.0
      %6001 = vmatprep.subr.mxu0 0.0
      %6002 = vmatpush2.msra.mxu0 0.0
      %6003 = vmatprep.subr.mxu0 0.0
      %6004 = vmatpush2.msra.mxu0 0.0
      %6005 = vmatprep.subr.mxu0 0.0
      %6006 = vmatpush2.msra.mxu0 0.0
      %6007 = vmatprep.subr.mxu0 0.0
      %6008 = vmatpush2.msra.mxu0 0.0
      %6009 = vmatprep.subr.mxu0 0.0
      %6010 = vmatpush2.msra.mxu0 0.0
      %6011 = vmatprep.subr.mxu0 0.0
      %6012 = vmatpush2.msra.mxu0 0.0
      %6013 = vmatprep.subr.mxu0 0.0
      %6014 = vmatpush2.msra.mxu0 0.0
      %6015 = vmatprep.subr.mxu0 0.0
      %6016 = vmatpush2.msra.mxu0 0.0
      %6017 = vmatprep.subr.mxu0 0.0
      %6018 = vmatpush2.msra.mxu0 0.0
      %6019 = vmatprep.subr.mxu0 0.0
      %6020 = vmatpush2.msra.mxu0 0.0
      %6021 = vmatprep.subr.mxu0 0.0
      %6022 = vmatpush2.msra.mxu0 0.0
      %6023 = vmatprep.subr.mxu0 0.0
      %6024 = vmatpush2.msra.mxu0 0.0
      %6025 = vmatprep.subr.mxu0 0.0
      %6026 = vmatpush2.msra.mxu0 0.0
      %6027 = vmatprep.subr.mxu0 0.0
      %6028 = vmatpush2.msra.mxu0 0.0
      %6029 = vmatprep.mubr.f32.mxu0 0.0
      %v6030 = vand.u32 %v5938, 4294901760
      %v6031 = vsub.f32 %v5938, %v6030
      %v6032 = vand.u32 %v6031, 4294901760
      %v6033 = vsub.f32 %v6031, %v6032
      %v6034 = vand.u32 %v6033, 4294901760
      %6035 = vmatmul.mubr.f32.gmra.mxu0 %v6034
      %v6036 = vpop.f32.mrf.mxu0
      %v6037 = vadd.f32 %v5935, %v6036
      %v6038 = vpop.f32.mrf.mxu0
      %6039 = vmatprep.mubr.f32.mxu0 0.0
      %v6040 = vand.u32 %v5941, 4294901760
      %v6041 = vsub.f32 %v5941, %v6040
      %v6042 = vand.u32 %v6041, 4294901760
      %v6043 = vsub.f32 %v6041, %v6042
      %v6044 = vand.u32 %v6043, 4294901760
      %6045 = vmatmul.mubr.f32.gmra.mxu0 %v6044
      %v6046 = vpop.f32.mrf.mxu0
      %v6047 = vadd.f32 %v5935, %v6046
      %v6048 = vpop.f32.mrf.mxu0
      %6049 = vmatprep.mubr.f32.mxu0 0.0
      %v6050 = vand.u32 %v5944, 4294901760
      %v6051 = vsub.f32 %v5944, %v6050
      %v6052 = vand.u32 %v6051, 4294901760
      %v6053 = vsub.f32 %v6051, %v6052
      %v6054 = vand.u32 %v6053, 4294901760
      %6055 = vmatmul.mubr.f32.gmra.mxu0 %v6054
      %v6056 = vpop.f32.mrf.mxu0
      %v6057 = vadd.f32 %v5935, %v6056
      %v6058 = vpop.f32.mrf.mxu0
      %6059 = vmatprep.mubr.f32.mxu0 0.0
      %v6060 = vand.u32 %v5947, 4294901760
      %v6061 = vsub.f32 %v5947, %v6060
      %v6062 = vand.u32 %v6061, 4294901760
      %v6063 = vsub.f32 %v6061, %v6062
      %v6064 = vand.u32 %v6063, 4294901760
      %6065 = vmatmul.mubr.f32.gmra.mxu0 %v6064
      %v6066 = vpop.f32.mrf.mxu0
      %v6067 = vadd.f32 %v5935, %v6066
      %v6068 = vpop.f32.mrf.mxu0
      %6069 = vmatprep.mubr.f32.mxu0 0.0
      %v6070 = vand.u32 %v5950, 4294901760
      %v6071 = vsub.f32 %v5950, %v6070
      %v6072 = vand.u32 %v6071, 4294901760
      %v6073 = vsub.f32 %v6071, %v6072
      %v6074 = vand.u32 %v6073, 4294901760
      %6075 = vmatmul.mubr.f32.gmra.mxu0 %v6074
      %v6076 = vpop.f32.mrf.mxu0
      %v6077 = vadd.f32 %v5935, %v6076
      %v6078 = vpop.f32.mrf.mxu0
      %6079 = vmatprep.mubr.f32.mxu0 0.0
      %v6080 = vand.u32 %v5953, 4294901760
      %v6081 = vsub.f32 %v5953, %v6080
      %v6082 = vand.u32 %v6081, 4294901760
      %v6083 = vsub.f32 %v6081, %v6082
      %v6084 = vand.u32 %v6083, 4294901760
      %6085 = vmatmul.mubr.f32.gmra.mxu0 %v6084
      %v6086 = vpop.f32.mrf.mxu0
      %v6087 = vadd.f32 %v5935, %v6086
      %v6088 = vpop.f32.mrf.mxu0
      %6089 = vmatprep.mubr.f32.mxu0 0.0
      %v6090 = vand.u32 %v5956, 4294901760
      %v6091 = vsub.f32 %v5956, %v6090
      %v6092 = vand.u32 %v6091, 4294901760
      %v6093 = vsub.f32 %v6091, %v6092
      %v6094 = vand.u32 %v6093, 4294901760
      %6095 = vmatmul.mubr.f32.gmra.mxu0 %v6094
      %v6096 = vpop.f32.mrf.mxu0
      %v6097 = vadd.f32 %v5935, %v6096
      %v6098 = vpop.f32.mrf.mxu0
      %6099 = vmatprep.mubr.f32.mxu0 0.0
      %v6100 = vand.u32 %v5959, 4294901760
      %v6101 = vsub.f32 %v5959, %v6100
      %v6102 = vand.u32 %v6101, 4294901760
      %v6103 = vsub.f32 %v6101, %v6102
      %v6104 = vand.u32 %v6103, 4294901760
      %6105 = vmatmul.mubr.f32.gmra.mxu0 %v6104
      %v6106 = vpop.f32.mrf.mxu0
      %v6107 = vadd.f32 %v5935, %v6106
      %v6108 = vpop.f32.mrf.mxu0
      %6109 = vdwg.mxu0
      %6110 = vmatprep.subr.mxu0 0.0
      %6111 = vmatpush1.msra.mxu0 0.0
      %6112 = vmatprep.subr.mxu0 0.0
      %6113 = vmatpush1.msra.mxu0 0.0
      %6114 = vmatprep.subr.mxu0 0.0
      %6115 = vmatpush1.msra.mxu0 0.0
      %6116 = vmatprep.subr.mxu0 0.0
      %6117 = vmatpush1.msra.mxu0 0.0
      %6118 = vmatprep.subr.mxu0 0.0
      %6119 = vmatpush1.msra.mxu0 0.0
      %6120 = vmatprep.subr.mxu0 0.0
      %6121 = vmatpush1.msra.mxu0 0.0
      %6122 = vmatprep.subr.mxu0 0.0
      %6123 = vmatpush1.msra.mxu0 0.0
      %6124 = vmatprep.subr.mxu0 0.0
      %6125 = vmatpush1.msra.mxu0 0.0
      %6126 = vmatprep.subr.mxu0 0.0
      %6127 = vmatpush1.msra.mxu0 0.0
      %6128 = vmatprep.subr.mxu0 0.0
      %6129 = vmatpush1.msra.mxu0 0.0
      %6130 = vmatprep.subr.mxu0 0.0
      %6131 = vmatpush1.msra.mxu0 0.0
      %6132 = vmatprep.subr.mxu0 0.0
      %6133 = vmatpush1.msra.mxu0 0.0
      %6134 = vmatprep.subr.mxu0 0.0
      %v6135 = vand.u32 %v5929, 4294901760
      %v6136 = vsub.f32 %v5929, %v6135
      %v6137 = vand.u32 %v6136, 4294901760
      %v6138 = vsub.f32 %v6136, %v6137
      %v6139 = vand.u32 %v6138, 4294901760
      %6140 = vmatpush1.msra.mxu0 %v6139
      %6141 = vmatprep.subr.mxu0 0.0
      %v6142 = vand.u32 %v5928, 4294901760
      %v6143 = vsub.f32 %v5928, %v6142
      %v6144 = vand.u32 %v6143, 4294901760
      %v6145 = vsub.f32 %v6143, %v6144
      %v6146 = vand.u32 %v6145, 4294901760
      %6147 = vmatpush1.msra.mxu0 %v6146
      %6148 = vmatprep.subr.mxu0 0.0
      %v6149 = vand.u32 %v5927, 4294901760
      %v6150 = vsub.f32 %v5927, %v6149
      %v6151 = vand.u32 %v6150, 4294901760
      %v6152 = vsub.f32 %v6150, %v6151
      %v6153 = vand.u32 %v6152, 4294901760
      %6154 = vmatpush1.msra.mxu0 %v6153
      %6155 = vmatprep.subr.mxu0 0.0
      %v6156 = vand.u32 %v5926, 4294901760
      %v6157 = vsub.f32 %v5926, %v6156
      %v6158 = vand.u32 %v6157, 4294901760
      %v6159 = vsub.f32 %v6157, %v6158
      %v6160 = vand.u32 %v6159, 4294901760
      %6161 = vmatpush1.msra.mxu0 %v6160
      %6162 = vmatprep.subr.mxu0 0.0
      %6163 = vmatpush2.msra.mxu0 0.0
      %6164 = vmatprep.subr.mxu0 0.0
      %6165 = vmatpush2.msra.mxu0 0.0
      %6166 = vmatprep.subr.mxu0 0.0
      %6167 = vmatpush2.msra.mxu0 0.0
      %6168 = vmatprep.subr.mxu0 0.0
      %6169 = vmatpush2.msra.mxu0 0.0
      %6170 = vmatprep.subr.mxu0 0.0
      %6171 = vmatpush2.msra.mxu0 0.0
      %6172 = vmatprep.subr.mxu0 0.0
      %6173 = vmatpush2.msra.mxu0 0.0
      %6174 = vmatprep.subr.mxu0 0.0
      %6175 = vmatpush2.msra.mxu0 0.0
      %6176 = vmatprep.subr.mxu0 0.0
      %6177 = vmatpush2.msra.mxu0 0.0
      %6178 = vmatprep.subr.mxu0 0.0
      %6179 = vmatpush2.msra.mxu0 0.0
      %6180 = vmatprep.subr.mxu0 0.0
      %6181 = vmatpush2.msra.mxu0 0.0
      %6182 = vmatprep.subr.mxu0 0.0
      %6183 = vmatpush2.msra.mxu0 0.0
      %6184 = vmatprep.subr.mxu0 0.0
      %6185 = vmatpush2.msra.mxu0 0.0
      %6186 = vmatprep.subr.mxu0 0.0
      %6187 = vmatpush2.msra.mxu0 0.0
      %6188 = vmatprep.subr.mxu0 0.0
      %6189 = vmatpush2.msra.mxu0 0.0
      %6190 = vmatprep.subr.mxu0 0.0
      %6191 = vmatpush2.msra.mxu0 0.0
      %6192 = vmatprep.subr.mxu0 0.0
      %6193 = vmatpush2.msra.mxu0 0.0
      %6194 = vmatprep.mubr.f32.mxu0 0.0
      %v6195 = vand.u32 %v5938, 4294901760
      %6196 = vmatmul.mubr.f32.gmra.mxu0 %v6195
      %v6197 = vpop.f32.mrf.mxu0
      %v6198 = vadd.f32 %v6037, %v6197
      %v6199 = vpop.f32.mrf.mxu0
      %6200 = vmatprep.mubr.f32.mxu0 0.0
      %v6201 = vand.u32 %v5941, 4294901760
      %6202 = vmatmul.mubr.f32.gmra.mxu0 %v6201
      %v6203 = vpop.f32.mrf.mxu0
      %v6204 = vadd.f32 %v6047, %v6203
      %v6205 = vpop.f32.mrf.mxu0
      %6206 = vmatprep.mubr.f32.mxu0 0.0
      %v6207 = vand.u32 %v5944, 4294901760
      %6208 = vmatmul.mubr.f32.gmra.mxu0 %v6207
      %v6209 = vpop.f32.mrf.mxu0
      %v6210 = vadd.f32 %v6057, %v6209
      %v6211 = vpop.f32.mrf.mxu0
      %6212 = vmatprep.mubr.f32.mxu0 0.0
      %v6213 = vand.u32 %v5947, 4294901760
      %6214 = vmatmul.mubr.f32.gmra.mxu0 %v6213
      %v6215 = vpop.f32.mrf.mxu0
      %v6216 = vadd.f32 %v6067, %v6215
      %v6217 = vpop.f32.mrf.mxu0
      %6218 = vmatprep.mubr.f32.mxu0 0.0
      %v6219 = vand.u32 %v5950, 4294901760
      %6220 = vmatmul.mubr.f32.gmra.mxu0 %v6219
      %v6221 = vpop.f32.mrf.mxu0
      %v6222 = vadd.f32 %v6077, %v6221
      %v6223 = vpop.f32.mrf.mxu0
      %6224 = vmatprep.mubr.f32.mxu0 0.0
      %v6225 = vand.u32 %v5953, 4294901760
      %6226 = vmatmul.mubr.f32.gmra.mxu0 %v6225
      %v6227 = vpop.f32.mrf.mxu0
      %v6228 = vadd.f32 %v6087, %v6227
      %v6229 = vpop.f32.mrf.mxu0
      %6230 = vmatprep.mubr.f32.mxu0 0.0
      %v6231 = vand.u32 %v5956, 4294901760
      %6232 = vmatmul.mubr.f32.gmra.mxu0 %v6231
      %v6233 = vpop.f32.mrf.mxu0
      %v6234 = vadd.f32 %v6097, %v6233
      %v6235 = vpop.f32.mrf.mxu0
      %6236 = vmatprep.mubr.f32.mxu0 0.0
      %v6237 = vand.u32 %v5959, 4294901760
      %6238 = vmatmul.mubr.f32.gmra.mxu0 %v6237
      %v6239 = vpop.f32.mrf.mxu0
      %v6240 = vadd.f32 %v6107, %v6239
      %v6241 = vpop.f32.mrf.mxu0
      %6242 = vdwg.mxu0
      %6243 = vmatprep.subr.mxu0 0.0
      %6244 = vmatpush1.msra.mxu0 0.0
      %6245 = vmatprep.subr.mxu0 0.0
      %6246 = vmatpush1.msra.mxu0 0.0
      %6247 = vmatprep.subr.mxu0 0.0
      %6248 = vmatpush1.msra.mxu0 0.0
      %6249 = vmatprep.subr.mxu0 0.0
      %6250 = vmatpush1.msra.mxu0 0.0
      %6251 = vmatprep.subr.mxu0 0.0
      %6252 = vmatpush1.msra.mxu0 0.0
      %6253 = vmatprep.subr.mxu0 0.0
      %6254 = vmatpush1.msra.mxu0 0.0
      %6255 = vmatprep.subr.mxu0 0.0
      %6256 = vmatpush1.msra.mxu0 0.0
      %6257 = vmatprep.subr.mxu0 0.0
      %6258 = vmatpush1.msra.mxu0 0.0
      %6259 = vmatprep.subr.mxu0 0.0
      %6260 = vmatpush1.msra.mxu0 0.0
      %6261 = vmatprep.subr.mxu0 0.0
      %6262 = vmatpush1.msra.mxu0 0.0
      %6263 = vmatprep.subr.mxu0 0.0
      %6264 = vmatpush1.msra.mxu0 0.0
      %6265 = vmatprep.subr.mxu0 0.0
      %6266 = vmatpush1.msra.mxu0 0.0
      %6267 = vmatprep.subr.mxu0 0.0
      %v6268 = vand.u32 %v5929, 4294901760
      %v6269 = vsub.f32 %v5929, %v6268
      %6270 = vmatpush1.msra.mxu0 %v6269
      %6271 = vmatprep.subr.mxu0 0.0
      %v6272 = vand.u32 %v5928, 4294901760
      %v6273 = vsub.f32 %v5928, %v6272
      %6274 = vmatpush1.msra.mxu0 %v6273
      %6275 = vmatprep.subr.mxu0 0.0
      %v6276 = vand.u32 %v5927, 4294901760
      %v6277 = vsub.f32 %v5927, %v6276
      %6278 = vmatpush1.msra.mxu0 %v6277
      %6279 = vmatprep.subr.mxu0 0.0
      %v6280 = vand.u32 %v5926, 4294901760
      %v6281 = vsub.f32 %v5926, %v6280
      %6282 = vmatpush1.msra.mxu0 %v6281
      %6283 = vmatprep.subr.mxu0 0.0
      %6284 = vmatpush2.msra.mxu0 0.0
      %6285 = vmatprep.subr.mxu0 0.0
      %6286 = vmatpush2.msra.mxu0 0.0
      %6287 = vmatprep.subr.mxu0 0.0
      %6288 = vmatpush2.msra.mxu0 0.0
      %6289 = vmatprep.subr.mxu0 0.0
      %6290 = vmatpush2.msra.mxu0 0.0
      %6291 = vmatprep.subr.mxu0 0.0
      %6292 = vmatpush2.msra.mxu0 0.0
      %6293 = vmatprep.subr.mxu0 0.0
      %6294 = vmatpush2.msra.mxu0 0.0
      %6295 = vmatprep.subr.mxu0 0.0
      %6296 = vmatpush2.msra.mxu0 0.0
      %6297 = vmatprep.subr.mxu0 0.0
      %6298 = vmatpush2.msra.mxu0 0.0
      %6299 = vmatprep.subr.mxu0 0.0
      %6300 = vmatpush2.msra.mxu0 0.0
      %6301 = vmatprep.subr.mxu0 0.0
      %6302 = vmatpush2.msra.mxu0 0.0
      %6303 = vmatprep.subr.mxu0 0.0
      %6304 = vmatpush2.msra.mxu0 0.0
      %6305 = vmatprep.subr.mxu0 0.0
      %6306 = vmatpush2.msra.mxu0 0.0
      %6307 = vmatprep.subr.mxu0 0.0
      %6308 = vmatpush2.msra.mxu0 0.0
      %6309 = vmatprep.subr.mxu0 0.0
      %6310 = vmatpush2.msra.mxu0 0.0
      %6311 = vmatprep.subr.mxu0 0.0
      %6312 = vmatpush2.msra.mxu0 0.0
      %6313 = vmatprep.subr.mxu0 0.0
      %6314 = vmatpush2.msra.mxu0 0.0
      %6315 = vmatprep.mubr.f32.mxu0 0.0
      %v6316 = vand.u32 %v5938, 4294901760
      %v6317 = vsub.f32 %v5938, %v6316
      %6318 = vmatmul.mubr.f32.gmra.mxu0 %v6317
      %v6319 = vpop.f32.mrf.mxu0
      %v6320 = vadd.f32 %v6198, %v6319
      %v6321 = vpop.f32.mrf.mxu0
      %6322 = vmatprep.mubr.f32.mxu0 0.0
      %v6323 = vand.u32 %v5941, 4294901760
      %v6324 = vsub.f32 %v5941, %v6323
      %6325 = vmatmul.mubr.f32.gmra.mxu0 %v6324
      %v6326 = vpop.f32.mrf.mxu0
      %v6327 = vadd.f32 %v6204, %v6326
      %v6328 = vpop.f32.mrf.mxu0
      %6329 = vmatprep.mubr.f32.mxu0 0.0
      %v6330 = vand.u32 %v5944, 4294901760
      %v6331 = vsub.f32 %v5944, %v6330
      %6332 = vmatmul.mubr.f32.gmra.mxu0 %v6331
      %v6333 = vpop.f32.mrf.mxu0
      %v6334 = vadd.f32 %v6210, %v6333
      %v6335 = vpop.f32.mrf.mxu0
      %6336 = vmatprep.mubr.f32.mxu0 0.0
      %v6337 = vand.u32 %v5947, 4294901760
      %v6338 = vsub.f32 %v5947, %v6337
      %6339 = vmatmul.mubr.f32.gmra.mxu0 %v6338
      %v6340 = vpop.f32.mrf.mxu0
      %v6341 = vadd.f32 %v6216, %v6340
      %v6342 = vpop.f32.mrf.mxu0
      %6343 = vmatprep.mubr.f32.mxu0 0.0
      %v6344 = vand.u32 %v5950, 4294901760
      %v6345 = vsub.f32 %v5950, %v6344
      %6346 = vmatmul.mubr.f32.gmra.mxu0 %v6345
      %v6347 = vpop.f32.mrf.mxu0
      %v6348 = vadd.f32 %v6222, %v6347
      %v6349 = vpop.f32.mrf.mxu0
      %6350 = vmatprep.mubr.f32.mxu0 0.0
      %v6351 = vand.u32 %v5953, 4294901760
      %v6352 = vsub.f32 %v5953, %v6351
      %6353 = vmatmul.mubr.f32.gmra.mxu0 %v6352
      %v6354 = vpop.f32.mrf.mxu0
      %v6355 = vadd.f32 %v6228, %v6354
      %v6356 = vpop.f32.mrf.mxu0
      %6357 = vmatprep.mubr.f32.mxu0 0.0
      %v6358 = vand.u32 %v5956, 4294901760
      %v6359 = vsub.f32 %v5956, %v6358
      %6360 = vmatmul.mubr.f32.gmra.mxu0 %v6359
      %v6361 = vpop.f32.mrf.mxu0
      %v6362 = vadd.f32 %v6234, %v6361
      %v6363 = vpop.f32.mrf.mxu0
      %6364 = vmatprep.mubr.f32.mxu0 0.0
      %v6365 = vand.u32 %v5959, 4294901760
      %v6366 = vsub.f32 %v5959, %v6365
      %6367 = vmatmul.mubr.f32.gmra.mxu0 %v6366
      %v6368 = vpop.f32.mrf.mxu0
      %v6369 = vadd.f32 %v6240, %v6368
      %v6370 = vpop.f32.mrf.mxu0
      %6371 = vdwg.mxu0
      %6372 = vmatprep.subr.mxu0 0.0
      %6373 = vmatpush1.msra.mxu0 0.0
      %6374 = vmatprep.subr.mxu0 0.0
      %6375 = vmatpush1.msra.mxu0 0.0
      %6376 = vmatprep.subr.mxu0 0.0
      %6377 = vmatpush1.msra.mxu0 0.0
      %6378 = vmatprep.subr.mxu0 0.0
      %6379 = vmatpush1.msra.mxu0 0.0
      %6380 = vmatprep.subr.mxu0 0.0
      %6381 = vmatpush1.msra.mxu0 0.0
      %6382 = vmatprep.subr.mxu0 0.0
      %6383 = vmatpush1.msra.mxu0 0.0
      %6384 = vmatprep.subr.mxu0 0.0
      %6385 = vmatpush1.msra.mxu0 0.0
      %6386 = vmatprep.subr.mxu0 0.0
      %6387 = vmatpush1.msra.mxu0 0.0
      %6388 = vmatprep.subr.mxu0 0.0
      %6389 = vmatpush1.msra.mxu0 0.0
      %6390 = vmatprep.subr.mxu0 0.0
      %6391 = vmatpush1.msra.mxu0 0.0
      %6392 = vmatprep.subr.mxu0 0.0
      %6393 = vmatpush1.msra.mxu0 0.0
      %6394 = vmatprep.subr.mxu0 0.0
      %6395 = vmatpush1.msra.mxu0 0.0
      %6396 = vmatprep.subr.mxu0 0.0
      %v6397 = vand.u32 %v5929, 4294901760
      %6398 = vmatpush1.msra.mxu0 %v6397
      %6399 = vmatprep.subr.mxu0 0.0
      %v6400 = vand.u32 %v5928, 4294901760
      %6401 = vmatpush1.msra.mxu0 %v6400
      %6402 = vmatprep.subr.mxu0 0.0
      %v6403 = vand.u32 %v5927, 4294901760
      %6404 = vmatpush1.msra.mxu0 %v6403
      %6405 = vmatprep.subr.mxu0 0.0
      %v6406 = vand.u32 %v5926, 4294901760
      %6407 = vmatpush1.msra.mxu0 %v6406
      %6408 = vmatprep.subr.mxu0 0.0
      %6409 = vmatpush2.msra.mxu0 0.0
      %6410 = vmatprep.subr.mxu0 0.0
      %6411 = vmatpush2.msra.mxu0 0.0
      %6412 = vmatprep.subr.mxu0 0.0
      %6413 = vmatpush2.msra.mxu0 0.0
      %6414 = vmatprep.subr.mxu0 0.0
      %6415 = vmatpush2.msra.mxu0 0.0
      %6416 = vmatprep.subr.mxu0 0.0
      %6417 = vmatpush2.msra.mxu0 0.0
      %6418 = vmatprep.subr.mxu0 0.0
      %6419 = vmatpush2.msra.mxu0 0.0
      %6420 = vmatprep.subr.mxu0 0.0
      %6421 = vmatpush2.msra.mxu0 0.0
      %6422 = vmatprep.subr.mxu0 0.0
      %6423 = vmatpush2.msra.mxu0 0.0
      %6424 = vmatprep.subr.mxu0 0.0
      %6425 = vmatpush2.msra.mxu0 0.0
      %6426 = vmatprep.subr.mxu0 0.0
      %6427 = vmatpush2.msra.mxu0 0.0
      %6428 = vmatprep.subr.mxu0 0.0
      %6429 = vmatpush2.msra.mxu0 0.0
      %6430 = vmatprep.subr.mxu0 0.0
      %6431 = vmatpush2.msra.mxu0 0.0
      %6432 = vmatprep.subr.mxu0 0.0
      %6433 = vmatpush2.msra.mxu0 0.0
      %6434 = vmatprep.subr.mxu0 0.0
      %6435 = vmatpush2.msra.mxu0 0.0
      %6436 = vmatprep.subr.mxu0 0.0
      %6437 = vmatpush2.msra.mxu0 0.0
      %6438 = vmatprep.subr.mxu0 0.0
      %6439 = vmatpush2.msra.mxu0 0.0
      %6440 = vmatprep.mubr.f32.mxu0 0.0
      %v6441 = vand.u32 %v5938, 4294901760
      %v6442 = vsub.f32 %v5938, %v6441
      %v6443 = vand.u32 %v6442, 4294901760
      %6444 = vmatmul.mubr.f32.gmra.mxu0 %v6443
      %v6445 = vpop.f32.mrf.mxu0
      %v6446 = vadd.f32 %v6320, %v6445
      %v6447 = vpop.f32.mrf.mxu0
      %6448 = vmatprep.mubr.f32.mxu0 0.0
      %v6449 = vand.u32 %v5941, 4294901760
      %v6450 = vsub.f32 %v5941, %v6449
      %v6451 = vand.u32 %v6450, 4294901760
      %6452 = vmatmul.mubr.f32.gmra.mxu0 %v6451
      %v6453 = vpop.f32.mrf.mxu0
      %v6454 = vadd.f32 %v6327, %v6453
      %v6455 = vpop.f32.mrf.mxu0
      %6456 = vmatprep.mubr.f32.mxu0 0.0
      %v6457 = vand.u32 %v5944, 4294901760
      %v6458 = vsub.f32 %v5944, %v6457
      %v6459 = vand.u32 %v6458, 4294901760
      %6460 = vmatmul.mubr.f32.gmra.mxu0 %v6459
      %v6461 = vpop.f32.mrf.mxu0
      %v6462 = vadd.f32 %v6334, %v6461
      %v6463 = vpop.f32.mrf.mxu0
      %6464 = vmatprep.mubr.f32.mxu0 0.0
      %v6465 = vand.u32 %v5947, 4294901760
      %v6466 = vsub.f32 %v5947, %v6465
      %v6467 = vand.u32 %v6466, 4294901760
      %6468 = vmatmul.mubr.f32.gmra.mxu0 %v6467
      %v6469 = vpop.f32.mrf.mxu0
      %v6470 = vadd.f32 %v6341, %v6469
      %v6471 = vpop.f32.mrf.mxu0
      %6472 = vmatprep.mubr.f32.mxu0 0.0
      %v6473 = vand.u32 %v5950, 4294901760
      %v6474 = vsub.f32 %v5950, %v6473
      %v6475 = vand.u32 %v6474, 4294901760
      %6476 = vmatmul.mubr.f32.gmra.mxu0 %v6475
      %v6477 = vpop.f32.mrf.mxu0
      %v6478 = vadd.f32 %v6348, %v6477
      %v6479 = vpop.f32.mrf.mxu0
      %6480 = vmatprep.mubr.f32.mxu0 0.0
      %v6481 = vand.u32 %v5953, 4294901760
      %v6482 = vsub.f32 %v5953, %v6481
      %v6483 = vand.u32 %v6482, 4294901760
      %6484 = vmatmul.mubr.f32.gmra.mxu0 %v6483
      %v6485 = vpop.f32.mrf.mxu0
      %v6486 = vadd.f32 %v6355, %v6485
      %v6487 = vpop.f32.mrf.mxu0
      %6488 = vmatprep.mubr.f32.mxu0 0.0
      %v6489 = vand.u32 %v5956, 4294901760
      %v6490 = vsub.f32 %v5956, %v6489
      %v6491 = vand.u32 %v6490, 4294901760
      %6492 = vmatmul.mubr.f32.gmra.mxu0 %v6491
      %v6493 = vpop.f32.mrf.mxu0
      %v6494 = vadd.f32 %v6362, %v6493
      %v6495 = vpop.f32.mrf.mxu0
      %6496 = vmatprep.mubr.f32.mxu0 0.0
      %v6497 = vand.u32 %v5959, 4294901760
      %v6498 = vsub.f32 %v5959, %v6497
      %v6499 = vand.u32 %v6498, 4294901760
      %6500 = vmatmul.mubr.f32.gmra.mxu0 %v6499
      %v6501 = vpop.f32.mrf.mxu0
      %v6502 = vadd.f32 %v6369, %v6501
      %v6503 = vpop.f32.mrf.mxu0
      %6504 = vdwg.mxu0
      %6505 = vmatprep.subr.mxu0 0.0
      %6506 = vmatpush1.msra.mxu0 0.0
      %6507 = vmatprep.subr.mxu0 0.0
      %6508 = vmatpush1.msra.mxu0 0.0
      %6509 = vmatprep.subr.mxu0 0.0
      %6510 = vmatpush1.msra.mxu0 0.0
      %6511 = vmatprep.subr.mxu0 0.0
      %6512 = vmatpush1.msra.mxu0 0.0
      %6513 = vmatprep.subr.mxu0 0.0
      %6514 = vmatpush1.msra.mxu0 0.0
      %6515 = vmatprep.subr.mxu0 0.0
      %6516 = vmatpush1.msra.mxu0 0.0
      %6517 = vmatprep.subr.mxu0 0.0
      %6518 = vmatpush1.msra.mxu0 0.0
      %6519 = vmatprep.subr.mxu0 0.0
      %6520 = vmatpush1.msra.mxu0 0.0
      %6521 = vmatprep.subr.mxu0 0.0
      %6522 = vmatpush1.msra.mxu0 0.0
      %6523 = vmatprep.subr.mxu0 0.0
      %6524 = vmatpush1.msra.mxu0 0.0
      %6525 = vmatprep.subr.mxu0 0.0
      %6526 = vmatpush1.msra.mxu0 0.0
      %6527 = vmatprep.subr.mxu0 0.0
      %6528 = vmatpush1.msra.mxu0 0.0
      %6529 = vmatprep.subr.mxu0 0.0
      %v6530 = vand.u32 %v5929, 4294901760
      %v6531 = vsub.f32 %v5929, %v6530
      %v6532 = vand.u32 %v6531, 4294901760
      %6533 = vmatpush1.msra.mxu0 %v6532
      %6534 = vmatprep.subr.mxu0 0.0
      %v6535 = vand.u32 %v5928, 4294901760
      %v6536 = vsub.f32 %v5928, %v6535
      %v6537 = vand.u32 %v6536, 4294901760
      %6538 = vmatpush1.msra.mxu0 %v6537
      %6539 = vmatprep.subr.mxu0 0.0
      %v6540 = vand.u32 %v5927, 4294901760
      %v6541 = vsub.f32 %v5927, %v6540
      %v6542 = vand.u32 %v6541, 4294901760
      %6543 = vmatpush1.msra.mxu0 %v6542
      %6544 = vmatprep.subr.mxu0 0.0
      %v6545 = vand.u32 %v5926, 4294901760
      %v6546 = vsub.f32 %v5926, %v6545
      %v6547 = vand.u32 %v6546, 4294901760
      %6548 = vmatpush1.msra.mxu0 %v6547
      %6549 = vmatprep.subr.mxu0 0.0
      %6550 = vmatpush2.msra.mxu0 0.0
      %6551 = vmatprep.subr.mxu0 0.0
      %6552 = vmatpush2.msra.mxu0 0.0
      %6553 = vmatprep.subr.mxu0 0.0
      %6554 = vmatpush2.msra.mxu0 0.0
      %6555 = vmatprep.subr.mxu0 0.0
      %6556 = vmatpush2.msra.mxu0 0.0
      %6557 = vmatprep.subr.mxu0 0.0
      %6558 = vmatpush2.msra.mxu0 0.0
      %6559 = vmatprep.subr.mxu0 0.0
      %6560 = vmatpush2.msra.mxu0 0.0
      %6561 = vmatprep.subr.mxu0 0.0
      %6562 = vmatpush2.msra.mxu0 0.0
      %6563 = vmatprep.subr.mxu0 0.0
      %6564 = vmatpush2.msra.mxu0 0.0
      %6565 = vmatprep.subr.mxu0 0.0
      %6566 = vmatpush2.msra.mxu0 0.0
      %6567 = vmatprep.subr.mxu0 0.0
      %6568 = vmatpush2.msra.mxu0 0.0
      %6569 = vmatprep.subr.mxu0 0.0
      %6570 = vmatpush2.msra.mxu0 0.0
      %6571 = vmatprep.subr.mxu0 0.0
      %6572 = vmatpush2.msra.mxu0 0.0
      %6573 = vmatprep.subr.mxu0 0.0
      %6574 = vmatpush2.msra.mxu0 0.0
      %6575 = vmatprep.subr.mxu0 0.0
      %6576 = vmatpush2.msra.mxu0 0.0
      %6577 = vmatprep.subr.mxu0 0.0
      %6578 = vmatpush2.msra.mxu0 0.0
      %6579 = vmatprep.subr.mxu0 0.0
      %6580 = vmatpush2.msra.mxu0 0.0
      %6581 = vmatprep.mubr.f32.mxu0 0.0
      %v6582 = vand.u32 %v5938, 4294901760
      %6583 = vmatmul.mubr.f32.gmra.mxu0 %v6582
      %v6584 = vpop.f32.mrf.mxu0
      %v6585 = vadd.f32 %v6446, %v6584
      %v6586 = vpop.f32.mrf.mxu0
      %6587 = vmatprep.mubr.f32.mxu0 0.0
      %v6588 = vand.u32 %v5941, 4294901760
      %6589 = vmatmul.mubr.f32.gmra.mxu0 %v6588
      %v6590 = vpop.f32.mrf.mxu0
      %v6591 = vadd.f32 %v6454, %v6590
      %v6592 = vpop.f32.mrf.mxu0
      %6593 = vmatprep.mubr.f32.mxu0 0.0
      %v6594 = vand.u32 %v5944, 4294901760
      %6595 = vmatmul.mubr.f32.gmra.mxu0 %v6594
      %v6596 = vpop.f32.mrf.mxu0
      %v6597 = vadd.f32 %v6462, %v6596
      %v6598 = vpop.f32.mrf.mxu0
      %6599 = vmatprep.mubr.f32.mxu0 0.0
      %v6600 = vand.u32 %v5947, 4294901760
      %6601 = vmatmul.mubr.f32.gmra.mxu0 %v6600
      %v6602 = vpop.f32.mrf.mxu0
      %v6603 = vadd.f32 %v6470, %v6602
      %v6604 = vpop.f32.mrf.mxu0
      %6605 = vmatprep.mubr.f32.mxu0 0.0
      %v6606 = vand.u32 %v5950, 4294901760
      %6607 = vmatmul.mubr.f32.gmra.mxu0 %v6606
      %v6608 = vpop.f32.mrf.mxu0
      %v6609 = vadd.f32 %v6478, %v6608
      %v6610 = vpop.f32.mrf.mxu0
      %6611 = vmatprep.mubr.f32.mxu0 0.0
      %v6612 = vand.u32 %v5953, 4294901760
      %6613 = vmatmul.mubr.f32.gmra.mxu0 %v6612
      %v6614 = vpop.f32.mrf.mxu0
      %v6615 = vadd.f32 %v6486, %v6614
      %v6616 = vpop.f32.mrf.mxu0
      %6617 = vmatprep.mubr.f32.mxu0 0.0
      %v6618 = vand.u32 %v5956, 4294901760
      %6619 = vmatmul.mubr.f32.gmra.mxu0 %v6618
      %v6620 = vpop.f32.mrf.mxu0
      %v6621 = vadd.f32 %v6494, %v6620
      %v6622 = vpop.f32.mrf.mxu0
      %6623 = vmatprep.mubr.f32.mxu0 0.0
      %v6624 = vand.u32 %v5959, 4294901760
      %6625 = vmatmul.mubr.f32.gmra.mxu0 %v6624
      %v6626 = vpop.f32.mrf.mxu0
      %v6627 = vadd.f32 %v6502, %v6626
      %v6628 = vpop.f32.mrf.mxu0
      %6629 = vdwg.mxu0
      %6630 = vmatprep.subr.mxu0 0.0
      %6631 = vmatpush1.msra.mxu0 0.0
      %6632 = vmatprep.subr.mxu0 0.0
      %6633 = vmatpush1.msra.mxu0 0.0
      %6634 = vmatprep.subr.mxu0 0.0
      %6635 = vmatpush1.msra.mxu0 0.0
      %6636 = vmatprep.subr.mxu0 0.0
      %6637 = vmatpush1.msra.mxu0 0.0
      %6638 = vmatprep.subr.mxu0 0.0
      %6639 = vmatpush1.msra.mxu0 0.0
      %6640 = vmatprep.subr.mxu0 0.0
      %6641 = vmatpush1.msra.mxu0 0.0
      %6642 = vmatprep.subr.mxu0 0.0
      %6643 = vmatpush1.msra.mxu0 0.0
      %6644 = vmatprep.subr.mxu0 0.0
      %6645 = vmatpush1.msra.mxu0 0.0
      %6646 = vmatprep.subr.mxu0 0.0
      %6647 = vmatpush1.msra.mxu0 0.0
      %6648 = vmatprep.subr.mxu0 0.0
      %6649 = vmatpush1.msra.mxu0 0.0
      %6650 = vmatprep.subr.mxu0 0.0
      %6651 = vmatpush1.msra.mxu0 0.0
      %6652 = vmatprep.subr.mxu0 0.0
      %6653 = vmatpush1.msra.mxu0 0.0
      %6654 = vmatprep.subr.mxu0 0.0
      %v6655 = vand.u32 %v5929, 4294901760
      %6656 = vmatpush1.msra.mxu0 %v6655
      %6657 = vmatprep.subr.mxu0 0.0
      %v6658 = vand.u32 %v5928, 4294901760
      %6659 = vmatpush1.msra.mxu0 %v6658
      %6660 = vmatprep.subr.mxu0 0.0
      %v6661 = vand.u32 %v5927, 4294901760
      %6662 = vmatpush1.msra.mxu0 %v6661
      %6663 = vmatprep.subr.mxu0 0.0
      %v6664 = vand.u32 %v5926, 4294901760
      %6665 = vmatpush1.msra.mxu0 %v6664
      %6666 = vmatprep.subr.mxu0 0.0
      %6667 = vmatpush2.msra.mxu0 0.0
      %6668 = vmatprep.subr.mxu0 0.0
      %6669 = vmatpush2.msra.mxu0 0.0
      %6670 = vmatprep.subr.mxu0 0.0
      %6671 = vmatpush2.msra.mxu0 0.0
      %6672 = vmatprep.subr.mxu0 0.0
      %6673 = vmatpush2.msra.mxu0 0.0
      %6674 = vmatprep.subr.mxu0 0.0
      %6675 = vmatpush2.msra.mxu0 0.0
      %6676 = vmatprep.subr.mxu0 0.0
      %6677 = vmatpush2.msra.mxu0 0.0
      %6678 = vmatprep.subr.mxu0 0.0
      %6679 = vmatpush2.msra.mxu0 0.0
      %6680 = vmatprep.subr.mxu0 0.0
      %6681 = vmatpush2.msra.mxu0 0.0
      %6682 = vmatprep.subr.mxu0 0.0
      %6683 = vmatpush2.msra.mxu0 0.0
      %6684 = vmatprep.subr.mxu0 0.0
      %6685 = vmatpush2.msra.mxu0 0.0
      %6686 = vmatprep.subr.mxu0 0.0
      %6687 = vmatpush2.msra.mxu0 0.0
      %6688 = vmatprep.subr.mxu0 0.0
      %6689 = vmatpush2.msra.mxu0 0.0
      %6690 = vmatprep.subr.mxu0 0.0
      %6691 = vmatpush2.msra.mxu0 0.0
      %6692 = vmatprep.subr.mxu0 0.0
      %6693 = vmatpush2.msra.mxu0 0.0
      %6694 = vmatprep.subr.mxu0 0.0
      %6695 = vmatpush2.msra.mxu0 0.0
      %6696 = vmatprep.subr.mxu0 0.0
      %6697 = vmatpush2.msra.mxu0 0.0
      %6698 = vmatprep.mubr.f32.mxu0 0.0
      %v6699 = vand.u32 %v5938, 4294901760
      %6700 = vmatmul.mubr.f32.gmra.mxu0 %v6699
      %v6701 = vpop.f32.mrf.mxu0
      %v6702 = vadd.f32 %v6585, %v6701
      %v6703 = vpop.f32.mrf.mxu0
      %6704 = vmatprep.mubr.f32.mxu0 0.0
      %v6705 = vand.u32 %v5941, 4294901760
      %6706 = vmatmul.mubr.f32.gmra.mxu0 %v6705
      %v6707 = vpop.f32.mrf.mxu0
      %v6708 = vadd.f32 %v6591, %v6707
      %v6709 = vpop.f32.mrf.mxu0
      %6710 = vmatprep.mubr.f32.mxu0 0.0
      %v6711 = vand.u32 %v5944, 4294901760
      %6712 = vmatmul.mubr.f32.gmra.mxu0 %v6711
      %v6713 = vpop.f32.mrf.mxu0
      %v6714 = vadd.f32 %v6597, %v6713
      %v6715 = vpop.f32.mrf.mxu0
      %6716 = vmatprep.mubr.f32.mxu0 0.0
      %v6717 = vand.u32 %v5947, 4294901760
      %6718 = vmatmul.mubr.f32.gmra.mxu0 %v6717
      %v6719 = vpop.f32.mrf.mxu0
      %v6720 = vadd.f32 %v6603, %v6719
      %v6721 = vpop.f32.mrf.mxu0
      %6722 = vmatprep.mubr.f32.mxu0 0.0
      %v6723 = vand.u32 %v5950, 4294901760
      %6724 = vmatmul.mubr.f32.gmra.mxu0 %v6723
      %v6725 = vpop.f32.mrf.mxu0
      %v6726 = vadd.f32 %v6609, %v6725
      %v6727 = vpop.f32.mrf.mxu0
      %6728 = vmatprep.mubr.f32.mxu0 0.0
      %v6729 = vand.u32 %v5953, 4294901760
      %6730 = vmatmul.mubr.f32.gmra.mxu0 %v6729
      %v6731 = vpop.f32.mrf.mxu0
      %v6732 = vadd.f32 %v6615, %v6731
      %v6733 = vpop.f32.mrf.mxu0
      %6734 = vmatprep.mubr.f32.mxu0 0.0
      %v6735 = vand.u32 %v5956, 4294901760
      %6736 = vmatmul.mubr.f32.gmra.mxu0 %v6735
      %v6737 = vpop.f32.mrf.mxu0
      %v6738 = vadd.f32 %v6621, %v6737
      %v6739 = vpop.f32.mrf.mxu0
      %6740 = vmatprep.mubr.f32.mxu0 0.0
      %v6741 = vand.u32 %v5959, 4294901760
      %6742 = vmatmul.mubr.f32.gmra.mxu0 %v6741
      %v6743 = vpop.f32.mrf.mxu0
      %v6744 = vadd.f32 %v6627, %v6743
      %v6745 = vpop.f32.mrf.mxu0
      %6746 = vdwg.mxu0
      %v6747 = vadd.f32 %v252, %v6702
      %v6748 = vadd.f32 %v253, %v6708
      %v6749 = vadd.f32 %v254, %v6714
      %v6750 = vadd.f32 %v255, %v6720
      %v6751 = vadd.f32 %v256, %v6726
      %v6752 = vadd.f32 %v257, %v6732
      %v6753 = vadd.f32 %v258, %v6738
      %v6754 = vadd.f32 %v259, %v6744
      %6755 = vst.msk [vmem:[%s251] sm:$0xff] %vm260, %v6747
      %6756 = vst.msk [vmem:[%s251 + $0x8] sm:$0xff] %vm260, %v6748
      %6757 = vst.msk [vmem:[%s251 + $0x10] sm:$0xff] %vm260, %v6749
      %6758 = vst.msk [vmem:[%s251 + $0x18] sm:$0xff] %vm260, %v6750
      %6759 = vst.msk [vmem:[%s251 + $0x20] sm:$0xff] %vm260, %v6751
      %6760 = vst.msk [vmem:[%s251 + $0x28] sm:$0xff] %vm260, %v6752
      %6761 = vst.msk [vmem:[%s251 + $0x30] sm:$0xff] %vm260, %v6753
      %6762 = vst.msk [vmem:[%s251 + $0x38] sm:$0xff] %vm260, %v6754
      %p6763 = scmp.lt.s32.totalorder %s17, 1
      %s6764 = scalar_select %p6763, %s17, 1
      %s6765 = smul.addr %s6764, 8
      %s6766 = smul.addr %s6765, 8
      %s6767 = scalar_lea.vmem %s6, %s6766
      // Predicated region
      $region45: #{tpu_custom_call.1} parent=43 // pred_check
        %p6768 = pneg %p166
      $region46: #{tpu_custom_call.1} parent=43 // pred_check_branch
        %6770 = sbr.rel (%p6768) target = $region48
      $region47: #{tpu_custom_call.1} parent=43 // pred_region
        _
      $region48: #{tpu_custom_call.1} parent=43 // pred_fallthru
        _
    $region44: #{tpu_custom_call.1} parent=5 // pred_fallthru
      _
    %p6771 = scmp.le.s32.totalorder 2, %s12
    // Predicated region
    $region49: #{tpu_custom_call.1} parent=5 // pred_check
      %p6772 = pneg %p6771
    $region50: #{tpu_custom_call.1} parent=5 // pred_check_branch
      %6774 = sbr.rel (%p6772) target = $region52
    $region51: #{tpu_custom_call.1} parent=5 // pred_region
      %s6775 = ssub.s32 %s12, 2
      // Predicated region
      $region53: #{tpu_custom_call.1} parent=51 // pred_check
        %p6776 = pneg %p172
      $region54: #{tpu_custom_call.1} parent=51 // pred_check_branch
        %6778 = sbr.rel (%p6776) target = $region56
      $region55: #{tpu_custom_call.1} parent=51 // pred_region
        %p6779 = scmp.lt.s32.totalorder %s18, 1
        %s6780 = scalar_select %p6779, %s18, 1
        %s6781 = smul.addr %s6780, 8
        %s6782 = smul.addr %s6781, 8
        %s6783 = scalar_lea.vmem %s6, %s6782
      $region56: #{tpu_custom_call.1} parent=51 // pred_fallthru
        _
    $region52: #{tpu_custom_call.1} parent=5 // pred_fallthru
      _
  $region6: #{tpu_custom_call.1} parent=0 // loop_footer
    %s16 = sadd.s32 1, %s12
  $region7: #{tpu_custom_call.1} parent=0 // loop_footer_branch
    %11 = sbr.rel target = $region3
  $region8: #{tpu_custom_call.1} parent=0 // loop_exit
    _

</llo_original>
